<compile_context>
chip_gen: v7x
topology: tpu7x:2x2x1
jax: 0.10.0
libtpu: 0.0.40
codegen_flags: <defaults>
</compile_context>

<pallas_src>
import functools

import jax
import jax.numpy as jnp
from jax.experimental import pallas as pl
from jax.experimental.pallas import tpu as pltpu

K = 5          # kernel_size
PAD = K // 2   # "same" padding
EPS = 1e-5     # BatchNorm2d default eps

# bf16 matmul operands, f32 accumulation (v5e/v6e/v7x MXU are bf16-native).
# Set to jnp.float32 for bit-tight comparisons against an f32 reference.
MATMUL_DTYPE = jnp.bfloat16


# --------------------------------------------------------------------------- #
# Kernels
# --------------------------------------------------------------------------- #
def _conv_tile_kernel(top_ref, core_ref, bot_ref, w_ref, b_ref, scale_ref,
                      shift_ref, y_ref, stats_ref, *, apply_act):
    """conv5x5 + bias for one (image, row tile) step, plus BN partial stats.

    top_ref  : (1, PAD, W, C)  input rows [i*TH-PAD, i*TH)      (clamped at i==0)
    core_ref : (1, TH,  W, C)  input rows [i*TH, i*TH+TH)
    bot_ref  : (1, PAD, W, C)  input rows [i*TH+TH, i*TH+TH+PAD) (clamped at last)
    w_ref    : (K, K, C, C)    weights laid out (kh, kw, cin, cout)
    b_ref    : (1, C)          conv bias (f32)
    scale_ref, shift_ref : (1, C) folded BN affine applied to the *input*
                           window when apply_act=True (fused BN0 + ReLU)
    y_ref    : (1, TH, W, C)   conv + bias output tile (pre-BN, f32)
    stats_ref: (1, 1, 2, C)    per-tile partial [sum, sum_sq] over TH*W
    """
    i = pl.program_id(1)
    n_tiles = pl.num_programs(1)
    _, TH, W, C = core_ref.shape
    THp = TH + 2 * PAD

    def pre(v):
        v = v.astype(jnp.float32)
        if apply_act:   # fused BN0 affine + ReLU on the conv input window
            v = jnp.maximum(v * scale_ref[...] + shift_ref[...], 0.0)
        return v

    # Halo rows outside the image must be zero AFTER the affine+ReLU
    # (relu(shift) != 0), hence masking here rather than zero-padding earlier.
    top = pre(top_ref[0]) * (i > 0).astype(jnp.float32)
    bot = pre(bot_ref[0]) * (i < n_tiles - 1).astype(jnp.float32)
    win = jnp.concatenate([top, pre(core_ref[0]), bot], axis=0)   # (THp, W, C)

    acc = jnp.zeros((TH * W, C), jnp.float32)
    for kw in range(K):                 # column shift hoisted out of the kh loop
        lo = kw - PAD
        if lo < 0:                      # zero columns left of the image
            shifted = jnp.concatenate(
                [jnp.zeros((THp, -lo, C), jnp.float32), win[:, :W + lo, :]], axis=1)
        elif lo > 0:                    # zero columns right of the image
            shifted = jnp.concatenate(
                [win[:, lo:, :], jnp.zeros((THp, lo, C), jnp.float32)], axis=1)
        else:
            shifted = win
        shifted = shifted.astype(w_ref.dtype)
        for kh in range(K):             # leading-dim slices: slab-aligned (W%8==0)
            tap = shifted[kh:kh + TH].reshape(TH * W, C)
            acc = acc + jnp.dot(tap, w_ref[kh, kw],
                                preferred_element_type=jnp.float32)
    # TODO(synk): on v6e/v7x with C <= 128, a per-kh im2col (contraction K*C)
    # fills the 256-deep MXU better; per-(kh,kw) dots are the right choice for
    # v5e and for C >= 256.

    y = acc + b_ref[...]                                   # (TH*W, C)
    y_ref[...] = y.reshape(1, TH, W, C)

    s = jnp.sum(y, axis=0, keepdims=True)                  # (1, C)
    sq = jnp.sum(y * y, axis=0, keepdims=True)             # (1, C)
    stats_ref[...] = jnp.concatenate([s, sq], axis=0).reshape(1, 1, 2, C)


def _bn_residual_relu_kernel(z_ref, x_ref, scale_ref, shift_ref, o_ref):
    """out = relu(z * scale + shift + x) for one row tile (pure streaming)."""
    o_ref[...] = jnp.maximum(
        z_ref[...] * scale_ref[...] + shift_ref[...] + x_ref[...], 0.0)


# --------------------------------------------------------------------------- #
# pallas_call builders
# --------------------------------------------------------------------------- #
def _vmem_limit(block_bytes, temp_bytes):
    """Double-buffered blocks + temporaries, 25% headroom, capped below 48 MiB."""
    need = int(1.25 * (2 * block_bytes + temp_bytes)) + (2 << 20)
    return max(16 << 20, min(need, 48 << 20))


def _conv_pass(x_nhwc, w_kkcc, b, scale, shift, row_tile, apply_act):
    N, H, W, C = x_nhwc.shape
    TH = row_tile
    nH = H // TH
    R = TH // PAD            # PAD-row blocks per row tile
    HB = H // PAD            # total PAD-row blocks along H

    wbytes = K * K * C * C * w_kkcc.dtype.itemsize
    block_bytes = 4 * ((TH + 2 * PAD) * W * C          # input tiles (core + halos)
                       + TH * W * C + 2 * C            # output tile + stats
                       + 3 * C) + wbytes               # bias/scale/shift + weights
    temp_bytes = 4 * (3 * (TH + 2 * PAD) * W * C + TH * W * C)   # win/shifted/acc

    flops = 2 * N * H * W * C * C * K * K + 6 * N * H * W * C
    bytes_accessed = (4 * (N * nH * (TH + 2 * PAD) * W * C      # halo'd reads
                           + N * H * W * C + N * nH * 2 * C)    # writes
                      + wbytes)

    kernel = functools.partial(_conv_tile_kernel, apply_act=apply_act)
    return pl.pallas_call(
        kernel,
        grid=(N, nH),
        in_specs=[
            # top halo: rows [i*TH - PAD, i*TH), block index clamped at 0
            pl.BlockSpec((1, PAD, W, C),
                         lambda n, i: (n, jnp.maximum(i * R - 1, 0), 0, 0)),
            # core rows [i*TH, i*TH + TH)
            pl.BlockSpec((1, TH, W, C), lambda n, i: (n, i, 0, 0)),
            # bottom halo: rows [i*TH + TH, i*TH + TH + PAD), clamped at last
            pl.BlockSpec((1, PAD, W, C),
                         lambda n, i: (n, jnp.minimum((i + 1) * R, HB - 1), 0, 0)),
            pl.BlockSpec((K, K, C, C), lambda n, i: (0, 0, 0, 0)),   # weights
            pl.BlockSpec((1, C), lambda n, i: (0, 0)),               # bias
            pl.BlockSpec((1, C), lambda n, i: (0, 0)),               # scale
            pl.BlockSpec((1, C), lambda n, i: (0, 0)),               # shift
        ],
        out_specs=(
            pl.BlockSpec((1, TH, W, C), lambda n, i: (n, i, 0, 0)),
            pl.BlockSpec((1, 1, 2, C), lambda n, i: (n, i, 0, 0)),
        ),
        out_shape=(
            jax.ShapeDtypeStruct((N, H, W, C), jnp.float32),
            jax.ShapeDtypeStruct((N, nH, 2, C), jnp.float32),
        ),
        compiler_params=pltpu.CompilerParams(
            dimension_semantics=("parallel", "parallel"),
            vmem_limit_bytes=_vmem_limit(block_bytes, temp_bytes)),
        cost_estimate=pl.CostEstimate(flops=flops, transcendentals=0,
                                      bytes_accessed=bytes_accessed),
    )(x_nhwc, x_nhwc, x_nhwc, w_kkcc, b, scale, shift)


def _epilogue_pass(z, x, scale, shift, row_tile):
    N, H, W, C = z.shape
    TH = row_tile
    nH = H // TH
    block_bytes = 4 * (3 * TH * W * C + 2 * C)
    return pl.pallas_call(
        _bn_residual_relu_kernel,
        grid=(N, nH),
        in_specs=[
            pl.BlockSpec((1, TH, W, C), lambda n, i: (n, i, 0, 0)),
            pl.BlockSpec((1, TH, W, C), lambda n, i: (n, i, 0, 0)),   # residual x
            pl.BlockSpec((1, C), lambda n, i: (0, 0)),
            pl.BlockSpec((1, C), lambda n, i: (0, 0)),
        ],
        out_specs=pl.BlockSpec((1, TH, W, C), lambda n, i: (n, i, 0, 0)),
        out_shape=jax.ShapeDtypeStruct((N, H, W, C), jnp.float32),
        compiler_params=pltpu.CompilerParams(
            dimension_semantics=("parallel", "parallel"),
            vmem_limit_bytes=_vmem_limit(block_bytes, 4 * TH * W * C)),
        cost_estimate=pl.CostEstimate(
            flops=4 * N * H * W * C, transcendentals=0,
            bytes_accessed=4 * 3 * N * H * W * C),
    )(z, x, scale, shift)


# --------------------------------------------------------------------------- #
# Wrapper
# --------------------------------------------------------------------------- #
def _pick_row_tile(H, W, C, target_bytes=4 << 20):
    """Largest divisor of H that is a multiple of PAD (preferably of 8) whose
    f32 (rows, W, C) tile fits target_bytes."""
    limit = max(PAD, target_bytes // max(1, 4 * W * C))
    divisors = [t for t in range(PAD, H + 1, PAD) if H % t == 0 and t <= limit]
    if not divisors:
        return H
    aligned = [t for t in divisors if t % 8 == 0]
    return max(aligned) if aligned else max(divisors)


def _prep_weight(w_oihw):
    """(Cout, Cin, KH, KW) -> (KH, KW, Cin, Cout) in MATMUL_DTYPE."""
    return jnp.transpose(w_oihw, (2, 3, 1, 0)).astype(MATMUL_DTYPE)


def _fold_bn(stats, gamma, beta, count):
    """Fold batch stats into per-channel scale/shift: y*scale + shift == bn(y)."""
    s = jnp.sum(stats.astype(jnp.float32), axis=(0, 1))    # (2, C)
    mean = s[0] / count
    var = s[1] / count - mean * mean                        # biased variance
    # TODO(synk): one-pass E[y^2]-E[y]^2 loses precision when |mean| >> std;
    # fine at this scale, consider a shifted/two-pass variant for large C.
    scale = gamma.astype(jnp.float32) * jax.lax.rsqrt(var + EPS)
    shift = beta.astype(jnp.float32) - mean * scale
    return scale.reshape(1, -1), shift.reshape(1, -1)


@functools.partial(jax.jit, static_argnames=("row_tile",))
def residual_block(x_nchw, params, row_tile=None):
    """x_nchw: (N, C, H, W) float32. Returns (N, C, H, W) float32."""
    N, C, H, W = x_nchw.shape
    if row_tile is None:
        row_tile = _pick_row_tile(H, W, C)
    assert H % PAD == 0 and row_tile % PAD == 0 and H % row_tile == 0, \
        (H, row_tile)

    x = jnp.transpose(x_nchw, (0, 2, 3, 1)).astype(jnp.float32)     # NHWC
    w0 = _prep_weight(params["w0"])
    w1 = _prep_weight(params["w1"])
    b0 = params["b0"].reshape(1, C).astype(jnp.float32)
    b1 = params["b1"].reshape(1, C).astype(jnp.float32)
    ones = jnp.ones((1, C), jnp.float32)
    zeros = jnp.zeros((1, C), jnp.float32)
    count = N * H * W

    # ---- conv0 + bias (Pallas), with per-tile BN0 partial statistics --------
    y_raw, stats0 = _conv_pass(x, w0, b0, ones, zeros, row_tile, apply_act=False)
    scale0, shift0 = _fold_bn(stats0, params["gamma0"], params["beta0"], count)

    # ---- conv1 + bias (Pallas) with BN0 affine + ReLU fused into the input
    #      window (padding masked AFTER the affine), plus BN1 partial stats ---
    z_raw, stats1 = _conv_pass(y_raw, w1, b1, scale0, shift0, row_tile,
                               apply_act=True)
    scale1, shift1 = _fold_bn(stats1, params["gamma1"], params["beta1"], count)

    # ---- BN1 affine + residual add + ReLU (Pallas, streaming) ---------------
    out = _epilogue_pass(z_raw, x, scale1, shift1, row_tile)
    return jnp.transpose(out, (0, 3, 1, 2))                          # NCHW


# --------------------------------------------------------------------------- #
# Pure-JAX reference (mirrors the PyTorch forward with training-mode BN)
# --------------------------------------------------------------------------- #
def reference(x_nchw, params):
    def conv(x, w, b):
        y = jax.lax.conv_general_dilated(
            x, w, window_strides=(1, 1), padding=[(PAD, PAD), (PAD, PAD)],
            dimension_numbers=("NCHW", "OIHW", "NCHW"))
        return y + b.reshape(1, -1, 1, 1)

    def bn(y, gamma, beta):
        mean = jnp.mean(y, axis=(0, 2, 3), keepdims=True)
        var = jnp.mean((y - mean) ** 2, axis=(0, 2, 3), keepdims=True)
        return (y - mean) / jnp.sqrt(var + EPS) * gamma.reshape(1, -1, 1, 1) \
               + beta.reshape(1, -1, 1, 1)

    y = jax.nn.relu(bn(conv(x_nchw, params["w0"], params["b0"]),
                       params["gamma0"], params["beta0"]))
    z = bn(conv(y, params["w1"], params["b1"]), params["gamma1"], params["beta1"])
    return jax.nn.relu(z + x_nchw)


def init_params(key, filters):
    # xavier_uniform_ with gain=1: bound = sqrt(6 / (fan_in + fan_out)),
    # fan_in = fan_out = filters * K * K.
    fan = filters * K * K
    bound = (6.0 / (fan + fan)) ** 0.5
    k0, k1 = jax.random.split(key)
    return {
        "w0": jax.random.uniform(k0, (filters, filters, K, K), jnp.float32,
                                 -bound, bound),
        "b0": jnp.zeros((filters,), jnp.float32),
        "w1": jax.random.uniform(k1, (filters, filters, K, K), jnp.float32,
                                 -bound, bound),
        "b1": jnp.zeros((filters,), jnp.float32),
        "gamma0": jnp.ones((filters,), jnp.float32),
        "beta0": jnp.zeros((filters,), jnp.float32),
        "gamma1": jnp.ones((filters,), jnp.float32),
        "beta1": jnp.zeros((filters,), jnp.float32),
    }


if __name__ == "__main__":
    key = jax.random.PRNGKey(0)
    kx, kp = jax.random.split(key)

    filters, N, H, W = 4, 2, 16, 16
    x = jax.random.normal(kx, (N, filters, H, W), jnp.float32)   # NCHW input
    params = init_params(kp, filters)

    # row_tile=8 -> 2 row tiles per image: exercises the halo blocks, the
    # boundary masking, and the cross-tile BN statistics reduction.
    out = residual_block(x, params, row_tile=8)
    out = jax.block_until_ready(out)

    ref = reference(x, params)
    err = float(jnp.max(jnp.abs(out - ref)))
    assert out.shape == (N, filters, H, W), out.shape
    # bf16 matmul operands with f32 accumulation: worst-element error ~1e-2
    # vs. the f32 reference, so the old 1e-3 bound is intentionally loosened.
    assert err < 5e-2, f"max abs error too large: {err}"
    print("KERNEL_OK")
</pallas_src>

<mosaic_0001>
module attributes {stable_mosaic.version = 11 : i64} {
  func.func @_conv_tile_kernel(%arg0: i32, %arg1: i32, %arg2: memref<1x2x16x4xf32, #tpu.memory_space<vmem>>, %arg3: memref<1x8x16x4xf32, #tpu.memory_space<vmem>>, %arg4: memref<1x2x16x4xf32, #tpu.memory_space<vmem>>, %arg5: memref<5x5x4x4xbf16, #tpu.memory_space<vmem>>, %arg6: memref<1x4xf32, #tpu.memory_space<vmem>>, %arg7: memref<1x4xf32, #tpu.memory_space<vmem>>, %arg8: memref<1x4xf32, #tpu.memory_space<vmem>>, %arg9: memref<1x8x16x4xf32, #tpu.memory_space<vmem>>, %arg10: memref<1x1x2x4xf32, #tpu.memory_space<vmem>>) attributes {dimension_semantics = [#tpu.dimension_semantics<parallel>, #tpu.dimension_semantics<parallel>], iteration_bounds = array<i64: 2, 2>, scalar_prefetch = 0 : i64, scratch_operands = 0 : i64, tpu.core_type = #tpu.core_type<tc>, window_params = [{transform_indices = @transform_0, window_bounds = array<i64: 1, 2, 16, 4>}, {transform_indices = @transform_1, window_bounds = array<i64: 1, 8, 16, 4>}, {transform_indices = @transform_2, window_bounds = array<i64: 1, 2, 16, 4>}, {pipeline_mode = #tpu.pipeline_mode<synchronous>, transform_indices = @transform_3, window_bounds = array<i64: 5, 5, 4, 4>}, {pipeline_mode = #tpu.pipeline_mode<synchronous>, transform_indices = @transform_4, window_bounds = array<i64: 1, 4>}, {pipeline_mode = #tpu.pipeline_mode<synchronous>, transform_indices = @transform_5, window_bounds = array<i64: 1, 4>}, {pipeline_mode = #tpu.pipeline_mode<synchronous>, transform_indices = @transform_6, window_bounds = array<i64: 1, 4>}, {transform_indices = @transform_7, window_bounds = array<i64: 1, 8, 16, 4>}, {transform_indices = @transform_8, window_bounds = array<i64: 1, 1, 2, 4>}]} {
    %c0 = arith.constant 0 : index
    %c0_0 = arith.constant 0 : index
    %c0_1 = arith.constant 0 : index
    %c0_2 = arith.constant 0 : index
    %0 = vector.load %arg2[%c0, %c0_0, %c0_1, %c0_2] : memref<1x2x16x4xf32, #tpu.memory_space<vmem>>, vector<1x2x16x4xf32>
    %1 = vector.shape_cast %0 : vector<1x2x16x4xf32> to vector<2x16x4xf32>
    %c0_i32 = arith.constant 0 : i32
    %2 = arith.cmpi sgt, %arg1, %c0_i32 : i32
    %3 = arith.extui %2 : i1 to i32
    %4 = arith.sitofp %3 : i32 to f32
    %5 = vector.broadcast %4 : f32 to vector<2x16x4xf32>
    %6 = arith.mulf %1, %5 : vector<2x16x4xf32>
    %c0_3 = arith.constant 0 : index
    %c0_4 = arith.constant 0 : index
    %c0_5 = arith.constant 0 : index
    %c0_6 = arith.constant 0 : index
    %7 = vector.load %arg4[%c0_3, %c0_4, %c0_5, %c0_6] : memref<1x2x16x4xf32, #tpu.memory_space<vmem>>, vector<1x2x16x4xf32>
    %8 = vector.shape_cast %7 : vector<1x2x16x4xf32> to vector<2x16x4xf32>
    %c1_i32 = arith.constant 1 : i32
    %9 = arith.cmpi slt, %arg1, %c1_i32 : i32
    %10 = arith.extui %9 : i1 to i32
    %11 = arith.sitofp %10 : i32 to f32
    %12 = vector.broadcast %11 : f32 to vector<2x16x4xf32>
    %13 = arith.mulf %8, %12 : vector<2x16x4xf32>
    %c0_7 = arith.constant 0 : index
    %c0_8 = arith.constant 0 : index
    %c0_9 = arith.constant 0 : index
    %c0_10 = arith.constant 0 : index
    %14 = vector.load %arg3[%c0_7, %c0_8, %c0_9, %c0_10] : memref<1x8x16x4xf32, #tpu.memory_space<vmem>>, vector<1x8x16x4xf32>
    %15 = vector.shape_cast %14 : vector<1x8x16x4xf32> to vector<8x16x4xf32>
    %16 = tpu.concatenate %6, %15, %13 in 0 : vector<2x16x4xf32>, vector<8x16x4xf32>, vector<2x16x4xf32> -> vector<12x16x4xf32>
    %cst = arith.constant 0.000000e+00 : f32
    %17 = vector.broadcast %cst : f32 to vector<128x4xf32>
    %cst_11 = arith.constant 0.000000e+00 : f32
    %18 = vector.broadcast %cst_11 : f32 to vector<12x2x4xf32>
    %19 = vector.extract_strided_slice %16 {offsets = [0, 0, 0], sizes = [12, 14, 4], strides = [1, 1, 1]} : vector<12x16x4xf32> to vector<12x14x4xf32>
    %20 = tpu.concatenate %18, %19 in 1 : vector<12x2x4xf32>, vector<12x14x4xf32> -> vector<12x16x4xf32>
    %21 = arith.truncf %20 : vector<12x16x4xf32> to vector<12x16x4xbf16>
    %22 = vector.extract_strided_slice %21 {offsets = [0, 0, 0], sizes = [8, 16, 4], strides = [1, 1, 1]} : vector<12x16x4xbf16> to vector<8x16x4xbf16>
    %23 = vector.shape_cast %22 : vector<8x16x4xbf16> to vector<128x4xbf16>
    %c0_12 = arith.constant 0 : index
    %c0_13 = arith.constant 0 : index
    %c0_14 = arith.constant 0 : index
    %c0_15 = arith.constant 0 : index
    %24 = vector.load %arg5[%c0_12, %c0_13, %c0_14, %c0_15] : memref<5x5x4x4xbf16, #tpu.memory_space<vmem>>, vector<1x1x4x4xbf16>
    %25 = vector.shape_cast %24 : vector<1x1x4x4xbf16> to vector<4x4xbf16>
    %cst_16 = arith.constant dense<0.000000e+00> : vector<128x4xf32>
    %26 = tpu.matmul %23, %25, %cst_16 {dimension_numbers = #tpu.dot_dimension_numbers<[1], [0], [0], [1], [0, 0, 1, 1], [], []>} : vector<128x4xbf16>, vector<4x4xbf16>, vector<128x4xf32> -> vector<128x4xf32>
    %27 = arith.addf %17, %26 : vector<128x4xf32>
    %28 = vector.extract_strided_slice %21 {offsets = [1, 0, 0], sizes = [8, 16, 4], strides = [1, 1, 1]} : vector<12x16x4xbf16> to vector<8x16x4xbf16>
    %29 = vector.shape_cast %28 : vector<8x16x4xbf16> to vector<128x4xbf16>
    %c1 = arith.constant 1 : index
    %c0_17 = arith.constant 0 : index
    %c0_18 = arith.constant 0 : index
    %c0_19 = arith.constant 0 : index
    %30 = vector.load %arg5[%c1, %c0_17, %c0_18, %c0_19] : memref<5x5x4x4xbf16, #tpu.memory_space<vmem>>, vector<1x1x4x4xbf16>
    %31 = vector.shape_cast %30 : vector<1x1x4x4xbf16> to vector<4x4xbf16>
    %cst_20 = arith.constant dense<0.000000e+00> : vector<128x4xf32>
    %32 = tpu.matmul %29, %31, %cst_20 {dimension_numbers = #tpu.dot_dimension_numbers<[1], [0], [0], [1], [0, 0, 1, 1], [], []>} : vector<128x4xbf16>, vector<4x4xbf16>, vector<128x4xf32> -> vector<128x4xf32>
    %33 = arith.addf %27, %32 : vector<128x4xf32>
    %34 = vector.extract_strided_slice %21 {offsets = [2, 0, 0], sizes = [8, 16, 4], strides = [1, 1, 1]} : vector<12x16x4xbf16> to vector<8x16x4xbf16>
    %35 = vector.shape_cast %34 : vector<8x16x4xbf16> to vector<128x4xbf16>
    %c2 = arith.constant 2 : index
    %c0_21 = arith.constant 0 : index
    %c0_22 = arith.constant 0 : index
    %c0_23 = arith.constant 0 : index
    %36 = vector.load %arg5[%c2, %c0_21, %c0_22, %c0_23] : memref<5x5x4x4xbf16, #tpu.memory_space<vmem>>, vector<1x1x4x4xbf16>
    %37 = vector.shape_cast %36 : vector<1x1x4x4xbf16> to vector<4x4xbf16>
    %cst_24 = arith.constant dense<0.000000e+00> : vector<128x4xf32>
    %38 = tpu.matmul %35, %37, %cst_24 {dimension_numbers = #tpu.dot_dimension_numbers<[1], [0], [0], [1], [0, 0, 1, 1], [], []>} : vector<128x4xbf16>, vector<4x4xbf16>, vector<128x4xf32> -> vector<128x4xf32>
    %39 = arith.addf %33, %38 : vector<128x4xf32>
    %40 = vector.extract_strided_slice %21 {offsets = [3, 0, 0], sizes = [8, 16, 4], strides = [1, 1, 1]} : vector<12x16x4xbf16> to vector<8x16x4xbf16>
    %41 = vector.shape_cast %40 : vector<8x16x4xbf16> to vector<128x4xbf16>
    %c3 = arith.constant 3 : index
    %c0_25 = arith.constant 0 : index
    %c0_26 = arith.constant 0 : index
    %c0_27 = arith.constant 0 : index
    %42 = vector.load %arg5[%c3, %c0_25, %c0_26, %c0_27] : memref<5x5x4x4xbf16, #tpu.memory_space<vmem>>, vector<1x1x4x4xbf16>
    %43 = vector.shape_cast %42 : vector<1x1x4x4xbf16> to vector<4x4xbf16>
    %cst_28 = arith.constant dense<0.000000e+00> : vector<128x4xf32>
    %44 = tpu.matmul %41, %43, %cst_28 {dimension_numbers = #tpu.dot_dimension_numbers<[1], [0], [0], [1], [0, 0, 1, 1], [], []>} : vector<128x4xbf16>, vector<4x4xbf16>, vector<128x4xf32> -> vector<128x4xf32>
    %45 = arith.addf %39, %44 : vector<128x4xf32>
    %46 = vector.extract_strided_slice %21 {offsets = [4, 0, 0], sizes = [8, 16, 4], strides = [1, 1, 1]} : vector<12x16x4xbf16> to vector<8x16x4xbf16>
    %47 = vector.shape_cast %46 : vector<8x16x4xbf16> to vector<128x4xbf16>
    %c4 = arith.constant 4 : index
    %c0_29 = arith.constant 0 : index
    %c0_30 = arith.constant 0 : index
    %c0_31 = arith.constant 0 : index
    %48 = vector.load %arg5[%c4, %c0_29, %c0_30, %c0_31] : memref<5x5x4x4xbf16, #tpu.memory_space<vmem>>, vector<1x1x4x4xbf16>
    %49 = vector.shape_cast %48 : vector<1x1x4x4xbf16> to vector<4x4xbf16>
    %cst_32 = arith.constant dense<0.000000e+00> : vector<128x4xf32>
    %50 = tpu.matmul %47, %49, %cst_32 {dimension_numbers = #tpu.dot_dimension_numbers<[1], [0], [0], [1], [0, 0, 1, 1], [], []>} : vector<128x4xbf16>, vector<4x4xbf16>, vector<128x4xf32> -> vector<128x4xf32>
    %51 = arith.addf %45, %50 : vector<128x4xf32>
    %cst_33 = arith.constant 0.000000e+00 : f32
    %52 = vector.broadcast %cst_33 : f32 to vector<12x1x4xf32>
    %53 = vector.extract_strided_slice %16 {offsets = [0, 0, 0], sizes = [12, 15, 4], strides = [1, 1, 1]} : vector<12x16x4xf32> to vector<12x15x4xf32>
    %54 = tpu.concatenate %52, %53 in 1 : vector<12x1x4xf32>, vector<12x15x4xf32> -> vector<12x16x4xf32>
    %55 = arith.truncf %54 : vector<12x16x4xf32> to vector<12x16x4xbf16>
    %56 = vector.extract_strided_slice %55 {offsets = [0, 0, 0], sizes = [8, 16, 4], strides = [1, 1, 1]} : vector<12x16x4xbf16> to vector<8x16x4xbf16>
    %57 = vector.shape_cast %56 : vector<8x16x4xbf16> to vector<128x4xbf16>
    %c0_34 = arith.constant 0 : index
    %c1_35 = arith.constant 1 : index
    %c0_36 = arith.constant 0 : index
    %c0_37 = arith.constant 0 : index
    %58 = vector.load %arg5[%c0_34, %c1_35, %c0_36, %c0_37] : memref<5x5x4x4xbf16, #tpu.memory_space<vmem>>, vector<1x1x4x4xbf16>
    %59 = vector.shape_cast %58 : vector<1x1x4x4xbf16> to vector<4x4xbf16>
    %cst_38 = arith.constant dense<0.000000e+00> : vector<128x4xf32>
    %60 = tpu.matmul %57, %59, %cst_38 {dimension_numbers = #tpu.dot_dimension_numbers<[1], [0], [0], [1], [0, 0, 1, 1], [], []>} : vector<128x4xbf16>, vector<4x4xbf16>, vector<128x4xf32> -> vector<128x4xf32>
    %61 = arith.addf %51, %60 : vector<128x4xf32>
    %62 = vector.extract_strided_slice %55 {offsets = [1, 0, 0], sizes = [8, 16, 4], strides = [1, 1, 1]} : vector<12x16x4xbf16> to vector<8x16x4xbf16>
    %63 = vector.shape_cast %62 : vector<8x16x4xbf16> to vector<128x4xbf16>
    %c1_39 = arith.constant 1 : index
    %c1_40 = arith.constant 1 : index
    %c0_41 = arith.constant 0 : index
    %c0_42 = arith.constant 0 : index
    %64 = vector.load %arg5[%c1_39, %c1_40, %c0_41, %c0_42] : memref<5x5x4x4xbf16, #tpu.memory_space<vmem>>, vector<1x1x4x4xbf16>
    %65 = vector.shape_cast %64 : vector<1x1x4x4xbf16> to vector<4x4xbf16>
    %cst_43 = arith.constant dense<0.000000e+00> : vector<128x4xf32>
    %66 = tpu.matmul %63, %65, %cst_43 {dimension_numbers = #tpu.dot_dimension_numbers<[1], [0], [0], [1], [0, 0, 1, 1], [], []>} : vector<128x4xbf16>, vector<4x4xbf16>, vector<128x4xf32> -> vector<128x4xf32>
    %67 = arith.addf %61, %66 : vector<128x4xf32>
    %68 = vector.extract_strided_slice %55 {offsets = [2, 0, 0], sizes = [8, 16, 4], strides = [1, 1, 1]} : vector<12x16x4xbf16> to vector<8x16x4xbf16>
    %69 = vector.shape_cast %68 : vector<8x16x4xbf16> to vector<128x4xbf16>
    %c2_44 = arith.constant 2 : index
    %c1_45 = arith.constant 1 : index
    %c0_46 = arith.constant 0 : index
    %c0_47 = arith.constant 0 : index
    %70 = vector.load %arg5[%c2_44, %c1_45, %c0_46, %c0_47] : memref<5x5x4x4xbf16, #tpu.memory_space<vmem>>, vector<1x1x4x4xbf16>
    %71 = vector.shape_cast %70 : vector<1x1x4x4xbf16> to vector<4x4xbf16>
    %cst_48 = arith.constant dense<0.000000e+00> : vector<128x4xf32>
    %72 = tpu.matmul %69, %71, %cst_48 {dimension_numbers = #tpu.dot_dimension_numbers<[1], [0], [0], [1], [0, 0, 1, 1], [], []>} : vector<128x4xbf16>, vector<4x4xbf16>, vector<128x4xf32> -> vector<128x4xf32>
    %73 = arith.addf %67, %72 : vector<128x4xf32>
    %74 = vector.extract_strided_slice %55 {offsets = [3, 0, 0], sizes = [8, 16, 4], strides = [1, 1, 1]} : vector<12x16x4xbf16> to vector<8x16x4xbf16>
    %75 = vector.shape_cast %74 : vector<8x16x4xbf16> to vector<128x4xbf16>
    %c3_49 = arith.constant 3 : index
    %c1_50 = arith.constant 1 : index
    %c0_51 = arith.constant 0 : index
    %c0_52 = arith.constant 0 : index
    %76 = vector.load %arg5[%c3_49, %c1_50, %c0_51, %c0_52] : memref<5x5x4x4xbf16, #tpu.memory_space<vmem>>, vector<1x1x4x4xbf16>
    %77 = vector.shape_cast %76 : vector<1x1x4x4xbf16> to vector<4x4xbf16>
    %cst_53 = arith.constant dense<0.000000e+00> : vector<128x4xf32>
    %78 = tpu.matmul %75, %77, %cst_53 {dimension_numbers = #tpu.dot_dimension_numbers<[1], [0], [0], [1], [0, 0, 1, 1], [], []>} : vector<128x4xbf16>, vector<4x4xbf16>, vector<128x4xf32> -> vector<128x4xf32>
    %79 = arith.addf %73, %78 : vector<128x4xf32>
    %80 = vector.extract_strided_slice %55 {offsets = [4, 0, 0], sizes = [8, 16, 4], strides = [1, 1, 1]} : vector<12x16x4xbf16> to vector<8x16x4xbf16>
    %81 = vector.shape_cast %80 : vector<8x16x4xbf16> to vector<128x4xbf16>
    %c4_54 = arith.constant 4 : index
    %c1_55 = arith.constant 1 : index
    %c0_56 = arith.constant 0 : index
    %c0_57 = arith.constant 0 : index
    %82 = vector.load %arg5[%c4_54, %c1_55, %c0_56, %c0_57] : memref<5x5x4x4xbf16, #tpu.memory_space<vmem>>, vector<1x1x4x4xbf16>
    %83 = vector.shape_cast %82 : vector<1x1x4x4xbf16> to vector<4x4xbf16>
    %cst_58 = arith.constant dense<0.000000e+00> : vector<128x4xf32>
    %84 = tpu.matmul %81, %83, %cst_58 {dimension_numbers = #tpu.dot_dimension_numbers<[1], [0], [0], [1], [0, 0, 1, 1], [], []>} : vector<128x4xbf16>, vector<4x4xbf16>, vector<128x4xf32> -> vector<128x4xf32>
    %85 = arith.addf %79, %84 : vector<128x4xf32>
    %86 = arith.truncf %16 : vector<12x16x4xf32> to vector<12x16x4xbf16>
    %87 = vector.extract_strided_slice %86 {offsets = [0, 0, 0], sizes = [8, 16, 4], strides = [1, 1, 1]} : vector<12x16x4xbf16> to vector<8x16x4xbf16>
    %88 = vector.shape_cast %87 : vector<8x16x4xbf16> to vector<128x4xbf16>
    %c0_59 = arith.constant 0 : index
    %c2_60 = arith.constant 2 : index
    %c0_61 = arith.constant 0 : index
    %c0_62 = arith.constant 0 : index
    %89 = vector.load %arg5[%c0_59, %c2_60, %c0_61, %c0_62] : memref<5x5x4x4xbf16, #tpu.memory_space<vmem>>, vector<1x1x4x4xbf16>
    %90 = vector.shape_cast %89 : vector<1x1x4x4xbf16> to vector<4x4xbf16>
    %cst_63 = arith.constant dense<0.000000e+00> : vector<128x4xf32>
    %91 = tpu.matmul %88, %90, %cst_63 {dimension_numbers = #tpu.dot_dimension_numbers<[1], [0], [0], [1], [0, 0, 1, 1], [], []>} : vector<128x4xbf16>, vector<4x4xbf16>, vector<128x4xf32> -> vector<128x4xf32>
    %92 = arith.addf %85, %91 : vector<128x4xf32>
    %93 = vector.extract_strided_slice %86 {offsets = [1, 0, 0], sizes = [8, 16, 4], strides = [1, 1, 1]} : vector<12x16x4xbf16> to vector<8x16x4xbf16>
    %94 = vector.shape_cast %93 : vector<8x16x4xbf16> to vector<128x4xbf16>
    %c1_64 = arith.constant 1 : index
    %c2_65 = arith.constant 2 : index
    %c0_66 = arith.constant 0 : index
    %c0_67 = arith.constant 0 : index
    %95 = vector.load %arg5[%c1_64, %c2_65, %c0_66, %c0_67] : memref<5x5x4x4xbf16, #tpu.memory_space<vmem>>, vector<1x1x4x4xbf16>
    %96 = vector.shape_cast %95 : vector<1x1x4x4xbf16> to vector<4x4xbf16>
    %cst_68 = arith.constant dense<0.000000e+00> : vector<128x4xf32>
    %97 = tpu.matmul %94, %96, %cst_68 {dimension_numbers = #tpu.dot_dimension_numbers<[1], [0], [0], [1], [0, 0, 1, 1], [], []>} : vector<128x4xbf16>, vector<4x4xbf16>, vector<128x4xf32> -> vector<128x4xf32>
    %98 = arith.addf %92, %97 : vector<128x4xf32>
    %99 = vector.extract_strided_slice %86 {offsets = [2, 0, 0], sizes = [8, 16, 4], strides = [1, 1, 1]} : vector<12x16x4xbf16> to vector<8x16x4xbf16>
    %100 = vector.shape_cast %99 : vector<8x16x4xbf16> to vector<128x4xbf16>
    %c2_69 = arith.constant 2 : index
    %c2_70 = arith.constant 2 : index
    %c0_71 = arith.constant 0 : index
    %c0_72 = arith.constant 0 : index
    %101 = vector.load %arg5[%c2_69, %c2_70, %c0_71, %c0_72] : memref<5x5x4x4xbf16, #tpu.memory_space<vmem>>, vector<1x1x4x4xbf16>
    %102 = vector.shape_cast %101 : vector<1x1x4x4xbf16> to vector<4x4xbf16>
    %cst_73 = arith.constant dense<0.000000e+00> : vector<128x4xf32>
    %103 = tpu.matmul %100, %102, %cst_73 {dimension_numbers = #tpu.dot_dimension_numbers<[1], [0], [0], [1], [0, 0, 1, 1], [], []>} : vector<128x4xbf16>, vector<4x4xbf16>, vector<128x4xf32> -> vector<128x4xf32>
    %104 = arith.addf %98, %103 : vector<128x4xf32>
    %105 = vector.extract_strided_slice %86 {offsets = [3, 0, 0], sizes = [8, 16, 4], strides = [1, 1, 1]} : vector<12x16x4xbf16> to vector<8x16x4xbf16>
    %106 = vector.shape_cast %105 : vector<8x16x4xbf16> to vector<128x4xbf16>
    %c3_74 = arith.constant 3 : index
    %c2_75 = arith.constant 2 : index
    %c0_76 = arith.constant 0 : index
    %c0_77 = arith.constant 0 : index
    %107 = vector.load %arg5[%c3_74, %c2_75, %c0_76, %c0_77] : memref<5x5x4x4xbf16, #tpu.memory_space<vmem>>, vector<1x1x4x4xbf16>
    %108 = vector.shape_cast %107 : vector<1x1x4x4xbf16> to vector<4x4xbf16>
    %cst_78 = arith.constant dense<0.000000e+00> : vector<128x4xf32>
    %109 = tpu.matmul %106, %108, %cst_78 {dimension_numbers = #tpu.dot_dimension_numbers<[1], [0], [0], [1], [0, 0, 1, 1], [], []>} : vector<128x4xbf16>, vector<4x4xbf16>, vector<128x4xf32> -> vector<128x4xf32>
    %110 = arith.addf %104, %109 : vector<128x4xf32>
    %111 = vector.extract_strided_slice %86 {offsets = [4, 0, 0], sizes = [8, 16, 4], strides = [1, 1, 1]} : vector<12x16x4xbf16> to vector<8x16x4xbf16>
    %112 = vector.shape_cast %111 : vector<8x16x4xbf16> to vector<128x4xbf16>
    %c4_79 = arith.constant 4 : index
    %c2_80 = arith.constant 2 : index
    %c0_81 = arith.constant 0 : index
    %c0_82 = arith.constant 0 : index
    %113 = vector.load %arg5[%c4_79, %c2_80, %c0_81, %c0_82] : memref<5x5x4x4xbf16, #tpu.memory_space<vmem>>, vector<1x1x4x4xbf16>
    %114 = vector.shape_cast %113 : vector<1x1x4x4xbf16> to vector<4x4xbf16>
    %cst_83 = arith.constant dense<0.000000e+00> : vector<128x4xf32>
    %115 = tpu.matmul %112, %114, %cst_83 {dimension_numbers = #tpu.dot_dimension_numbers<[1], [0], [0], [1], [0, 0, 1, 1], [], []>} : vector<128x4xbf16>, vector<4x4xbf16>, vector<128x4xf32> -> vector<128x4xf32>
    %116 = arith.addf %110, %115 : vector<128x4xf32>
    %117 = vector.extract_strided_slice %16 {offsets = [0, 1, 0], sizes = [12, 15, 4], strides = [1, 1, 1]} : vector<12x16x4xf32> to vector<12x15x4xf32>
    %cst_84 = arith.constant 0.000000e+00 : f32
    %118 = vector.broadcast %cst_84 : f32 to vector<12x1x4xf32>
    %119 = tpu.concatenate %117, %118 in 1 : vector<12x15x4xf32>, vector<12x1x4xf32> -> vector<12x16x4xf32>
    %120 = arith.truncf %119 : vector<12x16x4xf32> to vector<12x16x4xbf16>
    %121 = vector.extract_strided_slice %120 {offsets = [0, 0, 0], sizes = [8, 16, 4], strides = [1, 1, 1]} : vector<12x16x4xbf16> to vector<8x16x4xbf16>
    %122 = vector.shape_cast %121 : vector<8x16x4xbf16> to vector<128x4xbf16>
    %c0_85 = arith.constant 0 : index
    %c3_86 = arith.constant 3 : index
    %c0_87 = arith.constant 0 : index
    %c0_88 = arith.constant 0 : index
    %123 = vector.load %arg5[%c0_85, %c3_86, %c0_87, %c0_88] : memref<5x5x4x4xbf16, #tpu.memory_space<vmem>>, vector<1x1x4x4xbf16>
    %124 = vector.shape_cast %123 : vector<1x1x4x4xbf16> to vector<4x4xbf16>
    %cst_89 = arith.constant dense<0.000000e+00> : vector<128x4xf32>
    %125 = tpu.matmul %122, %124, %cst_89 {dimension_numbers = #tpu.dot_dimension_numbers<[1], [0], [0], [1], [0, 0, 1, 1], [], []>} : vector<128x4xbf16>, vector<4x4xbf16>, vector<128x4xf32> -> vector<128x4xf32>
    %126 = arith.addf %116, %125 : vector<128x4xf32>
    %127 = vector.extract_strided_slice %120 {offsets = [1, 0, 0], sizes = [8, 16, 4], strides = [1, 1, 1]} : vector<12x16x4xbf16> to vector<8x16x4xbf16>
    %128 = vector.shape_cast %127 : vector<8x16x4xbf16> to vector<128x4xbf16>
    %c1_90 = arith.constant 1 : index
    %c3_91 = arith.constant 3 : index
    %c0_92 = arith.constant 0 : index
    %c0_93 = arith.constant 0 : index
    %129 = vector.load %arg5[%c1_90, %c3_91, %c0_92, %c0_93] : memref<5x5x4x4xbf16, #tpu.memory_space<vmem>>, vector<1x1x4x4xbf16>
    %130 = vector.shape_cast %129 : vector<1x1x4x4xbf16> to vector<4x4xbf16>
    %cst_94 = arith.constant dense<0.000000e+00> : vector<128x4xf32>
    %131 = tpu.matmul %128, %130, %cst_94 {dimension_numbers = #tpu.dot_dimension_numbers<[1], [0], [0], [1], [0, 0, 1, 1], [], []>} : vector<128x4xbf16>, vector<4x4xbf16>, vector<128x4xf32> -> vector<128x4xf32>
    %132 = arith.addf %126, %131 : vector<128x4xf32>
    %133 = vector.extract_strided_slice %120 {offsets = [2, 0, 0], sizes = [8, 16, 4], strides = [1, 1, 1]} : vector<12x16x4xbf16> to vector<8x16x4xbf16>
    %134 = vector.shape_cast %133 : vector<8x16x4xbf16> to vector<128x4xbf16>
    %c2_95 = arith.constant 2 : index
    %c3_96 = arith.constant 3 : index
    %c0_97 = arith.constant 0 : index
    %c0_98 = arith.constant 0 : index
    %135 = vector.load %arg5[%c2_95, %c3_96, %c0_97, %c0_98] : memref<5x5x4x4xbf16, #tpu.memory_space<vmem>>, vector<1x1x4x4xbf16>
    %136 = vector.shape_cast %135 : vector<1x1x4x4xbf16> to vector<4x4xbf16>
    %cst_99 = arith.constant dense<0.000000e+00> : vector<128x4xf32>
    %137 = tpu.matmul %134, %136, %cst_99 {dimension_numbers = #tpu.dot_dimension_numbers<[1], [0], [0], [1], [0, 0, 1, 1], [], []>} : vector<128x4xbf16>, vector<4x4xbf16>, vector<128x4xf32> -> vector<128x4xf32>
    %138 = arith.addf %132, %137 : vector<128x4xf32>
    %139 = vector.extract_strided_slice %120 {offsets = [3, 0, 0], sizes = [8, 16, 4], strides = [1, 1, 1]} : vector<12x16x4xbf16> to vector<8x16x4xbf16>
    %140 = vector.shape_cast %139 : vector<8x16x4xbf16> to vector<128x4xbf16>
    %c3_100 = arith.constant 3 : index
    %c3_101 = arith.constant 3 : index
    %c0_102 = arith.constant 0 : index
    %c0_103 = arith.constant 0 : index
    %141 = vector.load %arg5[%c3_100, %c3_101, %c0_102, %c0_103] : memref<5x5x4x4xbf16, #tpu.memory_space<vmem>>, vector<1x1x4x4xbf16>
    %142 = vector.shape_cast %141 : vector<1x1x4x4xbf16> to vector<4x4xbf16>
    %cst_104 = arith.constant dense<0.000000e+00> : vector<128x4xf32>
    %143 = tpu.matmul %140, %142, %cst_104 {dimension_numbers = #tpu.dot_dimension_numbers<[1], [0], [0], [1], [0, 0, 1, 1], [], []>} : vector<128x4xbf16>, vector<4x4xbf16>, vector<128x4xf32> -> vector<128x4xf32>
    %144 = arith.addf %138, %143 : vector<128x4xf32>
    %145 = vector.extract_strided_slice %120 {offsets = [4, 0, 0], sizes = [8, 16, 4], strides = [1, 1, 1]} : vector<12x16x4xbf16> to vector<8x16x4xbf16>
    %146 = vector.shape_cast %145 : vector<8x16x4xbf16> to vector<128x4xbf16>
    %c4_105 = arith.constant 4 : index
    %c3_106 = arith.constant 3 : index
    %c0_107 = arith.constant 0 : index
    %c0_108 = arith.constant 0 : index
    %147 = vector.load %arg5[%c4_105, %c3_106, %c0_107, %c0_108] : memref<5x5x4x4xbf16, #tpu.memory_space<vmem>>, vector<1x1x4x4xbf16>
    %148 = vector.shape_cast %147 : vector<1x1x4x4xbf16> to vector<4x4xbf16>
    %cst_109 = arith.constant dense<0.000000e+00> : vector<128x4xf32>
    %149 = tpu.matmul %146, %148, %cst_109 {dimension_numbers = #tpu.dot_dimension_numbers<[1], [0], [0], [1], [0, 0, 1, 1], [], []>} : vector<128x4xbf16>, vector<4x4xbf16>, vector<128x4xf32> -> vector<128x4xf32>
    %150 = arith.addf %144, %149 : vector<128x4xf32>
    %151 = vector.extract_strided_slice %16 {offsets = [0, 2, 0], sizes = [12, 14, 4], strides = [1, 1, 1]} : vector<12x16x4xf32> to vector<12x14x4xf32>
    %cst_110 = arith.constant 0.000000e+00 : f32
    %152 = vector.broadcast %cst_110 : f32 to vector<12x2x4xf32>
    %153 = tpu.concatenate %151, %152 in 1 : vector<12x14x4xf32>, vector<12x2x4xf32> -> vector<12x16x4xf32>
    %154 = arith.truncf %153 : vector<12x16x4xf32> to vector<12x16x4xbf16>
    %155 = vector.extract_strided_slice %154 {offsets = [0, 0, 0], sizes = [8, 16, 4], strides = [1, 1, 1]} : vector<12x16x4xbf16> to vector<8x16x4xbf16>
    %156 = vector.shape_cast %155 : vector<8x16x4xbf16> to vector<128x4xbf16>
    %c0_111 = arith.constant 0 : index
    %c4_112 = arith.constant 4 : index
    %c0_113 = arith.constant 0 : index
    %c0_114 = arith.constant 0 : index
    %157 = vector.load %arg5[%c0_111, %c4_112, %c0_113, %c0_114] : memref<5x5x4x4xbf16, #tpu.memory_space<vmem>>, vector<1x1x4x4xbf16>
    %158 = vector.shape_cast %157 : vector<1x1x4x4xbf16> to vector<4x4xbf16>
    %cst_115 = arith.constant dense<0.000000e+00> : vector<128x4xf32>
    %159 = tpu.matmul %156, %158, %cst_115 {dimension_numbers = #tpu.dot_dimension_numbers<[1], [0], [0], [1], [0, 0, 1, 1], [], []>} : vector<128x4xbf16>, vector<4x4xbf16>, vector<128x4xf32> -> vector<128x4xf32>
    %160 = arith.addf %150, %159 : vector<128x4xf32>
    %161 = vector.extract_strided_slice %154 {offsets = [1, 0, 0], sizes = [8, 16, 4], strides = [1, 1, 1]} : vector<12x16x4xbf16> to vector<8x16x4xbf16>
    %162 = vector.shape_cast %161 : vector<8x16x4xbf16> to vector<128x4xbf16>
    %c1_116 = arith.constant 1 : index
    %c4_117 = arith.constant 4 : index
    %c0_118 = arith.constant 0 : index
    %c0_119 = arith.constant 0 : index
    %163 = vector.load %arg5[%c1_116, %c4_117, %c0_118, %c0_119] : memref<5x5x4x4xbf16, #tpu.memory_space<vmem>>, vector<1x1x4x4xbf16>
    %164 = vector.shape_cast %163 : vector<1x1x4x4xbf16> to vector<4x4xbf16>
    %cst_120 = arith.constant dense<0.000000e+00> : vector<128x4xf32>
    %165 = tpu.matmul %162, %164, %cst_120 {dimension_numbers = #tpu.dot_dimension_numbers<[1], [0], [0], [1], [0, 0, 1, 1], [], []>} : vector<128x4xbf16>, vector<4x4xbf16>, vector<128x4xf32> -> vector<128x4xf32>
    %166 = arith.addf %160, %165 : vector<128x4xf32>
    %167 = vector.extract_strided_slice %154 {offsets = [2, 0, 0], sizes = [8, 16, 4], strides = [1, 1, 1]} : vector<12x16x4xbf16> to vector<8x16x4xbf16>
    %168 = vector.shape_cast %167 : vector<8x16x4xbf16> to vector<128x4xbf16>
    %c2_121 = arith.constant 2 : index
    %c4_122 = arith.constant 4 : index
    %c0_123 = arith.constant 0 : index
    %c0_124 = arith.constant 0 : index
    %169 = vector.load %arg5[%c2_121, %c4_122, %c0_123, %c0_124] : memref<5x5x4x4xbf16, #tpu.memory_space<vmem>>, vector<1x1x4x4xbf16>
    %170 = vector.shape_cast %169 : vector<1x1x4x4xbf16> to vector<4x4xbf16>
    %cst_125 = arith.constant dense<0.000000e+00> : vector<128x4xf32>
    %171 = tpu.matmul %168, %170, %cst_125 {dimension_numbers = #tpu.dot_dimension_numbers<[1], [0], [0], [1], [0, 0, 1, 1], [], []>} : vector<128x4xbf16>, vector<4x4xbf16>, vector<128x4xf32> -> vector<128x4xf32>
    %172 = arith.addf %166, %171 : vector<128x4xf32>
    %173 = vector.extract_strided_slice %154 {offsets = [3, 0, 0], sizes = [8, 16, 4], strides = [1, 1, 1]} : vector<12x16x4xbf16> to vector<8x16x4xbf16>
    %174 = vector.shape_cast %173 : vector<8x16x4xbf16> to vector<128x4xbf16>
    %c3_126 = arith.constant 3 : index
    %c4_127 = arith.constant 4 : index
    %c0_128 = arith.constant 0 : index
    %c0_129 = arith.constant 0 : index
    %175 = vector.load %arg5[%c3_126, %c4_127, %c0_128, %c0_129] : memref<5x5x4x4xbf16, #tpu.memory_space<vmem>>, vector<1x1x4x4xbf16>
    %176 = vector.shape_cast %175 : vector<1x1x4x4xbf16> to vector<4x4xbf16>
    %cst_130 = arith.constant dense<0.000000e+00> : vector<128x4xf32>
    %177 = tpu.matmul %174, %176, %cst_130 {dimension_numbers = #tpu.dot_dimension_numbers<[1], [0], [0], [1], [0, 0, 1, 1], [], []>} : vector<128x4xbf16>, vector<4x4xbf16>, vector<128x4xf32> -> vector<128x4xf32>
    %178 = arith.addf %172, %177 : vector<128x4xf32>
    %179 = vector.extract_strided_slice %154 {offsets = [4, 0, 0], sizes = [8, 16, 4], strides = [1, 1, 1]} : vector<12x16x4xbf16> to vector<8x16x4xbf16>
    %180 = vector.shape_cast %179 : vector<8x16x4xbf16> to vector<128x4xbf16>
    %c4_131 = arith.constant 4 : index
    %c4_132 = arith.constant 4 : index
    %c0_133 = arith.constant 0 : index
    %c0_134 = arith.constant 0 : index
    %181 = vector.load %arg5[%c4_131, %c4_132, %c0_133, %c0_134] : memref<5x5x4x4xbf16, #tpu.memory_space<vmem>>, vector<1x1x4x4xbf16>
    %182 = vector.shape_cast %181 : vector<1x1x4x4xbf16> to vector<4x4xbf16>
    %cst_135 = arith.constant dense<0.000000e+00> : vector<128x4xf32>
    %183 = tpu.matmul %180, %182, %cst_135 {dimension_numbers = #tpu.dot_dimension_numbers<[1], [0], [0], [1], [0, 0, 1, 1], [], []>} : vector<128x4xbf16>, vector<4x4xbf16>, vector<128x4xf32> -> vector<128x4xf32>
    %184 = arith.addf %178, %183 : vector<128x4xf32>
    %c0_136 = arith.constant 0 : index
    %c0_137 = arith.constant 0 : index
    %185 = vector.load %arg6[%c0_136, %c0_137] : memref<1x4xf32, #tpu.memory_space<vmem>>, vector<1x4xf32>
    %186 = vector.broadcast %185 : vector<1x4xf32> to vector<128x4xf32>
    %187 = arith.addf %184, %186 : vector<128x4xf32>
    %188 = vector.shape_cast %187 : vector<128x4xf32> to vector<1x8x16x4xf32>
    %c0_138 = arith.constant 0 : index
    %c0_139 = arith.constant 0 : index
    %c0_140 = arith.constant 0 : index
    %c0_141 = arith.constant 0 : index
    %189 = vector.load %arg9[%c0_138, %c0_139, %c0_140, %c0_141] : memref<1x8x16x4xf32, #tpu.memory_space<vmem>>, vector<1x8x16x4xf32>
    tpu.vector_store %arg9[%c0_138, %c0_139, %c0_140, %c0_141], %188 {strides = array<i32>} : memref<1x8x16x4xf32, #tpu.memory_space<vmem>>, vector<1x8x16x4xf32>,
    %cst_142 = arith.constant dense<0.000000e+00> : vector<4xf32>
    %190 = vector.multi_reduction <add>, %187, %cst_142 [0] : vector<128x4xf32> to vector<4xf32>
    %191 = vector.shape_cast %190 : vector<4xf32> to vector<1x4xf32>
    %192 = arith.mulf %187, %187 : vector<128x4xf32>
    %cst_143 = arith.constant dense<0.000000e+00> : vector<4xf32>
    %193 = vector.multi_reduction <add>, %192, %cst_143 [0] : vector<128x4xf32> to vector<4xf32>
    %194 = vector.shape_cast %193 : vector<4xf32> to vector<1x4xf32>
    %195 = tpu.concatenate %191, %194 in 0 : vector<1x4xf32>, vector<1x4xf32> -> vector<2x4xf32>
    %196 = vector.shape_cast %195 : vector<2x4xf32> to vector<1x1x2x4xf32>
    %c0_144 = arith.constant 0 : index
    %c0_145 = arith.constant 0 : index
    %c0_146 = arith.constant 0 : index
    %c0_147 = arith.constant 0 : index
    %197 = vector.load %arg10[%c0_144, %c0_145, %c0_146, %c0_147] : memref<1x1x2x4xf32, #tpu.memory_space<vmem>>, vector<1x1x2x4xf32>
    tpu.vector_store %arg10[%c0_144, %c0_145, %c0_146, %c0_147], %196 {strides = array<i32>} : memref<1x1x2x4xf32, #tpu.memory_space<vmem>>, vector<1x1x2x4xf32>,
    return
  }
  func.func @transform_0(%arg0: i32, %arg1: i32) -> (i32, i32, i32, i32) {
    %c4_i32 = arith.constant 4 : i32
    %0 = arith.muli %arg1, %c4_i32 : i32
    %c1_i32 = arith.constant 1 : i32
    %1 = arith.subi %0, %c1_i32 : i32
    %c0_i32 = arith.constant 0 : i32
    %2 = arith.maxsi %1, %c0_i32 : i32
    %c0_i32_0 = arith.constant 0 : i32
    %c0_i32_1 = arith.constant 0 : i32
    %c0_i32_2 = arith.constant 0 : i32
    return %arg0, %2, %c0_i32_0, %c0_i32_1 : i32, i32, i32, i32
  }
  func.func @transform_1(%arg0: i32, %arg1: i32) -> (i32, i32, i32, i32) {
    %c0_i32 = arith.constant 0 : i32
    %c0_i32_0 = arith.constant 0 : i32
    %c0_i32_1 = arith.constant 0 : i32
    return %arg0, %arg1, %c0_i32, %c0_i32_0 : i32, i32, i32, i32
  }
  func.func @transform_2(%arg0: i32, %arg1: i32) -> (i32, i32, i32, i32) {
    %c1_i32 = arith.constant 1 : i32
    %0 = arith.addi %arg1, %c1_i32 : i32
    %c4_i32 = arith.constant 4 : i32
    %1 = arith.muli %0, %c4_i32 : i32
    %c7_i32 = arith.constant 7 : i32
    %2 = arith.minsi %1, %c7_i32 : i32
    %c0_i32 = arith.constant 0 : i32
    %c0_i32_0 = arith.constant 0 : i32
    %c0_i32_1 = arith.constant 0 : i32
    return %arg0, %2, %c0_i32, %c0_i32_0 : i32, i32, i32, i32
  }
  func.func @transform_3(%arg0: i32, %arg1: i32) -> (i32, i32, i32, i32) {
    %c0_i32 = arith.constant 0 : i32
    %c0_i32_0 = arith.constant 0 : i32
    %c0_i32_1 = arith.constant 0 : i32
    %c0_i32_2 = arith.constant 0 : i32
    %c0_i32_3 = arith.constant 0 : i32
    return %c0_i32, %c0_i32_0, %c0_i32_1, %c0_i32_2 : i32, i32, i32, i32
  }
  func.func @transform_4(%arg0: i32, %arg1: i32) -> (i32, i32) {
    %c0_i32 = arith.constant 0 : i32
    %c0_i32_0 = arith.constant 0 : i32
    %c0_i32_1 = arith.constant 0 : i32
    return %c0_i32, %c0_i32_0 : i32, i32
  }
  func.func @transform_5(%arg0: i32, %arg1: i32) -> (i32, i32) {
    %c0_i32 = arith.constant 0 : i32
    %c0_i32_0 = arith.constant 0 : i32
    %c0_i32_1 = arith.constant 0 : i32
    return %c0_i32, %c0_i32_0 : i32, i32
  }
  func.func @transform_6(%arg0: i32, %arg1: i32) -> (i32, i32) {
    %c0_i32 = arith.constant 0 : i32
    %c0_i32_0 = arith.constant 0 : i32
    %c0_i32_1 = arith.constant 0 : i32
    return %c0_i32, %c0_i32_0 : i32, i32
  }
  func.func @transform_7(%arg0: i32, %arg1: i32) -> (i32, i32, i32, i32) {
    %c0_i32 = arith.constant 0 : i32
    %c0_i32_0 = arith.constant 0 : i32
    %c0_i32_1 = arith.constant 0 : i32
    return %arg0, %arg1, %c0_i32, %c0_i32_0 : i32, i32, i32, i32
  }
  func.func @transform_8(%arg0: i32, %arg1: i32) -> (i32, i32, i32, i32) {
    %c0_i32 = arith.constant 0 : i32
    %c0_i32_0 = arith.constant 0 : i32
    %c0_i32_1 = arith.constant 0 : i32
    return %arg0, %arg1, %c0_i32, %c0_i32_0 : i32, i32, i32, i32
  }
}

module attributes {stable_mosaic.version = 11 : i64} {
  func.func @_bn_residual_relu_kernel(%arg0: i32, %arg1: i32, %arg2: memref<1x8x16x4xf32, #tpu.memory_space<vmem>>, %arg3: memref<1x8x16x4xf32, #tpu.memory_space<vmem>>, %arg4: memref<1x4xf32, #tpu.memory_space<vmem>>, %arg5: memref<1x4xf32, #tpu.memory_space<vmem>>, %arg6: memref<1x8x16x4xf32, #tpu.memory_space<vmem>>) attributes {dimension_semantics = [#tpu.dimension_semantics<parallel>, #tpu.dimension_semantics<parallel>], iteration_bounds = array<i64: 2, 2>, scalar_prefetch = 0 : i64, scratch_operands = 0 : i64, tpu.core_type = #tpu.core_type<tc>, window_params = [{transform_indices = @transform_0, window_bounds = array<i64: 1, 8, 16, 4>}, {transform_indices = @transform_1, window_bounds = array<i64: 1, 8, 16, 4>}, {pipeline_mode = #tpu.pipeline_mode<synchronous>, transform_indices = @transform_2, window_bounds = array<i64: 1, 4>}, {pipeline_mode = #tpu.pipeline_mode<synchronous>, transform_indices = @transform_3, window_bounds = array<i64: 1, 4>}, {transform_indices = @transform_4, window_bounds = array<i64: 1, 8, 16, 4>}]} {
    %c0 = arith.constant 0 : index
    %c0_0 = arith.constant 0 : index
    %c0_1 = arith.constant 0 : index
    %c0_2 = arith.constant 0 : index
    %0 = vector.load %arg2[%c0, %c0_0, %c0_1, %c0_2] : memref<1x8x16x4xf32, #tpu.memory_space<vmem>>, vector<1x8x16x4xf32>
    %c0_3 = arith.constant 0 : index
    %c0_4 = arith.constant 0 : index
    %1 = vector.load %arg4[%c0_3, %c0_4] : memref<1x4xf32, #tpu.memory_space<vmem>>, vector<1x4xf32>
    %2 = vector.shape_cast %1 : vector<1x4xf32> to vector<1x1x1x4xf32>
    %3 = vector.broadcast %2 : vector<1x1x1x4xf32> to vector<1x8x16x4xf32>
    %4 = arith.mulf %0, %3 : vector<1x8x16x4xf32>
    %c0_5 = arith.constant 0 : index
    %c0_6 = arith.constant 0 : index
    %5 = vector.load %arg5[%c0_5, %c0_6] : memref<1x4xf32, #tpu.memory_space<vmem>>, vector<1x4xf32>
    %6 = vector.shape_cast %5 : vector<1x4xf32> to vector<1x1x1x4xf32>
    %7 = vector.broadcast %6 : vector<1x1x1x4xf32> to vector<1x8x16x4xf32>
    %8 = arith.addf %4, %7 : vector<1x8x16x4xf32>
    %c0_7 = arith.constant 0 : index
    %c0_8 = arith.constant 0 : index
    %c0_9 = arith.constant 0 : index
    %c0_10 = arith.constant 0 : index
    %9 = vector.load %arg3[%c0_7, %c0_8, %c0_9, %c0_10] : memref<1x8x16x4xf32, #tpu.memory_space<vmem>>, vector<1x8x16x4xf32>
    %10 = arith.addf %8, %9 : vector<1x8x16x4xf32>
    %cst = arith.constant 0.000000e+00 : f32
    %11 = vector.broadcast %cst : f32 to vector<1x8x16x4xf32>
    %12 = arith.maximumf %10, %11 : vector<1x8x16x4xf32>
    %c0_11 = arith.constant 0 : index
    %c0_12 = arith.constant 0 : index
    %c0_13 = arith.constant 0 : index
    %c0_14 = arith.constant 0 : index
    %13 = vector.load %arg6[%c0_11, %c0_12, %c0_13, %c0_14] : memref<1x8x16x4xf32, #tpu.memory_space<vmem>>, vector<1x8x16x4xf32>
    tpu.vector_store %arg6[%c0_11, %c0_12, %c0_13, %c0_14], %12 {strides = array<i32>} : memref<1x8x16x4xf32, #tpu.memory_space<vmem>>, vector<1x8x16x4xf32>,
    return
  }
  func.func @transform_0(%arg0: i32, %arg1: i32) -> (i32, i32, i32, i32) {
    %c0_i32 = arith.constant 0 : i32
    %c0_i32_0 = arith.constant 0 : i32
    %c0_i32_1 = arith.constant 0 : i32
    return %arg0, %arg1, %c0_i32, %c0_i32_0 : i32, i32, i32, i32
  }
  func.func @transform_1(%arg0: i32, %arg1: i32) -> (i32, i32, i32, i32) {
    %c0_i32 = arith.constant 0 : i32
    %c0_i32_0 = arith.constant 0 : i32
    %c0_i32_1 = arith.constant 0 : i32
    return %arg0, %arg1, %c0_i32, %c0_i32_0 : i32, i32, i32, i32
  }
  func.func @transform_2(%arg0: i32, %arg1: i32) -> (i32, i32) {
    %c0_i32 = arith.constant 0 : i32
    %c0_i32_0 = arith.constant 0 : i32
    %c0_i32_1 = arith.constant 0 : i32
    return %c0_i32, %c0_i32_0 : i32, i32
  }
  func.func @transform_3(%arg0: i32, %arg1: i32) -> (i32, i32) {
    %c0_i32 = arith.constant 0 : i32
    %c0_i32_0 = arith.constant 0 : i32
    %c0_i32_1 = arith.constant 0 : i32
    return %c0_i32, %c0_i32_0 : i32, i32
  }
  func.func @transform_4(%arg0: i32, %arg1: i32) -> (i32, i32, i32, i32) {
    %c0_i32 = arith.constant 0 : i32
    %c0_i32_0 = arith.constant 0 : i32
    %c0_i32_1 = arith.constant 0 : i32
    return %arg0, %arg1, %c0_i32, %c0_i32_0 : i32, i32, i32, i32
  }
}

module attributes {stable_mosaic.version = 11 : i64} {
  func.func @_conv_tile_kernel(%arg0: i32, %arg1: i32, %arg2: memref<1x2x16x4xf32, #tpu.memory_space<vmem>>, %arg3: memref<1x8x16x4xf32, #tpu.memory_space<vmem>>, %arg4: memref<1x2x16x4xf32, #tpu.memory_space<vmem>>, %arg5: memref<5x5x4x4xbf16, #tpu.memory_space<vmem>>, %arg6: memref<1x4xf32, #tpu.memory_space<vmem>>, %arg7: memref<1x4xf32, #tpu.memory_space<vmem>>, %arg8: memref<1x4xf32, #tpu.memory_space<vmem>>, %arg9: memref<1x8x16x4xf32, #tpu.memory_space<vmem>>, %arg10: memref<1x1x2x4xf32, #tpu.memory_space<vmem>>) attributes {dimension_semantics = [#tpu.dimension_semantics<parallel>, #tpu.dimension_semantics<parallel>], iteration_bounds = array<i64: 2, 2>, scalar_prefetch = 0 : i64, scratch_operands = 0 : i64, tpu.core_type = #tpu.core_type<tc>, window_params = [{transform_indices = @transform_0, window_bounds = array<i64: 1, 2, 16, 4>}, {transform_indices = @transform_1, window_bounds = array<i64: 1, 8, 16, 4>}, {transform_indices = @transform_2, window_bounds = array<i64: 1, 2, 16, 4>}, {pipeline_mode = #tpu.pipeline_mode<synchronous>, transform_indices = @transform_3, window_bounds = array<i64: 5, 5, 4, 4>}, {pipeline_mode = #tpu.pipeline_mode<synchronous>, transform_indices = @transform_4, window_bounds = array<i64: 1, 4>}, {pipeline_mode = #tpu.pipeline_mode<synchronous>, transform_indices = @transform_5, window_bounds = array<i64: 1, 4>}, {pipeline_mode = #tpu.pipeline_mode<synchronous>, transform_indices = @transform_6, window_bounds = array<i64: 1, 4>}, {transform_indices = @transform_7, window_bounds = array<i64: 1, 8, 16, 4>}, {transform_indices = @transform_8, window_bounds = array<i64: 1, 1, 2, 4>}]} {
    %c0 = arith.constant 0 : index
    %c0_0 = arith.constant 0 : index
    %c0_1 = arith.constant 0 : index
    %c0_2 = arith.constant 0 : index
    %0 = vector.load %arg2[%c0, %c0_0, %c0_1, %c0_2] : memref<1x2x16x4xf32, #tpu.memory_space<vmem>>, vector<1x2x16x4xf32>
    %1 = vector.shape_cast %0 : vector<1x2x16x4xf32> to vector<2x16x4xf32>
    %c0_3 = arith.constant 0 : index
    %c0_4 = arith.constant 0 : index
    %2 = vector.load %arg7[%c0_3, %c0_4] : memref<1x4xf32, #tpu.memory_space<vmem>>, vector<1x4xf32>
    %3 = vector.shape_cast %2 : vector<1x4xf32> to vector<1x1x4xf32>
    %4 = vector.broadcast %3 : vector<1x1x4xf32> to vector<2x16x4xf32>
    %5 = arith.mulf %1, %4 : vector<2x16x4xf32>
    %c0_5 = arith.constant 0 : index
    %c0_6 = arith.constant 0 : index
    %6 = vector.load %arg8[%c0_5, %c0_6] : memref<1x4xf32, #tpu.memory_space<vmem>>, vector<1x4xf32>
    %7 = vector.shape_cast %6 : vector<1x4xf32> to vector<1x1x4xf32>
    %8 = vector.broadcast %7 : vector<1x1x4xf32> to vector<2x16x4xf32>
    %9 = arith.addf %5, %8 : vector<2x16x4xf32>
    %cst = arith.constant 0.000000e+00 : f32
    %10 = vector.broadcast %cst : f32 to vector<2x16x4xf32>
    %11 = arith.maximumf %9, %10 : vector<2x16x4xf32>
    %c0_i32 = arith.constant 0 : i32
    %12 = arith.cmpi sgt, %arg1, %c0_i32 : i32
    %13 = arith.extui %12 : i1 to i32
    %14 = arith.sitofp %13 : i32 to f32
    %15 = vector.broadcast %14 : f32 to vector<2x16x4xf32>
    %16 = arith.mulf %11, %15 : vector<2x16x4xf32>
    %c0_7 = arith.constant 0 : index
    %c0_8 = arith.constant 0 : index
    %c0_9 = arith.constant 0 : index
    %c0_10 = arith.constant 0 : index
    %17 = vector.load %arg4[%c0_7, %c0_8, %c0_9, %c0_10] : memref<1x2x16x4xf32, #tpu.memory_space<vmem>>, vector<1x2x16x4xf32>
    %18 = vector.shape_cast %17 : vector<1x2x16x4xf32> to vector<2x16x4xf32>
    %c0_11 = arith.constant 0 : index
    %c0_12 = arith.constant 0 : index
    %19 = vector.load %arg7[%c0_11, %c0_12] : memref<1x4xf32, #tpu.memory_space<vmem>>, vector<1x4xf32>
    %20 = vector.shape_cast %19 : vector<1x4xf32> to vector<1x1x4xf32>
    %21 = vector.broadcast %20 : vector<1x1x4xf32> to vector<2x16x4xf32>
    %22 = arith.mulf %18, %21 : vector<2x16x4xf32>
    %c0_13 = arith.constant 0 : index
    %c0_14 = arith.constant 0 : index
    %23 = vector.load %arg8[%c0_13, %c0_14] : memref<1x4xf32, #tpu.memory_space<vmem>>, vector<1x4xf32>
    %24 = vector.shape_cast %23 : vector<1x4xf32> to vector<1x1x4xf32>
    %25 = vector.broadcast %24 : vector<1x1x4xf32> to vector<2x16x4xf32>
    %26 = arith.addf %22, %25 : vector<2x16x4xf32>
    %cst_15 = arith.constant 0.000000e+00 : f32
    %27 = vector.broadcast %cst_15 : f32 to vector<2x16x4xf32>
    %28 = arith.maximumf %26, %27 : vector<2x16x4xf32>
    %c1_i32 = arith.constant 1 : i32
    %29 = arith.cmpi slt, %arg1, %c1_i32 : i32
    %30 = arith.extui %29 : i1 to i32
    %31 = arith.sitofp %30 : i32 to f32
    %32 = vector.broadcast %31 : f32 to vector<2x16x4xf32>
    %33 = arith.mulf %28, %32 : vector<2x16x4xf32>
    %c0_16 = arith.constant 0 : index
    %c0_17 = arith.constant 0 : index
    %c0_18 = arith.constant 0 : index
    %c0_19 = arith.constant 0 : index
    %34 = vector.load %arg3[%c0_16, %c0_17, %c0_18, %c0_19] : memref<1x8x16x4xf32, #tpu.memory_space<vmem>>, vector<1x8x16x4xf32>
    %35 = vector.shape_cast %34 : vector<1x8x16x4xf32> to vector<8x16x4xf32>
    %c0_20 = arith.constant 0 : index
    %c0_21 = arith.constant 0 : index
    %36 = vector.load %arg7[%c0_20, %c0_21] : memref<1x4xf32, #tpu.memory_space<vmem>>, vector<1x4xf32>
    %37 = vector.shape_cast %36 : vector<1x4xf32> to vector<1x1x4xf32>
    %38 = vector.broadcast %37 : vector<1x1x4xf32> to vector<8x16x4xf32>
    %39 = arith.mulf %35, %38 : vector<8x16x4xf32>
    %c0_22 = arith.constant 0 : index
    %c0_23 = arith.constant 0 : index
    %40 = vector.load %arg8[%c0_22, %c0_23] : memref<1x4xf32, #tpu.memory_space<vmem>>, vector<1x4xf32>
    %41 = vector.shape_cast %40 : vector<1x4xf32> to vector<1x1x4xf32>
    %42 = vector.broadcast %41 : vector<1x1x4xf32> to vector<8x16x4xf32>
    %43 = arith.addf %39, %42 : vector<8x16x4xf32>
    %cst_24 = arith.constant 0.000000e+00 : f32
    %44 = vector.broadcast %cst_24 : f32 to vector<8x16x4xf32>
    %45 = arith.maximumf %43, %44 : vector<8x16x4xf32>
    %46 = tpu.concatenate %16, %45, %33 in 0 : vector<2x16x4xf32>, vector<8x16x4xf32>, vector<2x16x4xf32> -> vector<12x16x4xf32>
    %cst_25 = arith.constant 0.000000e+00 : f32
    %47 = vector.broadcast %cst_25 : f32 to vector<128x4xf32>
    %cst_26 = arith.constant 0.000000e+00 : f32
    %48 = vector.broadcast %cst_26 : f32 to vector<12x2x4xf32>
    %49 = vector.extract_strided_slice %46 {offsets = [0, 0, 0], sizes = [12, 14, 4], strides = [1, 1, 1]} : vector<12x16x4xf32> to vector<12x14x4xf32>
    %50 = tpu.concatenate %48, %49 in 1 : vector<12x2x4xf32>, vector<12x14x4xf32> -> vector<12x16x4xf32>
    %51 = arith.truncf %50 : vector<12x16x4xf32> to vector<12x16x4xbf16>
    %52 = vector.extract_strided_slice %51 {offsets = [0, 0, 0], sizes = [8, 16, 4], strides = [1, 1, 1]} : vector<12x16x4xbf16> to vector<8x16x4xbf16>
    %53 = vector.shape_cast %52 : vector<8x16x4xbf16> to vector<128x4xbf16>
    %c0_27 = arith.constant 0 : index
    %c0_28 = arith.constant 0 : index
    %c0_29 = arith.constant 0 : index
    %c0_30 = arith.constant 0 : index
    %54 = vector.load %arg5[%c0_27, %c0_28, %c0_29, %c0_30] : memref<5x5x4x4xbf16, #tpu.memory_space<vmem>>, vector<1x1x4x4xbf16>
    %55 = vector.shape_cast %54 : vector<1x1x4x4xbf16> to vector<4x4xbf16>
    %cst_31 = arith.constant dense<0.000000e+00> : vector<128x4xf32>
    %56 = tpu.matmul %53, %55, %cst_31 {dimension_numbers = #tpu.dot_dimension_numbers<[1], [0], [0], [1], [0, 0, 1, 1], [], []>} : vector<128x4xbf16>, vector<4x4xbf16>, vector<128x4xf32> -> vector<128x4xf32>
    %57 = arith.addf %47, %56 : vector<128x4xf32>
    %58 = vector.extract_strided_slice %51 {offsets = [1, 0, 0], sizes = [8, 16, 4], strides = [1, 1, 1]} : vector<12x16x4xbf16> to vector<8x16x4xbf16>
    %59 = vector.shape_cast %58 : vector<8x16x4xbf16> to vector<128x4xbf16>
    %c1 = arith.constant 1 : index
    %c0_32 = arith.constant 0 : index
    %c0_33 = arith.constant 0 : index
    %c0_34 = arith.constant 0 : index
    %60 = vector.load %arg5[%c1, %c0_32, %c0_33, %c0_34] : memref<5x5x4x4xbf16, #tpu.memory_space<vmem>>, vector<1x1x4x4xbf16>
    %61 = vector.shape_cast %60 : vector<1x1x4x4xbf16> to vector<4x4xbf16>
    %cst_35 = arith.constant dense<0.000000e+00> : vector<128x4xf32>
    %62 = tpu.matmul %59, %61, %cst_35 {dimension_numbers = #tpu.dot_dimension_numbers<[1], [0], [0], [1], [0, 0, 1, 1], [], []>} : vector<128x4xbf16>, vector<4x4xbf16>, vector<128x4xf32> -> vector<128x4xf32>
    %63 = arith.addf %57, %62 : vector<128x4xf32>
    %64 = vector.extract_strided_slice %51 {offsets = [2, 0, 0], sizes = [8, 16, 4], strides = [1, 1, 1]} : vector<12x16x4xbf16> to vector<8x16x4xbf16>
    %65 = vector.shape_cast %64 : vector<8x16x4xbf16> to vector<128x4xbf16>
    %c2 = arith.constant 2 : index
    %c0_36 = arith.constant 0 : index
    %c0_37 = arith.constant 0 : index
    %c0_38 = arith.constant 0 : index
    %66 = vector.load %arg5[%c2, %c0_36, %c0_37, %c0_38] : memref<5x5x4x4xbf16, #tpu.memory_space<vmem>>, vector<1x1x4x4xbf16>
    %67 = vector.shape_cast %66 : vector<1x1x4x4xbf16> to vector<4x4xbf16>
    %cst_39 = arith.constant dense<0.000000e+00> : vector<128x4xf32>
    %68 = tpu.matmul %65, %67, %cst_39 {dimension_numbers = #tpu.dot_dimension_numbers<[1], [0], [0], [1], [0, 0, 1, 1], [], []>} : vector<128x4xbf16>, vector<4x4xbf16>, vector<128x4xf32> -> vector<128x4xf32>
    %69 = arith.addf %63, %68 : vector<128x4xf32>
    %70 = vector.extract_strided_slice %51 {offsets = [3, 0, 0], sizes = [8, 16, 4], strides = [1, 1, 1]} : vector<12x16x4xbf16> to vector<8x16x4xbf16>
    %71 = vector.shape_cast %70 : vector<8x16x4xbf16> to vector<128x4xbf16>
    %c3 = arith.constant 3 : index
    %c0_40 = arith.constant 0 : index
    %c0_41 = arith.constant 0 : index
    %c0_42 = arith.constant 0 : index
    %72 = vector.load %arg5[%c3, %c0_40, %c0_41, %c0_42] : memref<5x5x4x4xbf16, #tpu.memory_space<vmem>>, vector<1x1x4x4xbf16>
    %73 = vector.shape_cast %72 : vector<1x1x4x4xbf16> to vector<4x4xbf16>
    %cst_43 = arith.constant dense<0.000000e+00> : vector<128x4xf32>
    %74 = tpu.matmul %71, %73, %cst_43 {dimension_numbers = #tpu.dot_dimension_numbers<[1], [0], [0], [1], [0, 0, 1, 1], [], []>} : vector<128x4xbf16>, vector<4x4xbf16>, vector<128x4xf32> -> vector<128x4xf32>
    %75 = arith.addf %69, %74 : vector<128x4xf32>
    %76 = vector.extract_strided_slice %51 {offsets = [4, 0, 0], sizes = [8, 16, 4], strides = [1, 1, 1]} : vector<12x16x4xbf16> to vector<8x16x4xbf16>
    %77 = vector.shape_cast %76 : vector<8x16x4xbf16> to vector<128x4xbf16>
    %c4 = arith.constant 4 : index
    %c0_44 = arith.constant 0 : index
    %c0_45 = arith.constant 0 : index
    %c0_46 = arith.constant 0 : index
    %78 = vector.load %arg5[%c4, %c0_44, %c0_45, %c0_46] : memref<5x5x4x4xbf16, #tpu.memory_space<vmem>>, vector<1x1x4x4xbf16>
    %79 = vector.shape_cast %78 : vector<1x1x4x4xbf16> to vector<4x4xbf16>
    %cst_47 = arith.constant dense<0.000000e+00> : vector<128x4xf32>
    %80 = tpu.matmul %77, %79, %cst_47 {dimension_numbers = #tpu.dot_dimension_numbers<[1], [0], [0], [1], [0, 0, 1, 1], [], []>} : vector<128x4xbf16>, vector<4x4xbf16>, vector<128x4xf32> -> vector<128x4xf32>
    %81 = arith.addf %75, %80 : vector<128x4xf32>
    %cst_48 = arith.constant 0.000000e+00 : f32
    %82 = vector.broadcast %cst_48 : f32 to vector<12x1x4xf32>
    %83 = vector.extract_strided_slice %46 {offsets = [0, 0, 0], sizes = [12, 15, 4], strides = [1, 1, 1]} : vector<12x16x4xf32> to vector<12x15x4xf32>
    %84 = tpu.concatenate %82, %83 in 1 : vector<12x1x4xf32>, vector<12x15x4xf32> -> vector<12x16x4xf32>
    %85 = arith.truncf %84 : vector<12x16x4xf32> to vector<12x16x4xbf16>
    %86 = vector.extract_strided_slice %85 {offsets = [0, 0, 0], sizes = [8, 16, 4], strides = [1, 1, 1]} : vector<12x16x4xbf16> to vector<8x16x4xbf16>
    %87 = vector.shape_cast %86 : vector<8x16x4xbf16> to vector<128x4xbf16>
    %c0_49 = arith.constant 0 : index
    %c1_50 = arith.constant 1 : index
    %c0_51 = arith.constant 0 : index
    %c0_52 = arith.constant 0 : index
    %88 = vector.load %arg5[%c0_49, %c1_50, %c0_51, %c0_52] : memref<5x5x4x4xbf16, #tpu.memory_space<vmem>>, vector<1x1x4x4xbf16>
    %89 = vector.shape_cast %88 : vector<1x1x4x4xbf16> to vector<4x4xbf16>
    %cst_53 = arith.constant dense<0.000000e+00> : vector<128x4xf32>
    %90 = tpu.matmul %87, %89, %cst_53 {dimension_numbers = #tpu.dot_dimension_numbers<[1], [0], [0], [1], [0, 0, 1, 1], [], []>} : vector<128x4xbf16>, vector<4x4xbf16>, vector<128x4xf32> -> vector<128x4xf32>
    %91 = arith.addf %81, %90 : vector<128x4xf32>
    %92 = vector.extract_strided_slice %85 {offsets = [1, 0, 0], sizes = [8, 16, 4], strides = [1, 1, 1]} : vector<12x16x4xbf16> to vector<8x16x4xbf16>
    %93 = vector.shape_cast %92 : vector<8x16x4xbf16> to vector<128x4xbf16>
    %c1_54 = arith.constant 1 : index
    %c1_55 = arith.constant 1 : index
    %c0_56 = arith.constant 0 : index
    %c0_57 = arith.constant 0 : index
    %94 = vector.load %arg5[%c1_54, %c1_55, %c0_56, %c0_57] : memref<5x5x4x4xbf16, #tpu.memory_space<vmem>>, vector<1x1x4x4xbf16>
    %95 = vector.shape_cast %94 : vector<1x1x4x4xbf16> to vector<4x4xbf16>
    %cst_58 = arith.constant dense<0.000000e+00> : vector<128x4xf32>
    %96 = tpu.matmul %93, %95, %cst_58 {dimension_numbers = #tpu.dot_dimension_numbers<[1], [0], [0], [1], [0, 0, 1, 1], [], []>} : vector<128x4xbf16>, vector<4x4xbf16>, vector<128x4xf32> -> vector<128x4xf32>
    %97 = arith.addf %91, %96 : vector<128x4xf32>
    %98 = vector.extract_strided_slice %85 {offsets = [2, 0, 0], sizes = [8, 16, 4], strides = [1, 1, 1]} : vector<12x16x4xbf16> to vector<8x16x4xbf16>
    %99 = vector.shape_cast %98 : vector<8x16x4xbf16> to vector<128x4xbf16>
    %c2_59 = arith.constant 2 : index
    %c1_60 = arith.constant 1 : index
    %c0_61 = arith.constant 0 : index
    %c0_62 = arith.constant 0 : index
    %100 = vector.load %arg5[%c2_59, %c1_60, %c0_61, %c0_62] : memref<5x5x4x4xbf16, #tpu.memory_space<vmem>>, vector<1x1x4x4xbf16>
    %101 = vector.shape_cast %100 : vector<1x1x4x4xbf16> to vector<4x4xbf16>
    %cst_63 = arith.constant dense<0.000000e+00> : vector<128x4xf32>
    %102 = tpu.matmul %99, %101, %cst_63 {dimension_numbers = #tpu.dot_dimension_numbers<[1], [0], [0], [1], [0, 0, 1, 1], [], []>} : vector<128x4xbf16>, vector<4x4xbf16>, vector<128x4xf32> -> vector<128x4xf32>
    %103 = arith.addf %97, %102 : vector<128x4xf32>
    %104 = vector.extract_strided_slice %85 {offsets = [3, 0, 0], sizes = [8, 16, 4], strides = [1, 1, 1]} : vector<12x16x4xbf16> to vector<8x16x4xbf16>
    %105 = vector.shape_cast %104 : vector<8x16x4xbf16> to vector<128x4xbf16>
    %c3_64 = arith.constant 3 : index
    %c1_65 = arith.constant 1 : index
    %c0_66 = arith.constant 0 : index
    %c0_67 = arith.constant 0 : index
    %106 = vector.load %arg5[%c3_64, %c1_65, %c0_66, %c0_67] : memref<5x5x4x4xbf16, #tpu.memory_space<vmem>>, vector<1x1x4x4xbf16>
    %107 = vector.shape_cast %106 : vector<1x1x4x4xbf16> to vector<4x4xbf16>
    %cst_68 = arith.constant dense<0.000000e+00> : vector<128x4xf32>
    %108 = tpu.matmul %105, %107, %cst_68 {dimension_numbers = #tpu.dot_dimension_numbers<[1], [0], [0], [1], [0, 0, 1, 1], [], []>} : vector<128x4xbf16>, vector<4x4xbf16>, vector<128x4xf32> -> vector<128x4xf32>
    %109 = arith.addf %103, %108 : vector<128x4xf32>
    %110 = vector.extract_strided_slice %85 {offsets = [4, 0, 0], sizes = [8, 16, 4], strides = [1, 1, 1]} : vector<12x16x4xbf16> to vector<8x16x4xbf16>
    %111 = vector.shape_cast %110 : vector<8x16x4xbf16> to vector<128x4xbf16>
    %c4_69 = arith.constant 4 : index
    %c1_70 = arith.constant 1 : index
    %c0_71 = arith.constant 0 : index
    %c0_72 = arith.constant 0 : index
    %112 = vector.load %arg5[%c4_69, %c1_70, %c0_71, %c0_72] : memref<5x5x4x4xbf16, #tpu.memory_space<vmem>>, vector<1x1x4x4xbf16>
    %113 = vector.shape_cast %112 : vector<1x1x4x4xbf16> to vector<4x4xbf16>
    %cst_73 = arith.constant dense<0.000000e+00> : vector<128x4xf32>
    %114 = tpu.matmul %111, %113, %cst_73 {dimension_numbers = #tpu.dot_dimension_numbers<[1], [0], [0], [1], [0, 0, 1, 1], [], []>} : vector<128x4xbf16>, vector<4x4xbf16>, vector<128x4xf32> -> vector<128x4xf32>
    %115 = arith.addf %109, %114 : vector<128x4xf32>
    %116 = arith.truncf %46 : vector<12x16x4xf32> to vector<12x16x4xbf16>
    %117 = vector.extract_strided_slice %116 {offsets = [0, 0, 0], sizes = [8, 16, 4], strides = [1, 1, 1]} : vector<12x16x4xbf16> to vector<8x16x4xbf16>
    %118 = vector.shape_cast %117 : vector<8x16x4xbf16> to vector<128x4xbf16>
    %c0_74 = arith.constant 0 : index
    %c2_75 = arith.constant 2 : index
    %c0_76 = arith.constant 0 : index
    %c0_77 = arith.constant 0 : index
    %119 = vector.load %arg5[%c0_74, %c2_75, %c0_76, %c0_77] : memref<5x5x4x4xbf16, #tpu.memory_space<vmem>>, vector<1x1x4x4xbf16>
    %120 = vector.shape_cast %119 : vector<1x1x4x4xbf16> to vector<4x4xbf16>
    %cst_78 = arith.constant dense<0.000000e+00> : vector<128x4xf32>
    %121 = tpu.matmul %118, %120, %cst_78 {dimension_numbers = #tpu.dot_dimension_numbers<[1], [0], [0], [1], [0, 0, 1, 1], [], []>} : vector<128x4xbf16>, vector<4x4xbf16>, vector<128x4xf32> -> vector<128x4xf32>
    %122 = arith.addf %115, %121 : vector<128x4xf32>
    %123 = vector.extract_strided_slice %116 {offsets = [1, 0, 0], sizes = [8, 16, 4], strides = [1, 1, 1]} : vector<12x16x4xbf16> to vector<8x16x4xbf16>
    %124 = vector.shape_cast %123 : vector<8x16x4xbf16> to vector<128x4xbf16>
    %c1_79 = arith.constant 1 : index
    %c2_80 = arith.constant 2 : index
    %c0_81 = arith.constant 0 : index
    %c0_82 = arith.constant 0 : index
    %125 = vector.load %arg5[%c1_79, %c2_80, %c0_81, %c0_82] : memref<5x5x4x4xbf16, #tpu.memory_space<vmem>>, vector<1x1x4x4xbf16>
    %126 = vector.shape_cast %125 : vector<1x1x4x4xbf16> to vector<4x4xbf16>
    %cst_83 = arith.constant dense<0.000000e+00> : vector<128x4xf32>
    %127 = tpu.matmul %124, %126, %cst_83 {dimension_numbers = #tpu.dot_dimension_numbers<[1], [0], [0], [1], [0, 0, 1, 1], [], []>} : vector<128x4xbf16>, vector<4x4xbf16>, vector<128x4xf32> -> vector<128x4xf32>
    %128 = arith.addf %122, %127 : vector<128x4xf32>
    %129 = vector.extract_strided_slice %116 {offsets = [2, 0, 0], sizes = [8, 16, 4], strides = [1, 1, 1]} : vector<12x16x4xbf16> to vector<8x16x4xbf16>
    %130 = vector.shape_cast %129 : vector<8x16x4xbf16> to vector<128x4xbf16>
    %c2_84 = arith.constant 2 : index
    %c2_85 = arith.constant 2 : index
    %c0_86 = arith.constant 0 : index
    %c0_87 = arith.constant 0 : index
    %131 = vector.load %arg5[%c2_84, %c2_85, %c0_86, %c0_87] : memref<5x5x4x4xbf16, #tpu.memory_space<vmem>>, vector<1x1x4x4xbf16>
    %132 = vector.shape_cast %131 : vector<1x1x4x4xbf16> to vector<4x4xbf16>
    %cst_88 = arith.constant dense<0.000000e+00> : vector<128x4xf32>
    %133 = tpu.matmul %130, %132, %cst_88 {dimension_numbers = #tpu.dot_dimension_numbers<[1], [0], [0], [1], [0, 0, 1, 1], [], []>} : vector<128x4xbf16>, vector<4x4xbf16>, vector<128x4xf32> -> vector<128x4xf32>
    %134 = arith.addf %128, %133 : vector<128x4xf32>
    %135 = vector.extract_strided_slice %116 {offsets = [3, 0, 0], sizes = [8, 16, 4], strides = [1, 1, 1]} : vector<12x16x4xbf16> to vector<8x16x4xbf16>
    %136 = vector.shape_cast %135 : vector<8x16x4xbf16> to vector<128x4xbf16>
    %c3_89 = arith.constant 3 : index
    %c2_90 = arith.constant 2 : index
    %c0_91 = arith.constant 0 : index
    %c0_92 = arith.constant 0 : index
    %137 = vector.load %arg5[%c3_89, %c2_90, %c0_91, %c0_92] : memref<5x5x4x4xbf16, #tpu.memory_space<vmem>>, vector<1x1x4x4xbf16>
    %138 = vector.shape_cast %137 : vector<1x1x4x4xbf16> to vector<4x4xbf16>
    %cst_93 = arith.constant dense<0.000000e+00> : vector<128x4xf32>
    %139 = tpu.matmul %136, %138, %cst_93 {dimension_numbers = #tpu.dot_dimension_numbers<[1], [0], [0], [1], [0, 0, 1, 1], [], []>} : vector<128x4xbf16>, vector<4x4xbf16>, vector<128x4xf32> -> vector<128x4xf32>
    %140 = arith.addf %134, %139 : vector<128x4xf32>
    %141 = vector.extract_strided_slice %116 {offsets = [4, 0, 0], sizes = [8, 16, 4], strides = [1, 1, 1]} : vector<12x16x4xbf16> to vector<8x16x4xbf16>
    %142 = vector.shape_cast %141 : vector<8x16x4xbf16> to vector<128x4xbf16>
    %c4_94 = arith.constant 4 : index
    %c2_95 = arith.constant 2 : index
    %c0_96 = arith.constant 0 : index
    %c0_97 = arith.constant 0 : index
    %143 = vector.load %arg5[%c4_94, %c2_95, %c0_96, %c0_97] : memref<5x5x4x4xbf16, #tpu.memory_space<vmem>>, vector<1x1x4x4xbf16>
    %144 = vector.shape_cast %143 : vector<1x1x4x4xbf16> to vector<4x4xbf16>
    %cst_98 = arith.constant dense<0.000000e+00> : vector<128x4xf32>
    %145 = tpu.matmul %142, %144, %cst_98 {dimension_numbers = #tpu.dot_dimension_numbers<[1], [0], [0], [1], [0, 0, 1, 1], [], []>} : vector<128x4xbf16>, vector<4x4xbf16>, vector<128x4xf32> -> vector<128x4xf32>
    %146 = arith.addf %140, %145 : vector<128x4xf32>
    %147 = vector.extract_strided_slice %46 {offsets = [0, 1, 0], sizes = [12, 15, 4], strides = [1, 1, 1]} : vector<12x16x4xf32> to vector<12x15x4xf32>
    %cst_99 = arith.constant 0.000000e+00 : f32
    %148 = vector.broadcast %cst_99 : f32 to vector<12x1x4xf32>
    %149 = tpu.concatenate %147, %148 in 1 : vector<12x15x4xf32>, vector<12x1x4xf32> -> vector<12x16x4xf32>
    %150 = arith.truncf %149 : vector<12x16x4xf32> to vector<12x16x4xbf16>
    %151 = vector.extract_strided_slice %150 {offsets = [0, 0, 0], sizes = [8, 16, 4], strides = [1, 1, 1]} : vector<12x16x4xbf16> to vector<8x16x4xbf16>
    %152 = vector.shape_cast %151 : vector<8x16x4xbf16> to vector<128x4xbf16>
    %c0_100 = arith.constant 0 : index
    %c3_101 = arith.constant 3 : index
    %c0_102 = arith.constant 0 : index
    %c0_103 = arith.constant 0 : index
    %153 = vector.load %arg5[%c0_100, %c3_101, %c0_102, %c0_103] : memref<5x5x4x4xbf16, #tpu.memory_space<vmem>>, vector<1x1x4x4xbf16>
    %154 = vector.shape_cast %153 : vector<1x1x4x4xbf16> to vector<4x4xbf16>
    %cst_104 = arith.constant dense<0.000000e+00> : vector<128x4xf32>
    %155 = tpu.matmul %152, %154, %cst_104 {dimension_numbers = #tpu.dot_dimension_numbers<[1], [0], [0], [1], [0, 0, 1, 1], [], []>} : vector<128x4xbf16>, vector<4x4xbf16>, vector<128x4xf32> -> vector<128x4xf32>
    %156 = arith.addf %146, %155 : vector<128x4xf32>
    %157 = vector.extract_strided_slice %150 {offsets = [1, 0, 0], sizes = [8, 16, 4], strides = [1, 1, 1]} : vector<12x16x4xbf16> to vector<8x16x4xbf16>
    %158 = vector.shape_cast %157 : vector<8x16x4xbf16> to vector<128x4xbf16>
    %c1_105 = arith.constant 1 : index
    %c3_106 = arith.constant 3 : index
    %c0_107 = arith.constant 0 : index
    %c0_108 = arith.constant 0 : index
    %159 = vector.load %arg5[%c1_105, %c3_106, %c0_107, %c0_108] : memref<5x5x4x4xbf16, #tpu.memory_space<vmem>>, vector<1x1x4x4xbf16>
    %160 = vector.shape_cast %159 : vector<1x1x4x4xbf16> to vector<4x4xbf16>
    %cst_109 = arith.constant dense<0.000000e+00> : vector<128x4xf32>
    %161 = tpu.matmul %158, %160, %cst_109 {dimension_numbers = #tpu.dot_dimension_numbers<[1], [0], [0], [1], [0, 0, 1, 1], [], []>} : vector<128x4xbf16>, vector<4x4xbf16>, vector<128x4xf32> -> vector<128x4xf32>
    %162 = arith.addf %156, %161 : vector<128x4xf32>
    %163 = vector.extract_strided_slice %150 {offsets = [2, 0, 0], sizes = [8, 16, 4], strides = [1, 1, 1]} : vector<12x16x4xbf16> to vector<8x16x4xbf16>
    %164 = vector.shape_cast %163 : vector<8x16x4xbf16> to vector<128x4xbf16>
    %c2_110 = arith.constant 2 : index
    %c3_111 = arith.constant 3 : index
    %c0_112 = arith.constant 0 : index
    %c0_113 = arith.constant 0 : index
    %165 = vector.load %arg5[%c2_110, %c3_111, %c0_112, %c0_113] : memref<5x5x4x4xbf16, #tpu.memory_space<vmem>>, vector<1x1x4x4xbf16>
    %166 = vector.shape_cast %165 : vector<1x1x4x4xbf16> to vector<4x4xbf16>
    %cst_114 = arith.constant dense<0.000000e+00> : vector<128x4xf32>
    %167 = tpu.matmul %164, %166, %cst_114 {dimension_numbers = #tpu.dot_dimension_numbers<[1], [0], [0], [1], [0, 0, 1, 1], [], []>} : vector<128x4xbf16>, vector<4x4xbf16>, vector<128x4xf32> -> vector<128x4xf32>
    %168 = arith.addf %162, %167 : vector<128x4xf32>
    %169 = vector.extract_strided_slice %150 {offsets = [3, 0, 0], sizes = [8, 16, 4], strides = [1, 1, 1]} : vector<12x16x4xbf16> to vector<8x16x4xbf16>
    %170 = vector.shape_cast %169 : vector<8x16x4xbf16> to vector<128x4xbf16>
    %c3_115 = arith.constant 3 : index
    %c3_116 = arith.constant 3 : index
    %c0_117 = arith.constant 0 : index
    %c0_118 = arith.constant 0 : index
    %171 = vector.load %arg5[%c3_115, %c3_116, %c0_117, %c0_118] : memref<5x5x4x4xbf16, #tpu.memory_space<vmem>>, vector<1x1x4x4xbf16>
    %172 = vector.shape_cast %171 : vector<1x1x4x4xbf16> to vector<4x4xbf16>
    %cst_119 = arith.constant dense<0.000000e+00> : vector<128x4xf32>
    %173 = tpu.matmul %170, %172, %cst_119 {dimension_numbers = #tpu.dot_dimension_numbers<[1], [0], [0], [1], [0, 0, 1, 1], [], []>} : vector<128x4xbf16>, vector<4x4xbf16>, vector<128x4xf32> -> vector<128x4xf32>
    %174 = arith.addf %168, %173 : vector<128x4xf32>
    %175 = vector.extract_strided_slice %150 {offsets = [4, 0, 0], sizes = [8, 16, 4], strides = [1, 1, 1]} : vector<12x16x4xbf16> to vector<8x16x4xbf16>
    %176 = vector.shape_cast %175 : vector<8x16x4xbf16> to vector<128x4xbf16>
    %c4_120 = arith.constant 4 : index
    %c3_121 = arith.constant 3 : index
    %c0_122 = arith.constant 0 : index
    %c0_123 = arith.constant 0 : index
    %177 = vector.load %arg5[%c4_120, %c3_121, %c0_122, %c0_123] : memref<5x5x4x4xbf16, #tpu.memory_space<vmem>>, vector<1x1x4x4xbf16>
    %178 = vector.shape_cast %177 : vector<1x1x4x4xbf16> to vector<4x4xbf16>
    %cst_124 = arith.constant dense<0.000000e+00> : vector<128x4xf32>
    %179 = tpu.matmul %176, %178, %cst_124 {dimension_numbers = #tpu.dot_dimension_numbers<[1], [0], [0], [1], [0, 0, 1, 1], [], []>} : vector<128x4xbf16>, vector<4x4xbf16>, vector<128x4xf32> -> vector<128x4xf32>
    %180 = arith.addf %174, %179 : vector<128x4xf32>
    %181 = vector.extract_strided_slice %46 {offsets = [0, 2, 0], sizes = [12, 14, 4], strides = [1, 1, 1]} : vector<12x16x4xf32> to vector<12x14x4xf32>
    %cst_125 = arith.constant 0.000000e+00 : f32
    %182 = vector.broadcast %cst_125 : f32 to vector<12x2x4xf32>
    %183 = tpu.concatenate %181, %182 in 1 : vector<12x14x4xf32>, vector<12x2x4xf32> -> vector<12x16x4xf32>
    %184 = arith.truncf %183 : vector<12x16x4xf32> to vector<12x16x4xbf16>
    %185 = vector.extract_strided_slice %184 {offsets = [0, 0, 0], sizes = [8, 16, 4], strides = [1, 1, 1]} : vector<12x16x4xbf16> to vector<8x16x4xbf16>
    %186 = vector.shape_cast %185 : vector<8x16x4xbf16> to vector<128x4xbf16>
    %c0_126 = arith.constant 0 : index
    %c4_127 = arith.constant 4 : index
    %c0_128 = arith.constant 0 : index
    %c0_129 = arith.constant 0 : index
    %187 = vector.load %arg5[%c0_126, %c4_127, %c0_128, %c0_129] : memref<5x5x4x4xbf16, #tpu.memory_space<vmem>>, vector<1x1x4x4xbf16>
    %188 = vector.shape_cast %187 : vector<1x1x4x4xbf16> to vector<4x4xbf16>
    %cst_130 = arith.constant dense<0.000000e+00> : vector<128x4xf32>
    %189 = tpu.matmul %186, %188, %cst_130 {dimension_numbers = #tpu.dot_dimension_numbers<[1], [0], [0], [1], [0, 0, 1, 1], [], []>} : vector<128x4xbf16>, vector<4x4xbf16>, vector<128x4xf32> -> vector<128x4xf32>
    %190 = arith.addf %180, %189 : vector<128x4xf32>
    %191 = vector.extract_strided_slice %184 {offsets = [1, 0, 0], sizes = [8, 16, 4], strides = [1, 1, 1]} : vector<12x16x4xbf16> to vector<8x16x4xbf16>
    %192 = vector.shape_cast %191 : vector<8x16x4xbf16> to vector<128x4xbf16>
    %c1_131 = arith.constant 1 : index
    %c4_132 = arith.constant 4 : index
    %c0_133 = arith.constant 0 : index
    %c0_134 = arith.constant 0 : index
    %193 = vector.load %arg5[%c1_131, %c4_132, %c0_133, %c0_134] : memref<5x5x4x4xbf16, #tpu.memory_space<vmem>>, vector<1x1x4x4xbf16>
    %194 = vector.shape_cast %193 : vector<1x1x4x4xbf16> to vector<4x4xbf16>
    %cst_135 = arith.constant dense<0.000000e+00> : vector<128x4xf32>
    %195 = tpu.matmul %192, %194, %cst_135 {dimension_numbers = #tpu.dot_dimension_numbers<[1], [0], [0], [1], [0, 0, 1, 1], [], []>} : vector<128x4xbf16>, vector<4x4xbf16>, vector<128x4xf32> -> vector<128x4xf32>
    %196 = arith.addf %190, %195 : vector<128x4xf32>
    %197 = vector.extract_strided_slice %184 {offsets = [2, 0, 0], sizes = [8, 16, 4], strides = [1, 1, 1]} : vector<12x16x4xbf16> to vector<8x16x4xbf16>
    %198 = vector.shape_cast %197 : vector<8x16x4xbf16> to vector<128x4xbf16>
    %c2_136 = arith.constant 2 : index
    %c4_137 = arith.constant 4 : index
    %c0_138 = arith.constant 0 : index
    %c0_139 = arith.constant 0 : index
    %199 = vector.load %arg5[%c2_136, %c4_137, %c0_138, %c0_139] : memref<5x5x4x4xbf16, #tpu.memory_space<vmem>>, vector<1x1x4x4xbf16>
    %200 = vector.shape_cast %199 : vector<1x1x4x4xbf16> to vector<4x4xbf16>
    %cst_140 = arith.constant dense<0.000000e+00> : vector<128x4xf32>
    %201 = tpu.matmul %198, %200, %cst_140 {dimension_numbers = #tpu.dot_dimension_numbers<[1], [0], [0], [1], [0, 0, 1, 1], [], []>} : vector<128x4xbf16>, vector<4x4xbf16>, vector<128x4xf32> -> vector<128x4xf32>
    %202 = arith.addf %196, %201 : vector<128x4xf32>
    %203 = vector.extract_strided_slice %184 {offsets = [3, 0, 0], sizes = [8, 16, 4], strides = [1, 1, 1]} : vector<12x16x4xbf16> to vector<8x16x4xbf16>
    %204 = vector.shape_cast %203 : vector<8x16x4xbf16> to vector<128x4xbf16>
    %c3_141 = arith.constant 3 : index
    %c4_142 = arith.constant 4 : index
    %c0_143 = arith.constant 0 : index
    %c0_144 = arith.constant 0 : index
    %205 = vector.load %arg5[%c3_141, %c4_142, %c0_143, %c0_144] : memref<5x5x4x4xbf16, #tpu.memory_space<vmem>>, vector<1x1x4x4xbf16>
    %206 = vector.shape_cast %205 : vector<1x1x4x4xbf16> to vector<4x4xbf16>
    %cst_145 = arith.constant dense<0.000000e+00> : vector<128x4xf32>
    %207 = tpu.matmul %204, %206, %cst_145 {dimension_numbers = #tpu.dot_dimension_numbers<[1], [0], [0], [1], [0, 0, 1, 1], [], []>} : vector<128x4xbf16>, vector<4x4xbf16>, vector<128x4xf32> -> vector<128x4xf32>
    %208 = arith.addf %202, %207 : vector<128x4xf32>
    %209 = vector.extract_strided_slice %184 {offsets = [4, 0, 0], sizes = [8, 16, 4], strides = [1, 1, 1]} : vector<12x16x4xbf16> to vector<8x16x4xbf16>
    %210 = vector.shape_cast %209 : vector<8x16x4xbf16> to vector<128x4xbf16>
    %c4_146 = arith.constant 4 : index
    %c4_147 = arith.constant 4 : index
    %c0_148 = arith.constant 0 : index
    %c0_149 = arith.constant 0 : index
    %211 = vector.load %arg5[%c4_146, %c4_147, %c0_148, %c0_149] : memref<5x5x4x4xbf16, #tpu.memory_space<vmem>>, vector<1x1x4x4xbf16>
    %212 = vector.shape_cast %211 : vector<1x1x4x4xbf16> to vector<4x4xbf16>
    %cst_150 = arith.constant dense<0.000000e+00> : vector<128x4xf32>
    %213 = tpu.matmul %210, %212, %cst_150 {dimension_numbers = #tpu.dot_dimension_numbers<[1], [0], [0], [1], [0, 0, 1, 1], [], []>} : vector<128x4xbf16>, vector<4x4xbf16>, vector<128x4xf32> -> vector<128x4xf32>
    %214 = arith.addf %208, %213 : vector<128x4xf32>
    %c0_151 = arith.constant 0 : index
    %c0_152 = arith.constant 0 : index
    %215 = vector.load %arg6[%c0_151, %c0_152] : memref<1x4xf32, #tpu.memory_space<vmem>>, vector<1x4xf32>
    %216 = vector.broadcast %215 : vector<1x4xf32> to vector<128x4xf32>
    %217 = arith.addf %214, %216 : vector<128x4xf32>
    %218 = vector.shape_cast %217 : vector<128x4xf32> to vector<1x8x16x4xf32>
    %c0_153 = arith.constant 0 : index
    %c0_154 = arith.constant 0 : index
    %c0_155 = arith.constant 0 : index
    %c0_156 = arith.constant 0 : index
    %219 = vector.load %arg9[%c0_153, %c0_154, %c0_155, %c0_156] : memref<1x8x16x4xf32, #tpu.memory_space<vmem>>, vector<1x8x16x4xf32>
    tpu.vector_store %arg9[%c0_153, %c0_154, %c0_155, %c0_156], %218 {strides = array<i32>} : memref<1x8x16x4xf32, #tpu.memory_space<vmem>>, vector<1x8x16x4xf32>,
    %cst_157 = arith.constant dense<0.000000e+00> : vector<4xf32>
    %220 = vector.multi_reduction <add>, %217, %cst_157 [0] : vector<128x4xf32> to vector<4xf32>
    %221 = vector.shape_cast %220 : vector<4xf32> to vector<1x4xf32>
    %222 = arith.mulf %217, %217 : vector<128x4xf32>
    %cst_158 = arith.constant dense<0.000000e+00> : vector<4xf32>
    %223 = vector.multi_reduction <add>, %222, %cst_158 [0] : vector<128x4xf32> to vector<4xf32>
    %224 = vector.shape_cast %223 : vector<4xf32> to vector<1x4xf32>
    %225 = tpu.concatenate %221, %224 in 0 : vector<1x4xf32>, vector<1x4xf32> -> vector<2x4xf32>
    %226 = vector.shape_cast %225 : vector<2x4xf32> to vector<1x1x2x4xf32>
    %c0_159 = arith.constant 0 : index
    %c0_160 = arith.constant 0 : index
    %c0_161 = arith.constant 0 : index
    %c0_162 = arith.constant 0 : index
    %227 = vector.load %arg10[%c0_159, %c0_160, %c0_161, %c0_162] : memref<1x1x2x4xf32, #tpu.memory_space<vmem>>, vector<1x1x2x4xf32>
    tpu.vector_store %arg10[%c0_159, %c0_160, %c0_161, %c0_162], %226 {strides = array<i32>} : memref<1x1x2x4xf32, #tpu.memory_space<vmem>>, vector<1x1x2x4xf32>,
    return
  }
  func.func @transform_0(%arg0: i32, %arg1: i32) -> (i32, i32, i32, i32) {
    %c4_i32 = arith.constant 4 : i32
    %0 = arith.muli %arg1, %c4_i32 : i32
    %c1_i32 = arith.constant 1 : i32
    %1 = arith.subi %0, %c1_i32 : i32
    %c0_i32 = arith.constant 0 : i32
    %2 = arith.maxsi %1, %c0_i32 : i32
    %c0_i32_0 = arith.constant 0 : i32
    %c0_i32_1 = arith.constant 0 : i32
    %c0_i32_2 = arith.constant 0 : i32
    return %arg0, %2, %c0_i32_0, %c0_i32_1 : i32, i32, i32, i32
  }
  func.func @transform_1(%arg0: i32, %arg1: i32) -> (i32, i32, i32, i32) {
    %c0_i32 = arith.constant 0 : i32
    %c0_i32_0 = arith.constant 0 : i32
    %c0_i32_1 = arith.constant 0 : i32
    return %arg0, %arg1, %c0_i32, %c0_i32_0 : i32, i32, i32, i32
  }
  func.func @transform_2(%arg0: i32, %arg1: i32) -> (i32, i32, i32, i32) {
    %c1_i32 = arith.constant 1 : i32
    %0 = arith.addi %arg1, %c1_i32 : i32
    %c4_i32 = arith.constant 4 : i32
    %1 = arith.muli %0, %c4_i32 : i32
    %c7_i32 = arith.constant 7 : i32
    %2 = arith.minsi %1, %c7_i32 : i32
    %c0_i32 = arith.constant 0 : i32
    %c0_i32_0 = arith.constant 0 : i32
    %c0_i32_1 = arith.constant 0 : i32
    return %arg0, %2, %c0_i32, %c0_i32_0 : i32, i32, i32, i32
  }
  func.func @transform_3(%arg0: i32, %arg1: i32) -> (i32, i32, i32, i32) {
    %c0_i32 = arith.constant 0 : i32
    %c0_i32_0 = arith.constant 0 : i32
    %c0_i32_1 = arith.constant 0 : i32
    %c0_i32_2 = arith.constant 0 : i32
    %c0_i32_3 = arith.constant 0 : i32
    return %c0_i32, %c0_i32_0, %c0_i32_1, %c0_i32_2 : i32, i32, i32, i32
  }
  func.func @transform_4(%arg0: i32, %arg1: i32) -> (i32, i32) {
    %c0_i32 = arith.constant 0 : i32
    %c0_i32_0 = arith.constant 0 : i32
    %c0_i32_1 = arith.constant 0 : i32
    return %c0_i32, %c0_i32_0 : i32, i32
  }
  func.func @transform_5(%arg0: i32, %arg1: i32) -> (i32, i32) {
    %c0_i32 = arith.constant 0 : i32
    %c0_i32_0 = arith.constant 0 : i32
    %c0_i32_1 = arith.constant 0 : i32
    return %c0_i32, %c0_i32_0 : i32, i32
  }
  func.func @transform_6(%arg0: i32, %arg1: i32) -> (i32, i32) {
    %c0_i32 = arith.constant 0 : i32
    %c0_i32_0 = arith.constant 0 : i32
    %c0_i32_1 = arith.constant 0 : i32
    return %c0_i32, %c0_i32_0 : i32, i32
  }
  func.func @transform_7(%arg0: i32, %arg1: i32) -> (i32, i32, i32, i32) {
    %c0_i32 = arith.constant 0 : i32
    %c0_i32_0 = arith.constant 0 : i32
    %c0_i32_1 = arith.constant 0 : i32
    return %arg0, %arg1, %c0_i32, %c0_i32_0 : i32, i32, i32, i32
  }
  func.func @transform_8(%arg0: i32, %arg1: i32) -> (i32, i32, i32, i32) {
    %c0_i32 = arith.constant 0 : i32
    %c0_i32_0 = arith.constant 0 : i32
    %c0_i32_1 = arith.constant 0 : i32
    return %arg0, %arg1, %c0_i32, %c0_i32_0 : i32, i32, i32, i32
  }
}

</mosaic_0001>

<llo_original>
// kernel: residual_block.5
$region0: #{residual_block.5}
  #allocation0 [shape = 'u32[]', space=smem, size = 0x4, offset = 0x4, fixed_abs, tag = 'smem constant byte address 0x4 - core index']
  #allocation1 [shape = 'u32[144,128]{1,0:T(1,128)}', space=vmem, size = 0x12000, scoped, tag = 'internal scratch']
  %s0 = inlined_call_operand.vmem [shape: f32[2,16,16,4], index: 0, kind: input, shape index: {}]
  %s1 = inlined_call_operand.vmem [shape: f32[2,16,16,4], index: 1, kind: input, shape index: {}]
  %s2 = inlined_call_operand.vmem [shape: f32[1,4], index: 2, kind: input, shape index: {}]
  %s3 = inlined_call_operand.vmem [shape: f32[1,4], index: 3, kind: input, shape index: {}]
  %s4 = inlined_call_operand.vmem [shape: f32[2,16,16,4], index: 4, kind: output, shape index: {}]
  %s5 = sld [smem:[#allocation0]]
  $region49: #{residual_block.5} parent=0
    _
  %s7 = ssub.s32 1, %s5
  %s8 = scalar_select 0, %s7, %s5
  loop: start=0, step=1, limit=6
  $region2: #{residual_block.5} parent=0 // loop_pre_header
    _
  $region3: #{residual_block.5} parent=0 // loop_header
    %s10 = sphi 0, %s14
    %p11 = scmp.ge.s32.totalorder %s10, 6
    %s17 = sphi 0, %s29
    %s18 = sphi 0, %s25
    %s19 = sphi 0, %s17
    %s20 = sphi 0, %s18
    %s21 = sphi 0, %s19
    %s22 = sphi 0, %s20
    %s34 = sphi 0, %s36
    %s37 = sphi 0, %s34
    %s38 = sphi 0, %s37
    %s54 = sphi 0, %s38
    %s62 = sphi 0, %s64
    %s65 = sphi 0, %s62
    %s66 = sphi 0, %s65
    %s82 = sphi 0, %s66
    %s86 = sphi 0, %s86
    %s88 = sphi 0, %s86
    %s89 = sphi 0, %s88
    %s103 = sphi 0, %s89
    %s107 = sphi 0, %s107
    %s109 = sphi 0, %s107
    %s110 = sphi 0, %s109
    %s124 = sphi 0, %s110
    %s132 = sphi 0, %s134
    %s135 = sphi 0, %s132
    %s136 = sphi 0, %s135
    %s152 = sphi 0, %s136
  $region4: #{residual_block.5} parent=0 // loop_header_branch
    %13 = sbr.rel (%p11) target = $region8
  $region5: #{residual_block.5} parent=0 // loop_body
    %s15 = ssub.s32 %s10, 1
    %s16 = ssub.s32 %s10, 2
    %s23 = sadd.s32 1, %s18
    %p24 = scmp.ge.s32.totalorder %s23, 2
    %s25 = scalar_select %p24, 0, %s23
    %s26 = sadd.s32 1, %s17
    %s27 = scalar_select %p24, %s26, %s17
    %p28 = scmp.ge.s32.totalorder %s27, 2
    %s29 = scalar_select %p28, 0, %s27
    %s30 = ssub.s32 %s17, %s29
    %s31 = ssub.s32 %s18, %s25
    %s32 = sor.u32 %s30, %s31
    %p33 = scmp.eq.s32.totalorder %s32, 0
    %s35 = sadd.s32 %s34, 1
    %s36 = scalar_select %p33, %s34, %s35
    %p39 = pneg %p33
    %p40 = scmp.eq.s32.totalorder %s10, 3
    %p41 = por %p39, %p40
    %p42 = scmp.ne.s32.totalorder %s34, %s37
    %p43 = scmp.eq.s32.totalorder %s10, 0
    %p44 = por %p42, %p43
    %p45 = scmp.ne.s32.totalorder %s34, %s37
    %p46 = scmp.eq.s32.totalorder %s15, 3
    %p47 = por %p45, %p46
    %p48 = scmp.ne.s32.totalorder %s37, %s38
    %p49 = scmp.eq.s32.totalorder %s15, 0
    %p50 = por %p48, %p49
    %p51 = scmp.ne.s32.totalorder %s37, %s38
    %p52 = scmp.eq.s32.totalorder %s16, 3
    %p53 = por %p51, %p52
    %p55 = scmp.ne.s32.totalorder %s38, %s54
    %p56 = scmp.eq.s32.totalorder %s16, 0
    %p57 = por %p55, %p56
    %s58 = ssub.s32 %s17, %s29
    %s59 = ssub.s32 %s18, %s25
    %s60 = sor.u32 %s58, %s59
    %p61 = scmp.eq.s32.totalorder %s60, 0
    %s63 = sadd.s32 %s62, 1
    %s64 = scalar_select %p61, %s62, %s63
    %p67 = pneg %p61
    %p68 = scmp.eq.s32.totalorder %s10, 3
    %p69 = por %p67, %p68
    %p70 = scmp.ne.s32.totalorder %s62, %s65
    %p71 = scmp.eq.s32.totalorder %s10, 0
    %p72 = por %p70, %p71
    %p73 = scmp.ne.s32.totalorder %s62, %s65
    %p74 = scmp.eq.s32.totalorder %s15, 3
    %p75 = por %p73, %p74
    %p76 = scmp.ne.s32.totalorder %s65, %s66
    %p77 = scmp.eq.s32.totalorder %s15, 0
    %p78 = por %p76, %p77
    %p79 = scmp.ne.s32.totalorder %s65, %s66
    %p80 = scmp.eq.s32.totalorder %s16, 3
    %p81 = por %p79, %p80
    %p83 = scmp.ne.s32.totalorder %s66, %s82
    %p84 = scmp.eq.s32.totalorder %s16, 0
    %p85 = por %p83, %p84
    %s87 = sadd.s32 %s86, 1
    %p90 = scmp.eq.s32.totalorder %s10, 3
    %p91 = scmp.ne.s32.totalorder %s86, %s88
    %p92 = scmp.eq.s32.totalorder %s10, 0
    %p93 = por %p91, %p92
    %p94 = scmp.ne.s32.totalorder %s86, %s88
    %p95 = scmp.eq.s32.totalorder %s15, 3
    %p96 = por %p94, %p95
    %p97 = scmp.ne.s32.totalorder %s88, %s89
    %p98 = scmp.eq.s32.totalorder %s15, 0
    %p99 = por %p97, %p98
    %p100 = scmp.ne.s32.totalorder %s88, %s89
    %p101 = scmp.eq.s32.totalorder %s16, 3
    %p102 = por %p100, %p101
    %p104 = scmp.ne.s32.totalorder %s89, %s103
    %p105 = scmp.eq.s32.totalorder %s16, 0
    %p106 = por %p104, %p105
    %s108 = sadd.s32 %s107, 1
    %p111 = scmp.eq.s32.totalorder %s10, 3
    %p112 = scmp.ne.s32.totalorder %s107, %s109
    %p113 = scmp.eq.s32.totalorder %s10, 0
    %p114 = por %p112, %p113
    %p115 = scmp.ne.s32.totalorder %s107, %s109
    %p116 = scmp.eq.s32.totalorder %s15, 3
    %p117 = por %p115, %p116
    %p118 = scmp.ne.s32.totalorder %s109, %s110
    %p119 = scmp.eq.s32.totalorder %s15, 0
    %p120 = por %p118, %p119
    %p121 = scmp.ne.s32.totalorder %s109, %s110
    %p122 = scmp.eq.s32.totalorder %s16, 3
    %p123 = por %p121, %p122
    %p125 = scmp.ne.s32.totalorder %s110, %s124
    %p126 = scmp.eq.s32.totalorder %s16, 0
    %p127 = por %p125, %p126
    %s128 = ssub.s32 %s17, %s29
    %s129 = ssub.s32 %s18, %s25
    %s130 = sor.u32 %s128, %s129
    %p131 = scmp.eq.s32.totalorder %s130, 0
    %s133 = sadd.s32 %s132, 1
    %s134 = scalar_select %p131, %s132, %s133
    %p137 = pneg %p131
    %p138 = scmp.eq.s32.totalorder %s10, 3
    %p139 = por %p137, %p138
    %p140 = scmp.ne.s32.totalorder %s132, %s135
    %p141 = scmp.eq.s32.totalorder %s10, 0
    %p142 = por %p140, %p141
    %p143 = scmp.ne.s32.totalorder %s132, %s135
    %p144 = scmp.eq.s32.totalorder %s15, 3
    %p145 = por %p143, %p144
    %p146 = scmp.ne.s32.totalorder %s135, %s136
    %p147 = scmp.eq.s32.totalorder %s15, 0
    %p148 = por %p146, %p147
    %p149 = scmp.ne.s32.totalorder %s135, %s136
    %p150 = scmp.eq.s32.totalorder %s16, 3
    %p151 = por %p149, %p150
    %p153 = scmp.ne.s32.totalorder %s136, %s152
    %p154 = scmp.eq.s32.totalorder %s16, 0
    %p155 = por %p153, %p154
    %p156 = scmp.le.s32.totalorder 1, %s10
    %p157 = scmp.lt.s32.totalorder %s10, 5
    %p158 = pnand %p156, %p157
    %p159 = pneg %p158
    // Predicated region
    $region9: #{residual_block.5} parent=5 // pred_check
      _
    $region10: #{residual_block.5} parent=5 // pred_check_branch
      %161 = sbr.rel (%p158) target = $region12
    $region11: #{residual_block.5} parent=5 // pred_region
      %s162 = ssub.s32 %s10, 1
      // Predicated region
      $region13: #{residual_block.5} parent=11 // pred_check
        %p163 = pneg %p99
      $region14: #{residual_block.5} parent=11 // pred_check_branch
        %165 = sbr.rel (%p163) target = $region16
      $region15: #{residual_block.5} parent=11 // pred_region
        _
      $region16: #{residual_block.5} parent=11 // pred_fallthru
        _
      // Predicated region
      $region17: #{residual_block.5} parent=11 // pred_check
        %p166 = pneg %p120
      $region18: #{residual_block.5} parent=11 // pred_check_branch
        %168 = sbr.rel (%p166) target = $region20
      $region19: #{residual_block.5} parent=11 // pred_region
        _
      $region20: #{residual_block.5} parent=11 // pred_fallthru
        _
    $region12: #{residual_block.5} parent=5 // pred_fallthru
      _
    %p169 = scmp.lt.s32.totalorder %s10, 4
    // Predicated region
    $region21: #{residual_block.5} parent=5 // pred_check
      %p170 = pneg %p169
    $region22: #{residual_block.5} parent=5 // pred_check_branch
      %172 = sbr.rel (%p170) target = $region24
    $region23: #{residual_block.5} parent=5 // pred_region
      // Predicated region
      $region25: #{residual_block.5} parent=23 // pred_check
        %p173 = pneg %p44
      $region26: #{residual_block.5} parent=23 // pred_check_branch
        %175 = sbr.rel (%p173) target = $region28
      $region27: #{residual_block.5} parent=23 // pred_region
        %s176 = smul.u32 8, %s18
        %p177 = scmp.lt.s32.totalorder %s17, 1
        %s178 = scalar_select %p177, %s17, 1
        %p179 = scmp.lt.s32.totalorder %s176, 15
        %s180 = scalar_select %p179, %s176, 15
        %s181 = smul.addr %s180, 2
        %s182 = smul.addr %s178, 32
        %s183 = sadd.s32 %s181, %s182
        %s184 = smul.addr %s183, 8
        %s185 = scalar_lea.vmem %s0, %s184
        %s186 = smul.u32 8, %s18
      $region28: #{residual_block.5} parent=23 // pred_fallthru
        _
      // Predicated region
      $region29: #{residual_block.5} parent=23 // pred_check
        %p187 = pneg %p72
      $region30: #{residual_block.5} parent=23 // pred_check_branch
        %189 = sbr.rel (%p187) target = $region32
      $region31: #{residual_block.5} parent=23 // pred_region
        %s190 = smul.u32 8, %s18
        %p191 = scmp.lt.s32.totalorder %s17, 1
        %s192 = scalar_select %p191, %s17, 1
        %p193 = scmp.lt.s32.totalorder %s190, 15
        %s194 = scalar_select %p193, %s190, 15
        %s195 = smul.addr %s194, 2
        %s196 = smul.addr %s192, 32
        %s197 = sadd.s32 %s195, %s196
        %s198 = smul.addr %s197, 8
        %s199 = scalar_lea.vmem %s1, %s198
        %s200 = smul.u32 8, %s18
      $region32: #{residual_block.5} parent=23 // pred_fallthru
        _
    $region24: #{residual_block.5} parent=5 // pred_fallthru
      _
    %p201 = scmp.le.s32.totalorder 1, %s10
    %p202 = scmp.lt.s32.totalorder %s10, 5
    %p203 = pnand %p201, %p202
    %p204 = pneg %p203
    // Predicated region
    $region33: #{residual_block.5} parent=5 // pred_check
      _
    $region34: #{residual_block.5} parent=5 // pred_check_branch
      %206 = sbr.rel (%p203) target = $region36
    $region35: #{residual_block.5} parent=5 // pred_region
      %s207 = ssub.s32 %s10, 1
      %s208 = smul.u32 8, %s20
      %p209 = scmp.lt.s32.totalorder %s19, 1
      %s210 = scalar_select %p209, %s19, 1
      %p211 = scmp.lt.s32.totalorder %s208, 15
      %s212 = scalar_select %p211, %s208, 15
      %s213 = smul.addr %s212, 2
      %s214 = smul.addr %s210, 32
      %s215 = sadd.s32 %s213, %s214
      %s216 = smul.addr %s215, 8
      %s217 = scalar_lea.vmem %s0, %s216
      %p218 = pneg %p50
      %p219 = pneg %p47
      %s220 = smul.u32 8, %s20
      %p221 = scmp.lt.s32.totalorder %s19, 1
      %s222 = scalar_select %p221, %s19, 1
      %p223 = scmp.lt.s32.totalorder %s220, 15
      %s224 = scalar_select %p223, %s220, 15
      %s225 = smul.addr %s224, 2
      %s226 = smul.addr %s222, 32
      %s227 = sadd.s32 %s225, %s226
      %s228 = smul.addr %s227, 8
      %s229 = scalar_lea.vmem %s1, %s228
      %p230 = pneg %p78
      %p231 = pneg %p75
      %p232 = pneg %p99
      %p233 = pneg %p96
      %p234 = pneg %p120
      %p235 = pneg %p117
      %p236 = pneg %p148
      %p237 = pneg %p145
      %s238 = smul.u32 8, %s20
      %p239 = scmp.lt.s32.totalorder %s19, 1
      %s240 = scalar_select %p239, %s19, 1
      %p241 = scmp.lt.s32.totalorder %s238, 15
      %s242 = scalar_select %p241, %s238, 15
      %s243 = smul.addr %s242, 2
      %s244 = smul.addr %s240, 32
      %s245 = sadd.s32 %s243, %s244
      %s246 = smul.addr %s245, 8
      %s247 = scalar_lea.vmem %s4, %s246
      %s248 = smul.u32 8, %s20
      %p249 = scmp.lt.s32.totalorder %s19, 1
      %s250 = scalar_select %p249, %s19, 1
      %p251 = scmp.lt.s32.totalorder %s248, 15
      %s252 = scalar_select %p251, %s248, 15
      %s253 = smul.addr %s252, 2
      %s254 = smul.addr %s250, 32
      %s255 = sadd.s32 %s253, %s254
      %s256 = smul.addr %s255, 8
      %s257 = scalar_lea.vmem %s0, %s256
      %s258 = smul.u32 8, %s20
      %s259 = smul.u32 8, %s20
      %p260 = scmp.lt.s32.totalorder %s19, 1
      %s261 = scalar_select %p260, %s19, 1
      %p262 = scmp.lt.s32.totalorder %s259, 15
      %s263 = scalar_select %p262, %s259, 15
      %s264 = smul.addr %s263, 2
      %s265 = smul.addr %s261, 32
      %s266 = sadd.s32 %s264, %s265
      %s267 = smul.addr %s266, 8
      %s268 = scalar_lea.vmem %s1, %s267
      %s269 = smul.u32 8, %s20
      %s270 = smul.u32 8, %s20
      %p271 = scmp.lt.s32.totalorder %s19, 1
      %s272 = scalar_select %p271, %s19, 1
      %p273 = scmp.lt.s32.totalorder %s270, 15
      %s274 = scalar_select %p273, %s270, 15
      %s275 = smul.addr %s274, 2
      %s276 = smul.addr %s272, 32
      %s277 = sadd.s32 %s275, %s276
      %s278 = smul.addr %s277, 8
      %s279 = scalar_lea.vmem %s4, %s278
      %s280 = smul.u32 8, %s20
      %v281 = vld [vmem:[%s257] sm:$0xff]
      %v282 = vld [vmem:[%s257 + $0x8] sm:$0xff]
      %v283 = vld [vmem:[%s257 + $0x10] sm:$0xff]
      %v284 = vld [vmem:[%s257 + $0x18] sm:$0xff]
      %v285 = vld [vmem:[%s257 + $0x20] sm:$0xff]
      %v286 = vld [vmem:[%s257 + $0x28] sm:$0xff]
      %v287 = vld [vmem:[%s257 + $0x30] sm:$0xff]
      %v288 = vld [vmem:[%s257 + $0x38] sm:$0xff]
      %v289 = vld [vmem:[%s257 + $0x40] sm:$0xff]
      %v290 = vld [vmem:[%s257 + $0x48] sm:$0xff]
      %v291 = vld [vmem:[%s257 + $0x50] sm:$0xff]
      %v292 = vld [vmem:[%s257 + $0x58] sm:$0xff]
      %v293 = vld [vmem:[%s257 + $0x60] sm:$0xff]
      %v294 = vld [vmem:[%s257 + $0x68] sm:$0xff]
      %v295 = vld [vmem:[%s257 + $0x70] sm:$0xff]
      %v296 = vld [vmem:[%s257 + $0x78] sm:$0xff]
      %v297 = vld [vmem:[%s2] sm:$0x1]
      %v299 = vlaneseq
      %v300 = vshrl.u32 %v299, 7
      %v301 = vsub.s32 0, %v300
      %v302 = vrot.slane %v297, %v301
      %v304 = vmul.f32 %v281, %v302
      %v305 = vmul.f32 %v282, %v302
      %v306 = vmul.f32 %v283, %v302
      %v307 = vmul.f32 %v284, %v302
      %v308 = vmul.f32 %v285, %v302
      %v309 = vmul.f32 %v286, %v302
      %v310 = vmul.f32 %v287, %v302
      %v311 = vmul.f32 %v288, %v302
      %v312 = vmul.f32 %v289, %v302
      %v313 = vmul.f32 %v290, %v302
      %v314 = vmul.f32 %v291, %v302
      %v315 = vmul.f32 %v292, %v302
      %v316 = vmul.f32 %v293, %v302
      %v317 = vmul.f32 %v294, %v302
      %v318 = vmul.f32 %v295, %v302
      %v319 = vmul.f32 %v296, %v302
      %v320 = vld [vmem:[%s3] sm:$0x1]
      %v322 = vlaneseq
      %v323 = vshrl.u32 %v322, 7
      %v324 = vsub.s32 0, %v323
      %v325 = vrot.slane %v320, %v324
      %v327 = vadd.f32 %v304, %v325
      %v328 = vadd.f32 %v305, %v325
      %v329 = vadd.f32 %v306, %v325
      %v330 = vadd.f32 %v307, %v325
      %v331 = vadd.f32 %v308, %v325
      %v332 = vadd.f32 %v309, %v325
      %v333 = vadd.f32 %v310, %v325
      %v334 = vadd.f32 %v311, %v325
      %v335 = vadd.f32 %v312, %v325
      %v336 = vadd.f32 %v313, %v325
      %v337 = vadd.f32 %v314, %v325
      %v338 = vadd.f32 %v315, %v325
      %v339 = vadd.f32 %v316, %v325
      %v340 = vadd.f32 %v317, %v325
      %v341 = vadd.f32 %v318, %v325
      %v342 = vadd.f32 %v319, %v325
      %v343 = vld [vmem:[%s268] sm:$0xff]
      %v344 = vld [vmem:[%s268 + $0x8] sm:$0xff]
      %v345 = vld [vmem:[%s268 + $0x10] sm:$0xff]
      %v346 = vld [vmem:[%s268 + $0x18] sm:$0xff]
      %v347 = vld [vmem:[%s268 + $0x20] sm:$0xff]
      %v348 = vld [vmem:[%s268 + $0x28] sm:$0xff]
      %v349 = vld [vmem:[%s268 + $0x30] sm:$0xff]
      %v350 = vld [vmem:[%s268 + $0x38] sm:$0xff]
      %v351 = vld [vmem:[%s268 + $0x40] sm:$0xff]
      %v352 = vld [vmem:[%s268 + $0x48] sm:$0xff]
      %v353 = vld [vmem:[%s268 + $0x50] sm:$0xff]
      %v354 = vld [vmem:[%s268 + $0x58] sm:$0xff]
      %v355 = vld [vmem:[%s268 + $0x60] sm:$0xff]
      %v356 = vld [vmem:[%s268 + $0x68] sm:$0xff]
      %v357 = vld [vmem:[%s268 + $0x70] sm:$0xff]
      %v358 = vld [vmem:[%s268 + $0x78] sm:$0xff]
      %v359 = vadd.f32 %v327, %v343
      %v360 = vadd.f32 %v328, %v344
      %v361 = vadd.f32 %v329, %v345
      %v362 = vadd.f32 %v330, %v346
      %v363 = vadd.f32 %v331, %v347
      %v364 = vadd.f32 %v332, %v348
      %v365 = vadd.f32 %v333, %v349
      %v366 = vadd.f32 %v334, %v350
      %v367 = vadd.f32 %v335, %v351
      %v368 = vadd.f32 %v336, %v352
      %v369 = vadd.f32 %v337, %v353
      %v370 = vadd.f32 %v338, %v354
      %v371 = vadd.f32 %v339, %v355
      %v372 = vadd.f32 %v340, %v356
      %v373 = vadd.f32 %v341, %v357
      %v374 = vadd.f32 %v342, %v358
      %v375 = vmax.f32 %v359, 0.0
      %v376 = vmax.f32 %v360, 0.0
      %v377 = vmax.f32 %v361, 0.0
      %v378 = vmax.f32 %v362, 0.0
      %v379 = vmax.f32 %v363, 0.0
      %v380 = vmax.f32 %v364, 0.0
      %v381 = vmax.f32 %v365, 0.0
      %v382 = vmax.f32 %v366, 0.0
      %v383 = vmax.f32 %v367, 0.0
      %v384 = vmax.f32 %v368, 0.0
      %v385 = vmax.f32 %v369, 0.0
      %v386 = vmax.f32 %v370, 0.0
      %v387 = vmax.f32 %v371, 0.0
      %v388 = vmax.f32 %v372, 0.0
      %v389 = vmax.f32 %v373, 0.0
      %v390 = vmax.f32 %v374, 0.0
      %vm391 = vcmask 31744
      %392 = vst.msk [vmem:[%s279] sm:$0xff] %vm391, %v375
      %393 = vst.msk [vmem:[%s279 + $0x8] sm:$0xff] %vm391, %v376
      %394 = vst.msk [vmem:[%s279 + $0x10] sm:$0xff] %vm391, %v377
      %395 = vst.msk [vmem:[%s279 + $0x18] sm:$0xff] %vm391, %v378
      %396 = vst.msk [vmem:[%s279 + $0x20] sm:$0xff] %vm391, %v379
      %397 = vst.msk [vmem:[%s279 + $0x28] sm:$0xff] %vm391, %v380
      %398 = vst.msk [vmem:[%s279 + $0x30] sm:$0xff] %vm391, %v381
      %399 = vst.msk [vmem:[%s279 + $0x38] sm:$0xff] %vm391, %v382
      %400 = vst.msk [vmem:[%s279 + $0x40] sm:$0xff] %vm391, %v383
      %401 = vst.msk [vmem:[%s279 + $0x48] sm:$0xff] %vm391, %v384
      %402 = vst.msk [vmem:[%s279 + $0x50] sm:$0xff] %vm391, %v385
      %403 = vst.msk [vmem:[%s279 + $0x58] sm:$0xff] %vm391, %v386
      %404 = vst.msk [vmem:[%s279 + $0x60] sm:$0xff] %vm391, %v387
      %405 = vst.msk [vmem:[%s279 + $0x68] sm:$0xff] %vm391, %v388
      %406 = vst.msk [vmem:[%s279 + $0x70] sm:$0xff] %vm391, %v389
      %407 = vst.msk [vmem:[%s279 + $0x78] sm:$0xff] %vm391, %v390
      %s408 = smul.u32 8, %s20
      %p409 = scmp.lt.s32.totalorder %s19, 1
      %s410 = scalar_select %p409, %s19, 1
      %p411 = scmp.lt.s32.totalorder %s408, 15
      %s412 = scalar_select %p411, %s408, 15
      %s413 = smul.addr %s412, 2
      %s414 = smul.addr %s410, 32
      %s415 = sadd.s32 %s413, %s414
      %s416 = smul.addr %s415, 8
      %s417 = scalar_lea.vmem %s4, %s416
      // Predicated region
      $region37: #{residual_block.5} parent=35 // pred_check
        %p418 = pneg %p145
      $region38: #{residual_block.5} parent=35 // pred_check_branch
        %420 = sbr.rel (%p418) target = $region40
      $region39: #{residual_block.5} parent=35 // pred_region
        %s421 = smul.u32 8, %s20
      $region40: #{residual_block.5} parent=35 // pred_fallthru
        _
    $region36: #{residual_block.5} parent=5 // pred_fallthru
      _
    %p422 = scmp.le.s32.totalorder 2, %s10
    // Predicated region
    $region41: #{residual_block.5} parent=5 // pred_check
      %p423 = pneg %p422
    $region42: #{residual_block.5} parent=5 // pred_check_branch
      %425 = sbr.rel (%p423) target = $region44
    $region43: #{residual_block.5} parent=5 // pred_region
      %s426 = ssub.s32 %s10, 2
      // Predicated region
      $region45: #{residual_block.5} parent=43 // pred_check
        %p427 = pneg %p151
      $region46: #{residual_block.5} parent=43 // pred_check_branch
        %429 = sbr.rel (%p427) target = $region48
      $region47: #{residual_block.5} parent=43 // pred_region
        %s430 = smul.u32 8, %s22
        %p431 = scmp.lt.s32.totalorder %s21, 1
        %s432 = scalar_select %p431, %s21, 1
        %p433 = scmp.lt.s32.totalorder %s430, 15
        %s434 = scalar_select %p433, %s430, 15
        %s435 = smul.addr %s434, 2
        %s436 = smul.addr %s432, 32
        %s437 = sadd.s32 %s435, %s436
        %s438 = smul.addr %s437, 8
        %s439 = scalar_lea.vmem %s4, %s438
      $region48: #{residual_block.5} parent=43 // pred_fallthru
        _
    $region44: #{residual_block.5} parent=5 // pred_fallthru
      _
  $region6: #{residual_block.5} parent=0 // loop_footer
    %s14 = sadd.s32 1, %s10
  $region7: #{residual_block.5} parent=0 // loop_footer_branch
    %9 = sbr.rel target = $region3
  $region8: #{residual_block.5} parent=0 // loop_exit
    _

// kernel: residual_block.3
$region0: #{residual_block.3}
  #allocation0 [shape = 'u32[]', space=smem, size = 0x4, offset = 0x4, fixed_abs, tag = 'smem constant byte address 0x4 - core index']
  #allocation1 [shape = 'u32[144,128]{1,0:T(1,128)}', space=vmem, size = 0x12000, scoped, tag = 'internal scratch']
  %s0 = inlined_call_operand.vmem [shape: f32[2,16,16,4], index: 0, kind: input, shape index: {}, may-alias: {0,1,2}]
  %s1 = inlined_call_operand.vmem [shape: f32[2,16,16,4], index: 1, kind: input, shape index: {}, may-alias: {0,1,2}]
  %s2 = inlined_call_operand.vmem [shape: f32[2,16,16,4], index: 2, kind: input, shape index: {}, may-alias: {0,1,2}]
  %s3 = inlined_call_operand.vmem [shape: bf16[5,5,4,4], index: 3, kind: input, shape index: {}]
  %s4 = inlined_call_operand.vmem [shape: f32[1,4], index: 4, kind: input, shape index: {}]
  %s5 = inlined_call_operand.vmem [shape: f32[1,4], index: 5, kind: input, shape index: {}]
  %s6 = inlined_call_operand.vmem [shape: f32[1,4], index: 6, kind: input, shape index: {}]
  %s7 = inlined_call_operand.vmem [shape: f32[2,16,16,4], index: 7, kind: output, shape index: {0}]
  %s8 = inlined_call_operand.vmem [shape: f32[2,2,2,4], index: 8, kind: output, shape index: {1}]
  %9 = xla_tuple %s7, %s8
  %s10 = sld [smem:[#allocation0]]
  $region69: #{residual_block.3} parent=0
    _
  %s12 = ssub.s32 1, %s10
  %s13 = scalar_select 0, %s12, %s10
  loop: start=0, step=1, limit=6
  $region2: #{residual_block.3} parent=0 // loop_pre_header
    _
  $region3: #{residual_block.3} parent=0 // loop_header
    %s15 = sphi 0, %s19
    %p16 = scmp.ge.s32.totalorder %s15, 6
    %s22 = sphi 0, %s34
    %s23 = sphi 0, %s30
    %s24 = sphi 0, %s22
    %s25 = sphi 0, %s23
    %s26 = sphi 0, %s24
    %s27 = sphi 0, %s25
    %s47 = sphi 0, %s49
    %s50 = sphi 0, %s47
    %s51 = sphi 0, %s50
    %s67 = sphi 0, %s51
    %s75 = sphi 0, %s77
    %s78 = sphi 0, %s75
    %s79 = sphi 0, %s78
    %s95 = sphi 0, %s79
    %s111 = sphi 0, %s113
    %s114 = sphi 0, %s111
    %s115 = sphi 0, %s114
    %s131 = sphi 0, %s115
    %s135 = sphi 0, %s135
    %s137 = sphi 0, %s135
    %s138 = sphi 0, %s137
    %s152 = sphi 0, %s138
    %s156 = sphi 0, %s156
    %s158 = sphi 0, %s156
    %s159 = sphi 0, %s158
    %s173 = sphi 0, %s159
    %s177 = sphi 0, %s177
    %s179 = sphi 0, %s177
    %s180 = sphi 0, %s179
    %s194 = sphi 0, %s180
    %s198 = sphi 0, %s198
    %s200 = sphi 0, %s198
    %s201 = sphi 0, %s200
    %s215 = sphi 0, %s201
    %s223 = sphi 0, %s225
    %s226 = sphi 0, %s223
    %s227 = sphi 0, %s226
    %s243 = sphi 0, %s227
    %s251 = sphi 0, %s253
    %s254 = sphi 0, %s251
    %s255 = sphi 0, %s254
    %s271 = sphi 0, %s255
  $region4: #{residual_block.3} parent=0 // loop_header_branch
    %18 = sbr.rel (%p16) target = $region8
  $region5: #{residual_block.3} parent=0 // loop_body
    %s20 = ssub.s32 %s15, 1
    %s21 = ssub.s32 %s15, 2
    %s28 = sadd.s32 1, %s23
    %p29 = scmp.ge.s32.totalorder %s28, 2
    %s30 = scalar_select %p29, 0, %s28
    %s31 = sadd.s32 1, %s22
    %s32 = scalar_select %p29, %s31, %s22
    %p33 = scmp.ge.s32.totalorder %s32, 2
    %s34 = scalar_select %p33, 0, %s32
    %s35 = smul.u32 %s23, 4
    %s36 = ssub.s32 %s35, 1
    %p37 = scmp.gt.s32.totalorder %s36, 0
    %s38 = scalar_select %p37, %s36, 0
    %s39 = smul.u32 %s30, 4
    %s40 = ssub.s32 %s39, 1
    %p41 = scmp.gt.s32.totalorder %s40, 0
    %s42 = scalar_select %p41, %s40, 0
    %s43 = ssub.s32 %s22, %s34
    %s44 = ssub.s32 %s38, %s42
    %s45 = sor.u32 %s43, %s44
    %p46 = scmp.eq.s32.totalorder %s45, 0
    %s48 = sadd.s32 %s47, 1
    %s49 = scalar_select %p46, %s47, %s48
    %p52 = pneg %p46
    %p53 = scmp.eq.s32.totalorder %s15, 3
    %p54 = por %p52, %p53
    %p55 = scmp.ne.s32.totalorder %s47, %s50
    %p56 = scmp.eq.s32.totalorder %s15, 0
    %p57 = por %p55, %p56
    %p58 = scmp.ne.s32.totalorder %s47, %s50
    %p59 = scmp.eq.s32.totalorder %s20, 3
    %p60 = por %p58, %p59
    %p61 = scmp.ne.s32.totalorder %s50, %s51
    %p62 = scmp.eq.s32.totalorder %s20, 0
    %p63 = por %p61, %p62
    %p64 = scmp.ne.s32.totalorder %s50, %s51
    %p65 = scmp.eq.s32.totalorder %s21, 3
    %p66 = por %p64, %p65
    %p68 = scmp.ne.s32.totalorder %s51, %s67
    %p69 = scmp.eq.s32.totalorder %s21, 0
    %p70 = por %p68, %p69
    %s71 = ssub.s32 %s22, %s34
    %s72 = ssub.s32 %s23, %s30
    %s73 = sor.u32 %s71, %s72
    %p74 = scmp.eq.s32.totalorder %s73, 0
    %s76 = sadd.s32 %s75, 1
    %s77 = scalar_select %p74, %s75, %s76
    %p80 = pneg %p74
    %p81 = scmp.eq.s32.totalorder %s15, 3
    %p82 = por %p80, %p81
    %p83 = scmp.ne.s32.totalorder %s75, %s78
    %p84 = scmp.eq.s32.totalorder %s15, 0
    %p85 = por %p83, %p84
    %p86 = scmp.ne.s32.totalorder %s75, %s78
    %p87 = scmp.eq.s32.totalorder %s20, 3
    %p88 = por %p86, %p87
    %p89 = scmp.ne.s32.totalorder %s78, %s79
    %p90 = scmp.eq.s32.totalorder %s20, 0
    %p91 = por %p89, %p90
    %p92 = scmp.ne.s32.totalorder %s78, %s79
    %p93 = scmp.eq.s32.totalorder %s21, 3
    %p94 = por %p92, %p93
    %p96 = scmp.ne.s32.totalorder %s79, %s95
    %p97 = scmp.eq.s32.totalorder %s21, 0
    %p98 = por %p96, %p97
    %s99 = sadd.s32 %s23, 1
    %s100 = smul.u32 %s99, 4
    %p101 = scmp.lt.s32.totalorder %s100, 7
    %s102 = scalar_select %p101, %s100, 7
    %s103 = sadd.s32 %s30, 1
    %s104 = smul.u32 %s103, 4
    %p105 = scmp.lt.s32.totalorder %s104, 7
    %s106 = scalar_select %p105, %s104, 7
    %s107 = ssub.s32 %s22, %s34
    %s108 = ssub.s32 %s102, %s106
    %s109 = sor.u32 %s107, %s108
    %p110 = scmp.eq.s32.totalorder %s109, 0
    %s112 = sadd.s32 %s111, 1
    %s113 = scalar_select %p110, %s111, %s112
    %p116 = pneg %p110
    %p117 = scmp.eq.s32.totalorder %s15, 3
    %p118 = por %p116, %p117
    %p119 = scmp.ne.s32.totalorder %s111, %s114
    %p120 = scmp.eq.s32.totalorder %s15, 0
    %p121 = por %p119, %p120
    %p122 = scmp.ne.s32.totalorder %s111, %s114
    %p123 = scmp.eq.s32.totalorder %s20, 3
    %p124 = por %p122, %p123
    %p125 = scmp.ne.s32.totalorder %s114, %s115
    %p126 = scmp.eq.s32.totalorder %s20, 0
    %p127 = por %p125, %p126
    %p128 = scmp.ne.s32.totalorder %s114, %s115
    %p129 = scmp.eq.s32.totalorder %s21, 3
    %p130 = por %p128, %p129
    %p132 = scmp.ne.s32.totalorder %s115, %s131
    %p133 = scmp.eq.s32.totalorder %s21, 0
    %p134 = por %p132, %p133
    %s136 = sadd.s32 %s135, 1
    %p139 = scmp.eq.s32.totalorder %s15, 3
    %p140 = scmp.ne.s32.totalorder %s135, %s137
    %p141 = scmp.eq.s32.totalorder %s15, 0
    %p142 = por %p140, %p141
    %p143 = scmp.ne.s32.totalorder %s135, %s137
    %p144 = scmp.eq.s32.totalorder %s20, 3
    %p145 = por %p143, %p144
    %p146 = scmp.ne.s32.totalorder %s137, %s138
    %p147 = scmp.eq.s32.totalorder %s20, 0
    %p148 = por %p146, %p147
    %p149 = scmp.ne.s32.totalorder %s137, %s138
    %p150 = scmp.eq.s32.totalorder %s21, 3
    %p151 = por %p149, %p150
    %p153 = scmp.ne.s32.totalorder %s138, %s152
    %p154 = scmp.eq.s32.totalorder %s21, 0
    %p155 = por %p153, %p154
    %s157 = sadd.s32 %s156, 1
    %p160 = scmp.eq.s32.totalorder %s15, 3
    %p161 = scmp.ne.s32.totalorder %s156, %s158
    %p162 = scmp.eq.s32.totalorder %s15, 0
    %p163 = por %p161, %p162
    %p164 = scmp.ne.s32.totalorder %s156, %s158
    %p165 = scmp.eq.s32.totalorder %s20, 3
    %p166 = por %p164, %p165
    %p167 = scmp.ne.s32.totalorder %s158, %s159
    %p168 = scmp.eq.s32.totalorder %s20, 0
    %p169 = por %p167, %p168
    %p170 = scmp.ne.s32.totalorder %s158, %s159
    %p171 = scmp.eq.s32.totalorder %s21, 3
    %p172 = por %p170, %p171
    %p174 = scmp.ne.s32.totalorder %s159, %s173
    %p175 = scmp.eq.s32.totalorder %s21, 0
    %p176 = por %p174, %p175
    %s178 = sadd.s32 %s177, 1
    %p181 = scmp.eq.s32.totalorder %s15, 3
    %p182 = scmp.ne.s32.totalorder %s177, %s179
    %p183 = scmp.eq.s32.totalorder %s15, 0
    %p184 = por %p182, %p183
    %p185 = scmp.ne.s32.totalorder %s177, %s179
    %p186 = scmp.eq.s32.totalorder %s20, 3
    %p187 = por %p185, %p186
    %p188 = scmp.ne.s32.totalorder %s179, %s180
    %p189 = scmp.eq.s32.totalorder %s20, 0
    %p190 = por %p188, %p189
    %p191 = scmp.ne.s32.totalorder %s179, %s180
    %p192 = scmp.eq.s32.totalorder %s21, 3
    %p193 = por %p191, %p192
    %p195 = scmp.ne.s32.totalorder %s180, %s194
    %p196 = scmp.eq.s32.totalorder %s21, 0
    %p197 = por %p195, %p196
    %s199 = sadd.s32 %s198, 1
    %p202 = scmp.eq.s32.totalorder %s15, 3
    %p203 = scmp.ne.s32.totalorder %s198, %s200
    %p204 = scmp.eq.s32.totalorder %s15, 0
    %p205 = por %p203, %p204
    %p206 = scmp.ne.s32.totalorder %s198, %s200
    %p207 = scmp.eq.s32.totalorder %s20, 3
    %p208 = por %p206, %p207
    %p209 = scmp.ne.s32.totalorder %s200, %s201
    %p210 = scmp.eq.s32.totalorder %s20, 0
    %p211 = por %p209, %p210
    %p212 = scmp.ne.s32.totalorder %s200, %s201
    %p213 = scmp.eq.s32.totalorder %s21, 3
    %p214 = por %p212, %p213
    %p216 = scmp.ne.s32.totalorder %s201, %s215
    %p217 = scmp.eq.s32.totalorder %s21, 0
    %p218 = por %p216, %p217
    %s219 = ssub.s32 %s22, %s34
    %s220 = ssub.s32 %s23, %s30
    %s221 = sor.u32 %s219, %s220
    %p222 = scmp.eq.s32.totalorder %s221, 0
    %s224 = sadd.s32 %s223, 1
    %s225 = scalar_select %p222, %s223, %s224
    %p228 = pneg %p222
    %p229 = scmp.eq.s32.totalorder %s15, 3
    %p230 = por %p228, %p229
    %p231 = scmp.ne.s32.totalorder %s223, %s226
    %p232 = scmp.eq.s32.totalorder %s15, 0
    %p233 = por %p231, %p232
    %p234 = scmp.ne.s32.totalorder %s223, %s226
    %p235 = scmp.eq.s32.totalorder %s20, 3
    %p236 = por %p234, %p235
    %p237 = scmp.ne.s32.totalorder %s226, %s227
    %p238 = scmp.eq.s32.totalorder %s20, 0
    %p239 = por %p237, %p238
    %p240 = scmp.ne.s32.totalorder %s226, %s227
    %p241 = scmp.eq.s32.totalorder %s21, 3
    %p242 = por %p240, %p241
    %p244 = scmp.ne.s32.totalorder %s227, %s243
    %p245 = scmp.eq.s32.totalorder %s21, 0
    %p246 = por %p244, %p245
    %s247 = ssub.s32 %s22, %s34
    %s248 = ssub.s32 %s23, %s30
    %s249 = sor.u32 %s247, %s248
    %p250 = scmp.eq.s32.totalorder %s249, 0
    %s252 = sadd.s32 %s251, 1
    %s253 = scalar_select %p250, %s251, %s252
    %p256 = pneg %p250
    %p257 = scmp.eq.s32.totalorder %s15, 3
    %p258 = por %p256, %p257
    %p259 = scmp.ne.s32.totalorder %s251, %s254
    %p260 = scmp.eq.s32.totalorder %s15, 0
    %p261 = por %p259, %p260
    %p262 = scmp.ne.s32.totalorder %s251, %s254
    %p263 = scmp.eq.s32.totalorder %s20, 3
    %p264 = por %p262, %p263
    %p265 = scmp.ne.s32.totalorder %s254, %s255
    %p266 = scmp.eq.s32.totalorder %s20, 0
    %p267 = por %p265, %p266
    %p268 = scmp.ne.s32.totalorder %s254, %s255
    %p269 = scmp.eq.s32.totalorder %s21, 3
    %p270 = por %p268, %p269
    %p272 = scmp.ne.s32.totalorder %s255, %s271
    %p273 = scmp.eq.s32.totalorder %s21, 0
    %p274 = por %p272, %p273
    %p275 = scmp.le.s32.totalorder 1, %s15
    %p276 = scmp.lt.s32.totalorder %s15, 5
    %p277 = pnand %p275, %p276
    %p278 = pneg %p277
    // Predicated region
    $region9: #{residual_block.3} parent=5 // pred_check
      _
    $region10: #{residual_block.3} parent=5 // pred_check_branch
      %280 = sbr.rel (%p277) target = $region12
    $region11: #{residual_block.3} parent=5 // pred_region
      %s281 = ssub.s32 %s15, 1
      // Predicated region
      $region13: #{residual_block.3} parent=11 // pred_check
        %p282 = pneg %p148
      $region14: #{residual_block.3} parent=11 // pred_check_branch
        %284 = sbr.rel (%p282) target = $region16
      $region15: #{residual_block.3} parent=11 // pred_region
        _
      $region16: #{residual_block.3} parent=11 // pred_fallthru
        _
      // Predicated region
      $region17: #{residual_block.3} parent=11 // pred_check
        %p285 = pneg %p169
      $region18: #{residual_block.3} parent=11 // pred_check_branch
        %287 = sbr.rel (%p285) target = $region20
      $region19: #{residual_block.3} parent=11 // pred_region
        _
      $region20: #{residual_block.3} parent=11 // pred_fallthru
        _
      // Predicated region
      $region21: #{residual_block.3} parent=11 // pred_check
        %p288 = pneg %p190
      $region22: #{residual_block.3} parent=11 // pred_check_branch
        %290 = sbr.rel (%p288) target = $region24
      $region23: #{residual_block.3} parent=11 // pred_region
        _
      $region24: #{residual_block.3} parent=11 // pred_fallthru
        _
      // Predicated region
      $region25: #{residual_block.3} parent=11 // pred_check
        %p291 = pneg %p211
      $region26: #{residual_block.3} parent=11 // pred_check_branch
        %293 = sbr.rel (%p291) target = $region28
      $region27: #{residual_block.3} parent=11 // pred_region
        _
      $region28: #{residual_block.3} parent=11 // pred_fallthru
        _
    $region12: #{residual_block.3} parent=5 // pred_fallthru
      _
    %p294 = scmp.lt.s32.totalorder %s15, 4
    // Predicated region
    $region29: #{residual_block.3} parent=5 // pred_check
      %p295 = pneg %p294
    $region30: #{residual_block.3} parent=5 // pred_check_branch
      %297 = sbr.rel (%p295) target = $region32
    $region31: #{residual_block.3} parent=5 // pred_region
      // Predicated region
      $region33: #{residual_block.3} parent=31 // pred_check
        %p298 = pneg %p57
      $region34: #{residual_block.3} parent=31 // pred_check_branch
        %300 = sbr.rel (%p298) target = $region36
      $region35: #{residual_block.3} parent=31 // pred_region
        %s301 = smul.u32 %s23, 4
        %s302 = ssub.s32 %s301, 1
        %p303 = scmp.gt.s32.totalorder %s302, 0
        %s304 = scalar_select %p303, %s302, 0
        %s305 = smul.u32 2, %s304
        %p306 = scmp.lt.s32.totalorder %s22, 1
        %s307 = scalar_select %p306, %s22, 1
        %p308 = scmp.lt.s32.totalorder %s305, 15
        %s309 = scalar_select %p308, %s305, 15
        %s310 = smul.addr %s309, 2
        %s311 = smul.addr %s307, 32
        %s312 = sadd.s32 %s310, %s311
        %s313 = smul.addr %s312, 8
        %s314 = scalar_lea.vmem %s0, %s313
        %s315 = smul.u32 %s23, 4
        %s316 = ssub.s32 %s315, 1
        %p317 = scmp.gt.s32.totalorder %s316, 0
        %s318 = scalar_select %p317, %s316, 0
        %s319 = smul.u32 2, %s318
      $region36: #{residual_block.3} parent=31 // pred_fallthru
        _
      // Predicated region
      $region37: #{residual_block.3} parent=31 // pred_check
        %p320 = pneg %p85
      $region38: #{residual_block.3} parent=31 // pred_check_branch
        %322 = sbr.rel (%p320) target = $region40
      $region39: #{residual_block.3} parent=31 // pred_region
        %s323 = smul.u32 8, %s23
        %p324 = scmp.lt.s32.totalorder %s22, 1
        %s325 = scalar_select %p324, %s22, 1
        %p326 = scmp.lt.s32.totalorder %s323, 15
        %s327 = scalar_select %p326, %s323, 15
        %s328 = smul.addr %s327, 2
        %s329 = smul.addr %s325, 32
        %s330 = sadd.s32 %s328, %s329
        %s331 = smul.addr %s330, 8
        %s332 = scalar_lea.vmem %s1, %s331
        %s333 = smul.u32 8, %s23
      $region40: #{residual_block.3} parent=31 // pred_fallthru
        _
      // Predicated region
      $region41: #{residual_block.3} parent=31 // pred_check
        %p334 = pneg %p121
      $region42: #{residual_block.3} parent=31 // pred_check_branch
        %336 = sbr.rel (%p334) target = $region44
      $region43: #{residual_block.3} parent=31 // pred_region
        %s337 = sadd.s32 %s23, 1
        %s338 = smul.u32 %s337, 4
        %p339 = scmp.lt.s32.totalorder %s338, 7
        %s340 = scalar_select %p339, %s338, 7
        %s341 = smul.u32 2, %s340
        %p342 = scmp.lt.s32.totalorder %s22, 1
        %s343 = scalar_select %p342, %s22, 1
        %p344 = scmp.lt.s32.totalorder %s341, 15
        %s345 = scalar_select %p344, %s341, 15
        %s346 = smul.addr %s345, 2
        %s347 = smul.addr %s343, 32
        %s348 = sadd.s32 %s346, %s347
        %s349 = smul.addr %s348, 8
        %s350 = scalar_lea.vmem %s2, %s349
        %s351 = sadd.s32 %s23, 1
        %s352 = smul.u32 %s351, 4
        %p353 = scmp.lt.s32.totalorder %s352, 7
        %s354 = scalar_select %p353, %s352, 7
        %s355 = smul.u32 2, %s354
      $region44: #{residual_block.3} parent=31 // pred_fallthru
        _
    $region32: #{residual_block.3} parent=5 // pred_fallthru
      _
    %p356 = scmp.le.s32.totalorder 1, %s15
    %p357 = scmp.lt.s32.totalorder %s15, 5
    %p358 = pnand %p356, %p357
    %p359 = pneg %p358
    // Predicated region
    $region45: #{residual_block.3} parent=5 // pred_check
      _
    $region46: #{residual_block.3} parent=5 // pred_check_branch
      %361 = sbr.rel (%p358) target = $region48
    $region47: #{residual_block.3} parent=5 // pred_region
      %s362 = ssub.s32 %s15, 1
      %s363 = smul.u32 %s25, 4
      %s364 = ssub.s32 %s363, 1
      %p365 = scmp.gt.s32.totalorder %s364, 0
      %s366 = scalar_select %p365, %s364, 0
      %s367 = smul.u32 2, %s366
      %p368 = scmp.lt.s32.totalorder %s24, 1
      %s369 = scalar_select %p368, %s24, 1
      %p370 = scmp.lt.s32.totalorder %s367, 15
      %s371 = scalar_select %p370, %s367, 15
      %s372 = smul.addr %s371, 2
      %s373 = smul.addr %s369, 32
      %s374 = sadd.s32 %s372, %s373
      %s375 = smul.addr %s374, 8
      %s376 = scalar_lea.vmem %s0, %s375
      %p377 = pneg %p63
      %p378 = pneg %p60
      %s379 = smul.u32 8, %s25
      %p380 = scmp.lt.s32.totalorder %s24, 1
      %s381 = scalar_select %p380, %s24, 1
      %p382 = scmp.lt.s32.totalorder %s379, 15
      %s383 = scalar_select %p382, %s379, 15
      %s384 = smul.addr %s383, 2
      %s385 = smul.addr %s381, 32
      %s386 = sadd.s32 %s384, %s385
      %s387 = smul.addr %s386, 8
      %s388 = scalar_lea.vmem %s1, %s387
      %p389 = pneg %p91
      %p390 = pneg %p88
      %s391 = sadd.s32 %s25, 1
      %s392 = smul.u32 %s391, 4
      %p393 = scmp.lt.s32.totalorder %s392, 7
      %s394 = scalar_select %p393, %s392, 7
      %s395 = smul.u32 2, %s394
      %p396 = scmp.lt.s32.totalorder %s24, 1
      %s397 = scalar_select %p396, %s24, 1
      %p398 = scmp.lt.s32.totalorder %s395, 15
      %s399 = scalar_select %p398, %s395, 15
      %s400 = smul.addr %s399, 2
      %s401 = smul.addr %s397, 32
      %s402 = sadd.s32 %s400, %s401
      %s403 = smul.addr %s402, 8
      %s404 = scalar_lea.vmem %s2, %s403
      %p405 = pneg %p127
      %p406 = pneg %p124
      %p407 = pneg %p148
      %p408 = pneg %p145
      %p409 = pneg %p169
      %p410 = pneg %p166
      %p411 = pneg %p190
      %p412 = pneg %p187
      %p413 = pneg %p211
      %p414 = pneg %p208
      %p415 = pneg %p239
      %p416 = pneg %p236
      %s417 = smul.u32 8, %s25
      %p418 = scmp.lt.s32.totalorder %s24, 1
      %s419 = scalar_select %p418, %s24, 1
      %p420 = scmp.lt.s32.totalorder %s417, 15
      %s421 = scalar_select %p420, %s417, 15
      %s422 = smul.addr %s421, 2
      %s423 = smul.addr %s419, 32
      %s424 = sadd.s32 %s422, %s423
      %s425 = smul.addr %s424, 8
      %s426 = scalar_lea.vmem %s7, %s425
      %p427 = pneg %p267
      %p428 = pneg %p264
      %p429 = scmp.lt.s32.totalorder %s24, 1
      %s430 = scalar_select %p429, %s24, 1
      %p431 = scmp.lt.s32.totalorder %s25, 1
      %s432 = scalar_select %p431, %s25, 1
      %s433 = smul.addr %s430, 2
      %s434 = sadd.s32 %s432, %s433
      %s435 = smul.addr %s434, 2
      %s436 = scalar_lea.vmem %s8, %s435
      %s437 = smul.u32 %s25, 4
      %s438 = ssub.s32 %s437, 1
      %p439 = scmp.gt.s32.totalorder %s438, 0
      %s440 = scalar_select %p439, %s438, 0
      %s441 = smul.u32 2, %s440
      %p442 = scmp.lt.s32.totalorder %s24, 1
      %s443 = scalar_select %p442, %s24, 1
      %p444 = scmp.lt.s32.totalorder %s441, 15
      %s445 = scalar_select %p444, %s441, 15
      %s446 = smul.addr %s445, 2
      %s447 = smul.addr %s443, 32
      %s448 = sadd.s32 %s446, %s447
      %s449 = smul.addr %s448, 8
      %s450 = scalar_lea.vmem %s0, %s449
      %s451 = smul.u32 %s25, 4
      %s452 = ssub.s32 %s451, 1
      %p453 = scmp.gt.s32.totalorder %s452, 0
      %s454 = scalar_select %p453, %s452, 0
      %s455 = smul.u32 2, %s454
      %s456 = smul.u32 8, %s25
      %p457 = scmp.lt.s32.totalorder %s24, 1
      %s458 = scalar_select %p457, %s24, 1
      %p459 = scmp.lt.s32.totalorder %s456, 15
      %s460 = scalar_select %p459, %s456, 15
      %s461 = smul.addr %s460, 2
      %s462 = smul.addr %s458, 32
      %s463 = sadd.s32 %s461, %s462
      %s464 = smul.addr %s463, 8
      %s465 = scalar_lea.vmem %s1, %s464
      %s466 = smul.u32 8, %s25
      %s467 = sadd.s32 %s25, 1
      %s468 = smul.u32 %s467, 4
      %p469 = scmp.lt.s32.totalorder %s468, 7
      %s470 = scalar_select %p469, %s468, 7
      %s471 = smul.u32 2, %s470
      %p472 = scmp.lt.s32.totalorder %s24, 1
      %s473 = scalar_select %p472, %s24, 1
      %p474 = scmp.lt.s32.totalorder %s471, 15
      %s475 = scalar_select %p474, %s471, 15
      %s476 = smul.addr %s475, 2
      %s477 = smul.addr %s473, 32
      %s478 = sadd.s32 %s476, %s477
      %s479 = smul.addr %s478, 8
      %s480 = scalar_lea.vmem %s2, %s479
      %s481 = sadd.s32 %s25, 1
      %s482 = smul.u32 %s481, 4
      %p483 = scmp.lt.s32.totalorder %s482, 7
      %s484 = scalar_select %p483, %s482, 7
      %s485 = smul.u32 2, %s484
      %s486 = smul.u32 8, %s25
      %p487 = scmp.lt.s32.totalorder %s24, 1
      %s488 = scalar_select %p487, %s24, 1
      %p489 = scmp.lt.s32.totalorder %s486, 15
      %s490 = scalar_select %p489, %s486, 15
      %s491 = smul.addr %s490, 2
      %s492 = smul.addr %s488, 32
      %s493 = sadd.s32 %s491, %s492
      %s494 = smul.addr %s493, 8
      %s495 = scalar_lea.vmem %s7, %s494
      %s496 = smul.u32 8, %s25
      %p497 = scmp.lt.s32.totalorder %s24, 1
      %s498 = scalar_select %p497, %s24, 1
      %p499 = scmp.lt.s32.totalorder %s25, 1
      %s500 = scalar_select %p499, %s25, 1
      %s501 = smul.addr %s498, 2
      %s502 = sadd.s32 %s500, %s501
      %s503 = smul.addr %s502, 2
      %s504 = scalar_lea.vmem %s8, %s503
      %v506 = vld [vmem:[%s450] sm:$0xff]
      %v507 = vld [vmem:[%s450 + $0x8] sm:$0xff]
      %v508 = vld [vmem:[%s450 + $0x10] sm:$0xff]
      %v509 = vld [vmem:[%s450 + $0x18] sm:$0xff]
      %p510 = scmp.gt.s32.totalorder %s25, 0
      %s511 = scalar_select %p510, 1, 0
      %s512 = scvt.s32.f32 %s511
      %v513 = vstv %s512
      %v514 = vmul.f32 %v506, %v513
      %v515 = vmul.f32 %v507, %v513
      %v516 = vmul.f32 %v508, %v513
      %v517 = vmul.f32 %v509, %v513
      %v518 = vld [vmem:[%s480] sm:$0xff]
      %v519 = vld [vmem:[%s480 + $0x8] sm:$0xff]
      %v520 = vld [vmem:[%s480 + $0x10] sm:$0xff]
      %v521 = vld [vmem:[%s480 + $0x18] sm:$0xff]
      %p522 = scmp.lt.s32.totalorder %s25, 1
      %s523 = scalar_select %p522, 1, 0
      %s524 = scvt.s32.f32 %s523
      %v525 = vstv %s524
      %v526 = vmul.f32 %v518, %v525
      %v527 = vmul.f32 %v519, %v525
      %v528 = vmul.f32 %v520, %v525
      %v529 = vmul.f32 %v521, %v525
      %v530 = vld [vmem:[%s465] sm:$0xff]
      %v531 = vld [vmem:[%s465 + $0x8] sm:$0xff]
      %v532 = vld [vmem:[%s465 + $0x10] sm:$0xff]
      %v533 = vld [vmem:[%s465 + $0x18] sm:$0xff]
      %v534 = vld [vmem:[%s465 + $0x20] sm:$0xff]
      %v535 = vld [vmem:[%s465 + $0x28] sm:$0xff]
      %v536 = vld [vmem:[%s465 + $0x30] sm:$0xff]
      %v537 = vld [vmem:[%s465 + $0x38] sm:$0xff]
      %v538 = vld [vmem:[%s465 + $0x40] sm:$0xff]
      %v539 = vld [vmem:[%s465 + $0x48] sm:$0xff]
      %v540 = vld [vmem:[%s465 + $0x50] sm:$0xff]
      %v541 = vld [vmem:[%s465 + $0x58] sm:$0xff]
      %v542 = vld [vmem:[%s465 + $0x60] sm:$0xff]
      %v543 = vld [vmem:[%s465 + $0x68] sm:$0xff]
      %v544 = vld [vmem:[%s465 + $0x70] sm:$0xff]
      %v545 = vld [vmem:[%s465 + $0x78] sm:$0xff]
      %vm570 = vcmask 1041408
      %v571 = vrot.slane %v514, 6
      %v572 = vrot.slane %v515, 6
      %v573 = vsel %vm570, %v571, %v572
      %v574 = vrot.slane %v516, 6
      %v575 = vrot.slane %v517, 6
      %v576 = vsel %vm570, %v574, %v575
      %v577 = vrot.slane %v530, 6
      %v578 = vrot.slane %v531, 6
      %v579 = vsel %vm570, %v577, %v578
      %v580 = vrot.slane %v532, 6
      %v581 = vrot.slane %v533, 6
      %v582 = vsel %vm570, %v580, %v581
      %v583 = vrot.slane %v534, 6
      %v584 = vrot.slane %v535, 6
      %v585 = vsel %vm570, %v583, %v584
      %v586 = vrot.slane %v536, 6
      %v587 = vrot.slane %v537, 6
      %v588 = vsel %vm570, %v586, %v587
      %v589 = vrot.slane %v538, 6
      %v590 = vrot.slane %v539, 6
      %v591 = vsel %vm570, %v589, %v590
      %v592 = vrot.slane %v540, 6
      %v593 = vrot.slane %v541, 6
      %v594 = vsel %vm570, %v592, %v593
      %v595 = vrot.slane %v542, 6
      %v596 = vrot.slane %v543, 6
      %v597 = vsel %vm570, %v595, %v596
      %v598 = vrot.slane %v544, 6
      %v599 = vrot.slane %v545, 6
      %v600 = vsel %vm570, %v598, %v599
      %v601 = vrot.slane %v526, 6
      %v602 = vrot.slane %v527, 6
      %v603 = vsel %vm570, %v601, %v602
      %v604 = vrot.slane %v528, 6
      %v605 = vrot.slane %v529, 6
      %v606 = vsel %vm570, %v604, %v605
      %v631 = vsel %vm570, 0.0, %v571
      %v632 = vsel %vm570, 0.0, %v574
      %v633 = vsel %vm570, 0.0, %v577
      %v634 = vsel %vm570, 0.0, %v580
      %v635 = vsel %vm570, 0.0, %v583
      %v636 = vsel %vm570, 0.0, %v586
      %v637 = vsel %vm570, 0.0, %v589
      %v638 = vsel %vm570, 0.0, %v592
      %v639 = vsel %vm570, 0.0, %v595
      %v640 = vsel %vm570, 0.0, %v598
      %v641 = vsel %vm570, 0.0, %v601
      %v642 = vsel %vm570, 0.0, %v604
      %v643 = vpack.c.bf16 %v573, %v631
      %v644 = vpack.c.bf16 %v576, %v632
      %v645 = vpack.c.bf16 %v579, %v633
      %v646 = vpack.c.bf16 %v582, %v634
      %v647 = vpack.c.bf16 %v585, %v635
      %v648 = vpack.c.bf16 %v588, %v636
      %v649 = vpack.c.bf16 %v591, %v637
      %v650 = vpack.c.bf16 %v594, %v638
      %v651 = vpack.c.bf16 %v597, %v639
      %v652 = vpack.c.bf16 %v600, %v640
      %v653 = vpack.c.bf16 %v603, %v641
      %v654 = vpack.c.bf16 %v606, %v642
      %v655 = vld [vmem:[%s3] sm:$0x3]
      %s656 = scalar_lea.vmem %s3, 10
      %v657 = vld [vmem:[%s656] sm:$0x3]
      %vm658 = vcmask 31744
      %v660 = vsel %vm658, %v644, 0
      %v663 = vsel %vm658, %v645, 0
      %v666 = vsel %vm658, %v646, 0
      %v669 = vsel %vm658, %v647, 0
      %v672 = vsel %vm658, %v648, 0
      %v675 = vsel %vm658, %v649, 0
      %v678 = vsel %vm658, %v650, 0
      %v681 = vsel %vm658, %v651, 0
      %v684 = vsel %vm570, %v657, 0
      %686 = vmatprep.subr.bf16.mxu0 0
      %687 = vmatpush1.bf16.msra.mxu0 %v684
      %688 = vmatprep.subr.bf16.mxu0 0
      %689 = vmatpush1.bf16.msra.mxu0 0
      %690 = vmatprep.subr.bf16.mxu0 0
      %691 = vmatpush1.bf16.msra.mxu0 0
      %692 = vmatprep.subr.bf16.mxu0 0
      %693 = vmatpush1.bf16.msra.mxu0 0
      %694 = vmatprep.subr.bf16.mxu0 0
      %695 = vmatpush1.bf16.msra.mxu0 0
      %696 = vmatprep.subr.bf16.mxu0 0
      %697 = vmatpush1.bf16.msra.mxu0 0
      %698 = vmatprep.subr.bf16.mxu0 0
      %699 = vmatpush1.bf16.msra.mxu0 0
      %700 = vmatprep.subr.bf16.mxu0 0
      %701 = vmatpush1.bf16.msra.mxu0 0
      %702 = vmatprep.subr.bf16.mxu0 0
      %703 = vmatpush1.bf16.msra.mxu0 0
      %704 = vmatprep.subr.bf16.mxu0 0
      %705 = vmatpush1.bf16.msra.mxu0 0
      %706 = vmatprep.subr.bf16.mxu0 0
      %707 = vmatpush1.bf16.msra.mxu0 0
      %708 = vmatprep.subr.bf16.mxu0 0
      %709 = vmatpush1.bf16.msra.mxu0 0
      %710 = vmatprep.subr.bf16.mxu0 0
      %711 = vmatpush1.bf16.msra.mxu0 0
      %712 = vmatprep.subr.bf16.mxu0 0
      %713 = vmatpush1.bf16.msra.mxu0 0
      %714 = vmatprep.subr.bf16.mxu0 0
      %715 = vmatpush1.bf16.msra.mxu0 0
      %716 = vmatprep.subr.bf16.mxu0 0
      %717 = vmatpush1.bf16.msra.mxu0 0
      %718 = vmatprep.mubr.bf16.mxu0 0
      %719 = vmatmul.mubr.bf16.gmra.mrb[0].mxu0 %v660
      %v720 = vpop.f32.mrb[0].mxu0
      %v721 = vadd.f32 0.0, %v720
      %v722 = vpop.f32.mrb[0].mxu0
      %v723 = vpop.f32.mrb[0].mxu0
      %v724 = vadd.f32 0.0, %v723
      %v725 = vpop.f32.mrb[0].mxu0
      %726 = vmatprep.mubr.bf16.mxu0 0
      %727 = vmatmul.mubr.bf16.gmra.mrb[0].mxu0 %v663
      %v728 = vpop.f32.mrb[0].mxu0
      %v729 = vadd.f32 0.0, %v728
      %v730 = vpop.f32.mrb[0].mxu0
      %v731 = vpop.f32.mrb[0].mxu0
      %v732 = vadd.f32 0.0, %v731
      %v733 = vpop.f32.mrb[0].mxu0
      %734 = vmatprep.mubr.bf16.mxu0 0
      %735 = vmatmul.mubr.bf16.gmra.mrb[0].mxu0 %v666
      %v736 = vpop.f32.mrb[0].mxu0
      %v737 = vadd.f32 0.0, %v736
      %v738 = vpop.f32.mrb[0].mxu0
      %v739 = vpop.f32.mrb[0].mxu0
      %v740 = vadd.f32 0.0, %v739
      %v741 = vpop.f32.mrb[0].mxu0
      %742 = vmatprep.mubr.bf16.mxu0 0
      %743 = vmatmul.mubr.bf16.gmra.mrb[0].mxu0 %v669
      %v744 = vpop.f32.mrb[0].mxu0
      %v745 = vadd.f32 0.0, %v744
      %v746 = vpop.f32.mrb[0].mxu0
      %v747 = vpop.f32.mrb[0].mxu0
      %v748 = vadd.f32 0.0, %v747
      %v749 = vpop.f32.mrb[0].mxu0
      %750 = vmatprep.mubr.bf16.mxu0 0
      %751 = vmatmul.mubr.bf16.gmra.mrb[0].mxu0 %v672
      %v752 = vpop.f32.mrb[0].mxu0
      %v753 = vadd.f32 0.0, %v752
      %v754 = vpop.f32.mrb[0].mxu0
      %v755 = vpop.f32.mrb[0].mxu0
      %v756 = vadd.f32 0.0, %v755
      %v757 = vpop.f32.mrb[0].mxu0
      %758 = vmatprep.mubr.bf16.mxu0 0
      %759 = vmatmul.mubr.bf16.gmra.mrb[0].mxu0 %v675
      %v760 = vpop.f32.mrb[0].mxu0
      %v761 = vadd.f32 0.0, %v760
      %v762 = vpop.f32.mrb[0].mxu0
      %v763 = vpop.f32.mrb[0].mxu0
      %v764 = vadd.f32 0.0, %v763
      %v765 = vpop.f32.mrb[0].mxu0
      %766 = vmatprep.mubr.bf16.mxu0 0
      %767 = vmatmul.mubr.bf16.gmra.mrb[0].mxu0 %v678
      %v768 = vpop.f32.mrb[0].mxu0
      %v769 = vadd.f32 0.0, %v768
      %v770 = vpop.f32.mrb[0].mxu0
      %v771 = vpop.f32.mrb[0].mxu0
      %v772 = vadd.f32 0.0, %v771
      %v773 = vpop.f32.mrb[0].mxu0
      %774 = vmatprep.mubr.bf16.mxu0 0
      %775 = vmatmul.mubr.bf16.gmra.mrb[0].mxu0 %v681
      %v776 = vpop.f32.mrb[0].mxu0
      %v777 = vadd.f32 0.0, %v776
      %v778 = vpop.f32.mrb[0].mxu0
      %v779 = vpop.f32.mrb[0].mxu0
      %v780 = vadd.f32 0.0, %v779
      %v781 = vpop.f32.mrb[0].mxu0
      %782 = vdwg.mxu0
      %v784 = vsel %vm658, %v643, 0
      %v787 = vsel %vm570, %v655, 0
      %789 = vmatprep.subr.bf16.mxu0 0
      %790 = vmatpush1.bf16.msra.mxu0 %v787
      %791 = vmatprep.subr.bf16.mxu0 0
      %792 = vmatpush1.bf16.msra.mxu0 0
      %793 = vmatprep.subr.bf16.mxu0 0
      %794 = vmatpush1.bf16.msra.mxu0 0
      %795 = vmatprep.subr.bf16.mxu0 0
      %796 = vmatpush1.bf16.msra.mxu0 0
      %797 = vmatprep.subr.bf16.mxu0 0
      %798 = vmatpush1.bf16.msra.mxu0 0
      %799 = vmatprep.subr.bf16.mxu0 0
      %800 = vmatpush1.bf16.msra.mxu0 0
      %801 = vmatprep.subr.bf16.mxu0 0
      %802 = vmatpush1.bf16.msra.mxu0 0
      %803 = vmatprep.subr.bf16.mxu0 0
      %804 = vmatpush1.bf16.msra.mxu0 0
      %805 = vmatprep.subr.bf16.mxu0 0
      %806 = vmatpush1.bf16.msra.mxu0 0
      %807 = vmatprep.subr.bf16.mxu0 0
      %808 = vmatpush1.bf16.msra.mxu0 0
      %809 = vmatprep.subr.bf16.mxu0 0
      %810 = vmatpush1.bf16.msra.mxu0 0
      %811 = vmatprep.subr.bf16.mxu0 0
      %812 = vmatpush1.bf16.msra.mxu0 0
      %813 = vmatprep.subr.bf16.mxu0 0
      %814 = vmatpush1.bf16.msra.mxu0 0
      %815 = vmatprep.subr.bf16.mxu0 0
      %816 = vmatpush1.bf16.msra.mxu0 0
      %817 = vmatprep.subr.bf16.mxu0 0
      %818 = vmatpush1.bf16.msra.mxu0 0
      %819 = vmatprep.subr.bf16.mxu0 0
      %820 = vmatpush1.bf16.msra.mxu0 0
      %821 = vmatprep.mubr.bf16.mxu0 0
      %822 = vmatmul.mubr.bf16.gmra.mrb[0].mxu0 %v784
      %v823 = vpop.f32.mrb[0].mxu0
      %v824 = vadd.f32 %v721, %v823
      %v825 = vpop.f32.mrb[0].mxu0
      %v826 = vpop.f32.mrb[0].mxu0
      %v827 = vadd.f32 %v724, %v826
      %v828 = vpop.f32.mrb[0].mxu0
      %829 = vmatprep.mubr.bf16.mxu0 0
      %830 = vmatmul.mubr.bf16.gmra.mrb[0].mxu0 %v660
      %v831 = vpop.f32.mrb[0].mxu0
      %v832 = vadd.f32 %v729, %v831
      %v833 = vpop.f32.mrb[0].mxu0
      %v834 = vpop.f32.mrb[0].mxu0
      %v835 = vadd.f32 %v732, %v834
      %v836 = vpop.f32.mrb[0].mxu0
      %837 = vmatprep.mubr.bf16.mxu0 0
      %838 = vmatmul.mubr.bf16.gmra.mrb[0].mxu0 %v663
      %v839 = vpop.f32.mrb[0].mxu0
      %v840 = vadd.f32 %v737, %v839
      %v841 = vpop.f32.mrb[0].mxu0
      %v842 = vpop.f32.mrb[0].mxu0
      %v843 = vadd.f32 %v740, %v842
      %v844 = vpop.f32.mrb[0].mxu0
      %845 = vmatprep.mubr.bf16.mxu0 0
      %846 = vmatmul.mubr.bf16.gmra.mrb[0].mxu0 %v666
      %v847 = vpop.f32.mrb[0].mxu0
      %v848 = vadd.f32 %v745, %v847
      %v849 = vpop.f32.mrb[0].mxu0
      %v850 = vpop.f32.mrb[0].mxu0
      %v851 = vadd.f32 %v748, %v850
      %v852 = vpop.f32.mrb[0].mxu0
      %853 = vmatprep.mubr.bf16.mxu0 0
      %854 = vmatmul.mubr.bf16.gmra.mrb[0].mxu0 %v669
      %v855 = vpop.f32.mrb[0].mxu0
      %v856 = vadd.f32 %v753, %v855
      %v857 = vpop.f32.mrb[0].mxu0
      %v858 = vpop.f32.mrb[0].mxu0
      %v859 = vadd.f32 %v756, %v858
      %v860 = vpop.f32.mrb[0].mxu0
      %861 = vmatprep.mubr.bf16.mxu0 0
      %862 = vmatmul.mubr.bf16.gmra.mrb[0].mxu0 %v672
      %v863 = vpop.f32.mrb[0].mxu0
      %v864 = vadd.f32 %v761, %v863
      %v865 = vpop.f32.mrb[0].mxu0
      %v866 = vpop.f32.mrb[0].mxu0
      %v867 = vadd.f32 %v764, %v866
      %v868 = vpop.f32.mrb[0].mxu0
      %869 = vmatprep.mubr.bf16.mxu0 0
      %870 = vmatmul.mubr.bf16.gmra.mrb[0].mxu0 %v675
      %v871 = vpop.f32.mrb[0].mxu0
      %v872 = vadd.f32 %v769, %v871
      %v873 = vpop.f32.mrb[0].mxu0
      %v874 = vpop.f32.mrb[0].mxu0
      %v875 = vadd.f32 %v772, %v874
      %v876 = vpop.f32.mrb[0].mxu0
      %877 = vmatprep.mubr.bf16.mxu0 0
      %878 = vmatmul.mubr.bf16.gmra.mrb[0].mxu0 %v678
      %v879 = vpop.f32.mrb[0].mxu0
      %v880 = vadd.f32 %v777, %v879
      %v881 = vpop.f32.mrb[0].mxu0
      %v882 = vpop.f32.mrb[0].mxu0
      %v883 = vadd.f32 %v780, %v882
      %v884 = vpop.f32.mrb[0].mxu0
      %885 = vdwg.mxu0
      %s886 = scalar_lea.vmem %s3, 20
      %v887 = vld [vmem:[%s886] sm:$0x3]
      %v889 = vsel %vm658, %v652, 0
      %v892 = vsel %vm570, %v887, 0
      %894 = vmatprep.subr.bf16.mxu0 0
      %895 = vmatpush1.bf16.msra.mxu0 %v892
      %896 = vmatprep.subr.bf16.mxu0 0
      %897 = vmatpush1.bf16.msra.mxu0 0
      %898 = vmatprep.subr.bf16.mxu0 0
      %899 = vmatpush1.bf16.msra.mxu0 0
      %900 = vmatprep.subr.bf16.mxu0 0
      %901 = vmatpush1.bf16.msra.mxu0 0
      %902 = vmatprep.subr.bf16.mxu0 0
      %903 = vmatpush1.bf16.msra.mxu0 0
      %904 = vmatprep.subr.bf16.mxu0 0
      %905 = vmatpush1.bf16.msra.mxu0 0
      %906 = vmatprep.subr.bf16.mxu0 0
      %907 = vmatpush1.bf16.msra.mxu0 0
      %908 = vmatprep.subr.bf16.mxu0 0
      %909 = vmatpush1.bf16.msra.mxu0 0
      %910 = vmatprep.subr.bf16.mxu0 0
      %911 = vmatpush1.bf16.msra.mxu0 0
      %912 = vmatprep.subr.bf16.mxu0 0
      %913 = vmatpush1.bf16.msra.mxu0 0
      %914 = vmatprep.subr.bf16.mxu0 0
      %915 = vmatpush1.bf16.msra.mxu0 0
      %916 = vmatprep.subr.bf16.mxu0 0
      %917 = vmatpush1.bf16.msra.mxu0 0
      %918 = vmatprep.subr.bf16.mxu0 0
      %919 = vmatpush1.bf16.msra.mxu0 0
      %920 = vmatprep.subr.bf16.mxu0 0
      %921 = vmatpush1.bf16.msra.mxu0 0
      %922 = vmatprep.subr.bf16.mxu0 0
      %923 = vmatpush1.bf16.msra.mxu0 0
      %924 = vmatprep.subr.bf16.mxu0 0
      %925 = vmatpush1.bf16.msra.mxu0 0
      %926 = vmatprep.mubr.bf16.mxu0 0
      %927 = vmatmul.mubr.bf16.gmra.mrb[0].mxu0 %v663
      %v928 = vpop.f32.mrb[0].mxu0
      %v929 = vadd.f32 0.0, %v928
      %v930 = vpop.f32.mrb[0].mxu0
      %v931 = vpop.f32.mrb[0].mxu0
      %v932 = vadd.f32 0.0, %v931
      %v933 = vpop.f32.mrb[0].mxu0
      %934 = vmatprep.mubr.bf16.mxu0 0
      %935 = vmatmul.mubr.bf16.gmra.mrb[0].mxu0 %v666
      %v936 = vpop.f32.mrb[0].mxu0
      %v937 = vadd.f32 0.0, %v936
      %v938 = vpop.f32.mrb[0].mxu0
      %v939 = vpop.f32.mrb[0].mxu0
      %v940 = vadd.f32 0.0, %v939
      %v941 = vpop.f32.mrb[0].mxu0
      %942 = vmatprep.mubr.bf16.mxu0 0
      %943 = vmatmul.mubr.bf16.gmra.mrb[0].mxu0 %v669
      %v944 = vpop.f32.mrb[0].mxu0
      %v945 = vadd.f32 0.0, %v944
      %v946 = vpop.f32.mrb[0].mxu0
      %v947 = vpop.f32.mrb[0].mxu0
      %v948 = vadd.f32 0.0, %v947
      %v949 = vpop.f32.mrb[0].mxu0
      %950 = vmatprep.mubr.bf16.mxu0 0
      %951 = vmatmul.mubr.bf16.gmra.mrb[0].mxu0 %v672
      %v952 = vpop.f32.mrb[0].mxu0
      %v953 = vadd.f32 0.0, %v952
      %v954 = vpop.f32.mrb[0].mxu0
      %v955 = vpop.f32.mrb[0].mxu0
      %v956 = vadd.f32 0.0, %v955
      %v957 = vpop.f32.mrb[0].mxu0
      %958 = vmatprep.mubr.bf16.mxu0 0
      %959 = vmatmul.mubr.bf16.gmra.mrb[0].mxu0 %v675
      %v960 = vpop.f32.mrb[0].mxu0
      %v961 = vadd.f32 0.0, %v960
      %v962 = vpop.f32.mrb[0].mxu0
      %v963 = vpop.f32.mrb[0].mxu0
      %v964 = vadd.f32 0.0, %v963
      %v965 = vpop.f32.mrb[0].mxu0
      %966 = vmatprep.mubr.bf16.mxu0 0
      %967 = vmatmul.mubr.bf16.gmra.mrb[0].mxu0 %v678
      %v968 = vpop.f32.mrb[0].mxu0
      %v969 = vadd.f32 0.0, %v968
      %v970 = vpop.f32.mrb[0].mxu0
      %v971 = vpop.f32.mrb[0].mxu0
      %v972 = vadd.f32 0.0, %v971
      %v973 = vpop.f32.mrb[0].mxu0
      %974 = vmatprep.mubr.bf16.mxu0 0
      %975 = vmatmul.mubr.bf16.gmra.mrb[0].mxu0 %v681
      %v976 = vpop.f32.mrb[0].mxu0
      %v977 = vadd.f32 0.0, %v976
      %v978 = vpop.f32.mrb[0].mxu0
      %v979 = vpop.f32.mrb[0].mxu0
      %v980 = vadd.f32 0.0, %v979
      %v981 = vpop.f32.mrb[0].mxu0
      %982 = vmatprep.mubr.bf16.mxu0 0
      %983 = vmatmul.mubr.bf16.gmra.mrb[0].mxu0 %v889
      %v984 = vpop.f32.mrb[0].mxu0
      %v985 = vadd.f32 0.0, %v984
      %v986 = vpop.f32.mrb[0].mxu0
      %v987 = vpop.f32.mrb[0].mxu0
      %v988 = vadd.f32 0.0, %v987
      %v989 = vpop.f32.mrb[0].mxu0
      %990 = vdwg.mxu0
      %v991 = vadd.f32 %v824, %v929
      %v992 = vadd.f32 %v827, %v932
      %v993 = vadd.f32 %v832, %v937
      %v994 = vadd.f32 %v835, %v940
      %v995 = vadd.f32 %v840, %v945
      %v996 = vadd.f32 %v843, %v948
      %v997 = vadd.f32 %v848, %v953
      %v998 = vadd.f32 %v851, %v956
      %v999 = vadd.f32 %v856, %v961
      %v1000 = vadd.f32 %v859, %v964
      %v1001 = vadd.f32 %v864, %v969
      %v1002 = vadd.f32 %v867, %v972
      %v1003 = vadd.f32 %v872, %v977
      %v1004 = vadd.f32 %v875, %v980
      %v1005 = vadd.f32 %v880, %v985
      %v1006 = vadd.f32 %v883, %v988
      %s1007 = scalar_lea.vmem %s3, 30
      %v1008 = vld [vmem:[%s1007] sm:$0x3]
      %v1010 = vsel %vm658, %v653, 0
      %v1013 = vsel %vm570, %v1008, 0
      %1015 = vmatprep.subr.bf16.mxu0 0
      %1016 = vmatpush1.bf16.msra.mxu0 %v1013
      %1017 = vmatprep.subr.bf16.mxu0 0
      %1018 = vmatpush1.bf16.msra.mxu0 0
      %1019 = vmatprep.subr.bf16.mxu0 0
      %1020 = vmatpush1.bf16.msra.mxu0 0
      %1021 = vmatprep.subr.bf16.mxu0 0
      %1022 = vmatpush1.bf16.msra.mxu0 0
      %1023 = vmatprep.subr.bf16.mxu0 0
      %1024 = vmatpush1.bf16.msra.mxu0 0
      %1025 = vmatprep.subr.bf16.mxu0 0
      %1026 = vmatpush1.bf16.msra.mxu0 0
      %1027 = vmatprep.subr.bf16.mxu0 0
      %1028 = vmatpush1.bf16.msra.mxu0 0
      %1029 = vmatprep.subr.bf16.mxu0 0
      %1030 = vmatpush1.bf16.msra.mxu0 0
      %1031 = vmatprep.subr.bf16.mxu0 0
      %1032 = vmatpush1.bf16.msra.mxu0 0
      %1033 = vmatprep.subr.bf16.mxu0 0
      %1034 = vmatpush1.bf16.msra.mxu0 0
      %1035 = vmatprep.subr.bf16.mxu0 0
      %1036 = vmatpush1.bf16.msra.mxu0 0
      %1037 = vmatprep.subr.bf16.mxu0 0
      %1038 = vmatpush1.bf16.msra.mxu0 0
      %1039 = vmatprep.subr.bf16.mxu0 0
      %1040 = vmatpush1.bf16.msra.mxu0 0
      %1041 = vmatprep.subr.bf16.mxu0 0
      %1042 = vmatpush1.bf16.msra.mxu0 0
      %1043 = vmatprep.subr.bf16.mxu0 0
      %1044 = vmatpush1.bf16.msra.mxu0 0
      %1045 = vmatprep.subr.bf16.mxu0 0
      %1046 = vmatpush1.bf16.msra.mxu0 0
      %1047 = vmatprep.mubr.bf16.mxu0 0
      %1048 = vmatmul.mubr.bf16.gmra.mrb[0].mxu0 %v666
      %v1049 = vpop.f32.mrb[0].mxu0
      %v1050 = vadd.f32 0.0, %v1049
      %v1051 = vpop.f32.mrb[0].mxu0
      %v1052 = vpop.f32.mrb[0].mxu0
      %v1053 = vadd.f32 0.0, %v1052
      %v1054 = vpop.f32.mrb[0].mxu0
      %1055 = vmatprep.mubr.bf16.mxu0 0
      %1056 = vmatmul.mubr.bf16.gmra.mrb[0].mxu0 %v669
      %v1057 = vpop.f32.mrb[0].mxu0
      %v1058 = vadd.f32 0.0, %v1057
      %v1059 = vpop.f32.mrb[0].mxu0
      %v1060 = vpop.f32.mrb[0].mxu0
      %v1061 = vadd.f32 0.0, %v1060
      %v1062 = vpop.f32.mrb[0].mxu0
      %1063 = vmatprep.mubr.bf16.mxu0 0
      %1064 = vmatmul.mubr.bf16.gmra.mrb[0].mxu0 %v672
      %v1065 = vpop.f32.mrb[0].mxu0
      %v1066 = vadd.f32 0.0, %v1065
      %v1067 = vpop.f32.mrb[0].mxu0
      %v1068 = vpop.f32.mrb[0].mxu0
      %v1069 = vadd.f32 0.0, %v1068
      %v1070 = vpop.f32.mrb[0].mxu0
      %1071 = vmatprep.mubr.bf16.mxu0 0
      %1072 = vmatmul.mubr.bf16.gmra.mrb[0].mxu0 %v675
      %v1073 = vpop.f32.mrb[0].mxu0
      %v1074 = vadd.f32 0.0, %v1073
      %v1075 = vpop.f32.mrb[0].mxu0
      %v1076 = vpop.f32.mrb[0].mxu0
      %v1077 = vadd.f32 0.0, %v1076
      %v1078 = vpop.f32.mrb[0].mxu0
      %1079 = vmatprep.mubr.bf16.mxu0 0
      %1080 = vmatmul.mubr.bf16.gmra.mrb[0].mxu0 %v678
      %v1081 = vpop.f32.mrb[0].mxu0
      %v1082 = vadd.f32 0.0, %v1081
      %v1083 = vpop.f32.mrb[0].mxu0
      %v1084 = vpop.f32.mrb[0].mxu0
      %v1085 = vadd.f32 0.0, %v1084
      %v1086 = vpop.f32.mrb[0].mxu0
      %1087 = vmatprep.mubr.bf16.mxu0 0
      %1088 = vmatmul.mubr.bf16.gmra.mrb[0].mxu0 %v681
      %v1089 = vpop.f32.mrb[0].mxu0
      %v1090 = vadd.f32 0.0, %v1089
      %v1091 = vpop.f32.mrb[0].mxu0
      %v1092 = vpop.f32.mrb[0].mxu0
      %v1093 = vadd.f32 0.0, %v1092
      %v1094 = vpop.f32.mrb[0].mxu0
      %1095 = vmatprep.mubr.bf16.mxu0 0
      %1096 = vmatmul.mubr.bf16.gmra.mrb[0].mxu0 %v889
      %v1097 = vpop.f32.mrb[0].mxu0
      %v1098 = vadd.f32 0.0, %v1097
      %v1099 = vpop.f32.mrb[0].mxu0
      %v1100 = vpop.f32.mrb[0].mxu0
      %v1101 = vadd.f32 0.0, %v1100
      %v1102 = vpop.f32.mrb[0].mxu0
      %1103 = vmatprep.mubr.bf16.mxu0 0
      %1104 = vmatmul.mubr.bf16.gmra.mrb[0].mxu0 %v1010
      %v1105 = vpop.f32.mrb[0].mxu0
      %v1106 = vadd.f32 0.0, %v1105
      %v1107 = vpop.f32.mrb[0].mxu0
      %v1108 = vpop.f32.mrb[0].mxu0
      %v1109 = vadd.f32 0.0, %v1108
      %v1110 = vpop.f32.mrb[0].mxu0
      %1111 = vdwg.mxu0
      %v1112 = vadd.f32 %v991, %v1050
      %v1113 = vadd.f32 %v992, %v1053
      %v1114 = vadd.f32 %v993, %v1058
      %v1115 = vadd.f32 %v994, %v1061
      %v1116 = vadd.f32 %v995, %v1066
      %v1117 = vadd.f32 %v996, %v1069
      %v1118 = vadd.f32 %v997, %v1074
      %v1119 = vadd.f32 %v998, %v1077
      %v1120 = vadd.f32 %v999, %v1082
      %v1121 = vadd.f32 %v1000, %v1085
      %v1122 = vadd.f32 %v1001, %v1090
      %v1123 = vadd.f32 %v1002, %v1093
      %v1124 = vadd.f32 %v1003, %v1098
      %v1125 = vadd.f32 %v1004, %v1101
      %v1126 = vadd.f32 %v1005, %v1106
      %v1127 = vadd.f32 %v1006, %v1109
      %s1128 = scalar_lea.vmem %s3, 40
      %v1129 = vld [vmem:[%s1128] sm:$0x3]
      %v1131 = vsel %vm658, %v654, 0
      %v1134 = vsel %vm570, %v1129, 0
      %1136 = vmatprep.subr.bf16.mxu0 0
      %1137 = vmatpush1.bf16.msra.mxu0 %v1134
      %1138 = vmatprep.subr.bf16.mxu0 0
      %1139 = vmatpush1.bf16.msra.mxu0 0
      %1140 = vmatprep.subr.bf16.mxu0 0
      %1141 = vmatpush1.bf16.msra.mxu0 0
      %1142 = vmatprep.subr.bf16.mxu0 0
      %1143 = vmatpush1.bf16.msra.mxu0 0
      %1144 = vmatprep.subr.bf16.mxu0 0
      %1145 = vmatpush1.bf16.msra.mxu0 0
      %1146 = vmatprep.subr.bf16.mxu0 0
      %1147 = vmatpush1.bf16.msra.mxu0 0
      %1148 = vmatprep.subr.bf16.mxu0 0
      %1149 = vmatpush1.bf16.msra.mxu0 0
      %1150 = vmatprep.subr.bf16.mxu0 0
      %1151 = vmatpush1.bf16.msra.mxu0 0
      %1152 = vmatprep.subr.bf16.mxu0 0
      %1153 = vmatpush1.bf16.msra.mxu0 0
      %1154 = vmatprep.subr.bf16.mxu0 0
      %1155 = vmatpush1.bf16.msra.mxu0 0
      %1156 = vmatprep.subr.bf16.mxu0 0
      %1157 = vmatpush1.bf16.msra.mxu0 0
      %1158 = vmatprep.subr.bf16.mxu0 0
      %1159 = vmatpush1.bf16.msra.mxu0 0
      %1160 = vmatprep.subr.bf16.mxu0 0
      %1161 = vmatpush1.bf16.msra.mxu0 0
      %1162 = vmatprep.subr.bf16.mxu0 0
      %1163 = vmatpush1.bf16.msra.mxu0 0
      %1164 = vmatprep.subr.bf16.mxu0 0
      %1165 = vmatpush1.bf16.msra.mxu0 0
      %1166 = vmatprep.subr.bf16.mxu0 0
      %1167 = vmatpush1.bf16.msra.mxu0 0
      %1168 = vmatprep.mubr.bf16.mxu0 0
      %1169 = vmatmul.mubr.bf16.gmra.mrb[0].mxu0 %v669
      %v1170 = vpop.f32.mrb[0].mxu0
      %v1171 = vadd.f32 0.0, %v1170
      %v1172 = vpop.f32.mrb[0].mxu0
      %v1173 = vpop.f32.mrb[0].mxu0
      %v1174 = vadd.f32 0.0, %v1173
      %v1175 = vpop.f32.mrb[0].mxu0
      %1176 = vmatprep.mubr.bf16.mxu0 0
      %1177 = vmatmul.mubr.bf16.gmra.mrb[0].mxu0 %v672
      %v1178 = vpop.f32.mrb[0].mxu0
      %v1179 = vadd.f32 0.0, %v1178
      %v1180 = vpop.f32.mrb[0].mxu0
      %v1181 = vpop.f32.mrb[0].mxu0
      %v1182 = vadd.f32 0.0, %v1181
      %v1183 = vpop.f32.mrb[0].mxu0
      %1184 = vmatprep.mubr.bf16.mxu0 0
      %1185 = vmatmul.mubr.bf16.gmra.mrb[0].mxu0 %v675
      %v1186 = vpop.f32.mrb[0].mxu0
      %v1187 = vadd.f32 0.0, %v1186
      %v1188 = vpop.f32.mrb[0].mxu0
      %v1189 = vpop.f32.mrb[0].mxu0
      %v1190 = vadd.f32 0.0, %v1189
      %v1191 = vpop.f32.mrb[0].mxu0
      %1192 = vmatprep.mubr.bf16.mxu0 0
      %1193 = vmatmul.mubr.bf16.gmra.mrb[0].mxu0 %v678
      %v1194 = vpop.f32.mrb[0].mxu0
      %v1195 = vadd.f32 0.0, %v1194
      %v1196 = vpop.f32.mrb[0].mxu0
      %v1197 = vpop.f32.mrb[0].mxu0
      %v1198 = vadd.f32 0.0, %v1197
      %v1199 = vpop.f32.mrb[0].mxu0
      %1200 = vmatprep.mubr.bf16.mxu0 0
      %1201 = vmatmul.mubr.bf16.gmra.mrb[0].mxu0 %v681
      %v1202 = vpop.f32.mrb[0].mxu0
      %v1203 = vadd.f32 0.0, %v1202
      %v1204 = vpop.f32.mrb[0].mxu0
      %v1205 = vpop.f32.mrb[0].mxu0
      %v1206 = vadd.f32 0.0, %v1205
      %v1207 = vpop.f32.mrb[0].mxu0
      %1208 = vmatprep.mubr.bf16.mxu0 0
      %1209 = vmatmul.mubr.bf16.gmra.mrb[0].mxu0 %v889
      %v1210 = vpop.f32.mrb[0].mxu0
      %v1211 = vadd.f32 0.0, %v1210
      %v1212 = vpop.f32.mrb[0].mxu0
      %v1213 = vpop.f32.mrb[0].mxu0
      %v1214 = vadd.f32 0.0, %v1213
      %v1215 = vpop.f32.mrb[0].mxu0
      %1216 = vmatprep.mubr.bf16.mxu0 0
      %1217 = vmatmul.mubr.bf16.gmra.mrb[0].mxu0 %v1010
      %v1218 = vpop.f32.mrb[0].mxu0
      %v1219 = vadd.f32 0.0, %v1218
      %v1220 = vpop.f32.mrb[0].mxu0
      %v1221 = vpop.f32.mrb[0].mxu0
      %v1222 = vadd.f32 0.0, %v1221
      %v1223 = vpop.f32.mrb[0].mxu0
      %1224 = vmatprep.mubr.bf16.mxu0 0
      %1225 = vmatmul.mubr.bf16.gmra.mrb[0].mxu0 %v1131
      %v1226 = vpop.f32.mrb[0].mxu0
      %v1227 = vadd.f32 0.0, %v1226
      %v1228 = vpop.f32.mrb[0].mxu0
      %v1229 = vpop.f32.mrb[0].mxu0
      %v1230 = vadd.f32 0.0, %v1229
      %v1231 = vpop.f32.mrb[0].mxu0
      %1232 = vdwg.mxu0
      %v1233 = vadd.f32 %v1112, %v1171
      %v1234 = vadd.f32 %v1113, %v1174
      %v1235 = vadd.f32 %v1114, %v1179
      %v1236 = vadd.f32 %v1115, %v1182
      %v1237 = vadd.f32 %v1116, %v1187
      %v1238 = vadd.f32 %v1117, %v1190
      %v1239 = vadd.f32 %v1118, %v1195
      %v1240 = vadd.f32 %v1119, %v1198
      %v1241 = vadd.f32 %v1120, %v1203
      %v1242 = vadd.f32 %v1121, %v1206
      %v1243 = vadd.f32 %v1122, %v1211
      %v1244 = vadd.f32 %v1123, %v1214
      %v1245 = vadd.f32 %v1124, %v1219
      %v1246 = vadd.f32 %v1125, %v1222
      %v1247 = vadd.f32 %v1126, %v1227
      %v1248 = vadd.f32 %v1127, %v1230
      %vm1249 = vcmask 1040384
      %v1250 = vrot.slane %v514, 7
      %v1251 = vrot.slane %v515, 7
      %v1252 = vsel %vm1249, %v1250, %v1251
      %v1253 = vrot.slane %v516, 7
      %v1254 = vrot.slane %v517, 7
      %v1255 = vsel %vm1249, %v1253, %v1254
      %v1256 = vrot.slane %v530, 7
      %v1257 = vrot.slane %v531, 7
      %v1258 = vsel %vm1249, %v1256, %v1257
      %v1259 = vrot.slane %v532, 7
      %v1260 = vrot.slane %v533, 7
      %v1261 = vsel %vm1249, %v1259, %v1260
      %v1262 = vrot.slane %v534, 7
      %v1263 = vrot.slane %v535, 7
      %v1264 = vsel %vm1249, %v1262, %v1263
      %v1265 = vrot.slane %v536, 7
      %v1266 = vrot.slane %v537, 7
      %v1267 = vsel %vm1249, %v1265, %v1266
      %v1268 = vrot.slane %v538, 7
      %v1269 = vrot.slane %v539, 7
      %v1270 = vsel %vm1249, %v1268, %v1269
      %v1271 = vrot.slane %v540, 7
      %v1272 = vrot.slane %v541, 7
      %v1273 = vsel %vm1249, %v1271, %v1272
      %v1274 = vrot.slane %v542, 7
      %v1275 = vrot.slane %v543, 7
      %v1276 = vsel %vm1249, %v1274, %v1275
      %v1277 = vrot.slane %v544, 7
      %v1278 = vrot.slane %v545, 7
      %v1279 = vsel %vm1249, %v1277, %v1278
      %v1280 = vrot.slane %v526, 7
      %v1281 = vrot.slane %v527, 7
      %v1282 = vsel %vm1249, %v1280, %v1281
      %v1283 = vrot.slane %v528, 7
      %v1284 = vrot.slane %v529, 7
      %v1285 = vsel %vm1249, %v1283, %v1284
      %v1310 = vsel %vm1249, 0.0, %v1250
      %v1311 = vsel %vm1249, 0.0, %v1253
      %v1312 = vsel %vm1249, 0.0, %v1256
      %v1313 = vsel %vm1249, 0.0, %v1259
      %v1314 = vsel %vm1249, 0.0, %v1262
      %v1315 = vsel %vm1249, 0.0, %v1265
      %v1316 = vsel %vm1249, 0.0, %v1268
      %v1317 = vsel %vm1249, 0.0, %v1271
      %v1318 = vsel %vm1249, 0.0, %v1274
      %v1319 = vsel %vm1249, 0.0, %v1277
      %v1320 = vsel %vm1249, 0.0, %v1280
      %v1321 = vsel %vm1249, 0.0, %v1283
      %v1322 = vpack.c.bf16 %v1252, %v1310
      %v1323 = vpack.c.bf16 %v1255, %v1311
      %v1324 = vpack.c.bf16 %v1258, %v1312
      %v1325 = vpack.c.bf16 %v1261, %v1313
      %v1326 = vpack.c.bf16 %v1264, %v1314
      %v1327 = vpack.c.bf16 %v1267, %v1315
      %v1328 = vpack.c.bf16 %v1270, %v1316
      %v1329 = vpack.c.bf16 %v1273, %v1317
      %v1330 = vpack.c.bf16 %v1276, %v1318
      %v1331 = vpack.c.bf16 %v1279, %v1319
      %v1332 = vpack.c.bf16 %v1282, %v1320
      %v1333 = vpack.c.bf16 %v1285, %v1321
      %s1334 = scalar_lea.vmem %s3, 2
      %v1335 = vld [vmem:[%s1334] sm:$0x3]
      %v1337 = vsel %vm658, %v1322, 0
      %v1340 = vsel %vm658, %v1323, 0
      %v1343 = vsel %vm658, %v1324, 0
      %v1346 = vsel %vm658, %v1325, 0
      %v1349 = vsel %vm658, %v1326, 0
      %v1352 = vsel %vm658, %v1327, 0
      %v1355 = vsel %vm658, %v1328, 0
      %v1358 = vsel %vm658, %v1329, 0
      %v1361 = vsel %vm570, %v1335, 0
      %1363 = vmatprep.subr.bf16.mxu0 0
      %1364 = vmatpush1.bf16.msra.mxu0 %v1361
      %1365 = vmatprep.subr.bf16.mxu0 0
      %1366 = vmatpush1.bf16.msra.mxu0 0
      %1367 = vmatprep.subr.bf16.mxu0 0
      %1368 = vmatpush1.bf16.msra.mxu0 0
      %1369 = vmatprep.subr.bf16.mxu0 0
      %1370 = vmatpush1.bf16.msra.mxu0 0
      %1371 = vmatprep.subr.bf16.mxu0 0
      %1372 = vmatpush1.bf16.msra.mxu0 0
      %1373 = vmatprep.subr.bf16.mxu0 0
      %1374 = vmatpush1.bf16.msra.mxu0 0
      %1375 = vmatprep.subr.bf16.mxu0 0
      %1376 = vmatpush1.bf16.msra.mxu0 0
      %1377 = vmatprep.subr.bf16.mxu0 0
      %1378 = vmatpush1.bf16.msra.mxu0 0
      %1379 = vmatprep.subr.bf16.mxu0 0
      %1380 = vmatpush1.bf16.msra.mxu0 0
      %1381 = vmatprep.subr.bf16.mxu0 0
      %1382 = vmatpush1.bf16.msra.mxu0 0
      %1383 = vmatprep.subr.bf16.mxu0 0
      %1384 = vmatpush1.bf16.msra.mxu0 0
      %1385 = vmatprep.subr.bf16.mxu0 0
      %1386 = vmatpush1.bf16.msra.mxu0 0
      %1387 = vmatprep.subr.bf16.mxu0 0
      %1388 = vmatpush1.bf16.msra.mxu0 0
      %1389 = vmatprep.subr.bf16.mxu0 0
      %1390 = vmatpush1.bf16.msra.mxu0 0
      %1391 = vmatprep.subr.bf16.mxu0 0
      %1392 = vmatpush1.bf16.msra.mxu0 0
      %1393 = vmatprep.subr.bf16.mxu0 0
      %1394 = vmatpush1.bf16.msra.mxu0 0
      %1395 = vmatprep.mubr.bf16.mxu0 0
      %1396 = vmatmul.mubr.bf16.gmra.mrb[0].mxu0 %v1337
      %v1397 = vpop.f32.mrb[0].mxu0
      %v1398 = vadd.f32 0.0, %v1397
      %v1399 = vpop.f32.mrb[0].mxu0
      %v1400 = vpop.f32.mrb[0].mxu0
      %v1401 = vadd.f32 0.0, %v1400
      %v1402 = vpop.f32.mrb[0].mxu0
      %1403 = vmatprep.mubr.bf16.mxu0 0
      %1404 = vmatmul.mubr.bf16.gmra.mrb[0].mxu0 %v1340
      %v1405 = vpop.f32.mrb[0].mxu0
      %v1406 = vadd.f32 0.0, %v1405
      %v1407 = vpop.f32.mrb[0].mxu0
      %v1408 = vpop.f32.mrb[0].mxu0
      %v1409 = vadd.f32 0.0, %v1408
      %v1410 = vpop.f32.mrb[0].mxu0
      %1411 = vmatprep.mubr.bf16.mxu0 0
      %1412 = vmatmul.mubr.bf16.gmra.mrb[0].mxu0 %v1343
      %v1413 = vpop.f32.mrb[0].mxu0
      %v1414 = vadd.f32 0.0, %v1413
      %v1415 = vpop.f32.mrb[0].mxu0
      %v1416 = vpop.f32.mrb[0].mxu0
      %v1417 = vadd.f32 0.0, %v1416
      %v1418 = vpop.f32.mrb[0].mxu0
      %1419 = vmatprep.mubr.bf16.mxu0 0
      %1420 = vmatmul.mubr.bf16.gmra.mrb[0].mxu0 %v1346
      %v1421 = vpop.f32.mrb[0].mxu0
      %v1422 = vadd.f32 0.0, %v1421
      %v1423 = vpop.f32.mrb[0].mxu0
      %v1424 = vpop.f32.mrb[0].mxu0
      %v1425 = vadd.f32 0.0, %v1424
      %v1426 = vpop.f32.mrb[0].mxu0
      %1427 = vmatprep.mubr.bf16.mxu0 0
      %1428 = vmatmul.mubr.bf16.gmra.mrb[0].mxu0 %v1349
      %v1429 = vpop.f32.mrb[0].mxu0
      %v1430 = vadd.f32 0.0, %v1429
      %v1431 = vpop.f32.mrb[0].mxu0
      %v1432 = vpop.f32.mrb[0].mxu0
      %v1433 = vadd.f32 0.0, %v1432
      %v1434 = vpop.f32.mrb[0].mxu0
      %1435 = vmatprep.mubr.bf16.mxu0 0
      %1436 = vmatmul.mubr.bf16.gmra.mrb[0].mxu0 %v1352
      %v1437 = vpop.f32.mrb[0].mxu0
      %v1438 = vadd.f32 0.0, %v1437
      %v1439 = vpop.f32.mrb[0].mxu0
      %v1440 = vpop.f32.mrb[0].mxu0
      %v1441 = vadd.f32 0.0, %v1440
      %v1442 = vpop.f32.mrb[0].mxu0
      %1443 = vmatprep.mubr.bf16.mxu0 0
      %1444 = vmatmul.mubr.bf16.gmra.mrb[0].mxu0 %v1355
      %v1445 = vpop.f32.mrb[0].mxu0
      %v1446 = vadd.f32 0.0, %v1445
      %v1447 = vpop.f32.mrb[0].mxu0
      %v1448 = vpop.f32.mrb[0].mxu0
      %v1449 = vadd.f32 0.0, %v1448
      %v1450 = vpop.f32.mrb[0].mxu0
      %1451 = vmatprep.mubr.bf16.mxu0 0
      %1452 = vmatmul.mubr.bf16.gmra.mrb[0].mxu0 %v1358
      %v1453 = vpop.f32.mrb[0].mxu0
      %v1454 = vadd.f32 0.0, %v1453
      %v1455 = vpop.f32.mrb[0].mxu0
      %v1456 = vpop.f32.mrb[0].mxu0
      %v1457 = vadd.f32 0.0, %v1456
      %v1458 = vpop.f32.mrb[0].mxu0
      %1459 = vdwg.mxu0
      %v1460 = vadd.f32 %v1233, %v1398
      %v1461 = vadd.f32 %v1234, %v1401
      %v1462 = vadd.f32 %v1235, %v1406
      %v1463 = vadd.f32 %v1236, %v1409
      %v1464 = vadd.f32 %v1237, %v1414
      %v1465 = vadd.f32 %v1238, %v1417
      %v1466 = vadd.f32 %v1239, %v1422
      %v1467 = vadd.f32 %v1240, %v1425
      %v1468 = vadd.f32 %v1241, %v1430
      %v1469 = vadd.f32 %v1242, %v1433
      %v1470 = vadd.f32 %v1243, %v1438
      %v1471 = vadd.f32 %v1244, %v1441
      %v1472 = vadd.f32 %v1245, %v1446
      %v1473 = vadd.f32 %v1246, %v1449
      %v1474 = vadd.f32 %v1247, %v1454
      %v1475 = vadd.f32 %v1248, %v1457
      %s1476 = scalar_lea.vmem %s3, 12
      %v1477 = vld [vmem:[%s1476] sm:$0x3]
      %v1479 = vsel %vm658, %v1330, 0
      %v1482 = vsel %vm570, %v1477, 0
      %1484 = vmatprep.subr.bf16.mxu0 0
      %1485 = vmatpush1.bf16.msra.mxu0 %v1482
      %1486 = vmatprep.subr.bf16.mxu0 0
      %1487 = vmatpush1.bf16.msra.mxu0 0
      %1488 = vmatprep.subr.bf16.mxu0 0
      %1489 = vmatpush1.bf16.msra.mxu0 0
      %1490 = vmatprep.subr.bf16.mxu0 0
      %1491 = vmatpush1.bf16.msra.mxu0 0
      %1492 = vmatprep.subr.bf16.mxu0 0
      %1493 = vmatpush1.bf16.msra.mxu0 0
      %1494 = vmatprep.subr.bf16.mxu0 0
      %1495 = vmatpush1.bf16.msra.mxu0 0
      %1496 = vmatprep.subr.bf16.mxu0 0
      %1497 = vmatpush1.bf16.msra.mxu0 0
      %1498 = vmatprep.subr.bf16.mxu0 0
      %1499 = vmatpush1.bf16.msra.mxu0 0
      %1500 = vmatprep.subr.bf16.mxu0 0
      %1501 = vmatpush1.bf16.msra.mxu0 0
      %1502 = vmatprep.subr.bf16.mxu0 0
      %1503 = vmatpush1.bf16.msra.mxu0 0
      %1504 = vmatprep.subr.bf16.mxu0 0
      %1505 = vmatpush1.bf16.msra.mxu0 0
      %1506 = vmatprep.subr.bf16.mxu0 0
      %1507 = vmatpush1.bf16.msra.mxu0 0
      %1508 = vmatprep.subr.bf16.mxu0 0
      %1509 = vmatpush1.bf16.msra.mxu0 0
      %1510 = vmatprep.subr.bf16.mxu0 0
      %1511 = vmatpush1.bf16.msra.mxu0 0
      %1512 = vmatprep.subr.bf16.mxu0 0
      %1513 = vmatpush1.bf16.msra.mxu0 0
      %1514 = vmatprep.subr.bf16.mxu0 0
      %1515 = vmatpush1.bf16.msra.mxu0 0
      %1516 = vmatprep.mubr.bf16.mxu0 0
      %1517 = vmatmul.mubr.bf16.gmra.mrb[0].mxu0 %v1340
      %v1518 = vpop.f32.mrb[0].mxu0
      %v1519 = vadd.f32 0.0, %v1518
      %v1520 = vpop.f32.mrb[0].mxu0
      %v1521 = vpop.f32.mrb[0].mxu0
      %v1522 = vadd.f32 0.0, %v1521
      %v1523 = vpop.f32.mrb[0].mxu0
      %1524 = vmatprep.mubr.bf16.mxu0 0
      %1525 = vmatmul.mubr.bf16.gmra.mrb[0].mxu0 %v1343
      %v1526 = vpop.f32.mrb[0].mxu0
      %v1527 = vadd.f32 0.0, %v1526
      %v1528 = vpop.f32.mrb[0].mxu0
      %v1529 = vpop.f32.mrb[0].mxu0
      %v1530 = vadd.f32 0.0, %v1529
      %v1531 = vpop.f32.mrb[0].mxu0
      %1532 = vmatprep.mubr.bf16.mxu0 0
      %1533 = vmatmul.mubr.bf16.gmra.mrb[0].mxu0 %v1346
      %v1534 = vpop.f32.mrb[0].mxu0
      %v1535 = vadd.f32 0.0, %v1534
      %v1536 = vpop.f32.mrb[0].mxu0
      %v1537 = vpop.f32.mrb[0].mxu0
      %v1538 = vadd.f32 0.0, %v1537
      %v1539 = vpop.f32.mrb[0].mxu0
      %1540 = vmatprep.mubr.bf16.mxu0 0
      %1541 = vmatmul.mubr.bf16.gmra.mrb[0].mxu0 %v1349
      %v1542 = vpop.f32.mrb[0].mxu0
      %v1543 = vadd.f32 0.0, %v1542
      %v1544 = vpop.f32.mrb[0].mxu0
      %v1545 = vpop.f32.mrb[0].mxu0
      %v1546 = vadd.f32 0.0, %v1545
      %v1547 = vpop.f32.mrb[0].mxu0
      %1548 = vmatprep.mubr.bf16.mxu0 0
      %1549 = vmatmul.mubr.bf16.gmra.mrb[0].mxu0 %v1352
      %v1550 = vpop.f32.mrb[0].mxu0
      %v1551 = vadd.f32 0.0, %v1550
      %v1552 = vpop.f32.mrb[0].mxu0
      %v1553 = vpop.f32.mrb[0].mxu0
      %v1554 = vadd.f32 0.0, %v1553
      %v1555 = vpop.f32.mrb[0].mxu0
      %1556 = vmatprep.mubr.bf16.mxu0 0
      %1557 = vmatmul.mubr.bf16.gmra.mrb[0].mxu0 %v1355
      %v1558 = vpop.f32.mrb[0].mxu0
      %v1559 = vadd.f32 0.0, %v1558
      %v1560 = vpop.f32.mrb[0].mxu0
      %v1561 = vpop.f32.mrb[0].mxu0
      %v1562 = vadd.f32 0.0, %v1561
      %v1563 = vpop.f32.mrb[0].mxu0
      %1564 = vmatprep.mubr.bf16.mxu0 0
      %1565 = vmatmul.mubr.bf16.gmra.mrb[0].mxu0 %v1358
      %v1566 = vpop.f32.mrb[0].mxu0
      %v1567 = vadd.f32 0.0, %v1566
      %v1568 = vpop.f32.mrb[0].mxu0
      %v1569 = vpop.f32.mrb[0].mxu0
      %v1570 = vadd.f32 0.0, %v1569
      %v1571 = vpop.f32.mrb[0].mxu0
      %1572 = vmatprep.mubr.bf16.mxu0 0
      %1573 = vmatmul.mubr.bf16.gmra.mrb[0].mxu0 %v1479
      %v1574 = vpop.f32.mrb[0].mxu0
      %v1575 = vadd.f32 0.0, %v1574
      %v1576 = vpop.f32.mrb[0].mxu0
      %v1577 = vpop.f32.mrb[0].mxu0
      %v1578 = vadd.f32 0.0, %v1577
      %v1579 = vpop.f32.mrb[0].mxu0
      %1580 = vdwg.mxu0
      %v1581 = vadd.f32 %v1460, %v1519
      %v1582 = vadd.f32 %v1461, %v1522
      %v1583 = vadd.f32 %v1462, %v1527
      %v1584 = vadd.f32 %v1463, %v1530
      %v1585 = vadd.f32 %v1464, %v1535
      %v1586 = vadd.f32 %v1465, %v1538
      %v1587 = vadd.f32 %v1466, %v1543
      %v1588 = vadd.f32 %v1467, %v1546
      %v1589 = vadd.f32 %v1468, %v1551
      %v1590 = vadd.f32 %v1469, %v1554
      %v1591 = vadd.f32 %v1470, %v1559
      %v1592 = vadd.f32 %v1471, %v1562
      %v1593 = vadd.f32 %v1472, %v1567
      %v1594 = vadd.f32 %v1473, %v1570
      %v1595 = vadd.f32 %v1474, %v1575
      %v1596 = vadd.f32 %v1475, %v1578
      %s1597 = scalar_lea.vmem %s3, 22
      %v1598 = vld [vmem:[%s1597] sm:$0x3]
      %v1600 = vsel %vm658, %v1331, 0
      %v1603 = vsel %vm570, %v1598, 0
      %1605 = vmatprep.subr.bf16.mxu0 0
      %1606 = vmatpush1.bf16.msra.mxu0 %v1603
      %1607 = vmatprep.subr.bf16.mxu0 0
      %1608 = vmatpush1.bf16.msra.mxu0 0
      %1609 = vmatprep.subr.bf16.mxu0 0
      %1610 = vmatpush1.bf16.msra.mxu0 0
      %1611 = vmatprep.subr.bf16.mxu0 0
      %1612 = vmatpush1.bf16.msra.mxu0 0
      %1613 = vmatprep.subr.bf16.mxu0 0
      %1614 = vmatpush1.bf16.msra.mxu0 0
      %1615 = vmatprep.subr.bf16.mxu0 0
      %1616 = vmatpush1.bf16.msra.mxu0 0
      %1617 = vmatprep.subr.bf16.mxu0 0
      %1618 = vmatpush1.bf16.msra.mxu0 0
      %1619 = vmatprep.subr.bf16.mxu0 0
      %1620 = vmatpush1.bf16.msra.mxu0 0
      %1621 = vmatprep.subr.bf16.mxu0 0
      %1622 = vmatpush1.bf16.msra.mxu0 0
      %1623 = vmatprep.subr.bf16.mxu0 0
      %1624 = vmatpush1.bf16.msra.mxu0 0
      %1625 = vmatprep.subr.bf16.mxu0 0
      %1626 = vmatpush1.bf16.msra.mxu0 0
      %1627 = vmatprep.subr.bf16.mxu0 0
      %1628 = vmatpush1.bf16.msra.mxu0 0
      %1629 = vmatprep.subr.bf16.mxu0 0
      %1630 = vmatpush1.bf16.msra.mxu0 0
      %1631 = vmatprep.subr.bf16.mxu0 0
      %1632 = vmatpush1.bf16.msra.mxu0 0
      %1633 = vmatprep.subr.bf16.mxu0 0
      %1634 = vmatpush1.bf16.msra.mxu0 0
      %1635 = vmatprep.subr.bf16.mxu0 0
      %1636 = vmatpush1.bf16.msra.mxu0 0
      %1637 = vmatprep.mubr.bf16.mxu0 0
      %1638 = vmatmul.mubr.bf16.gmra.mrb[0].mxu0 %v1343
      %v1639 = vpop.f32.mrb[0].mxu0
      %v1640 = vadd.f32 0.0, %v1639
      %v1641 = vpop.f32.mrb[0].mxu0
      %v1642 = vpop.f32.mrb[0].mxu0
      %v1643 = vadd.f32 0.0, %v1642
      %v1644 = vpop.f32.mrb[0].mxu0
      %1645 = vmatprep.mubr.bf16.mxu0 0
      %1646 = vmatmul.mubr.bf16.gmra.mrb[0].mxu0 %v1346
      %v1647 = vpop.f32.mrb[0].mxu0
      %v1648 = vadd.f32 0.0, %v1647
      %v1649 = vpop.f32.mrb[0].mxu0
      %v1650 = vpop.f32.mrb[0].mxu0
      %v1651 = vadd.f32 0.0, %v1650
      %v1652 = vpop.f32.mrb[0].mxu0
      %1653 = vmatprep.mubr.bf16.mxu0 0
      %1654 = vmatmul.mubr.bf16.gmra.mrb[0].mxu0 %v1349
      %v1655 = vpop.f32.mrb[0].mxu0
      %v1656 = vadd.f32 0.0, %v1655
      %v1657 = vpop.f32.mrb[0].mxu0
      %v1658 = vpop.f32.mrb[0].mxu0
      %v1659 = vadd.f32 0.0, %v1658
      %v1660 = vpop.f32.mrb[0].mxu0
      %1661 = vmatprep.mubr.bf16.mxu0 0
      %1662 = vmatmul.mubr.bf16.gmra.mrb[0].mxu0 %v1352
      %v1663 = vpop.f32.mrb[0].mxu0
      %v1664 = vadd.f32 0.0, %v1663
      %v1665 = vpop.f32.mrb[0].mxu0
      %v1666 = vpop.f32.mrb[0].mxu0
      %v1667 = vadd.f32 0.0, %v1666
      %v1668 = vpop.f32.mrb[0].mxu0
      %1669 = vmatprep.mubr.bf16.mxu0 0
      %1670 = vmatmul.mubr.bf16.gmra.mrb[0].mxu0 %v1355
      %v1671 = vpop.f32.mrb[0].mxu0
      %v1672 = vadd.f32 0.0, %v1671
      %v1673 = vpop.f32.mrb[0].mxu0
      %v1674 = vpop.f32.mrb[0].mxu0
      %v1675 = vadd.f32 0.0, %v1674
      %v1676 = vpop.f32.mrb[0].mxu0
      %1677 = vmatprep.mubr.bf16.mxu0 0
      %1678 = vmatmul.mubr.bf16.gmra.mrb[0].mxu0 %v1358
      %v1679 = vpop.f32.mrb[0].mxu0
      %v1680 = vadd.f32 0.0, %v1679
      %v1681 = vpop.f32.mrb[0].mxu0
      %v1682 = vpop.f32.mrb[0].mxu0
      %v1683 = vadd.f32 0.0, %v1682
      %v1684 = vpop.f32.mrb[0].mxu0
      %1685 = vmatprep.mubr.bf16.mxu0 0
      %1686 = vmatmul.mubr.bf16.gmra.mrb[0].mxu0 %v1479
      %v1687 = vpop.f32.mrb[0].mxu0
      %v1688 = vadd.f32 0.0, %v1687
      %v1689 = vpop.f32.mrb[0].mxu0
      %v1690 = vpop.f32.mrb[0].mxu0
      %v1691 = vadd.f32 0.0, %v1690
      %v1692 = vpop.f32.mrb[0].mxu0
      %1693 = vmatprep.mubr.bf16.mxu0 0
      %1694 = vmatmul.mubr.bf16.gmra.mrb[0].mxu0 %v1600
      %v1695 = vpop.f32.mrb[0].mxu0
      %v1696 = vadd.f32 0.0, %v1695
      %v1697 = vpop.f32.mrb[0].mxu0
      %v1698 = vpop.f32.mrb[0].mxu0
      %v1699 = vadd.f32 0.0, %v1698
      %v1700 = vpop.f32.mrb[0].mxu0
      %1701 = vdwg.mxu0
      %v1702 = vadd.f32 %v1581, %v1640
      %v1703 = vadd.f32 %v1582, %v1643
      %v1704 = vadd.f32 %v1583, %v1648
      %v1705 = vadd.f32 %v1584, %v1651
      %v1706 = vadd.f32 %v1585, %v1656
      %v1707 = vadd.f32 %v1586, %v1659
      %v1708 = vadd.f32 %v1587, %v1664
      %v1709 = vadd.f32 %v1588, %v1667
      %v1710 = vadd.f32 %v1589, %v1672
      %v1711 = vadd.f32 %v1590, %v1675
      %v1712 = vadd.f32 %v1591, %v1680
      %v1713 = vadd.f32 %v1592, %v1683
      %v1714 = vadd.f32 %v1593, %v1688
      %v1715 = vadd.f32 %v1594, %v1691
      %v1716 = vadd.f32 %v1595, %v1696
      %v1717 = vadd.f32 %v1596, %v1699
      %s1718 = scalar_lea.vmem %s3, 32
      %v1719 = vld [vmem:[%s1718] sm:$0x3]
      %v1721 = vsel %vm658, %v1332, 0
      %v1724 = vsel %vm570, %v1719, 0
      %1726 = vmatprep.subr.bf16.mxu0 0
      %1727 = vmatpush1.bf16.msra.mxu0 %v1724
      %1728 = vmatprep.subr.bf16.mxu0 0
      %1729 = vmatpush1.bf16.msra.mxu0 0
      %1730 = vmatprep.subr.bf16.mxu0 0
      %1731 = vmatpush1.bf16.msra.mxu0 0
      %1732 = vmatprep.subr.bf16.mxu0 0
      %1733 = vmatpush1.bf16.msra.mxu0 0
      %1734 = vmatprep.subr.bf16.mxu0 0
      %1735 = vmatpush1.bf16.msra.mxu0 0
      %1736 = vmatprep.subr.bf16.mxu0 0
      %1737 = vmatpush1.bf16.msra.mxu0 0
      %1738 = vmatprep.subr.bf16.mxu0 0
      %1739 = vmatpush1.bf16.msra.mxu0 0
      %1740 = vmatprep.subr.bf16.mxu0 0
      %1741 = vmatpush1.bf16.msra.mxu0 0
      %1742 = vmatprep.subr.bf16.mxu0 0
      %1743 = vmatpush1.bf16.msra.mxu0 0
      %1744 = vmatprep.subr.bf16.mxu0 0
      %1745 = vmatpush1.bf16.msra.mxu0 0
      %1746 = vmatprep.subr.bf16.mxu0 0
      %1747 = vmatpush1.bf16.msra.mxu0 0
      %1748 = vmatprep.subr.bf16.mxu0 0
      %1749 = vmatpush1.bf16.msra.mxu0 0
      %1750 = vmatprep.subr.bf16.mxu0 0
      %1751 = vmatpush1.bf16.msra.mxu0 0
      %1752 = vmatprep.subr.bf16.mxu0 0
      %1753 = vmatpush1.bf16.msra.mxu0 0
      %1754 = vmatprep.subr.bf16.mxu0 0
      %1755 = vmatpush1.bf16.msra.mxu0 0
      %1756 = vmatprep.subr.bf16.mxu0 0
      %1757 = vmatpush1.bf16.msra.mxu0 0
      %1758 = vmatprep.mubr.bf16.mxu0 0
      %1759 = vmatmul.mubr.bf16.gmra.mrb[0].mxu0 %v1346
      %v1760 = vpop.f32.mrb[0].mxu0
      %v1761 = vadd.f32 0.0, %v1760
      %v1762 = vpop.f32.mrb[0].mxu0
      %v1763 = vpop.f32.mrb[0].mxu0
      %v1764 = vadd.f32 0.0, %v1763
      %v1765 = vpop.f32.mrb[0].mxu0
      %1766 = vmatprep.mubr.bf16.mxu0 0
      %1767 = vmatmul.mubr.bf16.gmra.mrb[0].mxu0 %v1349
      %v1768 = vpop.f32.mrb[0].mxu0
      %v1769 = vadd.f32 0.0, %v1768
      %v1770 = vpop.f32.mrb[0].mxu0
      %v1771 = vpop.f32.mrb[0].mxu0
      %v1772 = vadd.f32 0.0, %v1771
      %v1773 = vpop.f32.mrb[0].mxu0
      %1774 = vmatprep.mubr.bf16.mxu0 0
      %1775 = vmatmul.mubr.bf16.gmra.mrb[0].mxu0 %v1352
      %v1776 = vpop.f32.mrb[0].mxu0
      %v1777 = vadd.f32 0.0, %v1776
      %v1778 = vpop.f32.mrb[0].mxu0
      %v1779 = vpop.f32.mrb[0].mxu0
      %v1780 = vadd.f32 0.0, %v1779
      %v1781 = vpop.f32.mrb[0].mxu0
      %1782 = vmatprep.mubr.bf16.mxu0 0
      %1783 = vmatmul.mubr.bf16.gmra.mrb[0].mxu0 %v1355
      %v1784 = vpop.f32.mrb[0].mxu0
      %v1785 = vadd.f32 0.0, %v1784
      %v1786 = vpop.f32.mrb[0].mxu0
      %v1787 = vpop.f32.mrb[0].mxu0
      %v1788 = vadd.f32 0.0, %v1787
      %v1789 = vpop.f32.mrb[0].mxu0
      %1790 = vmatprep.mubr.bf16.mxu0 0
      %1791 = vmatmul.mubr.bf16.gmra.mrb[0].mxu0 %v1358
      %v1792 = vpop.f32.mrb[0].mxu0
      %v1793 = vadd.f32 0.0, %v1792
      %v1794 = vpop.f32.mrb[0].mxu0
      %v1795 = vpop.f32.mrb[0].mxu0
      %v1796 = vadd.f32 0.0, %v1795
      %v1797 = vpop.f32.mrb[0].mxu0
      %1798 = vmatprep.mubr.bf16.mxu0 0
      %1799 = vmatmul.mubr.bf16.gmra.mrb[0].mxu0 %v1479
      %v1800 = vpop.f32.mrb[0].mxu0
      %v1801 = vadd.f32 0.0, %v1800
      %v1802 = vpop.f32.mrb[0].mxu0
      %v1803 = vpop.f32.mrb[0].mxu0
      %v1804 = vadd.f32 0.0, %v1803
      %v1805 = vpop.f32.mrb[0].mxu0
      %1806 = vmatprep.mubr.bf16.mxu0 0
      %1807 = vmatmul.mubr.bf16.gmra.mrb[0].mxu0 %v1600
      %v1808 = vpop.f32.mrb[0].mxu0
      %v1809 = vadd.f32 0.0, %v1808
      %v1810 = vpop.f32.mrb[0].mxu0
      %v1811 = vpop.f32.mrb[0].mxu0
      %v1812 = vadd.f32 0.0, %v1811
      %v1813 = vpop.f32.mrb[0].mxu0
      %1814 = vmatprep.mubr.bf16.mxu0 0
      %1815 = vmatmul.mubr.bf16.gmra.mrb[0].mxu0 %v1721
      %v1816 = vpop.f32.mrb[0].mxu0
      %v1817 = vadd.f32 0.0, %v1816
      %v1818 = vpop.f32.mrb[0].mxu0
      %v1819 = vpop.f32.mrb[0].mxu0
      %v1820 = vadd.f32 0.0, %v1819
      %v1821 = vpop.f32.mrb[0].mxu0
      %1822 = vdwg.mxu0
      %v1823 = vadd.f32 %v1702, %v1761
      %v1824 = vadd.f32 %v1703, %v1764
      %v1825 = vadd.f32 %v1704, %v1769
      %v1826 = vadd.f32 %v1705, %v1772
      %v1827 = vadd.f32 %v1706, %v1777
      %v1828 = vadd.f32 %v1707, %v1780
      %v1829 = vadd.f32 %v1708, %v1785
      %v1830 = vadd.f32 %v1709, %v1788
      %v1831 = vadd.f32 %v1710, %v1793
      %v1832 = vadd.f32 %v1711, %v1796
      %v1833 = vadd.f32 %v1712, %v1801
      %v1834 = vadd.f32 %v1713, %v1804
      %v1835 = vadd.f32 %v1714, %v1809
      %v1836 = vadd.f32 %v1715, %v1812
      %v1837 = vadd.f32 %v1716, %v1817
      %v1838 = vadd.f32 %v1717, %v1820
      %s1839 = scalar_lea.vmem %s3, 42
      %v1840 = vld [vmem:[%s1839] sm:$0x3]
      %v1842 = vsel %vm658, %v1333, 0
      %v1845 = vsel %vm570, %v1840, 0
      %1847 = vmatprep.subr.bf16.mxu0 0
      %1848 = vmatpush1.bf16.msra.mxu0 %v1845
      %1849 = vmatprep.subr.bf16.mxu0 0
      %1850 = vmatpush1.bf16.msra.mxu0 0
      %1851 = vmatprep.subr.bf16.mxu0 0
      %1852 = vmatpush1.bf16.msra.mxu0 0
      %1853 = vmatprep.subr.bf16.mxu0 0
      %1854 = vmatpush1.bf16.msra.mxu0 0
      %1855 = vmatprep.subr.bf16.mxu0 0
      %1856 = vmatpush1.bf16.msra.mxu0 0
      %1857 = vmatprep.subr.bf16.mxu0 0
      %1858 = vmatpush1.bf16.msra.mxu0 0
      %1859 = vmatprep.subr.bf16.mxu0 0
      %1860 = vmatpush1.bf16.msra.mxu0 0
      %1861 = vmatprep.subr.bf16.mxu0 0
      %1862 = vmatpush1.bf16.msra.mxu0 0
      %1863 = vmatprep.subr.bf16.mxu0 0
      %1864 = vmatpush1.bf16.msra.mxu0 0
      %1865 = vmatprep.subr.bf16.mxu0 0
      %1866 = vmatpush1.bf16.msra.mxu0 0
      %1867 = vmatprep.subr.bf16.mxu0 0
      %1868 = vmatpush1.bf16.msra.mxu0 0
      %1869 = vmatprep.subr.bf16.mxu0 0
      %1870 = vmatpush1.bf16.msra.mxu0 0
      %1871 = vmatprep.subr.bf16.mxu0 0
      %1872 = vmatpush1.bf16.msra.mxu0 0
      %1873 = vmatprep.subr.bf16.mxu0 0
      %1874 = vmatpush1.bf16.msra.mxu0 0
      %1875 = vmatprep.subr.bf16.mxu0 0
      %1876 = vmatpush1.bf16.msra.mxu0 0
      %1877 = vmatprep.subr.bf16.mxu0 0
      %1878 = vmatpush1.bf16.msra.mxu0 0
      %1879 = vmatprep.mubr.bf16.mxu0 0
      %1880 = vmatmul.mubr.bf16.gmra.mrb[0].mxu0 %v1349
      %v1881 = vpop.f32.mrb[0].mxu0
      %v1882 = vadd.f32 0.0, %v1881
      %v1883 = vpop.f32.mrb[0].mxu0
      %v1884 = vpop.f32.mrb[0].mxu0
      %v1885 = vadd.f32 0.0, %v1884
      %v1886 = vpop.f32.mrb[0].mxu0
      %1887 = vmatprep.mubr.bf16.mxu0 0
      %1888 = vmatmul.mubr.bf16.gmra.mrb[0].mxu0 %v1352
      %v1889 = vpop.f32.mrb[0].mxu0
      %v1890 = vadd.f32 0.0, %v1889
      %v1891 = vpop.f32.mrb[0].mxu0
      %v1892 = vpop.f32.mrb[0].mxu0
      %v1893 = vadd.f32 0.0, %v1892
      %v1894 = vpop.f32.mrb[0].mxu0
      %1895 = vmatprep.mubr.bf16.mxu0 0
      %1896 = vmatmul.mubr.bf16.gmra.mrb[0].mxu0 %v1355
      %v1897 = vpop.f32.mrb[0].mxu0
      %v1898 = vadd.f32 0.0, %v1897
      %v1899 = vpop.f32.mrb[0].mxu0
      %v1900 = vpop.f32.mrb[0].mxu0
      %v1901 = vadd.f32 0.0, %v1900
      %v1902 = vpop.f32.mrb[0].mxu0
      %1903 = vmatprep.mubr.bf16.mxu0 0
      %1904 = vmatmul.mubr.bf16.gmra.mrb[0].mxu0 %v1358
      %v1905 = vpop.f32.mrb[0].mxu0
      %v1906 = vadd.f32 0.0, %v1905
      %v1907 = vpop.f32.mrb[0].mxu0
      %v1908 = vpop.f32.mrb[0].mxu0
      %v1909 = vadd.f32 0.0, %v1908
      %v1910 = vpop.f32.mrb[0].mxu0
      %1911 = vmatprep.mubr.bf16.mxu0 0
      %1912 = vmatmul.mubr.bf16.gmra.mrb[0].mxu0 %v1479
      %v1913 = vpop.f32.mrb[0].mxu0
      %v1914 = vadd.f32 0.0, %v1913
      %v1915 = vpop.f32.mrb[0].mxu0
      %v1916 = vpop.f32.mrb[0].mxu0
      %v1917 = vadd.f32 0.0, %v1916
      %v1918 = vpop.f32.mrb[0].mxu0
      %1919 = vmatprep.mubr.bf16.mxu0 0
      %1920 = vmatmul.mubr.bf16.gmra.mrb[0].mxu0 %v1600
      %v1921 = vpop.f32.mrb[0].mxu0
      %v1922 = vadd.f32 0.0, %v1921
      %v1923 = vpop.f32.mrb[0].mxu0
      %v1924 = vpop.f32.mrb[0].mxu0
      %v1925 = vadd.f32 0.0, %v1924
      %v1926 = vpop.f32.mrb[0].mxu0
      %1927 = vmatprep.mubr.bf16.mxu0 0
      %1928 = vmatmul.mubr.bf16.gmra.mrb[0].mxu0 %v1721
      %v1929 = vpop.f32.mrb[0].mxu0
      %v1930 = vadd.f32 0.0, %v1929
      %v1931 = vpop.f32.mrb[0].mxu0
      %v1932 = vpop.f32.mrb[0].mxu0
      %v1933 = vadd.f32 0.0, %v1932
      %v1934 = vpop.f32.mrb[0].mxu0
      %1935 = vmatprep.mubr.bf16.mxu0 0
      %1936 = vmatmul.mubr.bf16.gmra.mrb[0].mxu0 %v1842
      %v1937 = vpop.f32.mrb[0].mxu0
      %v1938 = vadd.f32 0.0, %v1937
      %v1939 = vpop.f32.mrb[0].mxu0
      %v1940 = vpop.f32.mrb[0].mxu0
      %v1941 = vadd.f32 0.0, %v1940
      %v1942 = vpop.f32.mrb[0].mxu0
      %1943 = vdwg.mxu0
      %v1944 = vadd.f32 %v1823, %v1882
      %v1945 = vadd.f32 %v1824, %v1885
      %v1946 = vadd.f32 %v1825, %v1890
      %v1947 = vadd.f32 %v1826, %v1893
      %v1948 = vadd.f32 %v1827, %v1898
      %v1949 = vadd.f32 %v1828, %v1901
      %v1950 = vadd.f32 %v1829, %v1906
      %v1951 = vadd.f32 %v1830, %v1909
      %v1952 = vadd.f32 %v1831, %v1914
      %v1953 = vadd.f32 %v1832, %v1917
      %v1954 = vadd.f32 %v1833, %v1922
      %v1955 = vadd.f32 %v1834, %v1925
      %v1956 = vadd.f32 %v1835, %v1930
      %v1957 = vadd.f32 %v1836, %v1933
      %v1958 = vadd.f32 %v1837, %v1938
      %v1959 = vadd.f32 %v1838, %v1941
      %v1960 = vpack.c.bf16 %v515, %v514
      %v1961 = vpack.c.bf16 %v517, %v516
      %v1962 = vpack.c.bf16 %v531, %v530
      %v1963 = vpack.c.bf16 %v533, %v532
      %v1964 = vpack.c.bf16 %v535, %v534
      %v1965 = vpack.c.bf16 %v537, %v536
      %v1966 = vpack.c.bf16 %v539, %v538
      %v1967 = vpack.c.bf16 %v541, %v540
      %v1968 = vpack.c.bf16 %v543, %v542
      %v1969 = vpack.c.bf16 %v545, %v544
      %v1970 = vpack.c.bf16 %v527, %v526
      %v1971 = vpack.c.bf16 %v529, %v528
      %s1972 = scalar_lea.vmem %s3, 4
      %v1973 = vld [vmem:[%s1972] sm:$0x3]
      %v1975 = vsel %vm658, %v1960, 0
      %v1978 = vsel %vm658, %v1961, 0
      %v1981 = vsel %vm658, %v1962, 0
      %v1984 = vsel %vm658, %v1963, 0
      %v1987 = vsel %vm658, %v1964, 0
      %v1990 = vsel %vm658, %v1965, 0
      %v1993 = vsel %vm658, %v1966, 0
      %v1996 = vsel %vm658, %v1967, 0
      %v1999 = vsel %vm570, %v1973, 0
      %2001 = vmatprep.subr.bf16.mxu0 0
      %2002 = vmatpush1.bf16.msra.mxu0 %v1999
      %2003 = vmatprep.subr.bf16.mxu0 0
      %2004 = vmatpush1.bf16.msra.mxu0 0
      %2005 = vmatprep.subr.bf16.mxu0 0
      %2006 = vmatpush1.bf16.msra.mxu0 0
      %2007 = vmatprep.subr.bf16.mxu0 0
      %2008 = vmatpush1.bf16.msra.mxu0 0
      %2009 = vmatprep.subr.bf16.mxu0 0
      %2010 = vmatpush1.bf16.msra.mxu0 0
      %2011 = vmatprep.subr.bf16.mxu0 0
      %2012 = vmatpush1.bf16.msra.mxu0 0
      %2013 = vmatprep.subr.bf16.mxu0 0
      %2014 = vmatpush1.bf16.msra.mxu0 0
      %2015 = vmatprep.subr.bf16.mxu0 0
      %2016 = vmatpush1.bf16.msra.mxu0 0
      %2017 = vmatprep.subr.bf16.mxu0 0
      %2018 = vmatpush1.bf16.msra.mxu0 0
      %2019 = vmatprep.subr.bf16.mxu0 0
      %2020 = vmatpush1.bf16.msra.mxu0 0
      %2021 = vmatprep.subr.bf16.mxu0 0
      %2022 = vmatpush1.bf16.msra.mxu0 0
      %2023 = vmatprep.subr.bf16.mxu0 0
      %2024 = vmatpush1.bf16.msra.mxu0 0
      %2025 = vmatprep.subr.bf16.mxu0 0
      %2026 = vmatpush1.bf16.msra.mxu0 0
      %2027 = vmatprep.subr.bf16.mxu0 0
      %2028 = vmatpush1.bf16.msra.mxu0 0
      %2029 = vmatprep.subr.bf16.mxu0 0
      %2030 = vmatpush1.bf16.msra.mxu0 0
      %2031 = vmatprep.subr.bf16.mxu0 0
      %2032 = vmatpush1.bf16.msra.mxu0 0
      %2033 = vmatprep.mubr.bf16.mxu0 0
      %2034 = vmatmul.mubr.bf16.gmra.mrb[0].mxu0 %v1975
      %v2035 = vpop.f32.mrb[0].mxu0
      %v2036 = vadd.f32 0.0, %v2035
      %v2037 = vpop.f32.mrb[0].mxu0
      %v2038 = vpop.f32.mrb[0].mxu0
      %v2039 = vadd.f32 0.0, %v2038
      %v2040 = vpop.f32.mrb[0].mxu0
      %2041 = vmatprep.mubr.bf16.mxu0 0
      %2042 = vmatmul.mubr.bf16.gmra.mrb[0].mxu0 %v1978
      %v2043 = vpop.f32.mrb[0].mxu0
      %v2044 = vadd.f32 0.0, %v2043
      %v2045 = vpop.f32.mrb[0].mxu0
      %v2046 = vpop.f32.mrb[0].mxu0
      %v2047 = vadd.f32 0.0, %v2046
      %v2048 = vpop.f32.mrb[0].mxu0
      %2049 = vmatprep.mubr.bf16.mxu0 0
      %2050 = vmatmul.mubr.bf16.gmra.mrb[0].mxu0 %v1981
      %v2051 = vpop.f32.mrb[0].mxu0
      %v2052 = vadd.f32 0.0, %v2051
      %v2053 = vpop.f32.mrb[0].mxu0
      %v2054 = vpop.f32.mrb[0].mxu0
      %v2055 = vadd.f32 0.0, %v2054
      %v2056 = vpop.f32.mrb[0].mxu0
      %2057 = vmatprep.mubr.bf16.mxu0 0
      %2058 = vmatmul.mubr.bf16.gmra.mrb[0].mxu0 %v1984
      %v2059 = vpop.f32.mrb[0].mxu0
      %v2060 = vadd.f32 0.0, %v2059
      %v2061 = vpop.f32.mrb[0].mxu0
      %v2062 = vpop.f32.mrb[0].mxu0
      %v2063 = vadd.f32 0.0, %v2062
      %v2064 = vpop.f32.mrb[0].mxu0
      %2065 = vmatprep.mubr.bf16.mxu0 0
      %2066 = vmatmul.mubr.bf16.gmra.mrb[0].mxu0 %v1987
      %v2067 = vpop.f32.mrb[0].mxu0
      %v2068 = vadd.f32 0.0, %v2067
      %v2069 = vpop.f32.mrb[0].mxu0
      %v2070 = vpop.f32.mrb[0].mxu0
      %v2071 = vadd.f32 0.0, %v2070
      %v2072 = vpop.f32.mrb[0].mxu0
      %2073 = vmatprep.mubr.bf16.mxu0 0
      %2074 = vmatmul.mubr.bf16.gmra.mrb[0].mxu0 %v1990
      %v2075 = vpop.f32.mrb[0].mxu0
      %v2076 = vadd.f32 0.0, %v2075
      %v2077 = vpop.f32.mrb[0].mxu0
      %v2078 = vpop.f32.mrb[0].mxu0
      %v2079 = vadd.f32 0.0, %v2078
      %v2080 = vpop.f32.mrb[0].mxu0
      %2081 = vmatprep.mubr.bf16.mxu0 0
      %2082 = vmatmul.mubr.bf16.gmra.mrb[0].mxu0 %v1993
      %v2083 = vpop.f32.mrb[0].mxu0
      %v2084 = vadd.f32 0.0, %v2083
      %v2085 = vpop.f32.mrb[0].mxu0
      %v2086 = vpop.f32.mrb[0].mxu0
      %v2087 = vadd.f32 0.0, %v2086
      %v2088 = vpop.f32.mrb[0].mxu0
      %2089 = vmatprep.mubr.bf16.mxu0 0
      %2090 = vmatmul.mubr.bf16.gmra.mrb[0].mxu0 %v1996
      %v2091 = vpop.f32.mrb[0].mxu0
      %v2092 = vadd.f32 0.0, %v2091
      %v2093 = vpop.f32.mrb[0].mxu0
      %v2094 = vpop.f32.mrb[0].mxu0
      %v2095 = vadd.f32 0.0, %v2094
      %v2096 = vpop.f32.mrb[0].mxu0
      %2097 = vdwg.mxu0
      %v2098 = vadd.f32 %v1944, %v2036
      %v2099 = vadd.f32 %v1945, %v2039
      %v2100 = vadd.f32 %v1946, %v2044
      %v2101 = vadd.f32 %v1947, %v2047
      %v2102 = vadd.f32 %v1948, %v2052
      %v2103 = vadd.f32 %v1949, %v2055
      %v2104 = vadd.f32 %v1950, %v2060
      %v2105 = vadd.f32 %v1951, %v2063
      %v2106 = vadd.f32 %v1952, %v2068
      %v2107 = vadd.f32 %v1953, %v2071
      %v2108 = vadd.f32 %v1954, %v2076
      %v2109 = vadd.f32 %v1955, %v2079
      %v2110 = vadd.f32 %v1956, %v2084
      %v2111 = vadd.f32 %v1957, %v2087
      %v2112 = vadd.f32 %v1958, %v2092
      %v2113 = vadd.f32 %v1959, %v2095
      %s2114 = scalar_lea.vmem %s3, 14
      %v2115 = vld [vmem:[%s2114] sm:$0x3]
      %v2117 = vsel %vm658, %v1968, 0
      %v2120 = vsel %vm570, %v2115, 0
      %2122 = vmatprep.subr.bf16.mxu0 0
      %2123 = vmatpush1.bf16.msra.mxu0 %v2120
      %2124 = vmatprep.subr.bf16.mxu0 0
      %2125 = vmatpush1.bf16.msra.mxu0 0
      %2126 = vmatprep.subr.bf16.mxu0 0
      %2127 = vmatpush1.bf16.msra.mxu0 0
      %2128 = vmatprep.subr.bf16.mxu0 0
      %2129 = vmatpush1.bf16.msra.mxu0 0
      %2130 = vmatprep.subr.bf16.mxu0 0
      %2131 = vmatpush1.bf16.msra.mxu0 0
      %2132 = vmatprep.subr.bf16.mxu0 0
      %2133 = vmatpush1.bf16.msra.mxu0 0
      %2134 = vmatprep.subr.bf16.mxu0 0
      %2135 = vmatpush1.bf16.msra.mxu0 0
      %2136 = vmatprep.subr.bf16.mxu0 0
      %2137 = vmatpush1.bf16.msra.mxu0 0
      %2138 = vmatprep.subr.bf16.mxu0 0
      %2139 = vmatpush1.bf16.msra.mxu0 0
      %2140 = vmatprep.subr.bf16.mxu0 0
      %2141 = vmatpush1.bf16.msra.mxu0 0
      %2142 = vmatprep.subr.bf16.mxu0 0
      %2143 = vmatpush1.bf16.msra.mxu0 0
      %2144 = vmatprep.subr.bf16.mxu0 0
      %2145 = vmatpush1.bf16.msra.mxu0 0
      %2146 = vmatprep.subr.bf16.mxu0 0
      %2147 = vmatpush1.bf16.msra.mxu0 0
      %2148 = vmatprep.subr.bf16.mxu0 0
      %2149 = vmatpush1.bf16.msra.mxu0 0
      %2150 = vmatprep.subr.bf16.mxu0 0
      %2151 = vmatpush1.bf16.msra.mxu0 0
      %2152 = vmatprep.subr.bf16.mxu0 0
      %2153 = vmatpush1.bf16.msra.mxu0 0
      %2154 = vmatprep.mubr.bf16.mxu0 0
      %2155 = vmatmul.mubr.bf16.gmra.mrb[0].mxu0 %v1978
      %v2156 = vpop.f32.mrb[0].mxu0
      %v2157 = vadd.f32 0.0, %v2156
      %v2158 = vpop.f32.mrb[0].mxu0
      %v2159 = vpop.f32.mrb[0].mxu0
      %v2160 = vadd.f32 0.0, %v2159
      %v2161 = vpop.f32.mrb[0].mxu0
      %2162 = vmatprep.mubr.bf16.mxu0 0
      %2163 = vmatmul.mubr.bf16.gmra.mrb[0].mxu0 %v1981
      %v2164 = vpop.f32.mrb[0].mxu0
      %v2165 = vadd.f32 0.0, %v2164
      %v2166 = vpop.f32.mrb[0].mxu0
      %v2167 = vpop.f32.mrb[0].mxu0
      %v2168 = vadd.f32 0.0, %v2167
      %v2169 = vpop.f32.mrb[0].mxu0
      %2170 = vmatprep.mubr.bf16.mxu0 0
      %2171 = vmatmul.mubr.bf16.gmra.mrb[0].mxu0 %v1984
      %v2172 = vpop.f32.mrb[0].mxu0
      %v2173 = vadd.f32 0.0, %v2172
      %v2174 = vpop.f32.mrb[0].mxu0
      %v2175 = vpop.f32.mrb[0].mxu0
      %v2176 = vadd.f32 0.0, %v2175
      %v2177 = vpop.f32.mrb[0].mxu0
      %2178 = vmatprep.mubr.bf16.mxu0 0
      %2179 = vmatmul.mubr.bf16.gmra.mrb[0].mxu0 %v1987
      %v2180 = vpop.f32.mrb[0].mxu0
      %v2181 = vadd.f32 0.0, %v2180
      %v2182 = vpop.f32.mrb[0].mxu0
      %v2183 = vpop.f32.mrb[0].mxu0
      %v2184 = vadd.f32 0.0, %v2183
      %v2185 = vpop.f32.mrb[0].mxu0
      %2186 = vmatprep.mubr.bf16.mxu0 0
      %2187 = vmatmul.mubr.bf16.gmra.mrb[0].mxu0 %v1990
      %v2188 = vpop.f32.mrb[0].mxu0
      %v2189 = vadd.f32 0.0, %v2188
      %v2190 = vpop.f32.mrb[0].mxu0
      %v2191 = vpop.f32.mrb[0].mxu0
      %v2192 = vadd.f32 0.0, %v2191
      %v2193 = vpop.f32.mrb[0].mxu0
      %2194 = vmatprep.mubr.bf16.mxu0 0
      %2195 = vmatmul.mubr.bf16.gmra.mrb[0].mxu0 %v1993
      %v2196 = vpop.f32.mrb[0].mxu0
      %v2197 = vadd.f32 0.0, %v2196
      %v2198 = vpop.f32.mrb[0].mxu0
      %v2199 = vpop.f32.mrb[0].mxu0
      %v2200 = vadd.f32 0.0, %v2199
      %v2201 = vpop.f32.mrb[0].mxu0
      %2202 = vmatprep.mubr.bf16.mxu0 0
      %2203 = vmatmul.mubr.bf16.gmra.mrb[0].mxu0 %v1996
      %v2204 = vpop.f32.mrb[0].mxu0
      %v2205 = vadd.f32 0.0, %v2204
      %v2206 = vpop.f32.mrb[0].mxu0
      %v2207 = vpop.f32.mrb[0].mxu0
      %v2208 = vadd.f32 0.0, %v2207
      %v2209 = vpop.f32.mrb[0].mxu0
      %2210 = vmatprep.mubr.bf16.mxu0 0
      %2211 = vmatmul.mubr.bf16.gmra.mrb[0].mxu0 %v2117
      %v2212 = vpop.f32.mrb[0].mxu0
      %v2213 = vadd.f32 0.0, %v2212
      %v2214 = vpop.f32.mrb[0].mxu0
      %v2215 = vpop.f32.mrb[0].mxu0
      %v2216 = vadd.f32 0.0, %v2215
      %v2217 = vpop.f32.mrb[0].mxu0
      %2218 = vdwg.mxu0
      %v2219 = vadd.f32 %v2098, %v2157
      %v2220 = vadd.f32 %v2099, %v2160
      %v2221 = vadd.f32 %v2100, %v2165
      %v2222 = vadd.f32 %v2101, %v2168
      %v2223 = vadd.f32 %v2102, %v2173
      %v2224 = vadd.f32 %v2103, %v2176
      %v2225 = vadd.f32 %v2104, %v2181
      %v2226 = vadd.f32 %v2105, %v2184
      %v2227 = vadd.f32 %v2106, %v2189
      %v2228 = vadd.f32 %v2107, %v2192
      %v2229 = vadd.f32 %v2108, %v2197
      %v2230 = vadd.f32 %v2109, %v2200
      %v2231 = vadd.f32 %v2110, %v2205
      %v2232 = vadd.f32 %v2111, %v2208
      %v2233 = vadd.f32 %v2112, %v2213
      %v2234 = vadd.f32 %v2113, %v2216
      %s2235 = scalar_lea.vmem %s3, 24
      %v2236 = vld [vmem:[%s2235] sm:$0x3]
      %v2238 = vsel %vm658, %v1969, 0
      %v2241 = vsel %vm570, %v2236, 0
      %2243 = vmatprep.subr.bf16.mxu0 0
      %2244 = vmatpush1.bf16.msra.mxu0 %v2241
      %2245 = vmatprep.subr.bf16.mxu0 0
      %2246 = vmatpush1.bf16.msra.mxu0 0
      %2247 = vmatprep.subr.bf16.mxu0 0
      %2248 = vmatpush1.bf16.msra.mxu0 0
      %2249 = vmatprep.subr.bf16.mxu0 0
      %2250 = vmatpush1.bf16.msra.mxu0 0
      %2251 = vmatprep.subr.bf16.mxu0 0
      %2252 = vmatpush1.bf16.msra.mxu0 0
      %2253 = vmatprep.subr.bf16.mxu0 0
      %2254 = vmatpush1.bf16.msra.mxu0 0
      %2255 = vmatprep.subr.bf16.mxu0 0
      %2256 = vmatpush1.bf16.msra.mxu0 0
      %2257 = vmatprep.subr.bf16.mxu0 0
      %2258 = vmatpush1.bf16.msra.mxu0 0
      %2259 = vmatprep.subr.bf16.mxu0 0
      %2260 = vmatpush1.bf16.msra.mxu0 0
      %2261 = vmatprep.subr.bf16.mxu0 0
      %2262 = vmatpush1.bf16.msra.mxu0 0
      %2263 = vmatprep.subr.bf16.mxu0 0
      %2264 = vmatpush1.bf16.msra.mxu0 0
      %2265 = vmatprep.subr.bf16.mxu0 0
      %2266 = vmatpush1.bf16.msra.mxu0 0
      %2267 = vmatprep.subr.bf16.mxu0 0
      %2268 = vmatpush1.bf16.msra.mxu0 0
      %2269 = vmatprep.subr.bf16.mxu0 0
      %2270 = vmatpush1.bf16.msra.mxu0 0
      %2271 = vmatprep.subr.bf16.mxu0 0
      %2272 = vmatpush1.bf16.msra.mxu0 0
      %2273 = vmatprep.subr.bf16.mxu0 0
      %2274 = vmatpush1.bf16.msra.mxu0 0
      %2275 = vmatprep.mubr.bf16.mxu0 0
      %2276 = vmatmul.mubr.bf16.gmra.mrb[0].mxu0 %v1981
      %v2277 = vpop.f32.mrb[0].mxu0
      %v2278 = vadd.f32 0.0, %v2277
      %v2279 = vpop.f32.mrb[0].mxu0
      %v2280 = vpop.f32.mrb[0].mxu0
      %v2281 = vadd.f32 0.0, %v2280
      %v2282 = vpop.f32.mrb[0].mxu0
      %2283 = vmatprep.mubr.bf16.mxu0 0
      %2284 = vmatmul.mubr.bf16.gmra.mrb[0].mxu0 %v1984
      %v2285 = vpop.f32.mrb[0].mxu0
      %v2286 = vadd.f32 0.0, %v2285
      %v2287 = vpop.f32.mrb[0].mxu0
      %v2288 = vpop.f32.mrb[0].mxu0
      %v2289 = vadd.f32 0.0, %v2288
      %v2290 = vpop.f32.mrb[0].mxu0
      %2291 = vmatprep.mubr.bf16.mxu0 0
      %2292 = vmatmul.mubr.bf16.gmra.mrb[0].mxu0 %v1987
      %v2293 = vpop.f32.mrb[0].mxu0
      %v2294 = vadd.f32 0.0, %v2293
      %v2295 = vpop.f32.mrb[0].mxu0
      %v2296 = vpop.f32.mrb[0].mxu0
      %v2297 = vadd.f32 0.0, %v2296
      %v2298 = vpop.f32.mrb[0].mxu0
      %2299 = vmatprep.mubr.bf16.mxu0 0
      %2300 = vmatmul.mubr.bf16.gmra.mrb[0].mxu0 %v1990
      %v2301 = vpop.f32.mrb[0].mxu0
      %v2302 = vadd.f32 0.0, %v2301
      %v2303 = vpop.f32.mrb[0].mxu0
      %v2304 = vpop.f32.mrb[0].mxu0
      %v2305 = vadd.f32 0.0, %v2304
      %v2306 = vpop.f32.mrb[0].mxu0
      %2307 = vmatprep.mubr.bf16.mxu0 0
      %2308 = vmatmul.mubr.bf16.gmra.mrb[0].mxu0 %v1993
      %v2309 = vpop.f32.mrb[0].mxu0
      %v2310 = vadd.f32 0.0, %v2309
      %v2311 = vpop.f32.mrb[0].mxu0
      %v2312 = vpop.f32.mrb[0].mxu0
      %v2313 = vadd.f32 0.0, %v2312
      %v2314 = vpop.f32.mrb[0].mxu0
      %2315 = vmatprep.mubr.bf16.mxu0 0
      %2316 = vmatmul.mubr.bf16.gmra.mrb[0].mxu0 %v1996
      %v2317 = vpop.f32.mrb[0].mxu0
      %v2318 = vadd.f32 0.0, %v2317
      %v2319 = vpop.f32.mrb[0].mxu0
      %v2320 = vpop.f32.mrb[0].mxu0
      %v2321 = vadd.f32 0.0, %v2320
      %v2322 = vpop.f32.mrb[0].mxu0
      %2323 = vmatprep.mubr.bf16.mxu0 0
      %2324 = vmatmul.mubr.bf16.gmra.mrb[0].mxu0 %v2117
      %v2325 = vpop.f32.mrb[0].mxu0
      %v2326 = vadd.f32 0.0, %v2325
      %v2327 = vpop.f32.mrb[0].mxu0
      %v2328 = vpop.f32.mrb[0].mxu0
      %v2329 = vadd.f32 0.0, %v2328
      %v2330 = vpop.f32.mrb[0].mxu0
      %2331 = vmatprep.mubr.bf16.mxu0 0
      %2332 = vmatmul.mubr.bf16.gmra.mrb[0].mxu0 %v2238
      %v2333 = vpop.f32.mrb[0].mxu0
      %v2334 = vadd.f32 0.0, %v2333
      %v2335 = vpop.f32.mrb[0].mxu0
      %v2336 = vpop.f32.mrb[0].mxu0
      %v2337 = vadd.f32 0.0, %v2336
      %v2338 = vpop.f32.mrb[0].mxu0
      %2339 = vdwg.mxu0
      %v2340 = vadd.f32 %v2219, %v2278
      %v2341 = vadd.f32 %v2220, %v2281
      %v2342 = vadd.f32 %v2221, %v2286
      %v2343 = vadd.f32 %v2222, %v2289
      %v2344 = vadd.f32 %v2223, %v2294
      %v2345 = vadd.f32 %v2224, %v2297
      %v2346 = vadd.f32 %v2225, %v2302
      %v2347 = vadd.f32 %v2226, %v2305
      %v2348 = vadd.f32 %v2227, %v2310
      %v2349 = vadd.f32 %v2228, %v2313
      %v2350 = vadd.f32 %v2229, %v2318
      %v2351 = vadd.f32 %v2230, %v2321
      %v2352 = vadd.f32 %v2231, %v2326
      %v2353 = vadd.f32 %v2232, %v2329
      %v2354 = vadd.f32 %v2233, %v2334
      %v2355 = vadd.f32 %v2234, %v2337
      %s2356 = scalar_lea.vmem %s3, 34
      %v2357 = vld [vmem:[%s2356] sm:$0x3]
      %v2359 = vsel %vm658, %v1970, 0
      %v2362 = vsel %vm570, %v2357, 0
      %2364 = vmatprep.subr.bf16.mxu0 0
      %2365 = vmatpush1.bf16.msra.mxu0 %v2362
      %2366 = vmatprep.subr.bf16.mxu0 0
      %2367 = vmatpush1.bf16.msra.mxu0 0
      %2368 = vmatprep.subr.bf16.mxu0 0
      %2369 = vmatpush1.bf16.msra.mxu0 0
      %2370 = vmatprep.subr.bf16.mxu0 0
      %2371 = vmatpush1.bf16.msra.mxu0 0
      %2372 = vmatprep.subr.bf16.mxu0 0
      %2373 = vmatpush1.bf16.msra.mxu0 0
      %2374 = vmatprep.subr.bf16.mxu0 0
      %2375 = vmatpush1.bf16.msra.mxu0 0
      %2376 = vmatprep.subr.bf16.mxu0 0
      %2377 = vmatpush1.bf16.msra.mxu0 0
      %2378 = vmatprep.subr.bf16.mxu0 0
      %2379 = vmatpush1.bf16.msra.mxu0 0
      %2380 = vmatprep.subr.bf16.mxu0 0
      %2381 = vmatpush1.bf16.msra.mxu0 0
      %2382 = vmatprep.subr.bf16.mxu0 0
      %2383 = vmatpush1.bf16.msra.mxu0 0
      %2384 = vmatprep.subr.bf16.mxu0 0
      %2385 = vmatpush1.bf16.msra.mxu0 0
      %2386 = vmatprep.subr.bf16.mxu0 0
      %2387 = vmatpush1.bf16.msra.mxu0 0
      %2388 = vmatprep.subr.bf16.mxu0 0
      %2389 = vmatpush1.bf16.msra.mxu0 0
      %2390 = vmatprep.subr.bf16.mxu0 0
      %2391 = vmatpush1.bf16.msra.mxu0 0
      %2392 = vmatprep.subr.bf16.mxu0 0
      %2393 = vmatpush1.bf16.msra.mxu0 0
      %2394 = vmatprep.subr.bf16.mxu0 0
      %2395 = vmatpush1.bf16.msra.mxu0 0
      %2396 = vmatprep.mubr.bf16.mxu0 0
      %2397 = vmatmul.mubr.bf16.gmra.mrb[0].mxu0 %v1984
      %v2398 = vpop.f32.mrb[0].mxu0
      %v2399 = vadd.f32 0.0, %v2398
      %v2400 = vpop.f32.mrb[0].mxu0
      %v2401 = vpop.f32.mrb[0].mxu0
      %v2402 = vadd.f32 0.0, %v2401
      %v2403 = vpop.f32.mrb[0].mxu0
      %2404 = vmatprep.mubr.bf16.mxu0 0
      %2405 = vmatmul.mubr.bf16.gmra.mrb[0].mxu0 %v1987
      %v2406 = vpop.f32.mrb[0].mxu0
      %v2407 = vadd.f32 0.0, %v2406
      %v2408 = vpop.f32.mrb[0].mxu0
      %v2409 = vpop.f32.mrb[0].mxu0
      %v2410 = vadd.f32 0.0, %v2409
      %v2411 = vpop.f32.mrb[0].mxu0
      %2412 = vmatprep.mubr.bf16.mxu0 0
      %2413 = vmatmul.mubr.bf16.gmra.mrb[0].mxu0 %v1990
      %v2414 = vpop.f32.mrb[0].mxu0
      %v2415 = vadd.f32 0.0, %v2414
      %v2416 = vpop.f32.mrb[0].mxu0
      %v2417 = vpop.f32.mrb[0].mxu0
      %v2418 = vadd.f32 0.0, %v2417
      %v2419 = vpop.f32.mrb[0].mxu0
      %2420 = vmatprep.mubr.bf16.mxu0 0
      %2421 = vmatmul.mubr.bf16.gmra.mrb[0].mxu0 %v1993
      %v2422 = vpop.f32.mrb[0].mxu0
      %v2423 = vadd.f32 0.0, %v2422
      %v2424 = vpop.f32.mrb[0].mxu0
      %v2425 = vpop.f32.mrb[0].mxu0
      %v2426 = vadd.f32 0.0, %v2425
      %v2427 = vpop.f32.mrb[0].mxu0
      %2428 = vmatprep.mubr.bf16.mxu0 0
      %2429 = vmatmul.mubr.bf16.gmra.mrb[0].mxu0 %v1996
      %v2430 = vpop.f32.mrb[0].mxu0
      %v2431 = vadd.f32 0.0, %v2430
      %v2432 = vpop.f32.mrb[0].mxu0
      %v2433 = vpop.f32.mrb[0].mxu0
      %v2434 = vadd.f32 0.0, %v2433
      %v2435 = vpop.f32.mrb[0].mxu0
      %2436 = vmatprep.mubr.bf16.mxu0 0
      %2437 = vmatmul.mubr.bf16.gmra.mrb[0].mxu0 %v2117
      %v2438 = vpop.f32.mrb[0].mxu0
      %v2439 = vadd.f32 0.0, %v2438
      %v2440 = vpop.f32.mrb[0].mxu0
      %v2441 = vpop.f32.mrb[0].mxu0
      %v2442 = vadd.f32 0.0, %v2441
      %v2443 = vpop.f32.mrb[0].mxu0
      %2444 = vmatprep.mubr.bf16.mxu0 0
      %2445 = vmatmul.mubr.bf16.gmra.mrb[0].mxu0 %v2238
      %v2446 = vpop.f32.mrb[0].mxu0
      %v2447 = vadd.f32 0.0, %v2446
      %v2448 = vpop.f32.mrb[0].mxu0
      %v2449 = vpop.f32.mrb[0].mxu0
      %v2450 = vadd.f32 0.0, %v2449
      %v2451 = vpop.f32.mrb[0].mxu0
      %2452 = vmatprep.mubr.bf16.mxu0 0
      %2453 = vmatmul.mubr.bf16.gmra.mrb[0].mxu0 %v2359
      %v2454 = vpop.f32.mrb[0].mxu0
      %v2455 = vadd.f32 0.0, %v2454
      %v2456 = vpop.f32.mrb[0].mxu0
      %v2457 = vpop.f32.mrb[0].mxu0
      %v2458 = vadd.f32 0.0, %v2457
      %v2459 = vpop.f32.mrb[0].mxu0
      %2460 = vdwg.mxu0
      %v2461 = vadd.f32 %v2340, %v2399
      %v2462 = vadd.f32 %v2341, %v2402
      %v2463 = vadd.f32 %v2342, %v2407
      %v2464 = vadd.f32 %v2343, %v2410
      %v2465 = vadd.f32 %v2344, %v2415
      %v2466 = vadd.f32 %v2345, %v2418
      %v2467 = vadd.f32 %v2346, %v2423
      %v2468 = vadd.f32 %v2347, %v2426
      %v2469 = vadd.f32 %v2348, %v2431
      %v2470 = vadd.f32 %v2349, %v2434
      %v2471 = vadd.f32 %v2350, %v2439
      %v2472 = vadd.f32 %v2351, %v2442
      %v2473 = vadd.f32 %v2352, %v2447
      %v2474 = vadd.f32 %v2353, %v2450
      %v2475 = vadd.f32 %v2354, %v2455
      %v2476 = vadd.f32 %v2355, %v2458
      %s2477 = scalar_lea.vmem %s3, 44
      %v2478 = vld [vmem:[%s2477] sm:$0x3]
      %v2480 = vsel %vm658, %v1971, 0
      %v2483 = vsel %vm570, %v2478, 0
      %2485 = vmatprep.subr.bf16.mxu0 0
      %2486 = vmatpush1.bf16.msra.mxu0 %v2483
      %2487 = vmatprep.subr.bf16.mxu0 0
      %2488 = vmatpush1.bf16.msra.mxu0 0
      %2489 = vmatprep.subr.bf16.mxu0 0
      %2490 = vmatpush1.bf16.msra.mxu0 0
      %2491 = vmatprep.subr.bf16.mxu0 0
      %2492 = vmatpush1.bf16.msra.mxu0 0
      %2493 = vmatprep.subr.bf16.mxu0 0
      %2494 = vmatpush1.bf16.msra.mxu0 0
      %2495 = vmatprep.subr.bf16.mxu0 0
      %2496 = vmatpush1.bf16.msra.mxu0 0
      %2497 = vmatprep.subr.bf16.mxu0 0
      %2498 = vmatpush1.bf16.msra.mxu0 0
      %2499 = vmatprep.subr.bf16.mxu0 0
      %2500 = vmatpush1.bf16.msra.mxu0 0
      %2501 = vmatprep.subr.bf16.mxu0 0
      %2502 = vmatpush1.bf16.msra.mxu0 0
      %2503 = vmatprep.subr.bf16.mxu0 0
      %2504 = vmatpush1.bf16.msra.mxu0 0
      %2505 = vmatprep.subr.bf16.mxu0 0
      %2506 = vmatpush1.bf16.msra.mxu0 0
      %2507 = vmatprep.subr.bf16.mxu0 0
      %2508 = vmatpush1.bf16.msra.mxu0 0
      %2509 = vmatprep.subr.bf16.mxu0 0
      %2510 = vmatpush1.bf16.msra.mxu0 0
      %2511 = vmatprep.subr.bf16.mxu0 0
      %2512 = vmatpush1.bf16.msra.mxu0 0
      %2513 = vmatprep.subr.bf16.mxu0 0
      %2514 = vmatpush1.bf16.msra.mxu0 0
      %2515 = vmatprep.subr.bf16.mxu0 0
      %2516 = vmatpush1.bf16.msra.mxu0 0
      %2517 = vmatprep.mubr.bf16.mxu0 0
      %2518 = vmatmul.mubr.bf16.gmra.mrb[0].mxu0 %v1987
      %v2519 = vpop.f32.mrb[0].mxu0
      %v2520 = vadd.f32 0.0, %v2519
      %v2521 = vpop.f32.mrb[0].mxu0
      %v2522 = vpop.f32.mrb[0].mxu0
      %v2523 = vadd.f32 0.0, %v2522
      %v2524 = vpop.f32.mrb[0].mxu0
      %2525 = vmatprep.mubr.bf16.mxu0 0
      %2526 = vmatmul.mubr.bf16.gmra.mrb[0].mxu0 %v1990
      %v2527 = vpop.f32.mrb[0].mxu0
      %v2528 = vadd.f32 0.0, %v2527
      %v2529 = vpop.f32.mrb[0].mxu0
      %v2530 = vpop.f32.mrb[0].mxu0
      %v2531 = vadd.f32 0.0, %v2530
      %v2532 = vpop.f32.mrb[0].mxu0
      %2533 = vmatprep.mubr.bf16.mxu0 0
      %2534 = vmatmul.mubr.bf16.gmra.mrb[0].mxu0 %v1993
      %v2535 = vpop.f32.mrb[0].mxu0
      %v2536 = vadd.f32 0.0, %v2535
      %v2537 = vpop.f32.mrb[0].mxu0
      %v2538 = vpop.f32.mrb[0].mxu0
      %v2539 = vadd.f32 0.0, %v2538
      %v2540 = vpop.f32.mrb[0].mxu0
      %2541 = vmatprep.mubr.bf16.mxu0 0
      %2542 = vmatmul.mubr.bf16.gmra.mrb[0].mxu0 %v1996
      %v2543 = vpop.f32.mrb[0].mxu0
      %v2544 = vadd.f32 0.0, %v2543
      %v2545 = vpop.f32.mrb[0].mxu0
      %v2546 = vpop.f32.mrb[0].mxu0
      %v2547 = vadd.f32 0.0, %v2546
      %v2548 = vpop.f32.mrb[0].mxu0
      %2549 = vmatprep.mubr.bf16.mxu0 0
      %2550 = vmatmul.mubr.bf16.gmra.mrb[0].mxu0 %v2117
      %v2551 = vpop.f32.mrb[0].mxu0
      %v2552 = vadd.f32 0.0, %v2551
      %v2553 = vpop.f32.mrb[0].mxu0
      %v2554 = vpop.f32.mrb[0].mxu0
      %v2555 = vadd.f32 0.0, %v2554
      %v2556 = vpop.f32.mrb[0].mxu0
      %2557 = vmatprep.mubr.bf16.mxu0 0
      %2558 = vmatmul.mubr.bf16.gmra.mrb[0].mxu0 %v2238
      %v2559 = vpop.f32.mrb[0].mxu0
      %v2560 = vadd.f32 0.0, %v2559
      %v2561 = vpop.f32.mrb[0].mxu0
      %v2562 = vpop.f32.mrb[0].mxu0
      %v2563 = vadd.f32 0.0, %v2562
      %v2564 = vpop.f32.mrb[0].mxu0
      %2565 = vmatprep.mubr.bf16.mxu0 0
      %2566 = vmatmul.mubr.bf16.gmra.mrb[0].mxu0 %v2359
      %v2567 = vpop.f32.mrb[0].mxu0
      %v2568 = vadd.f32 0.0, %v2567
      %v2569 = vpop.f32.mrb[0].mxu0
      %v2570 = vpop.f32.mrb[0].mxu0
      %v2571 = vadd.f32 0.0, %v2570
      %v2572 = vpop.f32.mrb[0].mxu0
      %2573 = vmatprep.mubr.bf16.mxu0 0
      %2574 = vmatmul.mubr.bf16.gmra.mrb[0].mxu0 %v2480
      %v2575 = vpop.f32.mrb[0].mxu0
      %v2576 = vadd.f32 0.0, %v2575
      %v2577 = vpop.f32.mrb[0].mxu0
      %v2578 = vpop.f32.mrb[0].mxu0
      %v2579 = vadd.f32 0.0, %v2578
      %v2580 = vpop.f32.mrb[0].mxu0
      %2581 = vdwg.mxu0
      %v2582 = vadd.f32 %v2461, %v2520
      %v2583 = vadd.f32 %v2462, %v2523
      %v2584 = vadd.f32 %v2463, %v2528
      %v2585 = vadd.f32 %v2464, %v2531
      %v2586 = vadd.f32 %v2465, %v2536
      %v2587 = vadd.f32 %v2466, %v2539
      %v2588 = vadd.f32 %v2467, %v2544
      %v2589 = vadd.f32 %v2468, %v2547
      %v2590 = vadd.f32 %v2469, %v2552
      %v2591 = vadd.f32 %v2470, %v2555
      %v2592 = vadd.f32 %v2471, %v2560
      %v2593 = vadd.f32 %v2472, %v2563
      %v2594 = vadd.f32 %v2473, %v2568
      %v2595 = vadd.f32 %v2474, %v2571
      %v2596 = vadd.f32 %v2475, %v2576
      %v2597 = vadd.f32 %v2476, %v2579
      %vm2598 = vcmask 1046528
      %v2599 = vrot.slane %v514, 1
      %v2600 = vrot.slane %v515, 1
      %v2601 = vsel %vm2598, %v2599, %v2600
      %v2602 = vrot.slane %v516, 1
      %v2603 = vrot.slane %v517, 1
      %v2604 = vsel %vm2598, %v2602, %v2603
      %v2605 = vrot.slane %v530, 1
      %v2606 = vrot.slane %v531, 1
      %v2607 = vsel %vm2598, %v2605, %v2606
      %v2608 = vrot.slane %v532, 1
      %v2609 = vrot.slane %v533, 1
      %v2610 = vsel %vm2598, %v2608, %v2609
      %v2611 = vrot.slane %v534, 1
      %v2612 = vrot.slane %v535, 1
      %v2613 = vsel %vm2598, %v2611, %v2612
      %v2614 = vrot.slane %v536, 1
      %v2615 = vrot.slane %v537, 1
      %v2616 = vsel %vm2598, %v2614, %v2615
      %v2617 = vrot.slane %v538, 1
      %v2618 = vrot.slane %v539, 1
      %v2619 = vsel %vm2598, %v2617, %v2618
      %v2620 = vrot.slane %v540, 1
      %v2621 = vrot.slane %v541, 1
      %v2622 = vsel %vm2598, %v2620, %v2621
      %v2623 = vrot.slane %v542, 1
      %v2624 = vrot.slane %v543, 1
      %v2625 = vsel %vm2598, %v2623, %v2624
      %v2626 = vrot.slane %v544, 1
      %v2627 = vrot.slane %v545, 1
      %v2628 = vsel %vm2598, %v2626, %v2627
      %v2629 = vrot.slane %v526, 1
      %v2630 = vrot.slane %v527, 1
      %v2631 = vsel %vm2598, %v2629, %v2630
      %v2632 = vrot.slane %v528, 1
      %v2633 = vrot.slane %v529, 1
      %v2634 = vsel %vm2598, %v2632, %v2633
      %v2659 = vsel %vm2598, %v2600, 0.0
      %v2660 = vsel %vm2598, %v2603, 0.0
      %v2661 = vsel %vm2598, %v2606, 0.0
      %v2662 = vsel %vm2598, %v2609, 0.0
      %v2663 = vsel %vm2598, %v2612, 0.0
      %v2664 = vsel %vm2598, %v2615, 0.0
      %v2665 = vsel %vm2598, %v2618, 0.0
      %v2666 = vsel %vm2598, %v2621, 0.0
      %v2667 = vsel %vm2598, %v2624, 0.0
      %v2668 = vsel %vm2598, %v2627, 0.0
      %v2669 = vsel %vm2598, %v2630, 0.0
      %v2670 = vsel %vm2598, %v2633, 0.0
      %v2671 = vpack.c.bf16 %v2659, %v2601
      %v2672 = vpack.c.bf16 %v2660, %v2604
      %v2673 = vpack.c.bf16 %v2661, %v2607
      %v2674 = vpack.c.bf16 %v2662, %v2610
      %v2675 = vpack.c.bf16 %v2663, %v2613
      %v2676 = vpack.c.bf16 %v2664, %v2616
      %v2677 = vpack.c.bf16 %v2665, %v2619
      %v2678 = vpack.c.bf16 %v2666, %v2622
      %v2679 = vpack.c.bf16 %v2667, %v2625
      %v2680 = vpack.c.bf16 %v2668, %v2628
      %v2681 = vpack.c.bf16 %v2669, %v2631
      %v2682 = vpack.c.bf16 %v2670, %v2634
      %s2683 = scalar_lea.vmem %s3, 6
      %v2684 = vld [vmem:[%s2683] sm:$0x3]
      %v2686 = vsel %vm658, %v2671, 0
      %v2689 = vsel %vm658, %v2672, 0
      %v2692 = vsel %vm658, %v2673, 0
      %v2695 = vsel %vm658, %v2674, 0
      %v2698 = vsel %vm658, %v2675, 0
      %v2701 = vsel %vm658, %v2676, 0
      %v2704 = vsel %vm658, %v2677, 0
      %v2707 = vsel %vm658, %v2678, 0
      %v2710 = vsel %vm570, %v2684, 0
      %2712 = vmatprep.subr.bf16.mxu0 0
      %2713 = vmatpush1.bf16.msra.mxu0 %v2710
      %2714 = vmatprep.subr.bf16.mxu0 0
      %2715 = vmatpush1.bf16.msra.mxu0 0
      %2716 = vmatprep.subr.bf16.mxu0 0
      %2717 = vmatpush1.bf16.msra.mxu0 0
      %2718 = vmatprep.subr.bf16.mxu0 0
      %2719 = vmatpush1.bf16.msra.mxu0 0
      %2720 = vmatprep.subr.bf16.mxu0 0
      %2721 = vmatpush1.bf16.msra.mxu0 0
      %2722 = vmatprep.subr.bf16.mxu0 0
      %2723 = vmatpush1.bf16.msra.mxu0 0
      %2724 = vmatprep.subr.bf16.mxu0 0
      %2725 = vmatpush1.bf16.msra.mxu0 0
      %2726 = vmatprep.subr.bf16.mxu0 0
      %2727 = vmatpush1.bf16.msra.mxu0 0
      %2728 = vmatprep.subr.bf16.mxu0 0
      %2729 = vmatpush1.bf16.msra.mxu0 0
      %2730 = vmatprep.subr.bf16.mxu0 0
      %2731 = vmatpush1.bf16.msra.mxu0 0
      %2732 = vmatprep.subr.bf16.mxu0 0
      %2733 = vmatpush1.bf16.msra.mxu0 0
      %2734 = vmatprep.subr.bf16.mxu0 0
      %2735 = vmatpush1.bf16.msra.mxu0 0
      %2736 = vmatprep.subr.bf16.mxu0 0
      %2737 = vmatpush1.bf16.msra.mxu0 0
      %2738 = vmatprep.subr.bf16.mxu0 0
      %2739 = vmatpush1.bf16.msra.mxu0 0
      %2740 = vmatprep.subr.bf16.mxu0 0
      %2741 = vmatpush1.bf16.msra.mxu0 0
      %2742 = vmatprep.subr.bf16.mxu0 0
      %2743 = vmatpush1.bf16.msra.mxu0 0
      %2744 = vmatprep.mubr.bf16.mxu0 0
      %2745 = vmatmul.mubr.bf16.gmra.mrb[0].mxu0 %v2686
      %v2746 = vpop.f32.mrb[0].mxu0
      %v2747 = vadd.f32 0.0, %v2746
      %v2748 = vpop.f32.mrb[0].mxu0
      %v2749 = vpop.f32.mrb[0].mxu0
      %v2750 = vadd.f32 0.0, %v2749
      %v2751 = vpop.f32.mrb[0].mxu0
      %2752 = vmatprep.mubr.bf16.mxu0 0
      %2753 = vmatmul.mubr.bf16.gmra.mrb[0].mxu0 %v2689
      %v2754 = vpop.f32.mrb[0].mxu0
      %v2755 = vadd.f32 0.0, %v2754
      %v2756 = vpop.f32.mrb[0].mxu0
      %v2757 = vpop.f32.mrb[0].mxu0
      %v2758 = vadd.f32 0.0, %v2757
      %v2759 = vpop.f32.mrb[0].mxu0
      %2760 = vmatprep.mubr.bf16.mxu0 0
      %2761 = vmatmul.mubr.bf16.gmra.mrb[0].mxu0 %v2692
      %v2762 = vpop.f32.mrb[0].mxu0
      %v2763 = vadd.f32 0.0, %v2762
      %v2764 = vpop.f32.mrb[0].mxu0
      %v2765 = vpop.f32.mrb[0].mxu0
      %v2766 = vadd.f32 0.0, %v2765
      %v2767 = vpop.f32.mrb[0].mxu0
      %2768 = vmatprep.mubr.bf16.mxu0 0
      %2769 = vmatmul.mubr.bf16.gmra.mrb[0].mxu0 %v2695
      %v2770 = vpop.f32.mrb[0].mxu0
      %v2771 = vadd.f32 0.0, %v2770
      %v2772 = vpop.f32.mrb[0].mxu0
      %v2773 = vpop.f32.mrb[0].mxu0
      %v2774 = vadd.f32 0.0, %v2773
      %v2775 = vpop.f32.mrb[0].mxu0
      %2776 = vmatprep.mubr.bf16.mxu0 0
      %2777 = vmatmul.mubr.bf16.gmra.mrb[0].mxu0 %v2698
      %v2778 = vpop.f32.mrb[0].mxu0
      %v2779 = vadd.f32 0.0, %v2778
      %v2780 = vpop.f32.mrb[0].mxu0
      %v2781 = vpop.f32.mrb[0].mxu0
      %v2782 = vadd.f32 0.0, %v2781
      %v2783 = vpop.f32.mrb[0].mxu0
      %2784 = vmatprep.mubr.bf16.mxu0 0
      %2785 = vmatmul.mubr.bf16.gmra.mrb[0].mxu0 %v2701
      %v2786 = vpop.f32.mrb[0].mxu0
      %v2787 = vadd.f32 0.0, %v2786
      %v2788 = vpop.f32.mrb[0].mxu0
      %v2789 = vpop.f32.mrb[0].mxu0
      %v2790 = vadd.f32 0.0, %v2789
      %v2791 = vpop.f32.mrb[0].mxu0
      %2792 = vmatprep.mubr.bf16.mxu0 0
      %2793 = vmatmul.mubr.bf16.gmra.mrb[0].mxu0 %v2704
      %v2794 = vpop.f32.mrb[0].mxu0
      %v2795 = vadd.f32 0.0, %v2794
      %v2796 = vpop.f32.mrb[0].mxu0
      %v2797 = vpop.f32.mrb[0].mxu0
      %v2798 = vadd.f32 0.0, %v2797
      %v2799 = vpop.f32.mrb[0].mxu0
      %2800 = vmatprep.mubr.bf16.mxu0 0
      %2801 = vmatmul.mubr.bf16.gmra.mrb[0].mxu0 %v2707
      %v2802 = vpop.f32.mrb[0].mxu0
      %v2803 = vadd.f32 0.0, %v2802
      %v2804 = vpop.f32.mrb[0].mxu0
      %v2805 = vpop.f32.mrb[0].mxu0
      %v2806 = vadd.f32 0.0, %v2805
      %v2807 = vpop.f32.mrb[0].mxu0
      %2808 = vdwg.mxu0
      %v2809 = vadd.f32 %v2582, %v2747
      %v2810 = vadd.f32 %v2583, %v2750
      %v2811 = vadd.f32 %v2584, %v2755
      %v2812 = vadd.f32 %v2585, %v2758
      %v2813 = vadd.f32 %v2586, %v2763
      %v2814 = vadd.f32 %v2587, %v2766
      %v2815 = vadd.f32 %v2588, %v2771
      %v2816 = vadd.f32 %v2589, %v2774
      %v2817 = vadd.f32 %v2590, %v2779
      %v2818 = vadd.f32 %v2591, %v2782
      %v2819 = vadd.f32 %v2592, %v2787
      %v2820 = vadd.f32 %v2593, %v2790
      %v2821 = vadd.f32 %v2594, %v2795
      %v2822 = vadd.f32 %v2595, %v2798
      %v2823 = vadd.f32 %v2596, %v2803
      %v2824 = vadd.f32 %v2597, %v2806
      %s2825 = scalar_lea.vmem %s3, 16
      %v2826 = vld [vmem:[%s2825] sm:$0x3]
      %v2828 = vsel %vm658, %v2679, 0
      %v2831 = vsel %vm570, %v2826, 0
      %2833 = vmatprep.subr.bf16.mxu0 0
      %2834 = vmatpush1.bf16.msra.mxu0 %v2831
      %2835 = vmatprep.subr.bf16.mxu0 0
      %2836 = vmatpush1.bf16.msra.mxu0 0
      %2837 = vmatprep.subr.bf16.mxu0 0
      %2838 = vmatpush1.bf16.msra.mxu0 0
      %2839 = vmatprep.subr.bf16.mxu0 0
      %2840 = vmatpush1.bf16.msra.mxu0 0
      %2841 = vmatprep.subr.bf16.mxu0 0
      %2842 = vmatpush1.bf16.msra.mxu0 0
      %2843 = vmatprep.subr.bf16.mxu0 0
      %2844 = vmatpush1.bf16.msra.mxu0 0
      %2845 = vmatprep.subr.bf16.mxu0 0
      %2846 = vmatpush1.bf16.msra.mxu0 0
      %2847 = vmatprep.subr.bf16.mxu0 0
      %2848 = vmatpush1.bf16.msra.mxu0 0
      %2849 = vmatprep.subr.bf16.mxu0 0
      %2850 = vmatpush1.bf16.msra.mxu0 0
      %2851 = vmatprep.subr.bf16.mxu0 0
      %2852 = vmatpush1.bf16.msra.mxu0 0
      %2853 = vmatprep.subr.bf16.mxu0 0
      %2854 = vmatpush1.bf16.msra.mxu0 0
      %2855 = vmatprep.subr.bf16.mxu0 0
      %2856 = vmatpush1.bf16.msra.mxu0 0
      %2857 = vmatprep.subr.bf16.mxu0 0
      %2858 = vmatpush1.bf16.msra.mxu0 0
      %2859 = vmatprep.subr.bf16.mxu0 0
      %2860 = vmatpush1.bf16.msra.mxu0 0
      %2861 = vmatprep.subr.bf16.mxu0 0
      %2862 = vmatpush1.bf16.msra.mxu0 0
      %2863 = vmatprep.subr.bf16.mxu0 0
      %2864 = vmatpush1.bf16.msra.mxu0 0
      %2865 = vmatprep.mubr.bf16.mxu0 0
      %2866 = vmatmul.mubr.bf16.gmra.mrb[0].mxu0 %v2689
      %v2867 = vpop.f32.mrb[0].mxu0
      %v2868 = vadd.f32 0.0, %v2867
      %v2869 = vpop.f32.mrb[0].mxu0
      %v2870 = vpop.f32.mrb[0].mxu0
      %v2871 = vadd.f32 0.0, %v2870
      %v2872 = vpop.f32.mrb[0].mxu0
      %2873 = vmatprep.mubr.bf16.mxu0 0
      %2874 = vmatmul.mubr.bf16.gmra.mrb[0].mxu0 %v2692
      %v2875 = vpop.f32.mrb[0].mxu0
      %v2876 = vadd.f32 0.0, %v2875
      %v2877 = vpop.f32.mrb[0].mxu0
      %v2878 = vpop.f32.mrb[0].mxu0
      %v2879 = vadd.f32 0.0, %v2878
      %v2880 = vpop.f32.mrb[0].mxu0
      %2881 = vmatprep.mubr.bf16.mxu0 0
      %2882 = vmatmul.mubr.bf16.gmra.mrb[0].mxu0 %v2695
      %v2883 = vpop.f32.mrb[0].mxu0
      %v2884 = vadd.f32 0.0, %v2883
      %v2885 = vpop.f32.mrb[0].mxu0
      %v2886 = vpop.f32.mrb[0].mxu0
      %v2887 = vadd.f32 0.0, %v2886
      %v2888 = vpop.f32.mrb[0].mxu0
      %2889 = vmatprep.mubr.bf16.mxu0 0
      %2890 = vmatmul.mubr.bf16.gmra.mrb[0].mxu0 %v2698
      %v2891 = vpop.f32.mrb[0].mxu0
      %v2892 = vadd.f32 0.0, %v2891
      %v2893 = vpop.f32.mrb[0].mxu0
      %v2894 = vpop.f32.mrb[0].mxu0
      %v2895 = vadd.f32 0.0, %v2894
      %v2896 = vpop.f32.mrb[0].mxu0
      %2897 = vmatprep.mubr.bf16.mxu0 0
      %2898 = vmatmul.mubr.bf16.gmra.mrb[0].mxu0 %v2701
      %v2899 = vpop.f32.mrb[0].mxu0
      %v2900 = vadd.f32 0.0, %v2899
      %v2901 = vpop.f32.mrb[0].mxu0
      %v2902 = vpop.f32.mrb[0].mxu0
      %v2903 = vadd.f32 0.0, %v2902
      %v2904 = vpop.f32.mrb[0].mxu0
      %2905 = vmatprep.mubr.bf16.mxu0 0
      %2906 = vmatmul.mubr.bf16.gmra.mrb[0].mxu0 %v2704
      %v2907 = vpop.f32.mrb[0].mxu0
      %v2908 = vadd.f32 0.0, %v2907
      %v2909 = vpop.f32.mrb[0].mxu0
      %v2910 = vpop.f32.mrb[0].mxu0
      %v2911 = vadd.f32 0.0, %v2910
      %v2912 = vpop.f32.mrb[0].mxu0
      %2913 = vmatprep.mubr.bf16.mxu0 0
      %2914 = vmatmul.mubr.bf16.gmra.mrb[0].mxu0 %v2707
      %v2915 = vpop.f32.mrb[0].mxu0
      %v2916 = vadd.f32 0.0, %v2915
      %v2917 = vpop.f32.mrb[0].mxu0
      %v2918 = vpop.f32.mrb[0].mxu0
      %v2919 = vadd.f32 0.0, %v2918
      %v2920 = vpop.f32.mrb[0].mxu0
      %2921 = vmatprep.mubr.bf16.mxu0 0
      %2922 = vmatmul.mubr.bf16.gmra.mrb[0].mxu0 %v2828
      %v2923 = vpop.f32.mrb[0].mxu0
      %v2924 = vadd.f32 0.0, %v2923
      %v2925 = vpop.f32.mrb[0].mxu0
      %v2926 = vpop.f32.mrb[0].mxu0
      %v2927 = vadd.f32 0.0, %v2926
      %v2928 = vpop.f32.mrb[0].mxu0
      %2929 = vdwg.mxu0
      %v2930 = vadd.f32 %v2809, %v2868
      %v2931 = vadd.f32 %v2810, %v2871
      %v2932 = vadd.f32 %v2811, %v2876
      %v2933 = vadd.f32 %v2812, %v2879
      %v2934 = vadd.f32 %v2813, %v2884
      %v2935 = vadd.f32 %v2814, %v2887
      %v2936 = vadd.f32 %v2815, %v2892
      %v2937 = vadd.f32 %v2816, %v2895
      %v2938 = vadd.f32 %v2817, %v2900
      %v2939 = vadd.f32 %v2818, %v2903
      %v2940 = vadd.f32 %v2819, %v2908
      %v2941 = vadd.f32 %v2820, %v2911
      %v2942 = vadd.f32 %v2821, %v2916
      %v2943 = vadd.f32 %v2822, %v2919
      %v2944 = vadd.f32 %v2823, %v2924
      %v2945 = vadd.f32 %v2824, %v2927
      %s2946 = scalar_lea.vmem %s3, 26
      %v2947 = vld [vmem:[%s2946] sm:$0x3]
      %v2949 = vsel %vm658, %v2680, 0
      %v2952 = vsel %vm570, %v2947, 0
      %2954 = vmatprep.subr.bf16.mxu0 0
      %2955 = vmatpush1.bf16.msra.mxu0 %v2952
      %2956 = vmatprep.subr.bf16.mxu0 0
      %2957 = vmatpush1.bf16.msra.mxu0 0
      %2958 = vmatprep.subr.bf16.mxu0 0
      %2959 = vmatpush1.bf16.msra.mxu0 0
      %2960 = vmatprep.subr.bf16.mxu0 0
      %2961 = vmatpush1.bf16.msra.mxu0 0
      %2962 = vmatprep.subr.bf16.mxu0 0
      %2963 = vmatpush1.bf16.msra.mxu0 0
      %2964 = vmatprep.subr.bf16.mxu0 0
      %2965 = vmatpush1.bf16.msra.mxu0 0
      %2966 = vmatprep.subr.bf16.mxu0 0
      %2967 = vmatpush1.bf16.msra.mxu0 0
      %2968 = vmatprep.subr.bf16.mxu0 0
      %2969 = vmatpush1.bf16.msra.mxu0 0
      %2970 = vmatprep.subr.bf16.mxu0 0
      %2971 = vmatpush1.bf16.msra.mxu0 0
      %2972 = vmatprep.subr.bf16.mxu0 0
      %2973 = vmatpush1.bf16.msra.mxu0 0
      %2974 = vmatprep.subr.bf16.mxu0 0
      %2975 = vmatpush1.bf16.msra.mxu0 0
      %2976 = vmatprep.subr.bf16.mxu0 0
      %2977 = vmatpush1.bf16.msra.mxu0 0
      %2978 = vmatprep.subr.bf16.mxu0 0
      %2979 = vmatpush1.bf16.msra.mxu0 0
      %2980 = vmatprep.subr.bf16.mxu0 0
      %2981 = vmatpush1.bf16.msra.mxu0 0
      %2982 = vmatprep.subr.bf16.mxu0 0
      %2983 = vmatpush1.bf16.msra.mxu0 0
      %2984 = vmatprep.subr.bf16.mxu0 0
      %2985 = vmatpush1.bf16.msra.mxu0 0
      %2986 = vmatprep.mubr.bf16.mxu0 0
      %2987 = vmatmul.mubr.bf16.gmra.mrb[0].mxu0 %v2692
      %v2988 = vpop.f32.mrb[0].mxu0
      %v2989 = vadd.f32 0.0, %v2988
      %v2990 = vpop.f32.mrb[0].mxu0
      %v2991 = vpop.f32.mrb[0].mxu0
      %v2992 = vadd.f32 0.0, %v2991
      %v2993 = vpop.f32.mrb[0].mxu0
      %2994 = vmatprep.mubr.bf16.mxu0 0
      %2995 = vmatmul.mubr.bf16.gmra.mrb[0].mxu0 %v2695
      %v2996 = vpop.f32.mrb[0].mxu0
      %v2997 = vadd.f32 0.0, %v2996
      %v2998 = vpop.f32.mrb[0].mxu0
      %v2999 = vpop.f32.mrb[0].mxu0
      %v3000 = vadd.f32 0.0, %v2999
      %v3001 = vpop.f32.mrb[0].mxu0
      %3002 = vmatprep.mubr.bf16.mxu0 0
      %3003 = vmatmul.mubr.bf16.gmra.mrb[0].mxu0 %v2698
      %v3004 = vpop.f32.mrb[0].mxu0
      %v3005 = vadd.f32 0.0, %v3004
      %v3006 = vpop.f32.mrb[0].mxu0
      %v3007 = vpop.f32.mrb[0].mxu0
      %v3008 = vadd.f32 0.0, %v3007
      %v3009 = vpop.f32.mrb[0].mxu0
      %3010 = vmatprep.mubr.bf16.mxu0 0
      %3011 = vmatmul.mubr.bf16.gmra.mrb[0].mxu0 %v2701
      %v3012 = vpop.f32.mrb[0].mxu0
      %v3013 = vadd.f32 0.0, %v3012
      %v3014 = vpop.f32.mrb[0].mxu0
      %v3015 = vpop.f32.mrb[0].mxu0
      %v3016 = vadd.f32 0.0, %v3015
      %v3017 = vpop.f32.mrb[0].mxu0
      %3018 = vmatprep.mubr.bf16.mxu0 0
      %3019 = vmatmul.mubr.bf16.gmra.mrb[0].mxu0 %v2704
      %v3020 = vpop.f32.mrb[0].mxu0
      %v3021 = vadd.f32 0.0, %v3020
      %v3022 = vpop.f32.mrb[0].mxu0
      %v3023 = vpop.f32.mrb[0].mxu0
      %v3024 = vadd.f32 0.0, %v3023
      %v3025 = vpop.f32.mrb[0].mxu0
      %3026 = vmatprep.mubr.bf16.mxu0 0
      %3027 = vmatmul.mubr.bf16.gmra.mrb[0].mxu0 %v2707
      %v3028 = vpop.f32.mrb[0].mxu0
      %v3029 = vadd.f32 0.0, %v3028
      %v3030 = vpop.f32.mrb[0].mxu0
      %v3031 = vpop.f32.mrb[0].mxu0
      %v3032 = vadd.f32 0.0, %v3031
      %v3033 = vpop.f32.mrb[0].mxu0
      %3034 = vmatprep.mubr.bf16.mxu0 0
      %3035 = vmatmul.mubr.bf16.gmra.mrb[0].mxu0 %v2828
      %v3036 = vpop.f32.mrb[0].mxu0
      %v3037 = vadd.f32 0.0, %v3036
      %v3038 = vpop.f32.mrb[0].mxu0
      %v3039 = vpop.f32.mrb[0].mxu0
      %v3040 = vadd.f32 0.0, %v3039
      %v3041 = vpop.f32.mrb[0].mxu0
      %3042 = vmatprep.mubr.bf16.mxu0 0
      %3043 = vmatmul.mubr.bf16.gmra.mrb[0].mxu0 %v2949
      %v3044 = vpop.f32.mrb[0].mxu0
      %v3045 = vadd.f32 0.0, %v3044
      %v3046 = vpop.f32.mrb[0].mxu0
      %v3047 = vpop.f32.mrb[0].mxu0
      %v3048 = vadd.f32 0.0, %v3047
      %v3049 = vpop.f32.mrb[0].mxu0
      %3050 = vdwg.mxu0
      %v3051 = vadd.f32 %v2930, %v2989
      %v3052 = vadd.f32 %v2931, %v2992
      %v3053 = vadd.f32 %v2932, %v2997
      %v3054 = vadd.f32 %v2933, %v3000
      %v3055 = vadd.f32 %v2934, %v3005
      %v3056 = vadd.f32 %v2935, %v3008
      %v3057 = vadd.f32 %v2936, %v3013
      %v3058 = vadd.f32 %v2937, %v3016
      %v3059 = vadd.f32 %v2938, %v3021
      %v3060 = vadd.f32 %v2939, %v3024
      %v3061 = vadd.f32 %v2940, %v3029
      %v3062 = vadd.f32 %v2941, %v3032
      %v3063 = vadd.f32 %v2942, %v3037
      %v3064 = vadd.f32 %v2943, %v3040
      %v3065 = vadd.f32 %v2944, %v3045
      %v3066 = vadd.f32 %v2945, %v3048
      %s3067 = scalar_lea.vmem %s3, 36
      %v3068 = vld [vmem:[%s3067] sm:$0x3]
      %v3070 = vsel %vm658, %v2681, 0
      %v3073 = vsel %vm570, %v3068, 0
      %3075 = vmatprep.subr.bf16.mxu0 0
      %3076 = vmatpush1.bf16.msra.mxu0 %v3073
      %3077 = vmatprep.subr.bf16.mxu0 0
      %3078 = vmatpush1.bf16.msra.mxu0 0
      %3079 = vmatprep.subr.bf16.mxu0 0
      %3080 = vmatpush1.bf16.msra.mxu0 0
      %3081 = vmatprep.subr.bf16.mxu0 0
      %3082 = vmatpush1.bf16.msra.mxu0 0
      %3083 = vmatprep.subr.bf16.mxu0 0
      %3084 = vmatpush1.bf16.msra.mxu0 0
      %3085 = vmatprep.subr.bf16.mxu0 0
      %3086 = vmatpush1.bf16.msra.mxu0 0
      %3087 = vmatprep.subr.bf16.mxu0 0
      %3088 = vmatpush1.bf16.msra.mxu0 0
      %3089 = vmatprep.subr.bf16.mxu0 0
      %3090 = vmatpush1.bf16.msra.mxu0 0
      %3091 = vmatprep.subr.bf16.mxu0 0
      %3092 = vmatpush1.bf16.msra.mxu0 0
      %3093 = vmatprep.subr.bf16.mxu0 0
      %3094 = vmatpush1.bf16.msra.mxu0 0
      %3095 = vmatprep.subr.bf16.mxu0 0
      %3096 = vmatpush1.bf16.msra.mxu0 0
      %3097 = vmatprep.subr.bf16.mxu0 0
      %3098 = vmatpush1.bf16.msra.mxu0 0
      %3099 = vmatprep.subr.bf16.mxu0 0
      %3100 = vmatpush1.bf16.msra.mxu0 0
      %3101 = vmatprep.subr.bf16.mxu0 0
      %3102 = vmatpush1.bf16.msra.mxu0 0
      %3103 = vmatprep.subr.bf16.mxu0 0
      %3104 = vmatpush1.bf16.msra.mxu0 0
      %3105 = vmatprep.subr.bf16.mxu0 0
      %3106 = vmatpush1.bf16.msra.mxu0 0
      %3107 = vmatprep.mubr.bf16.mxu0 0
      %3108 = vmatmul.mubr.bf16.gmra.mrb[0].mxu0 %v2695
      %v3109 = vpop.f32.mrb[0].mxu0
      %v3110 = vadd.f32 0.0, %v3109
      %v3111 = vpop.f32.mrb[0].mxu0
      %v3112 = vpop.f32.mrb[0].mxu0
      %v3113 = vadd.f32 0.0, %v3112
      %v3114 = vpop.f32.mrb[0].mxu0
      %3115 = vmatprep.mubr.bf16.mxu0 0
      %3116 = vmatmul.mubr.bf16.gmra.mrb[0].mxu0 %v2698
      %v3117 = vpop.f32.mrb[0].mxu0
      %v3118 = vadd.f32 0.0, %v3117
      %v3119 = vpop.f32.mrb[0].mxu0
      %v3120 = vpop.f32.mrb[0].mxu0
      %v3121 = vadd.f32 0.0, %v3120
      %v3122 = vpop.f32.mrb[0].mxu0
      %3123 = vmatprep.mubr.bf16.mxu0 0
      %3124 = vmatmul.mubr.bf16.gmra.mrb[0].mxu0 %v2701
      %v3125 = vpop.f32.mrb[0].mxu0
      %v3126 = vadd.f32 0.0, %v3125
      %v3127 = vpop.f32.mrb[0].mxu0
      %v3128 = vpop.f32.mrb[0].mxu0
      %v3129 = vadd.f32 0.0, %v3128
      %v3130 = vpop.f32.mrb[0].mxu0
      %3131 = vmatprep.mubr.bf16.mxu0 0
      %3132 = vmatmul.mubr.bf16.gmra.mrb[0].mxu0 %v2704
      %v3133 = vpop.f32.mrb[0].mxu0
      %v3134 = vadd.f32 0.0, %v3133
      %v3135 = vpop.f32.mrb[0].mxu0
      %v3136 = vpop.f32.mrb[0].mxu0
      %v3137 = vadd.f32 0.0, %v3136
      %v3138 = vpop.f32.mrb[0].mxu0
      %3139 = vmatprep.mubr.bf16.mxu0 0
      %3140 = vmatmul.mubr.bf16.gmra.mrb[0].mxu0 %v2707
      %v3141 = vpop.f32.mrb[0].mxu0
      %v3142 = vadd.f32 0.0, %v3141
      %v3143 = vpop.f32.mrb[0].mxu0
      %v3144 = vpop.f32.mrb[0].mxu0
      %v3145 = vadd.f32 0.0, %v3144
      %v3146 = vpop.f32.mrb[0].mxu0
      %3147 = vmatprep.mubr.bf16.mxu0 0
      %3148 = vmatmul.mubr.bf16.gmra.mrb[0].mxu0 %v2828
      %v3149 = vpop.f32.mrb[0].mxu0
      %v3150 = vadd.f32 0.0, %v3149
      %v3151 = vpop.f32.mrb[0].mxu0
      %v3152 = vpop.f32.mrb[0].mxu0
      %v3153 = vadd.f32 0.0, %v3152
      %v3154 = vpop.f32.mrb[0].mxu0
      %3155 = vmatprep.mubr.bf16.mxu0 0
      %3156 = vmatmul.mubr.bf16.gmra.mrb[0].mxu0 %v2949
      %v3157 = vpop.f32.mrb[0].mxu0
      %v3158 = vadd.f32 0.0, %v3157
      %v3159 = vpop.f32.mrb[0].mxu0
      %v3160 = vpop.f32.mrb[0].mxu0
      %v3161 = vadd.f32 0.0, %v3160
      %v3162 = vpop.f32.mrb[0].mxu0
      %3163 = vmatprep.mubr.bf16.mxu0 0
      %3164 = vmatmul.mubr.bf16.gmra.mrb[0].mxu0 %v3070
      %v3165 = vpop.f32.mrb[0].mxu0
      %v3166 = vadd.f32 0.0, %v3165
      %v3167 = vpop.f32.mrb[0].mxu0
      %v3168 = vpop.f32.mrb[0].mxu0
      %v3169 = vadd.f32 0.0, %v3168
      %v3170 = vpop.f32.mrb[0].mxu0
      %3171 = vdwg.mxu0
      %v3172 = vadd.f32 %v3051, %v3110
      %v3173 = vadd.f32 %v3052, %v3113
      %v3174 = vadd.f32 %v3053, %v3118
      %v3175 = vadd.f32 %v3054, %v3121
      %v3176 = vadd.f32 %v3055, %v3126
      %v3177 = vadd.f32 %v3056, %v3129
      %v3178 = vadd.f32 %v3057, %v3134
      %v3179 = vadd.f32 %v3058, %v3137
      %v3180 = vadd.f32 %v3059, %v3142
      %v3181 = vadd.f32 %v3060, %v3145
      %v3182 = vadd.f32 %v3061, %v3150
      %v3183 = vadd.f32 %v3062, %v3153
      %v3184 = vadd.f32 %v3063, %v3158
      %v3185 = vadd.f32 %v3064, %v3161
      %v3186 = vadd.f32 %v3065, %v3166
      %v3187 = vadd.f32 %v3066, %v3169
      %s3188 = scalar_lea.vmem %s3, 46
      %v3189 = vld [vmem:[%s3188] sm:$0x3]
      %v3191 = vsel %vm658, %v2682, 0
      %v3194 = vsel %vm570, %v3189, 0
      %3196 = vmatprep.subr.bf16.mxu0 0
      %3197 = vmatpush1.bf16.msra.mxu0 %v3194
      %3198 = vmatprep.subr.bf16.mxu0 0
      %3199 = vmatpush1.bf16.msra.mxu0 0
      %3200 = vmatprep.subr.bf16.mxu0 0
      %3201 = vmatpush1.bf16.msra.mxu0 0
      %3202 = vmatprep.subr.bf16.mxu0 0
      %3203 = vmatpush1.bf16.msra.mxu0 0
      %3204 = vmatprep.subr.bf16.mxu0 0
      %3205 = vmatpush1.bf16.msra.mxu0 0
      %3206 = vmatprep.subr.bf16.mxu0 0
      %3207 = vmatpush1.bf16.msra.mxu0 0
      %3208 = vmatprep.subr.bf16.mxu0 0
      %3209 = vmatpush1.bf16.msra.mxu0 0
      %3210 = vmatprep.subr.bf16.mxu0 0
      %3211 = vmatpush1.bf16.msra.mxu0 0
      %3212 = vmatprep.subr.bf16.mxu0 0
      %3213 = vmatpush1.bf16.msra.mxu0 0
      %3214 = vmatprep.subr.bf16.mxu0 0
      %3215 = vmatpush1.bf16.msra.mxu0 0
      %3216 = vmatprep.subr.bf16.mxu0 0
      %3217 = vmatpush1.bf16.msra.mxu0 0
      %3218 = vmatprep.subr.bf16.mxu0 0
      %3219 = vmatpush1.bf16.msra.mxu0 0
      %3220 = vmatprep.subr.bf16.mxu0 0
      %3221 = vmatpush1.bf16.msra.mxu0 0
      %3222 = vmatprep.subr.bf16.mxu0 0
      %3223 = vmatpush1.bf16.msra.mxu0 0
      %3224 = vmatprep.subr.bf16.mxu0 0
      %3225 = vmatpush1.bf16.msra.mxu0 0
      %3226 = vmatprep.subr.bf16.mxu0 0
      %3227 = vmatpush1.bf16.msra.mxu0 0
      %3228 = vmatprep.mubr.bf16.mxu0 0
      %3229 = vmatmul.mubr.bf16.gmra.mrb[0].mxu0 %v2698
      %v3230 = vpop.f32.mrb[0].mxu0
      %v3231 = vadd.f32 0.0, %v3230
      %v3232 = vpop.f32.mrb[0].mxu0
      %v3233 = vpop.f32.mrb[0].mxu0
      %v3234 = vadd.f32 0.0, %v3233
      %v3235 = vpop.f32.mrb[0].mxu0
      %3236 = vmatprep.mubr.bf16.mxu0 0
      %3237 = vmatmul.mubr.bf16.gmra.mrb[0].mxu0 %v2701
      %v3238 = vpop.f32.mrb[0].mxu0
      %v3239 = vadd.f32 0.0, %v3238
      %v3240 = vpop.f32.mrb[0].mxu0
      %v3241 = vpop.f32.mrb[0].mxu0
      %v3242 = vadd.f32 0.0, %v3241
      %v3243 = vpop.f32.mrb[0].mxu0
      %3244 = vmatprep.mubr.bf16.mxu0 0
      %3245 = vmatmul.mubr.bf16.gmra.mrb[0].mxu0 %v2704
      %v3246 = vpop.f32.mrb[0].mxu0
      %v3247 = vadd.f32 0.0, %v3246
      %v3248 = vpop.f32.mrb[0].mxu0
      %v3249 = vpop.f32.mrb[0].mxu0
      %v3250 = vadd.f32 0.0, %v3249
      %v3251 = vpop.f32.mrb[0].mxu0
      %3252 = vmatprep.mubr.bf16.mxu0 0
      %3253 = vmatmul.mubr.bf16.gmra.mrb[0].mxu0 %v2707
      %v3254 = vpop.f32.mrb[0].mxu0
      %v3255 = vadd.f32 0.0, %v3254
      %v3256 = vpop.f32.mrb[0].mxu0
      %v3257 = vpop.f32.mrb[0].mxu0
      %v3258 = vadd.f32 0.0, %v3257
      %v3259 = vpop.f32.mrb[0].mxu0
      %3260 = vmatprep.mubr.bf16.mxu0 0
      %3261 = vmatmul.mubr.bf16.gmra.mrb[0].mxu0 %v2828
      %v3262 = vpop.f32.mrb[0].mxu0
      %v3263 = vadd.f32 0.0, %v3262
      %v3264 = vpop.f32.mrb[0].mxu0
      %v3265 = vpop.f32.mrb[0].mxu0
      %v3266 = vadd.f32 0.0, %v3265
      %v3267 = vpop.f32.mrb[0].mxu0
      %3268 = vmatprep.mubr.bf16.mxu0 0
      %3269 = vmatmul.mubr.bf16.gmra.mrb[0].mxu0 %v2949
      %v3270 = vpop.f32.mrb[0].mxu0
      %v3271 = vadd.f32 0.0, %v3270
      %v3272 = vpop.f32.mrb[0].mxu0
      %v3273 = vpop.f32.mrb[0].mxu0
      %v3274 = vadd.f32 0.0, %v3273
      %v3275 = vpop.f32.mrb[0].mxu0
      %3276 = vmatprep.mubr.bf16.mxu0 0
      %3277 = vmatmul.mubr.bf16.gmra.mrb[0].mxu0 %v3070
      %v3278 = vpop.f32.mrb[0].mxu0
      %v3279 = vadd.f32 0.0, %v3278
      %v3280 = vpop.f32.mrb[0].mxu0
      %v3281 = vpop.f32.mrb[0].mxu0
      %v3282 = vadd.f32 0.0, %v3281
      %v3283 = vpop.f32.mrb[0].mxu0
      %3284 = vmatprep.mubr.bf16.mxu0 0
      %3285 = vmatmul.mubr.bf16.gmra.mrb[0].mxu0 %v3191
      %v3286 = vpop.f32.mrb[0].mxu0
      %v3287 = vadd.f32 0.0, %v3286
      %v3288 = vpop.f32.mrb[0].mxu0
      %v3289 = vpop.f32.mrb[0].mxu0
      %v3290 = vadd.f32 0.0, %v3289
      %v3291 = vpop.f32.mrb[0].mxu0
      %3292 = vdwg.mxu0
      %v3293 = vadd.f32 %v3172, %v3231
      %v3294 = vadd.f32 %v3173, %v3234
      %v3295 = vadd.f32 %v3174, %v3239
      %v3296 = vadd.f32 %v3175, %v3242
      %v3297 = vadd.f32 %v3176, %v3247
      %v3298 = vadd.f32 %v3177, %v3250
      %v3299 = vadd.f32 %v3178, %v3255
      %v3300 = vadd.f32 %v3179, %v3258
      %v3301 = vadd.f32 %v3180, %v3263
      %v3302 = vadd.f32 %v3181, %v3266
      %v3303 = vadd.f32 %v3182, %v3271
      %v3304 = vadd.f32 %v3183, %v3274
      %v3305 = vadd.f32 %v3184, %v3279
      %v3306 = vadd.f32 %v3185, %v3282
      %v3307 = vadd.f32 %v3186, %v3287
      %v3308 = vadd.f32 %v3187, %v3290
      %vm3309 = vcmask 1045504
      %v3310 = vrot.slane %v514, 2
      %v3311 = vrot.slane %v515, 2
      %v3312 = vsel %vm3309, %v3310, %v3311
      %v3313 = vrot.slane %v516, 2
      %v3314 = vrot.slane %v517, 2
      %v3315 = vsel %vm3309, %v3313, %v3314
      %v3316 = vrot.slane %v530, 2
      %v3317 = vrot.slane %v531, 2
      %v3318 = vsel %vm3309, %v3316, %v3317
      %v3319 = vrot.slane %v532, 2
      %v3320 = vrot.slane %v533, 2
      %v3321 = vsel %vm3309, %v3319, %v3320
      %v3322 = vrot.slane %v534, 2
      %v3323 = vrot.slane %v535, 2
      %v3324 = vsel %vm3309, %v3322, %v3323
      %v3325 = vrot.slane %v536, 2
      %v3326 = vrot.slane %v537, 2
      %v3327 = vsel %vm3309, %v3325, %v3326
      %v3328 = vrot.slane %v538, 2
      %v3329 = vrot.slane %v539, 2
      %v3330 = vsel %vm3309, %v3328, %v3329
      %v3331 = vrot.slane %v540, 2
      %v3332 = vrot.slane %v541, 2
      %v3333 = vsel %vm3309, %v3331, %v3332
      %v3334 = vrot.slane %v542, 2
      %v3335 = vrot.slane %v543, 2
      %v3336 = vsel %vm3309, %v3334, %v3335
      %v3337 = vrot.slane %v544, 2
      %v3338 = vrot.slane %v545, 2
      %v3339 = vsel %vm3309, %v3337, %v3338
      %v3340 = vrot.slane %v526, 2
      %v3341 = vrot.slane %v527, 2
      %v3342 = vsel %vm3309, %v3340, %v3341
      %v3343 = vrot.slane %v528, 2
      %v3344 = vrot.slane %v529, 2
      %v3345 = vsel %vm3309, %v3343, %v3344
      %v3370 = vsel %vm3309, %v3311, 0.0
      %v3371 = vsel %vm3309, %v3314, 0.0
      %v3372 = vsel %vm3309, %v3317, 0.0
      %v3373 = vsel %vm3309, %v3320, 0.0
      %v3374 = vsel %vm3309, %v3323, 0.0
      %v3375 = vsel %vm3309, %v3326, 0.0
      %v3376 = vsel %vm3309, %v3329, 0.0
      %v3377 = vsel %vm3309, %v3332, 0.0
      %v3378 = vsel %vm3309, %v3335, 0.0
      %v3379 = vsel %vm3309, %v3338, 0.0
      %v3380 = vsel %vm3309, %v3341, 0.0
      %v3381 = vsel %vm3309, %v3344, 0.0
      %v3382 = vpack.c.bf16 %v3370, %v3312
      %v3383 = vpack.c.bf16 %v3371, %v3315
      %v3384 = vpack.c.bf16 %v3372, %v3318
      %v3385 = vpack.c.bf16 %v3373, %v3321
      %v3386 = vpack.c.bf16 %v3374, %v3324
      %v3387 = vpack.c.bf16 %v3375, %v3327
      %v3388 = vpack.c.bf16 %v3376, %v3330
      %v3389 = vpack.c.bf16 %v3377, %v3333
      %v3390 = vpack.c.bf16 %v3378, %v3336
      %v3391 = vpack.c.bf16 %v3379, %v3339
      %v3392 = vpack.c.bf16 %v3380, %v3342
      %v3393 = vpack.c.bf16 %v3381, %v3345
      %s3394 = scalar_lea.vmem %s3, 8
      %v3395 = vld [vmem:[%s3394] sm:$0x3]
      %v3397 = vsel %vm658, %v3382, 0
      %v3400 = vsel %vm658, %v3383, 0
      %v3403 = vsel %vm658, %v3384, 0
      %v3406 = vsel %vm658, %v3385, 0
      %v3409 = vsel %vm658, %v3386, 0
      %v3412 = vsel %vm658, %v3387, 0
      %v3415 = vsel %vm658, %v3388, 0
      %v3418 = vsel %vm658, %v3389, 0
      %v3421 = vsel %vm570, %v3395, 0
      %3423 = vmatprep.subr.bf16.mxu0 0
      %3424 = vmatpush1.bf16.msra.mxu0 %v3421
      %3425 = vmatprep.subr.bf16.mxu0 0
      %3426 = vmatpush1.bf16.msra.mxu0 0
      %3427 = vmatprep.subr.bf16.mxu0 0
      %3428 = vmatpush1.bf16.msra.mxu0 0
      %3429 = vmatprep.subr.bf16.mxu0 0
      %3430 = vmatpush1.bf16.msra.mxu0 0
      %3431 = vmatprep.subr.bf16.mxu0 0
      %3432 = vmatpush1.bf16.msra.mxu0 0
      %3433 = vmatprep.subr.bf16.mxu0 0
      %3434 = vmatpush1.bf16.msra.mxu0 0
      %3435 = vmatprep.subr.bf16.mxu0 0
      %3436 = vmatpush1.bf16.msra.mxu0 0
      %3437 = vmatprep.subr.bf16.mxu0 0
      %3438 = vmatpush1.bf16.msra.mxu0 0
      %3439 = vmatprep.subr.bf16.mxu0 0
      %3440 = vmatpush1.bf16.msra.mxu0 0
      %3441 = vmatprep.subr.bf16.mxu0 0
      %3442 = vmatpush1.bf16.msra.mxu0 0
      %3443 = vmatprep.subr.bf16.mxu0 0
      %3444 = vmatpush1.bf16.msra.mxu0 0
      %3445 = vmatprep.subr.bf16.mxu0 0
      %3446 = vmatpush1.bf16.msra.mxu0 0
      %3447 = vmatprep.subr.bf16.mxu0 0
      %3448 = vmatpush1.bf16.msra.mxu0 0
      %3449 = vmatprep.subr.bf16.mxu0 0
      %3450 = vmatpush1.bf16.msra.mxu0 0
      %3451 = vmatprep.subr.bf16.mxu0 0
      %3452 = vmatpush1.bf16.msra.mxu0 0
      %3453 = vmatprep.subr.bf16.mxu0 0
      %3454 = vmatpush1.bf16.msra.mxu0 0
      %3455 = vmatprep.mubr.bf16.mxu0 0
      %3456 = vmatmul.mubr.bf16.gmra.mrb[0].mxu0 %v3397
      %v3457 = vpop.f32.mrb[0].mxu0
      %v3458 = vadd.f32 0.0, %v3457
      %v3459 = vpop.f32.mrb[0].mxu0
      %v3460 = vpop.f32.mrb[0].mxu0
      %v3461 = vadd.f32 0.0, %v3460
      %v3462 = vpop.f32.mrb[0].mxu0
      %3463 = vmatprep.mubr.bf16.mxu0 0
      %3464 = vmatmul.mubr.bf16.gmra.mrb[0].mxu0 %v3400
      %v3465 = vpop.f32.mrb[0].mxu0
      %v3466 = vadd.f32 0.0, %v3465
      %v3467 = vpop.f32.mrb[0].mxu0
      %v3468 = vpop.f32.mrb[0].mxu0
      %v3469 = vadd.f32 0.0, %v3468
      %v3470 = vpop.f32.mrb[0].mxu0
      %3471 = vmatprep.mubr.bf16.mxu0 0
      %3472 = vmatmul.mubr.bf16.gmra.mrb[0].mxu0 %v3403
      %v3473 = vpop.f32.mrb[0].mxu0
      %v3474 = vadd.f32 0.0, %v3473
      %v3475 = vpop.f32.mrb[0].mxu0
      %v3476 = vpop.f32.mrb[0].mxu0
      %v3477 = vadd.f32 0.0, %v3476
      %v3478 = vpop.f32.mrb[0].mxu0
      %3479 = vmatprep.mubr.bf16.mxu0 0
      %3480 = vmatmul.mubr.bf16.gmra.mrb[0].mxu0 %v3406
      %v3481 = vpop.f32.mrb[0].mxu0
      %v3482 = vadd.f32 0.0, %v3481
      %v3483 = vpop.f32.mrb[0].mxu0
      %v3484 = vpop.f32.mrb[0].mxu0
      %v3485 = vadd.f32 0.0, %v3484
      %v3486 = vpop.f32.mrb[0].mxu0
      %3487 = vmatprep.mubr.bf16.mxu0 0
      %3488 = vmatmul.mubr.bf16.gmra.mrb[0].mxu0 %v3409
      %v3489 = vpop.f32.mrb[0].mxu0
      %v3490 = vadd.f32 0.0, %v3489
      %v3491 = vpop.f32.mrb[0].mxu0
      %v3492 = vpop.f32.mrb[0].mxu0
      %v3493 = vadd.f32 0.0, %v3492
      %v3494 = vpop.f32.mrb[0].mxu0
      %3495 = vmatprep.mubr.bf16.mxu0 0
      %3496 = vmatmul.mubr.bf16.gmra.mrb[0].mxu0 %v3412
      %v3497 = vpop.f32.mrb[0].mxu0
      %v3498 = vadd.f32 0.0, %v3497
      %v3499 = vpop.f32.mrb[0].mxu0
      %v3500 = vpop.f32.mrb[0].mxu0
      %v3501 = vadd.f32 0.0, %v3500
      %v3502 = vpop.f32.mrb[0].mxu0
      %3503 = vmatprep.mubr.bf16.mxu0 0
      %3504 = vmatmul.mubr.bf16.gmra.mrb[0].mxu0 %v3415
      %v3505 = vpop.f32.mrb[0].mxu0
      %v3506 = vadd.f32 0.0, %v3505
      %v3507 = vpop.f32.mrb[0].mxu0
      %v3508 = vpop.f32.mrb[0].mxu0
      %v3509 = vadd.f32 0.0, %v3508
      %v3510 = vpop.f32.mrb[0].mxu0
      %3511 = vmatprep.mubr.bf16.mxu0 0
      %3512 = vmatmul.mubr.bf16.gmra.mrb[0].mxu0 %v3418
      %v3513 = vpop.f32.mrb[0].mxu0
      %v3514 = vadd.f32 0.0, %v3513
      %v3515 = vpop.f32.mrb[0].mxu0
      %v3516 = vpop.f32.mrb[0].mxu0
      %v3517 = vadd.f32 0.0, %v3516
      %v3518 = vpop.f32.mrb[0].mxu0
      %3519 = vdwg.mxu0
      %v3520 = vadd.f32 %v3293, %v3458
      %v3521 = vadd.f32 %v3294, %v3461
      %v3522 = vadd.f32 %v3295, %v3466
      %v3523 = vadd.f32 %v3296, %v3469
      %v3524 = vadd.f32 %v3297, %v3474
      %v3525 = vadd.f32 %v3298, %v3477
      %v3526 = vadd.f32 %v3299, %v3482
      %v3527 = vadd.f32 %v3300, %v3485
      %v3528 = vadd.f32 %v3301, %v3490
      %v3529 = vadd.f32 %v3302, %v3493
      %v3530 = vadd.f32 %v3303, %v3498
      %v3531 = vadd.f32 %v3304, %v3501
      %v3532 = vadd.f32 %v3305, %v3506
      %v3533 = vadd.f32 %v3306, %v3509
      %v3534 = vadd.f32 %v3307, %v3514
      %v3535 = vadd.f32 %v3308, %v3517
      %s3536 = scalar_lea.vmem %s3, 18
      %v3537 = vld [vmem:[%s3536] sm:$0x3]
      %v3539 = vsel %vm658, %v3390, 0
      %v3542 = vsel %vm570, %v3537, 0
      %3544 = vmatprep.subr.bf16.mxu0 0
      %3545 = vmatpush1.bf16.msra.mxu0 %v3542
      %3546 = vmatprep.subr.bf16.mxu0 0
      %3547 = vmatpush1.bf16.msra.mxu0 0
      %3548 = vmatprep.subr.bf16.mxu0 0
      %3549 = vmatpush1.bf16.msra.mxu0 0
      %3550 = vmatprep.subr.bf16.mxu0 0
      %3551 = vmatpush1.bf16.msra.mxu0 0
      %3552 = vmatprep.subr.bf16.mxu0 0
      %3553 = vmatpush1.bf16.msra.mxu0 0
      %3554 = vmatprep.subr.bf16.mxu0 0
      %3555 = vmatpush1.bf16.msra.mxu0 0
      %3556 = vmatprep.subr.bf16.mxu0 0
      %3557 = vmatpush1.bf16.msra.mxu0 0
      %3558 = vmatprep.subr.bf16.mxu0 0
      %3559 = vmatpush1.bf16.msra.mxu0 0
      %3560 = vmatprep.subr.bf16.mxu0 0
      %3561 = vmatpush1.bf16.msra.mxu0 0
      %3562 = vmatprep.subr.bf16.mxu0 0
      %3563 = vmatpush1.bf16.msra.mxu0 0
      %3564 = vmatprep.subr.bf16.mxu0 0
      %3565 = vmatpush1.bf16.msra.mxu0 0
      %3566 = vmatprep.subr.bf16.mxu0 0
      %3567 = vmatpush1.bf16.msra.mxu0 0
      %3568 = vmatprep.subr.bf16.mxu0 0
      %3569 = vmatpush1.bf16.msra.mxu0 0
      %3570 = vmatprep.subr.bf16.mxu0 0
      %3571 = vmatpush1.bf16.msra.mxu0 0
      %3572 = vmatprep.subr.bf16.mxu0 0
      %3573 = vmatpush1.bf16.msra.mxu0 0
      %3574 = vmatprep.subr.bf16.mxu0 0
      %3575 = vmatpush1.bf16.msra.mxu0 0
      %3576 = vmatprep.mubr.bf16.mxu0 0
      %3577 = vmatmul.mubr.bf16.gmra.mrb[0].mxu0 %v3400
      %v3578 = vpop.f32.mrb[0].mxu0
      %v3579 = vadd.f32 0.0, %v3578
      %v3580 = vpop.f32.mrb[0].mxu0
      %v3581 = vpop.f32.mrb[0].mxu0
      %v3582 = vadd.f32 0.0, %v3581
      %v3583 = vpop.f32.mrb[0].mxu0
      %3584 = vmatprep.mubr.bf16.mxu0 0
      %3585 = vmatmul.mubr.bf16.gmra.mrb[0].mxu0 %v3403
      %v3586 = vpop.f32.mrb[0].mxu0
      %v3587 = vadd.f32 0.0, %v3586
      %v3588 = vpop.f32.mrb[0].mxu0
      %v3589 = vpop.f32.mrb[0].mxu0
      %v3590 = vadd.f32 0.0, %v3589
      %v3591 = vpop.f32.mrb[0].mxu0
      %3592 = vmatprep.mubr.bf16.mxu0 0
      %3593 = vmatmul.mubr.bf16.gmra.mrb[0].mxu0 %v3406
      %v3594 = vpop.f32.mrb[0].mxu0
      %v3595 = vadd.f32 0.0, %v3594
      %v3596 = vpop.f32.mrb[0].mxu0
      %v3597 = vpop.f32.mrb[0].mxu0
      %v3598 = vadd.f32 0.0, %v3597
      %v3599 = vpop.f32.mrb[0].mxu0
      %3600 = vmatprep.mubr.bf16.mxu0 0
      %3601 = vmatmul.mubr.bf16.gmra.mrb[0].mxu0 %v3409
      %v3602 = vpop.f32.mrb[0].mxu0
      %v3603 = vadd.f32 0.0, %v3602
      %v3604 = vpop.f32.mrb[0].mxu0
      %v3605 = vpop.f32.mrb[0].mxu0
      %v3606 = vadd.f32 0.0, %v3605
      %v3607 = vpop.f32.mrb[0].mxu0
      %3608 = vmatprep.mubr.bf16.mxu0 0
      %3609 = vmatmul.mubr.bf16.gmra.mrb[0].mxu0 %v3412
      %v3610 = vpop.f32.mrb[0].mxu0
      %v3611 = vadd.f32 0.0, %v3610
      %v3612 = vpop.f32.mrb[0].mxu0
      %v3613 = vpop.f32.mrb[0].mxu0
      %v3614 = vadd.f32 0.0, %v3613
      %v3615 = vpop.f32.mrb[0].mxu0
      %3616 = vmatprep.mubr.bf16.mxu0 0
      %3617 = vmatmul.mubr.bf16.gmra.mrb[0].mxu0 %v3415
      %v3618 = vpop.f32.mrb[0].mxu0
      %v3619 = vadd.f32 0.0, %v3618
      %v3620 = vpop.f32.mrb[0].mxu0
      %v3621 = vpop.f32.mrb[0].mxu0
      %v3622 = vadd.f32 0.0, %v3621
      %v3623 = vpop.f32.mrb[0].mxu0
      %3624 = vmatprep.mubr.bf16.mxu0 0
      %3625 = vmatmul.mubr.bf16.gmra.mrb[0].mxu0 %v3418
      %v3626 = vpop.f32.mrb[0].mxu0
      %v3627 = vadd.f32 0.0, %v3626
      %v3628 = vpop.f32.mrb[0].mxu0
      %v3629 = vpop.f32.mrb[0].mxu0
      %v3630 = vadd.f32 0.0, %v3629
      %v3631 = vpop.f32.mrb[0].mxu0
      %3632 = vmatprep.mubr.bf16.mxu0 0
      %3633 = vmatmul.mubr.bf16.gmra.mrb[0].mxu0 %v3539
      %v3634 = vpop.f32.mrb[0].mxu0
      %v3635 = vadd.f32 0.0, %v3634
      %v3636 = vpop.f32.mrb[0].mxu0
      %v3637 = vpop.f32.mrb[0].mxu0
      %v3638 = vadd.f32 0.0, %v3637
      %v3639 = vpop.f32.mrb[0].mxu0
      %3640 = vdwg.mxu0
      %v3641 = vadd.f32 %v3520, %v3579
      %v3642 = vadd.f32 %v3521, %v3582
      %v3643 = vadd.f32 %v3522, %v3587
      %v3644 = vadd.f32 %v3523, %v3590
      %v3645 = vadd.f32 %v3524, %v3595
      %v3646 = vadd.f32 %v3525, %v3598
      %v3647 = vadd.f32 %v3526, %v3603
      %v3648 = vadd.f32 %v3527, %v3606
      %v3649 = vadd.f32 %v3528, %v3611
      %v3650 = vadd.f32 %v3529, %v3614
      %v3651 = vadd.f32 %v3530, %v3619
      %v3652 = vadd.f32 %v3531, %v3622
      %v3653 = vadd.f32 %v3532, %v3627
      %v3654 = vadd.f32 %v3533, %v3630
      %v3655 = vadd.f32 %v3534, %v3635
      %v3656 = vadd.f32 %v3535, %v3638
      %s3657 = scalar_lea.vmem %s3, 28
      %v3658 = vld [vmem:[%s3657] sm:$0x3]
      %v3660 = vsel %vm658, %v3391, 0
      %v3663 = vsel %vm570, %v3658, 0
      %3665 = vmatprep.subr.bf16.mxu0 0
      %3666 = vmatpush1.bf16.msra.mxu0 %v3663
      %3667 = vmatprep.subr.bf16.mxu0 0
      %3668 = vmatpush1.bf16.msra.mxu0 0
      %3669 = vmatprep.subr.bf16.mxu0 0
      %3670 = vmatpush1.bf16.msra.mxu0 0
      %3671 = vmatprep.subr.bf16.mxu0 0
      %3672 = vmatpush1.bf16.msra.mxu0 0
      %3673 = vmatprep.subr.bf16.mxu0 0
      %3674 = vmatpush1.bf16.msra.mxu0 0
      %3675 = vmatprep.subr.bf16.mxu0 0
      %3676 = vmatpush1.bf16.msra.mxu0 0
      %3677 = vmatprep.subr.bf16.mxu0 0
      %3678 = vmatpush1.bf16.msra.mxu0 0
      %3679 = vmatprep.subr.bf16.mxu0 0
      %3680 = vmatpush1.bf16.msra.mxu0 0
      %3681 = vmatprep.subr.bf16.mxu0 0
      %3682 = vmatpush1.bf16.msra.mxu0 0
      %3683 = vmatprep.subr.bf16.mxu0 0
      %3684 = vmatpush1.bf16.msra.mxu0 0
      %3685 = vmatprep.subr.bf16.mxu0 0
      %3686 = vmatpush1.bf16.msra.mxu0 0
      %3687 = vmatprep.subr.bf16.mxu0 0
      %3688 = vmatpush1.bf16.msra.mxu0 0
      %3689 = vmatprep.subr.bf16.mxu0 0
      %3690 = vmatpush1.bf16.msra.mxu0 0
      %3691 = vmatprep.subr.bf16.mxu0 0
      %3692 = vmatpush1.bf16.msra.mxu0 0
      %3693 = vmatprep.subr.bf16.mxu0 0
      %3694 = vmatpush1.bf16.msra.mxu0 0
      %3695 = vmatprep.subr.bf16.mxu0 0
      %3696 = vmatpush1.bf16.msra.mxu0 0
      %3697 = vmatprep.mubr.bf16.mxu0 0
      %3698 = vmatmul.mubr.bf16.gmra.mrb[0].mxu0 %v3403
      %v3699 = vpop.f32.mrb[0].mxu0
      %v3700 = vadd.f32 0.0, %v3699
      %v3701 = vpop.f32.mrb[0].mxu0
      %v3702 = vpop.f32.mrb[0].mxu0
      %v3703 = vadd.f32 0.0, %v3702
      %v3704 = vpop.f32.mrb[0].mxu0
      %3705 = vmatprep.mubr.bf16.mxu0 0
      %3706 = vmatmul.mubr.bf16.gmra.mrb[0].mxu0 %v3406
      %v3707 = vpop.f32.mrb[0].mxu0
      %v3708 = vadd.f32 0.0, %v3707
      %v3709 = vpop.f32.mrb[0].mxu0
      %v3710 = vpop.f32.mrb[0].mxu0
      %v3711 = vadd.f32 0.0, %v3710
      %v3712 = vpop.f32.mrb[0].mxu0
      %3713 = vmatprep.mubr.bf16.mxu0 0
      %3714 = vmatmul.mubr.bf16.gmra.mrb[0].mxu0 %v3409
      %v3715 = vpop.f32.mrb[0].mxu0
      %v3716 = vadd.f32 0.0, %v3715
      %v3717 = vpop.f32.mrb[0].mxu0
      %v3718 = vpop.f32.mrb[0].mxu0
      %v3719 = vadd.f32 0.0, %v3718
      %v3720 = vpop.f32.mrb[0].mxu0
      %3721 = vmatprep.mubr.bf16.mxu0 0
      %3722 = vmatmul.mubr.bf16.gmra.mrb[0].mxu0 %v3412
      %v3723 = vpop.f32.mrb[0].mxu0
      %v3724 = vadd.f32 0.0, %v3723
      %v3725 = vpop.f32.mrb[0].mxu0
      %v3726 = vpop.f32.mrb[0].mxu0
      %v3727 = vadd.f32 0.0, %v3726
      %v3728 = vpop.f32.mrb[0].mxu0
      %3729 = vmatprep.mubr.bf16.mxu0 0
      %3730 = vmatmul.mubr.bf16.gmra.mrb[0].mxu0 %v3415
      %v3731 = vpop.f32.mrb[0].mxu0
      %v3732 = vadd.f32 0.0, %v3731
      %v3733 = vpop.f32.mrb[0].mxu0
      %v3734 = vpop.f32.mrb[0].mxu0
      %v3735 = vadd.f32 0.0, %v3734
      %v3736 = vpop.f32.mrb[0].mxu0
      %3737 = vmatprep.mubr.bf16.mxu0 0
      %3738 = vmatmul.mubr.bf16.gmra.mrb[0].mxu0 %v3418
      %v3739 = vpop.f32.mrb[0].mxu0
      %v3740 = vadd.f32 0.0, %v3739
      %v3741 = vpop.f32.mrb[0].mxu0
      %v3742 = vpop.f32.mrb[0].mxu0
      %v3743 = vadd.f32 0.0, %v3742
      %v3744 = vpop.f32.mrb[0].mxu0
      %3745 = vmatprep.mubr.bf16.mxu0 0
      %3746 = vmatmul.mubr.bf16.gmra.mrb[0].mxu0 %v3539
      %v3747 = vpop.f32.mrb[0].mxu0
      %v3748 = vadd.f32 0.0, %v3747
      %v3749 = vpop.f32.mrb[0].mxu0
      %v3750 = vpop.f32.mrb[0].mxu0
      %v3751 = vadd.f32 0.0, %v3750
      %v3752 = vpop.f32.mrb[0].mxu0
      %3753 = vmatprep.mubr.bf16.mxu0 0
      %3754 = vmatmul.mubr.bf16.gmra.mrb[0].mxu0 %v3660
      %v3755 = vpop.f32.mrb[0].mxu0
      %v3756 = vadd.f32 0.0, %v3755
      %v3757 = vpop.f32.mrb[0].mxu0
      %v3758 = vpop.f32.mrb[0].mxu0
      %v3759 = vadd.f32 0.0, %v3758
      %v3760 = vpop.f32.mrb[0].mxu0
      %3761 = vdwg.mxu0
      %v3762 = vadd.f32 %v3641, %v3700
      %v3763 = vadd.f32 %v3642, %v3703
      %v3764 = vadd.f32 %v3643, %v3708
      %v3765 = vadd.f32 %v3644, %v3711
      %v3766 = vadd.f32 %v3645, %v3716
      %v3767 = vadd.f32 %v3646, %v3719
      %v3768 = vadd.f32 %v3647, %v3724
      %v3769 = vadd.f32 %v3648, %v3727
      %v3770 = vadd.f32 %v3649, %v3732
      %v3771 = vadd.f32 %v3650, %v3735
      %v3772 = vadd.f32 %v3651, %v3740
      %v3773 = vadd.f32 %v3652, %v3743
      %v3774 = vadd.f32 %v3653, %v3748
      %v3775 = vadd.f32 %v3654, %v3751
      %v3776 = vadd.f32 %v3655, %v3756
      %v3777 = vadd.f32 %v3656, %v3759
      %s3778 = scalar_lea.vmem %s3, 38
      %v3779 = vld [vmem:[%s3778] sm:$0x3]
      %v3781 = vsel %vm658, %v3392, 0
      %v3784 = vsel %vm570, %v3779, 0
      %3786 = vmatprep.subr.bf16.mxu0 0
      %3787 = vmatpush1.bf16.msra.mxu0 %v3784
      %3788 = vmatprep.subr.bf16.mxu0 0
      %3789 = vmatpush1.bf16.msra.mxu0 0
      %3790 = vmatprep.subr.bf16.mxu0 0
      %3791 = vmatpush1.bf16.msra.mxu0 0
      %3792 = vmatprep.subr.bf16.mxu0 0
      %3793 = vmatpush1.bf16.msra.mxu0 0
      %3794 = vmatprep.subr.bf16.mxu0 0
      %3795 = vmatpush1.bf16.msra.mxu0 0
      %3796 = vmatprep.subr.bf16.mxu0 0
      %3797 = vmatpush1.bf16.msra.mxu0 0
      %3798 = vmatprep.subr.bf16.mxu0 0
      %3799 = vmatpush1.bf16.msra.mxu0 0
      %3800 = vmatprep.subr.bf16.mxu0 0
      %3801 = vmatpush1.bf16.msra.mxu0 0
      %3802 = vmatprep.subr.bf16.mxu0 0
      %3803 = vmatpush1.bf16.msra.mxu0 0
      %3804 = vmatprep.subr.bf16.mxu0 0
      %3805 = vmatpush1.bf16.msra.mxu0 0
      %3806 = vmatprep.subr.bf16.mxu0 0
      %3807 = vmatpush1.bf16.msra.mxu0 0
      %3808 = vmatprep.subr.bf16.mxu0 0
      %3809 = vmatpush1.bf16.msra.mxu0 0
      %3810 = vmatprep.subr.bf16.mxu0 0
      %3811 = vmatpush1.bf16.msra.mxu0 0
      %3812 = vmatprep.subr.bf16.mxu0 0
      %3813 = vmatpush1.bf16.msra.mxu0 0
      %3814 = vmatprep.subr.bf16.mxu0 0
      %3815 = vmatpush1.bf16.msra.mxu0 0
      %3816 = vmatprep.subr.bf16.mxu0 0
      %3817 = vmatpush1.bf16.msra.mxu0 0
      %3818 = vmatprep.mubr.bf16.mxu0 0
      %3819 = vmatmul.mubr.bf16.gmra.mrb[0].mxu0 %v3406
      %v3820 = vpop.f32.mrb[0].mxu0
      %v3821 = vadd.f32 0.0, %v3820
      %v3822 = vpop.f32.mrb[0].mxu0
      %v3823 = vpop.f32.mrb[0].mxu0
      %v3824 = vadd.f32 0.0, %v3823
      %v3825 = vpop.f32.mrb[0].mxu0
      %3826 = vmatprep.mubr.bf16.mxu0 0
      %3827 = vmatmul.mubr.bf16.gmra.mrb[0].mxu0 %v3409
      %v3828 = vpop.f32.mrb[0].mxu0
      %v3829 = vadd.f32 0.0, %v3828
      %v3830 = vpop.f32.mrb[0].mxu0
      %v3831 = vpop.f32.mrb[0].mxu0
      %v3832 = vadd.f32 0.0, %v3831
      %v3833 = vpop.f32.mrb[0].mxu0
      %3834 = vmatprep.mubr.bf16.mxu0 0
      %3835 = vmatmul.mubr.bf16.gmra.mrb[0].mxu0 %v3412
      %v3836 = vpop.f32.mrb[0].mxu0
      %v3837 = vadd.f32 0.0, %v3836
      %v3838 = vpop.f32.mrb[0].mxu0
      %v3839 = vpop.f32.mrb[0].mxu0
      %v3840 = vadd.f32 0.0, %v3839
      %v3841 = vpop.f32.mrb[0].mxu0
      %3842 = vmatprep.mubr.bf16.mxu0 0
      %3843 = vmatmul.mubr.bf16.gmra.mrb[0].mxu0 %v3415
      %v3844 = vpop.f32.mrb[0].mxu0
      %v3845 = vadd.f32 0.0, %v3844
      %v3846 = vpop.f32.mrb[0].mxu0
      %v3847 = vpop.f32.mrb[0].mxu0
      %v3848 = vadd.f32 0.0, %v3847
      %v3849 = vpop.f32.mrb[0].mxu0
      %3850 = vmatprep.mubr.bf16.mxu0 0
      %3851 = vmatmul.mubr.bf16.gmra.mrb[0].mxu0 %v3418
      %v3852 = vpop.f32.mrb[0].mxu0
      %v3853 = vadd.f32 0.0, %v3852
      %v3854 = vpop.f32.mrb[0].mxu0
      %v3855 = vpop.f32.mrb[0].mxu0
      %v3856 = vadd.f32 0.0, %v3855
      %v3857 = vpop.f32.mrb[0].mxu0
      %3858 = vmatprep.mubr.bf16.mxu0 0
      %3859 = vmatmul.mubr.bf16.gmra.mrb[0].mxu0 %v3539
      %v3860 = vpop.f32.mrb[0].mxu0
      %v3861 = vadd.f32 0.0, %v3860
      %v3862 = vpop.f32.mrb[0].mxu0
      %v3863 = vpop.f32.mrb[0].mxu0
      %v3864 = vadd.f32 0.0, %v3863
      %v3865 = vpop.f32.mrb[0].mxu0
      %3866 = vmatprep.mubr.bf16.mxu0 0
      %3867 = vmatmul.mubr.bf16.gmra.mrb[0].mxu0 %v3660
      %v3868 = vpop.f32.mrb[0].mxu0
      %v3869 = vadd.f32 0.0, %v3868
      %v3870 = vpop.f32.mrb[0].mxu0
      %v3871 = vpop.f32.mrb[0].mxu0
      %v3872 = vadd.f32 0.0, %v3871
      %v3873 = vpop.f32.mrb[0].mxu0
      %3874 = vmatprep.mubr.bf16.mxu0 0
      %3875 = vmatmul.mubr.bf16.gmra.mrb[0].mxu0 %v3781
      %v3876 = vpop.f32.mrb[0].mxu0
      %v3877 = vadd.f32 0.0, %v3876
      %v3878 = vpop.f32.mrb[0].mxu0
      %v3879 = vpop.f32.mrb[0].mxu0
      %v3880 = vadd.f32 0.0, %v3879
      %v3881 = vpop.f32.mrb[0].mxu0
      %3882 = vdwg.mxu0
      %v3883 = vadd.f32 %v3762, %v3821
      %v3884 = vadd.f32 %v3763, %v3824
      %v3885 = vadd.f32 %v3764, %v3829
      %v3886 = vadd.f32 %v3765, %v3832
      %v3887 = vadd.f32 %v3766, %v3837
      %v3888 = vadd.f32 %v3767, %v3840
      %v3889 = vadd.f32 %v3768, %v3845
      %v3890 = vadd.f32 %v3769, %v3848
      %v3891 = vadd.f32 %v3770, %v3853
      %v3892 = vadd.f32 %v3771, %v3856
      %v3893 = vadd.f32 %v3772, %v3861
      %v3894 = vadd.f32 %v3773, %v3864
      %v3895 = vadd.f32 %v3774, %v3869
      %v3896 = vadd.f32 %v3775, %v3872
      %v3897 = vadd.f32 %v3776, %v3877
      %v3898 = vadd.f32 %v3777, %v3880
      %s3899 = scalar_lea.vmem %s3, 48
      %v3900 = vld [vmem:[%s3899] sm:$0x3]
      %v3902 = vsel %vm658, %v3393, 0
      %v3905 = vsel %vm570, %v3900, 0
      %3907 = vmatprep.subr.bf16.mxu0 0
      %3908 = vmatpush1.bf16.msra.mxu0 %v3905
      %3909 = vmatprep.subr.bf16.mxu0 0
      %3910 = vmatpush1.bf16.msra.mxu0 0
      %3911 = vmatprep.subr.bf16.mxu0 0
      %3912 = vmatpush1.bf16.msra.mxu0 0
      %3913 = vmatprep.subr.bf16.mxu0 0
      %3914 = vmatpush1.bf16.msra.mxu0 0
      %3915 = vmatprep.subr.bf16.mxu0 0
      %3916 = vmatpush1.bf16.msra.mxu0 0
      %3917 = vmatprep.subr.bf16.mxu0 0
      %3918 = vmatpush1.bf16.msra.mxu0 0
      %3919 = vmatprep.subr.bf16.mxu0 0
      %3920 = vmatpush1.bf16.msra.mxu0 0
      %3921 = vmatprep.subr.bf16.mxu0 0
      %3922 = vmatpush1.bf16.msra.mxu0 0
      %3923 = vmatprep.subr.bf16.mxu0 0
      %3924 = vmatpush1.bf16.msra.mxu0 0
      %3925 = vmatprep.subr.bf16.mxu0 0
      %3926 = vmatpush1.bf16.msra.mxu0 0
      %3927 = vmatprep.subr.bf16.mxu0 0
      %3928 = vmatpush1.bf16.msra.mxu0 0
      %3929 = vmatprep.subr.bf16.mxu0 0
      %3930 = vmatpush1.bf16.msra.mxu0 0
      %3931 = vmatprep.subr.bf16.mxu0 0
      %3932 = vmatpush1.bf16.msra.mxu0 0
      %3933 = vmatprep.subr.bf16.mxu0 0
      %3934 = vmatpush1.bf16.msra.mxu0 0
      %3935 = vmatprep.subr.bf16.mxu0 0
      %3936 = vmatpush1.bf16.msra.mxu0 0
      %3937 = vmatprep.subr.bf16.mxu0 0
      %3938 = vmatpush1.bf16.msra.mxu0 0
      %3939 = vmatprep.mubr.bf16.mxu0 0
      %3940 = vmatmul.mubr.bf16.gmra.mrb[0].mxu0 %v3409
      %v3941 = vpop.f32.mrb[0].mxu0
      %v3942 = vadd.f32 0.0, %v3941
      %v3943 = vpop.f32.mrb[0].mxu0
      %v3944 = vpop.f32.mrb[0].mxu0
      %v3945 = vadd.f32 0.0, %v3944
      %v3946 = vpop.f32.mrb[0].mxu0
      %3947 = vmatprep.mubr.bf16.mxu0 0
      %3948 = vmatmul.mubr.bf16.gmra.mrb[0].mxu0 %v3412
      %v3949 = vpop.f32.mrb[0].mxu0
      %v3950 = vadd.f32 0.0, %v3949
      %v3951 = vpop.f32.mrb[0].mxu0
      %v3952 = vpop.f32.mrb[0].mxu0
      %v3953 = vadd.f32 0.0, %v3952
      %v3954 = vpop.f32.mrb[0].mxu0
      %3955 = vmatprep.mubr.bf16.mxu0 0
      %3956 = vmatmul.mubr.bf16.gmra.mrb[0].mxu0 %v3415
      %v3957 = vpop.f32.mrb[0].mxu0
      %v3958 = vadd.f32 0.0, %v3957
      %v3959 = vpop.f32.mrb[0].mxu0
      %v3960 = vpop.f32.mrb[0].mxu0
      %v3961 = vadd.f32 0.0, %v3960
      %v3962 = vpop.f32.mrb[0].mxu0
      %3963 = vmatprep.mubr.bf16.mxu0 0
      %3964 = vmatmul.mubr.bf16.gmra.mrb[0].mxu0 %v3418
      %v3965 = vpop.f32.mrb[0].mxu0
      %v3966 = vadd.f32 0.0, %v3965
      %v3967 = vpop.f32.mrb[0].mxu0
      %v3968 = vpop.f32.mrb[0].mxu0
      %v3969 = vadd.f32 0.0, %v3968
      %v3970 = vpop.f32.mrb[0].mxu0
      %3971 = vmatprep.mubr.bf16.mxu0 0
      %3972 = vmatmul.mubr.bf16.gmra.mrb[0].mxu0 %v3539
      %v3973 = vpop.f32.mrb[0].mxu0
      %v3974 = vadd.f32 0.0, %v3973
      %v3975 = vpop.f32.mrb[0].mxu0
      %v3976 = vpop.f32.mrb[0].mxu0
      %v3977 = vadd.f32 0.0, %v3976
      %v3978 = vpop.f32.mrb[0].mxu0
      %3979 = vmatprep.mubr.bf16.mxu0 0
      %3980 = vmatmul.mubr.bf16.gmra.mrb[0].mxu0 %v3660
      %v3981 = vpop.f32.mrb[0].mxu0
      %v3982 = vadd.f32 0.0, %v3981
      %v3983 = vpop.f32.mrb[0].mxu0
      %v3984 = vpop.f32.mrb[0].mxu0
      %v3985 = vadd.f32 0.0, %v3984
      %v3986 = vpop.f32.mrb[0].mxu0
      %3987 = vmatprep.mubr.bf16.mxu0 0
      %3988 = vmatmul.mubr.bf16.gmra.mrb[0].mxu0 %v3781
      %v3989 = vpop.f32.mrb[0].mxu0
      %v3990 = vadd.f32 0.0, %v3989
      %v3991 = vpop.f32.mrb[0].mxu0
      %v3992 = vpop.f32.mrb[0].mxu0
      %v3993 = vadd.f32 0.0, %v3992
      %v3994 = vpop.f32.mrb[0].mxu0
      %3995 = vmatprep.mubr.bf16.mxu0 0
      %3996 = vmatmul.mubr.bf16.gmra.mrb[0].mxu0 %v3902
      %v3997 = vpop.f32.mrb[0].mxu0
      %v3998 = vadd.f32 0.0, %v3997
      %v3999 = vpop.f32.mrb[0].mxu0
      %v4000 = vpop.f32.mrb[0].mxu0
      %v4001 = vadd.f32 0.0, %v4000
      %v4002 = vpop.f32.mrb[0].mxu0
      %4003 = vdwg.mxu0
      %v4004 = vadd.f32 %v3883, %v3942
      %v4005 = vadd.f32 %v3884, %v3945
      %v4006 = vadd.f32 %v3885, %v3950
      %v4007 = vadd.f32 %v3886, %v3953
      %v4008 = vadd.f32 %v3887, %v3958
      %v4009 = vadd.f32 %v3888, %v3961
      %v4010 = vadd.f32 %v3889, %v3966
      %v4011 = vadd.f32 %v3890, %v3969
      %v4012 = vadd.f32 %v3891, %v3974
      %v4013 = vadd.f32 %v3892, %v3977
      %v4014 = vadd.f32 %v3893, %v3982
      %v4015 = vadd.f32 %v3894, %v3985
      %v4016 = vadd.f32 %v3895, %v3990
      %v4017 = vadd.f32 %v3896, %v3993
      %v4018 = vadd.f32 %v3897, %v3998
      %v4019 = vadd.f32 %v3898, %v4001
      %v4020 = vld [vmem:[%s4] sm:$0x1]
      %v4022 = vlaneseq
      %v4023 = vshrl.u32 %v4022, 7
      %v4024 = vsub.s32 0, %v4023
      %v4025 = vrot.slane %v4020, %v4024
      %v4027 = vadd.f32 %v4004, %v4025
      %v4028 = vadd.f32 %v4005, %v4025
      %v4029 = vadd.f32 %v4006, %v4025
      %v4030 = vadd.f32 %v4007, %v4025
      %v4031 = vadd.f32 %v4008, %v4025
      %v4032 = vadd.f32 %v4009, %v4025
      %v4033 = vadd.f32 %v4010, %v4025
      %v4034 = vadd.f32 %v4011, %v4025
      %v4035 = vadd.f32 %v4012, %v4025
      %v4036 = vadd.f32 %v4013, %v4025
      %v4037 = vadd.f32 %v4014, %v4025
      %v4038 = vadd.f32 %v4015, %v4025
      %v4039 = vadd.f32 %v4016, %v4025
      %v4040 = vadd.f32 %v4017, %v4025
      %v4041 = vadd.f32 %v4018, %v4025
      %v4042 = vadd.f32 %v4019, %v4025
      %4043 = vst.msk [vmem:[%s495] sm:$0xff] %vm658, %v4027
      %4044 = vst.msk [vmem:[%s495 + $0x8] sm:$0xff] %vm658, %v4028
      %4045 = vst.msk [vmem:[%s495 + $0x10] sm:$0xff] %vm658, %v4029
      %4046 = vst.msk [vmem:[%s495 + $0x18] sm:$0xff] %vm658, %v4030
      %4047 = vst.msk [vmem:[%s495 + $0x20] sm:$0xff] %vm658, %v4031
      %4048 = vst.msk [vmem:[%s495 + $0x28] sm:$0xff] %vm658, %v4032
      %4049 = vst.msk [vmem:[%s495 + $0x30] sm:$0xff] %vm658, %v4033
      %4050 = vst.msk [vmem:[%s495 + $0x38] sm:$0xff] %vm658, %v4034
      %4051 = vst.msk [vmem:[%s495 + $0x40] sm:$0xff] %vm658, %v4035
      %4052 = vst.msk [vmem:[%s495 + $0x48] sm:$0xff] %vm658, %v4036
      %4053 = vst.msk [vmem:[%s495 + $0x50] sm:$0xff] %vm658, %v4037
      %4054 = vst.msk [vmem:[%s495 + $0x58] sm:$0xff] %vm658, %v4038
      %4055 = vst.msk [vmem:[%s495 + $0x60] sm:$0xff] %vm658, %v4039
      %4056 = vst.msk [vmem:[%s495 + $0x68] sm:$0xff] %vm658, %v4040
      %4057 = vst.msk [vmem:[%s495 + $0x70] sm:$0xff] %vm658, %v4041
      %4058 = vst.msk [vmem:[%s495 + $0x78] sm:$0xff] %vm658, %v4042
      %v4059 = vsel %vm658, %v4027, 0.0
      %v4060 = vsel %vm658, %v4028, 0.0
      %v4061 = vadd.f32 %v4059, %v4060
      %v4062 = vsel %vm658, %v4029, 0.0
      %v4063 = vadd.f32 %v4061, %v4062
      %v4064 = vsel %vm658, %v4030, 0.0
      %v4065 = vadd.f32 %v4063, %v4064
      %v4066 = vsel %vm658, %v4031, 0.0
      %v4067 = vadd.f32 %v4065, %v4066
      %v4068 = vsel %vm658, %v4032, 0.0
      %v4069 = vadd.f32 %v4067, %v4068
      %v4070 = vsel %vm658, %v4033, 0.0
      %v4071 = vadd.f32 %v4069, %v4070
      %v4072 = vsel %vm658, %v4034, 0.0
      %v4073 = vadd.f32 %v4071, %v4072
      %v4074 = vsel %vm658, %v4035, 0.0
      %v4075 = vadd.f32 %v4073, %v4074
      %v4076 = vsel %vm658, %v4036, 0.0
      %v4077 = vadd.f32 %v4075, %v4076
      %v4078 = vsel %vm658, %v4037, 0.0
      %v4079 = vadd.f32 %v4077, %v4078
      %v4080 = vsel %vm658, %v4038, 0.0
      %v4081 = vadd.f32 %v4079, %v4080
      %v4082 = vsel %vm658, %v4039, 0.0
      %v4083 = vadd.f32 %v4081, %v4082
      %v4084 = vsel %vm658, %v4040, 0.0
      %v4085 = vadd.f32 %v4083, %v4084
      %v4086 = vsel %vm658, %v4041, 0.0
      %v4087 = vadd.f32 %v4085, %v4086
      %v4088 = vsel %vm658, %v4042, 0.0
      %v4089 = vadd.f32 %v4087, %v4088
      %v4090 = vrot.slane %v4089, 4
      %v4091 = vadd.f32 %v4089, %v4090
      %v4092 = vrot.slane %v4091, 2
      %v4093 = vadd.f32 %v4091, %v4092
      %v4094 = vrot.slane %v4093, 1
      %v4095 = vadd.f32 %v4093, %v4094
      %v4096 = vmul.f32 %v4027, %v4027
      %v4097 = vmul.f32 %v4028, %v4028
      %v4098 = vmul.f32 %v4029, %v4029
      %v4099 = vmul.f32 %v4030, %v4030
      %v4100 = vmul.f32 %v4031, %v4031
      %v4101 = vmul.f32 %v4032, %v4032
      %v4102 = vmul.f32 %v4033, %v4033
      %v4103 = vmul.f32 %v4034, %v4034
      %v4104 = vmul.f32 %v4035, %v4035
      %v4105 = vmul.f32 %v4036, %v4036
      %v4106 = vmul.f32 %v4037, %v4037
      %v4107 = vmul.f32 %v4038, %v4038
      %v4108 = vmul.f32 %v4039, %v4039
      %v4109 = vmul.f32 %v4040, %v4040
      %v4110 = vmul.f32 %v4041, %v4041
      %v4111 = vmul.f32 %v4042, %v4042
      %v4112 = vsel %vm658, %v4096, 0.0
      %v4113 = vsel %vm658, %v4097, 0.0
      %v4114 = vadd.f32 %v4112, %v4113
      %v4115 = vsel %vm658, %v4098, 0.0
      %v4116 = vadd.f32 %v4114, %v4115
      %v4117 = vsel %vm658, %v4099, 0.0
      %v4118 = vadd.f32 %v4116, %v4117
      %v4119 = vsel %vm658, %v4100, 0.0
      %v4120 = vadd.f32 %v4118, %v4119
      %v4121 = vsel %vm658, %v4101, 0.0
      %v4122 = vadd.f32 %v4120, %v4121
      %v4123 = vsel %vm658, %v4102, 0.0
      %v4124 = vadd.f32 %v4122, %v4123
      %v4125 = vsel %vm658, %v4103, 0.0
      %v4126 = vadd.f32 %v4124, %v4125
      %v4127 = vsel %vm658, %v4104, 0.0
      %v4128 = vadd.f32 %v4126, %v4127
      %v4129 = vsel %vm658, %v4105, 0.0
      %v4130 = vadd.f32 %v4128, %v4129
      %v4131 = vsel %vm658, %v4106, 0.0
      %v4132 = vadd.f32 %v4130, %v4131
      %v4133 = vsel %vm658, %v4107, 0.0
      %v4134 = vadd.f32 %v4132, %v4133
      %v4135 = vsel %vm658, %v4108, 0.0
      %v4136 = vadd.f32 %v4134, %v4135
      %v4137 = vsel %vm658, %v4109, 0.0
      %v4138 = vadd.f32 %v4136, %v4137
      %v4139 = vsel %vm658, %v4110, 0.0
      %v4140 = vadd.f32 %v4138, %v4139
      %v4141 = vsel %vm658, %v4111, 0.0
      %v4142 = vadd.f32 %v4140, %v4141
      %v4143 = vrot.slane %v4142, 4
      %v4144 = vadd.f32 %v4142, %v4143
      %v4145 = vrot.slane %v4144, 2
      %v4146 = vadd.f32 %v4144, %v4145
      %v4147 = vrot.slane %v4146, 1
      %v4148 = vadd.f32 %v4146, %v4147
      %v4149 = vsel %vm1249, %v4095, %v4148
      %vm4150 = vcmask 25600
      %4151 = vst.msk [vmem:[%s504] sm:$0x3] %vm4150, %v4149
      %s4152 = smul.u32 8, %s25
      %p4153 = scmp.lt.s32.totalorder %s24, 1
      %s4154 = scalar_select %p4153, %s24, 1
      %p4155 = scmp.lt.s32.totalorder %s4152, 15
      %s4156 = scalar_select %p4155, %s4152, 15
      %s4157 = smul.addr %s4156, 2
      %s4158 = smul.addr %s4154, 32
      %s4159 = sadd.s32 %s4157, %s4158
      %s4160 = smul.addr %s4159, 8
      %s4161 = scalar_lea.vmem %s7, %s4160
      %p4162 = scmp.lt.s32.totalorder %s24, 1
      %s4163 = scalar_select %p4162, %s24, 1
      %p4164 = scmp.lt.s32.totalorder %s25, 1
      %s4165 = scalar_select %p4164, %s25, 1
      %s4166 = smul.addr %s4163, 2
      %s4167 = sadd.s32 %s4165, %s4166
      %s4168 = smul.addr %s4167, 2
      %s4169 = scalar_lea.vmem %s8, %s4168
      // Predicated region
      $region49: #{residual_block.3} parent=47 // pred_check
        %p4170 = pneg %p236
      $region50: #{residual_block.3} parent=47 // pred_check_branch
        %4172 = sbr.rel (%p4170) target = $region52
      $region51: #{residual_block.3} parent=47 // pred_region
        %s4173 = smul.u32 8, %s25
      $region52: #{residual_block.3} parent=47 // pred_fallthru
        _
      // Predicated region
      $region53: #{residual_block.3} parent=47 // pred_check
        %p4174 = pneg %p264
      $region54: #{residual_block.3} parent=47 // pred_check_branch
        %4176 = sbr.rel (%p4174) target = $region56
      $region55: #{residual_block.3} parent=47 // pred_region
        _
      $region56: #{residual_block.3} parent=47 // pred_fallthru
        _
    $region48: #{residual_block.3} parent=5 // pred_fallthru
      _
    %p4177 = scmp.le.s32.totalorder 2, %s15
    // Predicated region
    $region57: #{residual_block.3} parent=5 // pred_check
      %p4178 = pneg %p4177
    $region58: #{residual_block.3} parent=5 // pred_check_branch
      %4180 = sbr.rel (%p4178) target = $region60
    $region59: #{residual_block.3} parent=5 // pred_region
      %s4181 = ssub.s32 %s15, 2
      // Predicated region
      $region61: #{residual_block.3} parent=59 // pred_check
        %p4182 = pneg %p242
      $region62: #{residual_block.3} parent=59 // pred_check_branch
        %4184 = sbr.rel (%p4182) target = $region64
      $region63: #{residual_block.3} parent=59 // pred_region
        %s4185 = smul.u32 8, %s27
        %p4186 = scmp.lt.s32.totalorder %s26, 1
        %s4187 = scalar_select %p4186, %s26, 1
        %p4188 = scmp.lt.s32.totalorder %s4185, 15
        %s4189 = scalar_select %p4188, %s4185, 15
        %s4190 = smul.addr %s4189, 2
        %s4191 = smul.addr %s4187, 32
        %s4192 = sadd.s32 %s4190, %s4191
        %s4193 = smul.addr %s4192, 8
        %s4194 = scalar_lea.vmem %s7, %s4193
      $region64: #{residual_block.3} parent=59 // pred_fallthru
        _
      // Predicated region
      $region65: #{residual_block.3} parent=59 // pred_check
        %p4195 = pneg %p270
      $region66: #{residual_block.3} parent=59 // pred_check_branch
        %4197 = sbr.rel (%p4195) target = $region68
      $region67: #{residual_block.3} parent=59 // pred_region
        %p4198 = scmp.lt.s32.totalorder %s26, 1
        %s4199 = scalar_select %p4198, %s26, 1
        %p4200 = scmp.lt.s32.totalorder %s27, 1
        %s4201 = scalar_select %p4200, %s27, 1
        %s4202 = smul.addr %s4199, 2
        %s4203 = sadd.s32 %s4201, %s4202
        %s4204 = smul.addr %s4203, 2
        %s4205 = scalar_lea.vmem %s8, %s4204
      $region68: #{residual_block.3} parent=59 // pred_fallthru
        _
    $region60: #{residual_block.3} parent=5 // pred_fallthru
      _
  $region6: #{residual_block.3} parent=0 // loop_footer
    %s19 = sadd.s32 1, %s15
  $region7: #{residual_block.3} parent=0 // loop_footer_branch
    %14 = sbr.rel target = $region3
  $region8: #{residual_block.3} parent=0 // loop_exit
    _

// kernel: residual_block.4
$region0: #{residual_block.4}
  #allocation0 [shape = 'u32[]', space=smem, size = 0x4, offset = 0x4, fixed_abs, tag = 'smem constant byte address 0x4 - core index']
  #allocation1 [shape = 'u32[144,128]{1,0:T(1,128)}', space=vmem, size = 0x12000, scoped, tag = 'internal scratch']
  %s0 = inlined_call_operand.vmem [shape: f32[2,16,16,4], index: 0, kind: input, shape index: {}, may-alias: {0,1,2}]
  %s1 = inlined_call_operand.vmem [shape: f32[2,16,16,4], index: 1, kind: input, shape index: {}, may-alias: {0,1,2}]
  %s2 = inlined_call_operand.vmem [shape: f32[2,16,16,4], index: 2, kind: input, shape index: {}, may-alias: {0,1,2}]
  %s3 = inlined_call_operand.vmem [shape: bf16[5,5,4,4], index: 3, kind: input, shape index: {}]
  %s4 = inlined_call_operand.vmem [shape: f32[1,4], index: 4, kind: input, shape index: {}]
  %s5 = inlined_call_operand.vmem [shape: f32[1,4], index: 5, kind: input, shape index: {}]
  %s6 = inlined_call_operand.vmem [shape: f32[1,4], index: 6, kind: input, shape index: {}]
  %s7 = inlined_call_operand.vmem [shape: f32[2,16,16,4], index: 7, kind: output, shape index: {0}]
  %s8 = inlined_call_operand.vmem [shape: f32[2,2,2,4], index: 8, kind: output, shape index: {1}]
  %9 = xla_tuple %s7, %s8
  %s10 = sld [smem:[#allocation0]]
  $region69: #{residual_block.4} parent=0
    _
  %s12 = ssub.s32 1, %s10
  %s13 = scalar_select 0, %s12, %s10
  loop: start=0, step=1, limit=6
  $region2: #{residual_block.4} parent=0 // loop_pre_header
    _
  $region3: #{residual_block.4} parent=0 // loop_header
    %s15 = sphi 0, %s19
    %p16 = scmp.ge.s32.totalorder %s15, 6
    %s22 = sphi 0, %s34
    %s23 = sphi 0, %s30
    %s24 = sphi 0, %s22
    %s25 = sphi 0, %s23
    %s26 = sphi 0, %s24
    %s27 = sphi 0, %s25
    %s47 = sphi 0, %s49
    %s50 = sphi 0, %s47
    %s51 = sphi 0, %s50
    %s67 = sphi 0, %s51
    %s75 = sphi 0, %s77
    %s78 = sphi 0, %s75
    %s79 = sphi 0, %s78
    %s95 = sphi 0, %s79
    %s111 = sphi 0, %s113
    %s114 = sphi 0, %s111
    %s115 = sphi 0, %s114
    %s131 = sphi 0, %s115
    %s135 = sphi 0, %s135
    %s137 = sphi 0, %s135
    %s138 = sphi 0, %s137
    %s152 = sphi 0, %s138
    %s156 = sphi 0, %s156
    %s158 = sphi 0, %s156
    %s159 = sphi 0, %s158
    %s173 = sphi 0, %s159
    %s177 = sphi 0, %s177
    %s179 = sphi 0, %s177
    %s180 = sphi 0, %s179
    %s194 = sphi 0, %s180
    %s198 = sphi 0, %s198
    %s200 = sphi 0, %s198
    %s201 = sphi 0, %s200
    %s215 = sphi 0, %s201
    %s223 = sphi 0, %s225
    %s226 = sphi 0, %s223
    %s227 = sphi 0, %s226
    %s243 = sphi 0, %s227
    %s251 = sphi 0, %s253
    %s254 = sphi 0, %s251
    %s255 = sphi 0, %s254
    %s271 = sphi 0, %s255
  $region4: #{residual_block.4} parent=0 // loop_header_branch
    %18 = sbr.rel (%p16) target = $region8
  $region5: #{residual_block.4} parent=0 // loop_body
    %s20 = ssub.s32 %s15, 1
    %s21 = ssub.s32 %s15, 2
    %s28 = sadd.s32 1, %s23
    %p29 = scmp.ge.s32.totalorder %s28, 2
    %s30 = scalar_select %p29, 0, %s28
    %s31 = sadd.s32 1, %s22
    %s32 = scalar_select %p29, %s31, %s22
    %p33 = scmp.ge.s32.totalorder %s32, 2
    %s34 = scalar_select %p33, 0, %s32
    %s35 = smul.u32 %s23, 4
    %s36 = ssub.s32 %s35, 1
    %p37 = scmp.gt.s32.totalorder %s36, 0
    %s38 = scalar_select %p37, %s36, 0
    %s39 = smul.u32 %s30, 4
    %s40 = ssub.s32 %s39, 1
    %p41 = scmp.gt.s32.totalorder %s40, 0
    %s42 = scalar_select %p41, %s40, 0
    %s43 = ssub.s32 %s22, %s34
    %s44 = ssub.s32 %s38, %s42
    %s45 = sor.u32 %s43, %s44
    %p46 = scmp.eq.s32.totalorder %s45, 0
    %s48 = sadd.s32 %s47, 1
    %s49 = scalar_select %p46, %s47, %s48
    %p52 = pneg %p46
    %p53 = scmp.eq.s32.totalorder %s15, 3
    %p54 = por %p52, %p53
    %p55 = scmp.ne.s32.totalorder %s47, %s50
    %p56 = scmp.eq.s32.totalorder %s15, 0
    %p57 = por %p55, %p56
    %p58 = scmp.ne.s32.totalorder %s47, %s50
    %p59 = scmp.eq.s32.totalorder %s20, 3
    %p60 = por %p58, %p59
    %p61 = scmp.ne.s32.totalorder %s50, %s51
    %p62 = scmp.eq.s32.totalorder %s20, 0
    %p63 = por %p61, %p62
    %p64 = scmp.ne.s32.totalorder %s50, %s51
    %p65 = scmp.eq.s32.totalorder %s21, 3
    %p66 = por %p64, %p65
    %p68 = scmp.ne.s32.totalorder %s51, %s67
    %p69 = scmp.eq.s32.totalorder %s21, 0
    %p70 = por %p68, %p69
    %s71 = ssub.s32 %s22, %s34
    %s72 = ssub.s32 %s23, %s30
    %s73 = sor.u32 %s71, %s72
    %p74 = scmp.eq.s32.totalorder %s73, 0
    %s76 = sadd.s32 %s75, 1
    %s77 = scalar_select %p74, %s75, %s76
    %p80 = pneg %p74
    %p81 = scmp.eq.s32.totalorder %s15, 3
    %p82 = por %p80, %p81
    %p83 = scmp.ne.s32.totalorder %s75, %s78
    %p84 = scmp.eq.s32.totalorder %s15, 0
    %p85 = por %p83, %p84
    %p86 = scmp.ne.s32.totalorder %s75, %s78
    %p87 = scmp.eq.s32.totalorder %s20, 3
    %p88 = por %p86, %p87
    %p89 = scmp.ne.s32.totalorder %s78, %s79
    %p90 = scmp.eq.s32.totalorder %s20, 0
    %p91 = por %p89, %p90
    %p92 = scmp.ne.s32.totalorder %s78, %s79
    %p93 = scmp.eq.s32.totalorder %s21, 3
    %p94 = por %p92, %p93
    %p96 = scmp.ne.s32.totalorder %s79, %s95
    %p97 = scmp.eq.s32.totalorder %s21, 0
    %p98 = por %p96, %p97
    %s99 = sadd.s32 %s23, 1
    %s100 = smul.u32 %s99, 4
    %p101 = scmp.lt.s32.totalorder %s100, 7
    %s102 = scalar_select %p101, %s100, 7
    %s103 = sadd.s32 %s30, 1
    %s104 = smul.u32 %s103, 4
    %p105 = scmp.lt.s32.totalorder %s104, 7
    %s106 = scalar_select %p105, %s104, 7
    %s107 = ssub.s32 %s22, %s34
    %s108 = ssub.s32 %s102, %s106
    %s109 = sor.u32 %s107, %s108
    %p110 = scmp.eq.s32.totalorder %s109, 0
    %s112 = sadd.s32 %s111, 1
    %s113 = scalar_select %p110, %s111, %s112
    %p116 = pneg %p110
    %p117 = scmp.eq.s32.totalorder %s15, 3
    %p118 = por %p116, %p117
    %p119 = scmp.ne.s32.totalorder %s111, %s114
    %p120 = scmp.eq.s32.totalorder %s15, 0
    %p121 = por %p119, %p120
    %p122 = scmp.ne.s32.totalorder %s111, %s114
    %p123 = scmp.eq.s32.totalorder %s20, 3
    %p124 = por %p122, %p123
    %p125 = scmp.ne.s32.totalorder %s114, %s115
    %p126 = scmp.eq.s32.totalorder %s20, 0
    %p127 = por %p125, %p126
    %p128 = scmp.ne.s32.totalorder %s114, %s115
    %p129 = scmp.eq.s32.totalorder %s21, 3
    %p130 = por %p128, %p129
    %p132 = scmp.ne.s32.totalorder %s115, %s131
    %p133 = scmp.eq.s32.totalorder %s21, 0
    %p134 = por %p132, %p133
    %s136 = sadd.s32 %s135, 1
    %p139 = scmp.eq.s32.totalorder %s15, 3
    %p140 = scmp.ne.s32.totalorder %s135, %s137
    %p141 = scmp.eq.s32.totalorder %s15, 0
    %p142 = por %p140, %p141
    %p143 = scmp.ne.s32.totalorder %s135, %s137
    %p144 = scmp.eq.s32.totalorder %s20, 3
    %p145 = por %p143, %p144
    %p146 = scmp.ne.s32.totalorder %s137, %s138
    %p147 = scmp.eq.s32.totalorder %s20, 0
    %p148 = por %p146, %p147
    %p149 = scmp.ne.s32.totalorder %s137, %s138
    %p150 = scmp.eq.s32.totalorder %s21, 3
    %p151 = por %p149, %p150
    %p153 = scmp.ne.s32.totalorder %s138, %s152
    %p154 = scmp.eq.s32.totalorder %s21, 0
    %p155 = por %p153, %p154
    %s157 = sadd.s32 %s156, 1
    %p160 = scmp.eq.s32.totalorder %s15, 3
    %p161 = scmp.ne.s32.totalorder %s156, %s158
    %p162 = scmp.eq.s32.totalorder %s15, 0
    %p163 = por %p161, %p162
    %p164 = scmp.ne.s32.totalorder %s156, %s158
    %p165 = scmp.eq.s32.totalorder %s20, 3
    %p166 = por %p164, %p165
    %p167 = scmp.ne.s32.totalorder %s158, %s159
    %p168 = scmp.eq.s32.totalorder %s20, 0
    %p169 = por %p167, %p168
    %p170 = scmp.ne.s32.totalorder %s158, %s159
    %p171 = scmp.eq.s32.totalorder %s21, 3
    %p172 = por %p170, %p171
    %p174 = scmp.ne.s32.totalorder %s159, %s173
    %p175 = scmp.eq.s32.totalorder %s21, 0
    %p176 = por %p174, %p175
    %s178 = sadd.s32 %s177, 1
    %p181 = scmp.eq.s32.totalorder %s15, 3
    %p182 = scmp.ne.s32.totalorder %s177, %s179
    %p183 = scmp.eq.s32.totalorder %s15, 0
    %p184 = por %p182, %p183
    %p185 = scmp.ne.s32.totalorder %s177, %s179
    %p186 = scmp.eq.s32.totalorder %s20, 3
    %p187 = por %p185, %p186
    %p188 = scmp.ne.s32.totalorder %s179, %s180
    %p189 = scmp.eq.s32.totalorder %s20, 0
    %p190 = por %p188, %p189
    %p191 = scmp.ne.s32.totalorder %s179, %s180
    %p192 = scmp.eq.s32.totalorder %s21, 3
    %p193 = por %p191, %p192
    %p195 = scmp.ne.s32.totalorder %s180, %s194
    %p196 = scmp.eq.s32.totalorder %s21, 0
    %p197 = por %p195, %p196
    %s199 = sadd.s32 %s198, 1
    %p202 = scmp.eq.s32.totalorder %s15, 3
    %p203 = scmp.ne.s32.totalorder %s198, %s200
    %p204 = scmp.eq.s32.totalorder %s15, 0
    %p205 = por %p203, %p204
    %p206 = scmp.ne.s32.totalorder %s198, %s200
    %p207 = scmp.eq.s32.totalorder %s20, 3
    %p208 = por %p206, %p207
    %p209 = scmp.ne.s32.totalorder %s200, %s201
    %p210 = scmp.eq.s32.totalorder %s20, 0
    %p211 = por %p209, %p210
    %p212 = scmp.ne.s32.totalorder %s200, %s201
    %p213 = scmp.eq.s32.totalorder %s21, 3
    %p214 = por %p212, %p213
    %p216 = scmp.ne.s32.totalorder %s201, %s215
    %p217 = scmp.eq.s32.totalorder %s21, 0
    %p218 = por %p216, %p217
    %s219 = ssub.s32 %s22, %s34
    %s220 = ssub.s32 %s23, %s30
    %s221 = sor.u32 %s219, %s220
    %p222 = scmp.eq.s32.totalorder %s221, 0
    %s224 = sadd.s32 %s223, 1
    %s225 = scalar_select %p222, %s223, %s224
    %p228 = pneg %p222
    %p229 = scmp.eq.s32.totalorder %s15, 3
    %p230 = por %p228, %p229
    %p231 = scmp.ne.s32.totalorder %s223, %s226
    %p232 = scmp.eq.s32.totalorder %s15, 0
    %p233 = por %p231, %p232
    %p234 = scmp.ne.s32.totalorder %s223, %s226
    %p235 = scmp.eq.s32.totalorder %s20, 3
    %p236 = por %p234, %p235
    %p237 = scmp.ne.s32.totalorder %s226, %s227
    %p238 = scmp.eq.s32.totalorder %s20, 0
    %p239 = por %p237, %p238
    %p240 = scmp.ne.s32.totalorder %s226, %s227
    %p241 = scmp.eq.s32.totalorder %s21, 3
    %p242 = por %p240, %p241
    %p244 = scmp.ne.s32.totalorder %s227, %s243
    %p245 = scmp.eq.s32.totalorder %s21, 0
    %p246 = por %p244, %p245
    %s247 = ssub.s32 %s22, %s34
    %s248 = ssub.s32 %s23, %s30
    %s249 = sor.u32 %s247, %s248
    %p250 = scmp.eq.s32.totalorder %s249, 0
    %s252 = sadd.s32 %s251, 1
    %s253 = scalar_select %p250, %s251, %s252
    %p256 = pneg %p250
    %p257 = scmp.eq.s32.totalorder %s15, 3
    %p258 = por %p256, %p257
    %p259 = scmp.ne.s32.totalorder %s251, %s254
    %p260 = scmp.eq.s32.totalorder %s15, 0
    %p261 = por %p259, %p260
    %p262 = scmp.ne.s32.totalorder %s251, %s254
    %p263 = scmp.eq.s32.totalorder %s20, 3
    %p264 = por %p262, %p263
    %p265 = scmp.ne.s32.totalorder %s254, %s255
    %p266 = scmp.eq.s32.totalorder %s20, 0
    %p267 = por %p265, %p266
    %p268 = scmp.ne.s32.totalorder %s254, %s255
    %p269 = scmp.eq.s32.totalorder %s21, 3
    %p270 = por %p268, %p269
    %p272 = scmp.ne.s32.totalorder %s255, %s271
    %p273 = scmp.eq.s32.totalorder %s21, 0
    %p274 = por %p272, %p273
    %p275 = scmp.le.s32.totalorder 1, %s15
    %p276 = scmp.lt.s32.totalorder %s15, 5
    %p277 = pnand %p275, %p276
    %p278 = pneg %p277
    // Predicated region
    $region9: #{residual_block.4} parent=5 // pred_check
      _
    $region10: #{residual_block.4} parent=5 // pred_check_branch
      %280 = sbr.rel (%p277) target = $region12
    $region11: #{residual_block.4} parent=5 // pred_region
      %s281 = ssub.s32 %s15, 1
      // Predicated region
      $region13: #{residual_block.4} parent=11 // pred_check
        %p282 = pneg %p148
      $region14: #{residual_block.4} parent=11 // pred_check_branch
        %284 = sbr.rel (%p282) target = $region16
      $region15: #{residual_block.4} parent=11 // pred_region
        _
      $region16: #{residual_block.4} parent=11 // pred_fallthru
        _
      // Predicated region
      $region17: #{residual_block.4} parent=11 // pred_check
        %p285 = pneg %p169
      $region18: #{residual_block.4} parent=11 // pred_check_branch
        %287 = sbr.rel (%p285) target = $region20
      $region19: #{residual_block.4} parent=11 // pred_region
        _
      $region20: #{residual_block.4} parent=11 // pred_fallthru
        _
      // Predicated region
      $region21: #{residual_block.4} parent=11 // pred_check
        %p288 = pneg %p190
      $region22: #{residual_block.4} parent=11 // pred_check_branch
        %290 = sbr.rel (%p288) target = $region24
      $region23: #{residual_block.4} parent=11 // pred_region
        _
      $region24: #{residual_block.4} parent=11 // pred_fallthru
        _
      // Predicated region
      $region25: #{residual_block.4} parent=11 // pred_check
        %p291 = pneg %p211
      $region26: #{residual_block.4} parent=11 // pred_check_branch
        %293 = sbr.rel (%p291) target = $region28
      $region27: #{residual_block.4} parent=11 // pred_region
        _
      $region28: #{residual_block.4} parent=11 // pred_fallthru
        _
    $region12: #{residual_block.4} parent=5 // pred_fallthru
      _
    %p294 = scmp.lt.s32.totalorder %s15, 4
    // Predicated region
    $region29: #{residual_block.4} parent=5 // pred_check
      %p295 = pneg %p294
    $region30: #{residual_block.4} parent=5 // pred_check_branch
      %297 = sbr.rel (%p295) target = $region32
    $region31: #{residual_block.4} parent=5 // pred_region
      // Predicated region
      $region33: #{residual_block.4} parent=31 // pred_check
        %p298 = pneg %p57
      $region34: #{residual_block.4} parent=31 // pred_check_branch
        %300 = sbr.rel (%p298) target = $region36
      $region35: #{residual_block.4} parent=31 // pred_region
        %s301 = smul.u32 %s23, 4
        %s302 = ssub.s32 %s301, 1
        %p303 = scmp.gt.s32.totalorder %s302, 0
        %s304 = scalar_select %p303, %s302, 0
        %s305 = smul.u32 2, %s304
        %p306 = scmp.lt.s32.totalorder %s22, 1
        %s307 = scalar_select %p306, %s22, 1
        %p308 = scmp.lt.s32.totalorder %s305, 15
        %s309 = scalar_select %p308, %s305, 15
        %s310 = smul.addr %s309, 2
        %s311 = smul.addr %s307, 32
        %s312 = sadd.s32 %s310, %s311
        %s313 = smul.addr %s312, 8
        %s314 = scalar_lea.vmem %s0, %s313
        %s315 = smul.u32 %s23, 4
        %s316 = ssub.s32 %s315, 1
        %p317 = scmp.gt.s32.totalorder %s316, 0
        %s318 = scalar_select %p317, %s316, 0
        %s319 = smul.u32 2, %s318
      $region36: #{residual_block.4} parent=31 // pred_fallthru
        _
      // Predicated region
      $region37: #{residual_block.4} parent=31 // pred_check
        %p320 = pneg %p85
      $region38: #{residual_block.4} parent=31 // pred_check_branch
        %322 = sbr.rel (%p320) target = $region40
      $region39: #{residual_block.4} parent=31 // pred_region
        %s323 = smul.u32 8, %s23
        %p324 = scmp.lt.s32.totalorder %s22, 1
        %s325 = scalar_select %p324, %s22, 1
        %p326 = scmp.lt.s32.totalorder %s323, 15
        %s327 = scalar_select %p326, %s323, 15
        %s328 = smul.addr %s327, 2
        %s329 = smul.addr %s325, 32
        %s330 = sadd.s32 %s328, %s329
        %s331 = smul.addr %s330, 8
        %s332 = scalar_lea.vmem %s1, %s331
        %s333 = smul.u32 8, %s23
      $region40: #{residual_block.4} parent=31 // pred_fallthru
        _
      // Predicated region
      $region41: #{residual_block.4} parent=31 // pred_check
        %p334 = pneg %p121
      $region42: #{residual_block.4} parent=31 // pred_check_branch
        %336 = sbr.rel (%p334) target = $region44
      $region43: #{residual_block.4} parent=31 // pred_region
        %s337 = sadd.s32 %s23, 1
        %s338 = smul.u32 %s337, 4
        %p339 = scmp.lt.s32.totalorder %s338, 7
        %s340 = scalar_select %p339, %s338, 7
        %s341 = smul.u32 2, %s340
        %p342 = scmp.lt.s32.totalorder %s22, 1
        %s343 = scalar_select %p342, %s22, 1
        %p344 = scmp.lt.s32.totalorder %s341, 15
        %s345 = scalar_select %p344, %s341, 15
        %s346 = smul.addr %s345, 2
        %s347 = smul.addr %s343, 32
        %s348 = sadd.s32 %s346, %s347
        %s349 = smul.addr %s348, 8
        %s350 = scalar_lea.vmem %s2, %s349
        %s351 = sadd.s32 %s23, 1
        %s352 = smul.u32 %s351, 4
        %p353 = scmp.lt.s32.totalorder %s352, 7
        %s354 = scalar_select %p353, %s352, 7
        %s355 = smul.u32 2, %s354
      $region44: #{residual_block.4} parent=31 // pred_fallthru
        _
    $region32: #{residual_block.4} parent=5 // pred_fallthru
      _
    %p356 = scmp.le.s32.totalorder 1, %s15
    %p357 = scmp.lt.s32.totalorder %s15, 5
    %p358 = pnand %p356, %p357
    %p359 = pneg %p358
    // Predicated region
    $region45: #{residual_block.4} parent=5 // pred_check
      _
    $region46: #{residual_block.4} parent=5 // pred_check_branch
      %361 = sbr.rel (%p358) target = $region48
    $region47: #{residual_block.4} parent=5 // pred_region
      %s362 = ssub.s32 %s15, 1
      %s363 = smul.u32 %s25, 4
      %s364 = ssub.s32 %s363, 1
      %p365 = scmp.gt.s32.totalorder %s364, 0
      %s366 = scalar_select %p365, %s364, 0
      %s367 = smul.u32 2, %s366
      %p368 = scmp.lt.s32.totalorder %s24, 1
      %s369 = scalar_select %p368, %s24, 1
      %p370 = scmp.lt.s32.totalorder %s367, 15
      %s371 = scalar_select %p370, %s367, 15
      %s372 = smul.addr %s371, 2
      %s373 = smul.addr %s369, 32
      %s374 = sadd.s32 %s372, %s373
      %s375 = smul.addr %s374, 8
      %s376 = scalar_lea.vmem %s0, %s375
      %p377 = pneg %p63
      %p378 = pneg %p60
      %s379 = smul.u32 8, %s25
      %p380 = scmp.lt.s32.totalorder %s24, 1
      %s381 = scalar_select %p380, %s24, 1
      %p382 = scmp.lt.s32.totalorder %s379, 15
      %s383 = scalar_select %p382, %s379, 15
      %s384 = smul.addr %s383, 2
      %s385 = smul.addr %s381, 32
      %s386 = sadd.s32 %s384, %s385
      %s387 = smul.addr %s386, 8
      %s388 = scalar_lea.vmem %s1, %s387
      %p389 = pneg %p91
      %p390 = pneg %p88
      %s391 = sadd.s32 %s25, 1
      %s392 = smul.u32 %s391, 4
      %p393 = scmp.lt.s32.totalorder %s392, 7
      %s394 = scalar_select %p393, %s392, 7
      %s395 = smul.u32 2, %s394
      %p396 = scmp.lt.s32.totalorder %s24, 1
      %s397 = scalar_select %p396, %s24, 1
      %p398 = scmp.lt.s32.totalorder %s395, 15
      %s399 = scalar_select %p398, %s395, 15
      %s400 = smul.addr %s399, 2
      %s401 = smul.addr %s397, 32
      %s402 = sadd.s32 %s400, %s401
      %s403 = smul.addr %s402, 8
      %s404 = scalar_lea.vmem %s2, %s403
      %p405 = pneg %p127
      %p406 = pneg %p124
      %p407 = pneg %p148
      %p408 = pneg %p145
      %p409 = pneg %p169
      %p410 = pneg %p166
      %p411 = pneg %p190
      %p412 = pneg %p187
      %p413 = pneg %p211
      %p414 = pneg %p208
      %p415 = pneg %p239
      %p416 = pneg %p236
      %s417 = smul.u32 8, %s25
      %p418 = scmp.lt.s32.totalorder %s24, 1
      %s419 = scalar_select %p418, %s24, 1
      %p420 = scmp.lt.s32.totalorder %s417, 15
      %s421 = scalar_select %p420, %s417, 15
      %s422 = smul.addr %s421, 2
      %s423 = smul.addr %s419, 32
      %s424 = sadd.s32 %s422, %s423
      %s425 = smul.addr %s424, 8
      %s426 = scalar_lea.vmem %s7, %s425
      %p427 = pneg %p267
      %p428 = pneg %p264
      %p429 = scmp.lt.s32.totalorder %s24, 1
      %s430 = scalar_select %p429, %s24, 1
      %p431 = scmp.lt.s32.totalorder %s25, 1
      %s432 = scalar_select %p431, %s25, 1
      %s433 = smul.addr %s430, 2
      %s434 = sadd.s32 %s432, %s433
      %s435 = smul.addr %s434, 2
      %s436 = scalar_lea.vmem %s8, %s435
      %s437 = smul.u32 %s25, 4
      %s438 = ssub.s32 %s437, 1
      %p439 = scmp.gt.s32.totalorder %s438, 0
      %s440 = scalar_select %p439, %s438, 0
      %s441 = smul.u32 2, %s440
      %p442 = scmp.lt.s32.totalorder %s24, 1
      %s443 = scalar_select %p442, %s24, 1
      %p444 = scmp.lt.s32.totalorder %s441, 15
      %s445 = scalar_select %p444, %s441, 15
      %s446 = smul.addr %s445, 2
      %s447 = smul.addr %s443, 32
      %s448 = sadd.s32 %s446, %s447
      %s449 = smul.addr %s448, 8
      %s450 = scalar_lea.vmem %s0, %s449
      %s451 = smul.u32 %s25, 4
      %s452 = ssub.s32 %s451, 1
      %p453 = scmp.gt.s32.totalorder %s452, 0
      %s454 = scalar_select %p453, %s452, 0
      %s455 = smul.u32 2, %s454
      %s456 = smul.u32 8, %s25
      %p457 = scmp.lt.s32.totalorder %s24, 1
      %s458 = scalar_select %p457, %s24, 1
      %p459 = scmp.lt.s32.totalorder %s456, 15
      %s460 = scalar_select %p459, %s456, 15
      %s461 = smul.addr %s460, 2
      %s462 = smul.addr %s458, 32
      %s463 = sadd.s32 %s461, %s462
      %s464 = smul.addr %s463, 8
      %s465 = scalar_lea.vmem %s1, %s464
      %s466 = smul.u32 8, %s25
      %s467 = sadd.s32 %s25, 1
      %s468 = smul.u32 %s467, 4
      %p469 = scmp.lt.s32.totalorder %s468, 7
      %s470 = scalar_select %p469, %s468, 7
      %s471 = smul.u32 2, %s470
      %p472 = scmp.lt.s32.totalorder %s24, 1
      %s473 = scalar_select %p472, %s24, 1
      %p474 = scmp.lt.s32.totalorder %s471, 15
      %s475 = scalar_select %p474, %s471, 15
      %s476 = smul.addr %s475, 2
      %s477 = smul.addr %s473, 32
      %s478 = sadd.s32 %s476, %s477
      %s479 = smul.addr %s478, 8
      %s480 = scalar_lea.vmem %s2, %s479
      %s481 = sadd.s32 %s25, 1
      %s482 = smul.u32 %s481, 4
      %p483 = scmp.lt.s32.totalorder %s482, 7
      %s484 = scalar_select %p483, %s482, 7
      %s485 = smul.u32 2, %s484
      %s486 = smul.u32 8, %s25
      %p487 = scmp.lt.s32.totalorder %s24, 1
      %s488 = scalar_select %p487, %s24, 1
      %p489 = scmp.lt.s32.totalorder %s486, 15
      %s490 = scalar_select %p489, %s486, 15
      %s491 = smul.addr %s490, 2
      %s492 = smul.addr %s488, 32
      %s493 = sadd.s32 %s491, %s492
      %s494 = smul.addr %s493, 8
      %s495 = scalar_lea.vmem %s7, %s494
      %s496 = smul.u32 8, %s25
      %p497 = scmp.lt.s32.totalorder %s24, 1
      %s498 = scalar_select %p497, %s24, 1
      %p499 = scmp.lt.s32.totalorder %s25, 1
      %s500 = scalar_select %p499, %s25, 1
      %s501 = smul.addr %s498, 2
      %s502 = sadd.s32 %s500, %s501
      %s503 = smul.addr %s502, 2
      %s504 = scalar_lea.vmem %s8, %s503
      %v506 = vld [vmem:[%s450] sm:$0xff]
      %v507 = vld [vmem:[%s450 + $0x8] sm:$0xff]
      %v508 = vld [vmem:[%s450 + $0x10] sm:$0xff]
      %v509 = vld [vmem:[%s450 + $0x18] sm:$0xff]
      %v510 = vld [vmem:[%s5] sm:$0x1]
      %v512 = vlaneseq
      %v513 = vshrl.u32 %v512, 7
      %v514 = vsub.s32 0, %v513
      %v515 = vrot.slane %v510, %v514
      %v517 = vmul.f32 %v506, %v515
      %v518 = vmul.f32 %v507, %v515
      %v519 = vmul.f32 %v508, %v515
      %v520 = vmul.f32 %v509, %v515
      %v521 = vld [vmem:[%s6] sm:$0x1]
      %v523 = vlaneseq
      %v524 = vshrl.u32 %v523, 7
      %v525 = vsub.s32 0, %v524
      %v526 = vrot.slane %v521, %v525
      %v528 = vadd.f32 %v517, %v526
      %v529 = vadd.f32 %v518, %v526
      %v530 = vadd.f32 %v519, %v526
      %v531 = vadd.f32 %v520, %v526
      %v532 = vmax.f32 %v528, 0.0
      %v533 = vmax.f32 %v529, 0.0
      %v534 = vmax.f32 %v530, 0.0
      %v535 = vmax.f32 %v531, 0.0
      %p536 = scmp.gt.s32.totalorder %s25, 0
      %s537 = scalar_select %p536, 1, 0
      %s538 = scvt.s32.f32 %s537
      %v539 = vstv %s538
      %v540 = vmul.f32 %v532, %v539
      %v541 = vmul.f32 %v533, %v539
      %v542 = vmul.f32 %v534, %v539
      %v543 = vmul.f32 %v535, %v539
      %v544 = vld [vmem:[%s480] sm:$0xff]
      %v545 = vld [vmem:[%s480 + $0x8] sm:$0xff]
      %v546 = vld [vmem:[%s480 + $0x10] sm:$0xff]
      %v547 = vld [vmem:[%s480 + $0x18] sm:$0xff]
      %v548 = vmul.f32 %v544, %v515
      %v549 = vmul.f32 %v545, %v515
      %v550 = vmul.f32 %v546, %v515
      %v551 = vmul.f32 %v547, %v515
      %v552 = vadd.f32 %v548, %v526
      %v553 = vadd.f32 %v549, %v526
      %v554 = vadd.f32 %v550, %v526
      %v555 = vadd.f32 %v551, %v526
      %v556 = vmax.f32 %v552, 0.0
      %v557 = vmax.f32 %v553, 0.0
      %v558 = vmax.f32 %v554, 0.0
      %v559 = vmax.f32 %v555, 0.0
      %p560 = scmp.lt.s32.totalorder %s25, 1
      %s561 = scalar_select %p560, 1, 0
      %s562 = scvt.s32.f32 %s561
      %v563 = vstv %s562
      %v564 = vmul.f32 %v556, %v563
      %v565 = vmul.f32 %v557, %v563
      %v566 = vmul.f32 %v558, %v563
      %v567 = vmul.f32 %v559, %v563
      %v568 = vld [vmem:[%s465] sm:$0xff]
      %v569 = vld [vmem:[%s465 + $0x8] sm:$0xff]
      %v570 = vld [vmem:[%s465 + $0x10] sm:$0xff]
      %v571 = vld [vmem:[%s465 + $0x18] sm:$0xff]
      %v572 = vld [vmem:[%s465 + $0x20] sm:$0xff]
      %v573 = vld [vmem:[%s465 + $0x28] sm:$0xff]
      %v574 = vld [vmem:[%s465 + $0x30] sm:$0xff]
      %v575 = vld [vmem:[%s465 + $0x38] sm:$0xff]
      %v576 = vld [vmem:[%s465 + $0x40] sm:$0xff]
      %v577 = vld [vmem:[%s465 + $0x48] sm:$0xff]
      %v578 = vld [vmem:[%s465 + $0x50] sm:$0xff]
      %v579 = vld [vmem:[%s465 + $0x58] sm:$0xff]
      %v580 = vld [vmem:[%s465 + $0x60] sm:$0xff]
      %v581 = vld [vmem:[%s465 + $0x68] sm:$0xff]
      %v582 = vld [vmem:[%s465 + $0x70] sm:$0xff]
      %v583 = vld [vmem:[%s465 + $0x78] sm:$0xff]
      %v584 = vmul.f32 %v568, %v515
      %v585 = vmul.f32 %v569, %v515
      %v586 = vmul.f32 %v570, %v515
      %v587 = vmul.f32 %v571, %v515
      %v588 = vmul.f32 %v572, %v515
      %v589 = vmul.f32 %v573, %v515
      %v590 = vmul.f32 %v574, %v515
      %v591 = vmul.f32 %v575, %v515
      %v592 = vmul.f32 %v576, %v515
      %v593 = vmul.f32 %v577, %v515
      %v594 = vmul.f32 %v578, %v515
      %v595 = vmul.f32 %v579, %v515
      %v596 = vmul.f32 %v580, %v515
      %v597 = vmul.f32 %v581, %v515
      %v598 = vmul.f32 %v582, %v515
      %v599 = vmul.f32 %v583, %v515
      %v600 = vadd.f32 %v584, %v526
      %v601 = vadd.f32 %v585, %v526
      %v602 = vadd.f32 %v586, %v526
      %v603 = vadd.f32 %v587, %v526
      %v604 = vadd.f32 %v588, %v526
      %v605 = vadd.f32 %v589, %v526
      %v606 = vadd.f32 %v590, %v526
      %v607 = vadd.f32 %v591, %v526
      %v608 = vadd.f32 %v592, %v526
      %v609 = vadd.f32 %v593, %v526
      %v610 = vadd.f32 %v594, %v526
      %v611 = vadd.f32 %v595, %v526
      %v612 = vadd.f32 %v596, %v526
      %v613 = vadd.f32 %v597, %v526
      %v614 = vadd.f32 %v598, %v526
      %v615 = vadd.f32 %v599, %v526
      %v616 = vmax.f32 %v600, 0.0
      %v617 = vmax.f32 %v601, 0.0
      %v618 = vmax.f32 %v602, 0.0
      %v619 = vmax.f32 %v603, 0.0
      %v620 = vmax.f32 %v604, 0.0
      %v621 = vmax.f32 %v605, 0.0
      %v622 = vmax.f32 %v606, 0.0
      %v623 = vmax.f32 %v607, 0.0
      %v624 = vmax.f32 %v608, 0.0
      %v625 = vmax.f32 %v609, 0.0
      %v626 = vmax.f32 %v610, 0.0
      %v627 = vmax.f32 %v611, 0.0
      %v628 = vmax.f32 %v612, 0.0
      %v629 = vmax.f32 %v613, 0.0
      %v630 = vmax.f32 %v614, 0.0
      %v631 = vmax.f32 %v615, 0.0
      %vm656 = vcmask 1041408
      %v657 = vrot.slane %v540, 6
      %v658 = vrot.slane %v541, 6
      %v659 = vsel %vm656, %v657, %v658
      %v660 = vrot.slane %v542, 6
      %v661 = vrot.slane %v543, 6
      %v662 = vsel %vm656, %v660, %v661
      %v663 = vrot.slane %v616, 6
      %v664 = vrot.slane %v617, 6
      %v665 = vsel %vm656, %v663, %v664
      %v666 = vrot.slane %v618, 6
      %v667 = vrot.slane %v619, 6
      %v668 = vsel %vm656, %v666, %v667
      %v669 = vrot.slane %v620, 6
      %v670 = vrot.slane %v621, 6
      %v671 = vsel %vm656, %v669, %v670
      %v672 = vrot.slane %v622, 6
      %v673 = vrot.slane %v623, 6
      %v674 = vsel %vm656, %v672, %v673
      %v675 = vrot.slane %v624, 6
      %v676 = vrot.slane %v625, 6
      %v677 = vsel %vm656, %v675, %v676
      %v678 = vrot.slane %v626, 6
      %v679 = vrot.slane %v627, 6
      %v680 = vsel %vm656, %v678, %v679
      %v681 = vrot.slane %v628, 6
      %v682 = vrot.slane %v629, 6
      %v683 = vsel %vm656, %v681, %v682
      %v684 = vrot.slane %v630, 6
      %v685 = vrot.slane %v631, 6
      %v686 = vsel %vm656, %v684, %v685
      %v687 = vrot.slane %v564, 6
      %v688 = vrot.slane %v565, 6
      %v689 = vsel %vm656, %v687, %v688
      %v690 = vrot.slane %v566, 6
      %v691 = vrot.slane %v567, 6
      %v692 = vsel %vm656, %v690, %v691
      %v717 = vsel %vm656, 0.0, %v657
      %v718 = vsel %vm656, 0.0, %v660
      %v719 = vsel %vm656, 0.0, %v663
      %v720 = vsel %vm656, 0.0, %v666
      %v721 = vsel %vm656, 0.0, %v669
      %v722 = vsel %vm656, 0.0, %v672
      %v723 = vsel %vm656, 0.0, %v675
      %v724 = vsel %vm656, 0.0, %v678
      %v725 = vsel %vm656, 0.0, %v681
      %v726 = vsel %vm656, 0.0, %v684
      %v727 = vsel %vm656, 0.0, %v687
      %v728 = vsel %vm656, 0.0, %v690
      %v729 = vpack.c.bf16 %v659, %v717
      %v730 = vpack.c.bf16 %v662, %v718
      %v731 = vpack.c.bf16 %v665, %v719
      %v732 = vpack.c.bf16 %v668, %v720
      %v733 = vpack.c.bf16 %v671, %v721
      %v734 = vpack.c.bf16 %v674, %v722
      %v735 = vpack.c.bf16 %v677, %v723
      %v736 = vpack.c.bf16 %v680, %v724
      %v737 = vpack.c.bf16 %v683, %v725
      %v738 = vpack.c.bf16 %v686, %v726
      %v739 = vpack.c.bf16 %v689, %v727
      %v740 = vpack.c.bf16 %v692, %v728
      %v741 = vld [vmem:[%s3] sm:$0x3]
      %s742 = scalar_lea.vmem %s3, 10
      %v743 = vld [vmem:[%s742] sm:$0x3]
      %vm744 = vcmask 31744
      %v746 = vsel %vm744, %v730, 0
      %v749 = vsel %vm744, %v731, 0
      %v752 = vsel %vm744, %v732, 0
      %v755 = vsel %vm744, %v733, 0
      %v758 = vsel %vm744, %v734, 0
      %v761 = vsel %vm744, %v735, 0
      %v764 = vsel %vm744, %v736, 0
      %v767 = vsel %vm744, %v737, 0
      %v770 = vsel %vm656, %v743, 0
      %772 = vmatprep.subr.bf16.mxu0 0
      %773 = vmatpush1.bf16.msra.mxu0 %v770
      %774 = vmatprep.subr.bf16.mxu0 0
      %775 = vmatpush1.bf16.msra.mxu0 0
      %776 = vmatprep.subr.bf16.mxu0 0
      %777 = vmatpush1.bf16.msra.mxu0 0
      %778 = vmatprep.subr.bf16.mxu0 0
      %779 = vmatpush1.bf16.msra.mxu0 0
      %780 = vmatprep.subr.bf16.mxu0 0
      %781 = vmatpush1.bf16.msra.mxu0 0
      %782 = vmatprep.subr.bf16.mxu0 0
      %783 = vmatpush1.bf16.msra.mxu0 0
      %784 = vmatprep.subr.bf16.mxu0 0
      %785 = vmatpush1.bf16.msra.mxu0 0
      %786 = vmatprep.subr.bf16.mxu0 0
      %787 = vmatpush1.bf16.msra.mxu0 0
      %788 = vmatprep.subr.bf16.mxu0 0
      %789 = vmatpush1.bf16.msra.mxu0 0
      %790 = vmatprep.subr.bf16.mxu0 0
      %791 = vmatpush1.bf16.msra.mxu0 0
      %792 = vmatprep.subr.bf16.mxu0 0
      %793 = vmatpush1.bf16.msra.mxu0 0
      %794 = vmatprep.subr.bf16.mxu0 0
      %795 = vmatpush1.bf16.msra.mxu0 0
      %796 = vmatprep.subr.bf16.mxu0 0
      %797 = vmatpush1.bf16.msra.mxu0 0
      %798 = vmatprep.subr.bf16.mxu0 0
      %799 = vmatpush1.bf16.msra.mxu0 0
      %800 = vmatprep.subr.bf16.mxu0 0
      %801 = vmatpush1.bf16.msra.mxu0 0
      %802 = vmatprep.subr.bf16.mxu0 0
      %803 = vmatpush1.bf16.msra.mxu0 0
      %804 = vmatprep.mubr.bf16.mxu0 0
      %805 = vmatmul.mubr.bf16.gmra.mrb[0].mxu0 %v746
      %v806 = vpop.f32.mrb[0].mxu0
      %v807 = vadd.f32 0.0, %v806
      %v808 = vpop.f32.mrb[0].mxu0
      %v809 = vpop.f32.mrb[0].mxu0
      %v810 = vadd.f32 0.0, %v809
      %v811 = vpop.f32.mrb[0].mxu0
      %812 = vmatprep.mubr.bf16.mxu0 0
      %813 = vmatmul.mubr.bf16.gmra.mrb[0].mxu0 %v749
      %v814 = vpop.f32.mrb[0].mxu0
      %v815 = vadd.f32 0.0, %v814
      %v816 = vpop.f32.mrb[0].mxu0
      %v817 = vpop.f32.mrb[0].mxu0
      %v818 = vadd.f32 0.0, %v817
      %v819 = vpop.f32.mrb[0].mxu0
      %820 = vmatprep.mubr.bf16.mxu0 0
      %821 = vmatmul.mubr.bf16.gmra.mrb[0].mxu0 %v752
      %v822 = vpop.f32.mrb[0].mxu0
      %v823 = vadd.f32 0.0, %v822
      %v824 = vpop.f32.mrb[0].mxu0
      %v825 = vpop.f32.mrb[0].mxu0
      %v826 = vadd.f32 0.0, %v825
      %v827 = vpop.f32.mrb[0].mxu0
      %828 = vmatprep.mubr.bf16.mxu0 0
      %829 = vmatmul.mubr.bf16.gmra.mrb[0].mxu0 %v755
      %v830 = vpop.f32.mrb[0].mxu0
      %v831 = vadd.f32 0.0, %v830
      %v832 = vpop.f32.mrb[0].mxu0
      %v833 = vpop.f32.mrb[0].mxu0
      %v834 = vadd.f32 0.0, %v833
      %v835 = vpop.f32.mrb[0].mxu0
      %836 = vmatprep.mubr.bf16.mxu0 0
      %837 = vmatmul.mubr.bf16.gmra.mrb[0].mxu0 %v758
      %v838 = vpop.f32.mrb[0].mxu0
      %v839 = vadd.f32 0.0, %v838
      %v840 = vpop.f32.mrb[0].mxu0
      %v841 = vpop.f32.mrb[0].mxu0
      %v842 = vadd.f32 0.0, %v841
      %v843 = vpop.f32.mrb[0].mxu0
      %844 = vmatprep.mubr.bf16.mxu0 0
      %845 = vmatmul.mubr.bf16.gmra.mrb[0].mxu0 %v761
      %v846 = vpop.f32.mrb[0].mxu0
      %v847 = vadd.f32 0.0, %v846
      %v848 = vpop.f32.mrb[0].mxu0
      %v849 = vpop.f32.mrb[0].mxu0
      %v850 = vadd.f32 0.0, %v849
      %v851 = vpop.f32.mrb[0].mxu0
      %852 = vmatprep.mubr.bf16.mxu0 0
      %853 = vmatmul.mubr.bf16.gmra.mrb[0].mxu0 %v764
      %v854 = vpop.f32.mrb[0].mxu0
      %v855 = vadd.f32 0.0, %v854
      %v856 = vpop.f32.mrb[0].mxu0
      %v857 = vpop.f32.mrb[0].mxu0
      %v858 = vadd.f32 0.0, %v857
      %v859 = vpop.f32.mrb[0].mxu0
      %860 = vmatprep.mubr.bf16.mxu0 0
      %861 = vmatmul.mubr.bf16.gmra.mrb[0].mxu0 %v767
      %v862 = vpop.f32.mrb[0].mxu0
      %v863 = vadd.f32 0.0, %v862
      %v864 = vpop.f32.mrb[0].mxu0
      %v865 = vpop.f32.mrb[0].mxu0
      %v866 = vadd.f32 0.0, %v865
      %v867 = vpop.f32.mrb[0].mxu0
      %868 = vdwg.mxu0
      %v870 = vsel %vm744, %v729, 0
      %v873 = vsel %vm656, %v741, 0
      %875 = vmatprep.subr.bf16.mxu0 0
      %876 = vmatpush1.bf16.msra.mxu0 %v873
      %877 = vmatprep.subr.bf16.mxu0 0
      %878 = vmatpush1.bf16.msra.mxu0 0
      %879 = vmatprep.subr.bf16.mxu0 0
      %880 = vmatpush1.bf16.msra.mxu0 0
      %881 = vmatprep.subr.bf16.mxu0 0
      %882 = vmatpush1.bf16.msra.mxu0 0
      %883 = vmatprep.subr.bf16.mxu0 0
      %884 = vmatpush1.bf16.msra.mxu0 0
      %885 = vmatprep.subr.bf16.mxu0 0
      %886 = vmatpush1.bf16.msra.mxu0 0
      %887 = vmatprep.subr.bf16.mxu0 0
      %888 = vmatpush1.bf16.msra.mxu0 0
      %889 = vmatprep.subr.bf16.mxu0 0
      %890 = vmatpush1.bf16.msra.mxu0 0
      %891 = vmatprep.subr.bf16.mxu0 0
      %892 = vmatpush1.bf16.msra.mxu0 0
      %893 = vmatprep.subr.bf16.mxu0 0
      %894 = vmatpush1.bf16.msra.mxu0 0
      %895 = vmatprep.subr.bf16.mxu0 0
      %896 = vmatpush1.bf16.msra.mxu0 0
      %897 = vmatprep.subr.bf16.mxu0 0
      %898 = vmatpush1.bf16.msra.mxu0 0
      %899 = vmatprep.subr.bf16.mxu0 0
      %900 = vmatpush1.bf16.msra.mxu0 0
      %901 = vmatprep.subr.bf16.mxu0 0
      %902 = vmatpush1.bf16.msra.mxu0 0
      %903 = vmatprep.subr.bf16.mxu0 0
      %904 = vmatpush1.bf16.msra.mxu0 0
      %905 = vmatprep.subr.bf16.mxu0 0
      %906 = vmatpush1.bf16.msra.mxu0 0
      %907 = vmatprep.mubr.bf16.mxu0 0
      %908 = vmatmul.mubr.bf16.gmra.mrb[0].mxu0 %v870
      %v909 = vpop.f32.mrb[0].mxu0
      %v910 = vadd.f32 %v807, %v909
      %v911 = vpop.f32.mrb[0].mxu0
      %v912 = vpop.f32.mrb[0].mxu0
      %v913 = vadd.f32 %v810, %v912
      %v914 = vpop.f32.mrb[0].mxu0
      %915 = vmatprep.mubr.bf16.mxu0 0
      %916 = vmatmul.mubr.bf16.gmra.mrb[0].mxu0 %v746
      %v917 = vpop.f32.mrb[0].mxu0
      %v918 = vadd.f32 %v815, %v917
      %v919 = vpop.f32.mrb[0].mxu0
      %v920 = vpop.f32.mrb[0].mxu0
      %v921 = vadd.f32 %v818, %v920
      %v922 = vpop.f32.mrb[0].mxu0
      %923 = vmatprep.mubr.bf16.mxu0 0
      %924 = vmatmul.mubr.bf16.gmra.mrb[0].mxu0 %v749
      %v925 = vpop.f32.mrb[0].mxu0
      %v926 = vadd.f32 %v823, %v925
      %v927 = vpop.f32.mrb[0].mxu0
      %v928 = vpop.f32.mrb[0].mxu0
      %v929 = vadd.f32 %v826, %v928
      %v930 = vpop.f32.mrb[0].mxu0
      %931 = vmatprep.mubr.bf16.mxu0 0
      %932 = vmatmul.mubr.bf16.gmra.mrb[0].mxu0 %v752
      %v933 = vpop.f32.mrb[0].mxu0
      %v934 = vadd.f32 %v831, %v933
      %v935 = vpop.f32.mrb[0].mxu0
      %v936 = vpop.f32.mrb[0].mxu0
      %v937 = vadd.f32 %v834, %v936
      %v938 = vpop.f32.mrb[0].mxu0
      %939 = vmatprep.mubr.bf16.mxu0 0
      %940 = vmatmul.mubr.bf16.gmra.mrb[0].mxu0 %v755
      %v941 = vpop.f32.mrb[0].mxu0
      %v942 = vadd.f32 %v839, %v941
      %v943 = vpop.f32.mrb[0].mxu0
      %v944 = vpop.f32.mrb[0].mxu0
      %v945 = vadd.f32 %v842, %v944
      %v946 = vpop.f32.mrb[0].mxu0
      %947 = vmatprep.mubr.bf16.mxu0 0
      %948 = vmatmul.mubr.bf16.gmra.mrb[0].mxu0 %v758
      %v949 = vpop.f32.mrb[0].mxu0
      %v950 = vadd.f32 %v847, %v949
      %v951 = vpop.f32.mrb[0].mxu0
      %v952 = vpop.f32.mrb[0].mxu0
      %v953 = vadd.f32 %v850, %v952
      %v954 = vpop.f32.mrb[0].mxu0
      %955 = vmatprep.mubr.bf16.mxu0 0
      %956 = vmatmul.mubr.bf16.gmra.mrb[0].mxu0 %v761
      %v957 = vpop.f32.mrb[0].mxu0
      %v958 = vadd.f32 %v855, %v957
      %v959 = vpop.f32.mrb[0].mxu0
      %v960 = vpop.f32.mrb[0].mxu0
      %v961 = vadd.f32 %v858, %v960
      %v962 = vpop.f32.mrb[0].mxu0
      %963 = vmatprep.mubr.bf16.mxu0 0
      %964 = vmatmul.mubr.bf16.gmra.mrb[0].mxu0 %v764
      %v965 = vpop.f32.mrb[0].mxu0
      %v966 = vadd.f32 %v863, %v965
      %v967 = vpop.f32.mrb[0].mxu0
      %v968 = vpop.f32.mrb[0].mxu0
      %v969 = vadd.f32 %v866, %v968
      %v970 = vpop.f32.mrb[0].mxu0
      %971 = vdwg.mxu0
      %s972 = scalar_lea.vmem %s3, 20
      %v973 = vld [vmem:[%s972] sm:$0x3]
      %v975 = vsel %vm744, %v738, 0
      %v978 = vsel %vm656, %v973, 0
      %980 = vmatprep.subr.bf16.mxu0 0
      %981 = vmatpush1.bf16.msra.mxu0 %v978
      %982 = vmatprep.subr.bf16.mxu0 0
      %983 = vmatpush1.bf16.msra.mxu0 0
      %984 = vmatprep.subr.bf16.mxu0 0
      %985 = vmatpush1.bf16.msra.mxu0 0
      %986 = vmatprep.subr.bf16.mxu0 0
      %987 = vmatpush1.bf16.msra.mxu0 0
      %988 = vmatprep.subr.bf16.mxu0 0
      %989 = vmatpush1.bf16.msra.mxu0 0
      %990 = vmatprep.subr.bf16.mxu0 0
      %991 = vmatpush1.bf16.msra.mxu0 0
      %992 = vmatprep.subr.bf16.mxu0 0
      %993 = vmatpush1.bf16.msra.mxu0 0
      %994 = vmatprep.subr.bf16.mxu0 0
      %995 = vmatpush1.bf16.msra.mxu0 0
      %996 = vmatprep.subr.bf16.mxu0 0
      %997 = vmatpush1.bf16.msra.mxu0 0
      %998 = vmatprep.subr.bf16.mxu0 0
      %999 = vmatpush1.bf16.msra.mxu0 0
      %1000 = vmatprep.subr.bf16.mxu0 0
      %1001 = vmatpush1.bf16.msra.mxu0 0
      %1002 = vmatprep.subr.bf16.mxu0 0
      %1003 = vmatpush1.bf16.msra.mxu0 0
      %1004 = vmatprep.subr.bf16.mxu0 0
      %1005 = vmatpush1.bf16.msra.mxu0 0
      %1006 = vmatprep.subr.bf16.mxu0 0
      %1007 = vmatpush1.bf16.msra.mxu0 0
      %1008 = vmatprep.subr.bf16.mxu0 0
      %1009 = vmatpush1.bf16.msra.mxu0 0
      %1010 = vmatprep.subr.bf16.mxu0 0
      %1011 = vmatpush1.bf16.msra.mxu0 0
      %1012 = vmatprep.mubr.bf16.mxu0 0
      %1013 = vmatmul.mubr.bf16.gmra.mrb[0].mxu0 %v749
      %v1014 = vpop.f32.mrb[0].mxu0
      %v1015 = vadd.f32 0.0, %v1014
      %v1016 = vpop.f32.mrb[0].mxu0
      %v1017 = vpop.f32.mrb[0].mxu0
      %v1018 = vadd.f32 0.0, %v1017
      %v1019 = vpop.f32.mrb[0].mxu0
      %1020 = vmatprep.mubr.bf16.mxu0 0
      %1021 = vmatmul.mubr.bf16.gmra.mrb[0].mxu0 %v752
      %v1022 = vpop.f32.mrb[0].mxu0
      %v1023 = vadd.f32 0.0, %v1022
      %v1024 = vpop.f32.mrb[0].mxu0
      %v1025 = vpop.f32.mrb[0].mxu0
      %v1026 = vadd.f32 0.0, %v1025
      %v1027 = vpop.f32.mrb[0].mxu0
      %1028 = vmatprep.mubr.bf16.mxu0 0
      %1029 = vmatmul.mubr.bf16.gmra.mrb[0].mxu0 %v755
      %v1030 = vpop.f32.mrb[0].mxu0
      %v1031 = vadd.f32 0.0, %v1030
      %v1032 = vpop.f32.mrb[0].mxu0
      %v1033 = vpop.f32.mrb[0].mxu0
      %v1034 = vadd.f32 0.0, %v1033
      %v1035 = vpop.f32.mrb[0].mxu0
      %1036 = vmatprep.mubr.bf16.mxu0 0
      %1037 = vmatmul.mubr.bf16.gmra.mrb[0].mxu0 %v758
      %v1038 = vpop.f32.mrb[0].mxu0
      %v1039 = vadd.f32 0.0, %v1038
      %v1040 = vpop.f32.mrb[0].mxu0
      %v1041 = vpop.f32.mrb[0].mxu0
      %v1042 = vadd.f32 0.0, %v1041
      %v1043 = vpop.f32.mrb[0].mxu0
      %1044 = vmatprep.mubr.bf16.mxu0 0
      %1045 = vmatmul.mubr.bf16.gmra.mrb[0].mxu0 %v761
      %v1046 = vpop.f32.mrb[0].mxu0
      %v1047 = vadd.f32 0.0, %v1046
      %v1048 = vpop.f32.mrb[0].mxu0
      %v1049 = vpop.f32.mrb[0].mxu0
      %v1050 = vadd.f32 0.0, %v1049
      %v1051 = vpop.f32.mrb[0].mxu0
      %1052 = vmatprep.mubr.bf16.mxu0 0
      %1053 = vmatmul.mubr.bf16.gmra.mrb[0].mxu0 %v764
      %v1054 = vpop.f32.mrb[0].mxu0
      %v1055 = vadd.f32 0.0, %v1054
      %v1056 = vpop.f32.mrb[0].mxu0
      %v1057 = vpop.f32.mrb[0].mxu0
      %v1058 = vadd.f32 0.0, %v1057
      %v1059 = vpop.f32.mrb[0].mxu0
      %1060 = vmatprep.mubr.bf16.mxu0 0
      %1061 = vmatmul.mubr.bf16.gmra.mrb[0].mxu0 %v767
      %v1062 = vpop.f32.mrb[0].mxu0
      %v1063 = vadd.f32 0.0, %v1062
      %v1064 = vpop.f32.mrb[0].mxu0
      %v1065 = vpop.f32.mrb[0].mxu0
      %v1066 = vadd.f32 0.0, %v1065
      %v1067 = vpop.f32.mrb[0].mxu0
      %1068 = vmatprep.mubr.bf16.mxu0 0
      %1069 = vmatmul.mubr.bf16.gmra.mrb[0].mxu0 %v975
      %v1070 = vpop.f32.mrb[0].mxu0
      %v1071 = vadd.f32 0.0, %v1070
      %v1072 = vpop.f32.mrb[0].mxu0
      %v1073 = vpop.f32.mrb[0].mxu0
      %v1074 = vadd.f32 0.0, %v1073
      %v1075 = vpop.f32.mrb[0].mxu0
      %1076 = vdwg.mxu0
      %v1077 = vadd.f32 %v910, %v1015
      %v1078 = vadd.f32 %v913, %v1018
      %v1079 = vadd.f32 %v918, %v1023
      %v1080 = vadd.f32 %v921, %v1026
      %v1081 = vadd.f32 %v926, %v1031
      %v1082 = vadd.f32 %v929, %v1034
      %v1083 = vadd.f32 %v934, %v1039
      %v1084 = vadd.f32 %v937, %v1042
      %v1085 = vadd.f32 %v942, %v1047
      %v1086 = vadd.f32 %v945, %v1050
      %v1087 = vadd.f32 %v950, %v1055
      %v1088 = vadd.f32 %v953, %v1058
      %v1089 = vadd.f32 %v958, %v1063
      %v1090 = vadd.f32 %v961, %v1066
      %v1091 = vadd.f32 %v966, %v1071
      %v1092 = vadd.f32 %v969, %v1074
      %s1093 = scalar_lea.vmem %s3, 30
      %v1094 = vld [vmem:[%s1093] sm:$0x3]
      %v1096 = vsel %vm744, %v739, 0
      %v1099 = vsel %vm656, %v1094, 0
      %1101 = vmatprep.subr.bf16.mxu0 0
      %1102 = vmatpush1.bf16.msra.mxu0 %v1099
      %1103 = vmatprep.subr.bf16.mxu0 0
      %1104 = vmatpush1.bf16.msra.mxu0 0
      %1105 = vmatprep.subr.bf16.mxu0 0
      %1106 = vmatpush1.bf16.msra.mxu0 0
      %1107 = vmatprep.subr.bf16.mxu0 0
      %1108 = vmatpush1.bf16.msra.mxu0 0
      %1109 = vmatprep.subr.bf16.mxu0 0
      %1110 = vmatpush1.bf16.msra.mxu0 0
      %1111 = vmatprep.subr.bf16.mxu0 0
      %1112 = vmatpush1.bf16.msra.mxu0 0
      %1113 = vmatprep.subr.bf16.mxu0 0
      %1114 = vmatpush1.bf16.msra.mxu0 0
      %1115 = vmatprep.subr.bf16.mxu0 0
      %1116 = vmatpush1.bf16.msra.mxu0 0
      %1117 = vmatprep.subr.bf16.mxu0 0
      %1118 = vmatpush1.bf16.msra.mxu0 0
      %1119 = vmatprep.subr.bf16.mxu0 0
      %1120 = vmatpush1.bf16.msra.mxu0 0
      %1121 = vmatprep.subr.bf16.mxu0 0
      %1122 = vmatpush1.bf16.msra.mxu0 0
      %1123 = vmatprep.subr.bf16.mxu0 0
      %1124 = vmatpush1.bf16.msra.mxu0 0
      %1125 = vmatprep.subr.bf16.mxu0 0
      %1126 = vmatpush1.bf16.msra.mxu0 0
      %1127 = vmatprep.subr.bf16.mxu0 0
      %1128 = vmatpush1.bf16.msra.mxu0 0
      %1129 = vmatprep.subr.bf16.mxu0 0
      %1130 = vmatpush1.bf16.msra.mxu0 0
      %1131 = vmatprep.subr.bf16.mxu0 0
      %1132 = vmatpush1.bf16.msra.mxu0 0
      %1133 = vmatprep.mubr.bf16.mxu0 0
      %1134 = vmatmul.mubr.bf16.gmra.mrb[0].mxu0 %v752
      %v1135 = vpop.f32.mrb[0].mxu0
      %v1136 = vadd.f32 0.0, %v1135
      %v1137 = vpop.f32.mrb[0].mxu0
      %v1138 = vpop.f32.mrb[0].mxu0
      %v1139 = vadd.f32 0.0, %v1138
      %v1140 = vpop.f32.mrb[0].mxu0
      %1141 = vmatprep.mubr.bf16.mxu0 0
      %1142 = vmatmul.mubr.bf16.gmra.mrb[0].mxu0 %v755
      %v1143 = vpop.f32.mrb[0].mxu0
      %v1144 = vadd.f32 0.0, %v1143
      %v1145 = vpop.f32.mrb[0].mxu0
      %v1146 = vpop.f32.mrb[0].mxu0
      %v1147 = vadd.f32 0.0, %v1146
      %v1148 = vpop.f32.mrb[0].mxu0
      %1149 = vmatprep.mubr.bf16.mxu0 0
      %1150 = vmatmul.mubr.bf16.gmra.mrb[0].mxu0 %v758
      %v1151 = vpop.f32.mrb[0].mxu0
      %v1152 = vadd.f32 0.0, %v1151
      %v1153 = vpop.f32.mrb[0].mxu0
      %v1154 = vpop.f32.mrb[0].mxu0
      %v1155 = vadd.f32 0.0, %v1154
      %v1156 = vpop.f32.mrb[0].mxu0
      %1157 = vmatprep.mubr.bf16.mxu0 0
      %1158 = vmatmul.mubr.bf16.gmra.mrb[0].mxu0 %v761
      %v1159 = vpop.f32.mrb[0].mxu0
      %v1160 = vadd.f32 0.0, %v1159
      %v1161 = vpop.f32.mrb[0].mxu0
      %v1162 = vpop.f32.mrb[0].mxu0
      %v1163 = vadd.f32 0.0, %v1162
      %v1164 = vpop.f32.mrb[0].mxu0
      %1165 = vmatprep.mubr.bf16.mxu0 0
      %1166 = vmatmul.mubr.bf16.gmra.mrb[0].mxu0 %v764
      %v1167 = vpop.f32.mrb[0].mxu0
      %v1168 = vadd.f32 0.0, %v1167
      %v1169 = vpop.f32.mrb[0].mxu0
      %v1170 = vpop.f32.mrb[0].mxu0
      %v1171 = vadd.f32 0.0, %v1170
      %v1172 = vpop.f32.mrb[0].mxu0
      %1173 = vmatprep.mubr.bf16.mxu0 0
      %1174 = vmatmul.mubr.bf16.gmra.mrb[0].mxu0 %v767
      %v1175 = vpop.f32.mrb[0].mxu0
      %v1176 = vadd.f32 0.0, %v1175
      %v1177 = vpop.f32.mrb[0].mxu0
      %v1178 = vpop.f32.mrb[0].mxu0
      %v1179 = vadd.f32 0.0, %v1178
      %v1180 = vpop.f32.mrb[0].mxu0
      %1181 = vmatprep.mubr.bf16.mxu0 0
      %1182 = vmatmul.mubr.bf16.gmra.mrb[0].mxu0 %v975
      %v1183 = vpop.f32.mrb[0].mxu0
      %v1184 = vadd.f32 0.0, %v1183
      %v1185 = vpop.f32.mrb[0].mxu0
      %v1186 = vpop.f32.mrb[0].mxu0
      %v1187 = vadd.f32 0.0, %v1186
      %v1188 = vpop.f32.mrb[0].mxu0
      %1189 = vmatprep.mubr.bf16.mxu0 0
      %1190 = vmatmul.mubr.bf16.gmra.mrb[0].mxu0 %v1096
      %v1191 = vpop.f32.mrb[0].mxu0
      %v1192 = vadd.f32 0.0, %v1191
      %v1193 = vpop.f32.mrb[0].mxu0
      %v1194 = vpop.f32.mrb[0].mxu0
      %v1195 = vadd.f32 0.0, %v1194
      %v1196 = vpop.f32.mrb[0].mxu0
      %1197 = vdwg.mxu0
      %v1198 = vadd.f32 %v1077, %v1136
      %v1199 = vadd.f32 %v1078, %v1139
      %v1200 = vadd.f32 %v1079, %v1144
      %v1201 = vadd.f32 %v1080, %v1147
      %v1202 = vadd.f32 %v1081, %v1152
      %v1203 = vadd.f32 %v1082, %v1155
      %v1204 = vadd.f32 %v1083, %v1160
      %v1205 = vadd.f32 %v1084, %v1163
      %v1206 = vadd.f32 %v1085, %v1168
      %v1207 = vadd.f32 %v1086, %v1171
      %v1208 = vadd.f32 %v1087, %v1176
      %v1209 = vadd.f32 %v1088, %v1179
      %v1210 = vadd.f32 %v1089, %v1184
      %v1211 = vadd.f32 %v1090, %v1187
      %v1212 = vadd.f32 %v1091, %v1192
      %v1213 = vadd.f32 %v1092, %v1195
      %s1214 = scalar_lea.vmem %s3, 40
      %v1215 = vld [vmem:[%s1214] sm:$0x3]
      %v1217 = vsel %vm744, %v740, 0
      %v1220 = vsel %vm656, %v1215, 0
      %1222 = vmatprep.subr.bf16.mxu0 0
      %1223 = vmatpush1.bf16.msra.mxu0 %v1220
      %1224 = vmatprep.subr.bf16.mxu0 0
      %1225 = vmatpush1.bf16.msra.mxu0 0
      %1226 = vmatprep.subr.bf16.mxu0 0
      %1227 = vmatpush1.bf16.msra.mxu0 0
      %1228 = vmatprep.subr.bf16.mxu0 0
      %1229 = vmatpush1.bf16.msra.mxu0 0
      %1230 = vmatprep.subr.bf16.mxu0 0
      %1231 = vmatpush1.bf16.msra.mxu0 0
      %1232 = vmatprep.subr.bf16.mxu0 0
      %1233 = vmatpush1.bf16.msra.mxu0 0
      %1234 = vmatprep.subr.bf16.mxu0 0
      %1235 = vmatpush1.bf16.msra.mxu0 0
      %1236 = vmatprep.subr.bf16.mxu0 0
      %1237 = vmatpush1.bf16.msra.mxu0 0
      %1238 = vmatprep.subr.bf16.mxu0 0
      %1239 = vmatpush1.bf16.msra.mxu0 0
      %1240 = vmatprep.subr.bf16.mxu0 0
      %1241 = vmatpush1.bf16.msra.mxu0 0
      %1242 = vmatprep.subr.bf16.mxu0 0
      %1243 = vmatpush1.bf16.msra.mxu0 0
      %1244 = vmatprep.subr.bf16.mxu0 0
      %1245 = vmatpush1.bf16.msra.mxu0 0
      %1246 = vmatprep.subr.bf16.mxu0 0
      %1247 = vmatpush1.bf16.msra.mxu0 0
      %1248 = vmatprep.subr.bf16.mxu0 0
      %1249 = vmatpush1.bf16.msra.mxu0 0
      %1250 = vmatprep.subr.bf16.mxu0 0
      %1251 = vmatpush1.bf16.msra.mxu0 0
      %1252 = vmatprep.subr.bf16.mxu0 0
      %1253 = vmatpush1.bf16.msra.mxu0 0
      %1254 = vmatprep.mubr.bf16.mxu0 0
      %1255 = vmatmul.mubr.bf16.gmra.mrb[0].mxu0 %v755
      %v1256 = vpop.f32.mrb[0].mxu0
      %v1257 = vadd.f32 0.0, %v1256
      %v1258 = vpop.f32.mrb[0].mxu0
      %v1259 = vpop.f32.mrb[0].mxu0
      %v1260 = vadd.f32 0.0, %v1259
      %v1261 = vpop.f32.mrb[0].mxu0
      %1262 = vmatprep.mubr.bf16.mxu0 0
      %1263 = vmatmul.mubr.bf16.gmra.mrb[0].mxu0 %v758
      %v1264 = vpop.f32.mrb[0].mxu0
      %v1265 = vadd.f32 0.0, %v1264
      %v1266 = vpop.f32.mrb[0].mxu0
      %v1267 = vpop.f32.mrb[0].mxu0
      %v1268 = vadd.f32 0.0, %v1267
      %v1269 = vpop.f32.mrb[0].mxu0
      %1270 = vmatprep.mubr.bf16.mxu0 0
      %1271 = vmatmul.mubr.bf16.gmra.mrb[0].mxu0 %v761
      %v1272 = vpop.f32.mrb[0].mxu0
      %v1273 = vadd.f32 0.0, %v1272
      %v1274 = vpop.f32.mrb[0].mxu0
      %v1275 = vpop.f32.mrb[0].mxu0
      %v1276 = vadd.f32 0.0, %v1275
      %v1277 = vpop.f32.mrb[0].mxu0
      %1278 = vmatprep.mubr.bf16.mxu0 0
      %1279 = vmatmul.mubr.bf16.gmra.mrb[0].mxu0 %v764
      %v1280 = vpop.f32.mrb[0].mxu0
      %v1281 = vadd.f32 0.0, %v1280
      %v1282 = vpop.f32.mrb[0].mxu0
      %v1283 = vpop.f32.mrb[0].mxu0
      %v1284 = vadd.f32 0.0, %v1283
      %v1285 = vpop.f32.mrb[0].mxu0
      %1286 = vmatprep.mubr.bf16.mxu0 0
      %1287 = vmatmul.mubr.bf16.gmra.mrb[0].mxu0 %v767
      %v1288 = vpop.f32.mrb[0].mxu0
      %v1289 = vadd.f32 0.0, %v1288
      %v1290 = vpop.f32.mrb[0].mxu0
      %v1291 = vpop.f32.mrb[0].mxu0
      %v1292 = vadd.f32 0.0, %v1291
      %v1293 = vpop.f32.mrb[0].mxu0
      %1294 = vmatprep.mubr.bf16.mxu0 0
      %1295 = vmatmul.mubr.bf16.gmra.mrb[0].mxu0 %v975
      %v1296 = vpop.f32.mrb[0].mxu0
      %v1297 = vadd.f32 0.0, %v1296
      %v1298 = vpop.f32.mrb[0].mxu0
      %v1299 = vpop.f32.mrb[0].mxu0
      %v1300 = vadd.f32 0.0, %v1299
      %v1301 = vpop.f32.mrb[0].mxu0
      %1302 = vmatprep.mubr.bf16.mxu0 0
      %1303 = vmatmul.mubr.bf16.gmra.mrb[0].mxu0 %v1096
      %v1304 = vpop.f32.mrb[0].mxu0
      %v1305 = vadd.f32 0.0, %v1304
      %v1306 = vpop.f32.mrb[0].mxu0
      %v1307 = vpop.f32.mrb[0].mxu0
      %v1308 = vadd.f32 0.0, %v1307
      %v1309 = vpop.f32.mrb[0].mxu0
      %1310 = vmatprep.mubr.bf16.mxu0 0
      %1311 = vmatmul.mubr.bf16.gmra.mrb[0].mxu0 %v1217
      %v1312 = vpop.f32.mrb[0].mxu0
      %v1313 = vadd.f32 0.0, %v1312
      %v1314 = vpop.f32.mrb[0].mxu0
      %v1315 = vpop.f32.mrb[0].mxu0
      %v1316 = vadd.f32 0.0, %v1315
      %v1317 = vpop.f32.mrb[0].mxu0
      %1318 = vdwg.mxu0
      %v1319 = vadd.f32 %v1198, %v1257
      %v1320 = vadd.f32 %v1199, %v1260
      %v1321 = vadd.f32 %v1200, %v1265
      %v1322 = vadd.f32 %v1201, %v1268
      %v1323 = vadd.f32 %v1202, %v1273
      %v1324 = vadd.f32 %v1203, %v1276
      %v1325 = vadd.f32 %v1204, %v1281
      %v1326 = vadd.f32 %v1205, %v1284
      %v1327 = vadd.f32 %v1206, %v1289
      %v1328 = vadd.f32 %v1207, %v1292
      %v1329 = vadd.f32 %v1208, %v1297
      %v1330 = vadd.f32 %v1209, %v1300
      %v1331 = vadd.f32 %v1210, %v1305
      %v1332 = vadd.f32 %v1211, %v1308
      %v1333 = vadd.f32 %v1212, %v1313
      %v1334 = vadd.f32 %v1213, %v1316
      %vm1335 = vcmask 1040384
      %v1336 = vrot.slane %v540, 7
      %v1337 = vrot.slane %v541, 7
      %v1338 = vsel %vm1335, %v1336, %v1337
      %v1339 = vrot.slane %v542, 7
      %v1340 = vrot.slane %v543, 7
      %v1341 = vsel %vm1335, %v1339, %v1340
      %v1342 = vrot.slane %v616, 7
      %v1343 = vrot.slane %v617, 7
      %v1344 = vsel %vm1335, %v1342, %v1343
      %v1345 = vrot.slane %v618, 7
      %v1346 = vrot.slane %v619, 7
      %v1347 = vsel %vm1335, %v1345, %v1346
      %v1348 = vrot.slane %v620, 7
      %v1349 = vrot.slane %v621, 7
      %v1350 = vsel %vm1335, %v1348, %v1349
      %v1351 = vrot.slane %v622, 7
      %v1352 = vrot.slane %v623, 7
      %v1353 = vsel %vm1335, %v1351, %v1352
      %v1354 = vrot.slane %v624, 7
      %v1355 = vrot.slane %v625, 7
      %v1356 = vsel %vm1335, %v1354, %v1355
      %v1357 = vrot.slane %v626, 7
      %v1358 = vrot.slane %v627, 7
      %v1359 = vsel %vm1335, %v1357, %v1358
      %v1360 = vrot.slane %v628, 7
      %v1361 = vrot.slane %v629, 7
      %v1362 = vsel %vm1335, %v1360, %v1361
      %v1363 = vrot.slane %v630, 7
      %v1364 = vrot.slane %v631, 7
      %v1365 = vsel %vm1335, %v1363, %v1364
      %v1366 = vrot.slane %v564, 7
      %v1367 = vrot.slane %v565, 7
      %v1368 = vsel %vm1335, %v1366, %v1367
      %v1369 = vrot.slane %v566, 7
      %v1370 = vrot.slane %v567, 7
      %v1371 = vsel %vm1335, %v1369, %v1370
      %v1396 = vsel %vm1335, 0.0, %v1336
      %v1397 = vsel %vm1335, 0.0, %v1339
      %v1398 = vsel %vm1335, 0.0, %v1342
      %v1399 = vsel %vm1335, 0.0, %v1345
      %v1400 = vsel %vm1335, 0.0, %v1348
      %v1401 = vsel %vm1335, 0.0, %v1351
      %v1402 = vsel %vm1335, 0.0, %v1354
      %v1403 = vsel %vm1335, 0.0, %v1357
      %v1404 = vsel %vm1335, 0.0, %v1360
      %v1405 = vsel %vm1335, 0.0, %v1363
      %v1406 = vsel %vm1335, 0.0, %v1366
      %v1407 = vsel %vm1335, 0.0, %v1369
      %v1408 = vpack.c.bf16 %v1338, %v1396
      %v1409 = vpack.c.bf16 %v1341, %v1397
      %v1410 = vpack.c.bf16 %v1344, %v1398
      %v1411 = vpack.c.bf16 %v1347, %v1399
      %v1412 = vpack.c.bf16 %v1350, %v1400
      %v1413 = vpack.c.bf16 %v1353, %v1401
      %v1414 = vpack.c.bf16 %v1356, %v1402
      %v1415 = vpack.c.bf16 %v1359, %v1403
      %v1416 = vpack.c.bf16 %v1362, %v1404
      %v1417 = vpack.c.bf16 %v1365, %v1405
      %v1418 = vpack.c.bf16 %v1368, %v1406
      %v1419 = vpack.c.bf16 %v1371, %v1407
      %s1420 = scalar_lea.vmem %s3, 2
      %v1421 = vld [vmem:[%s1420] sm:$0x3]
      %v1423 = vsel %vm744, %v1408, 0
      %v1426 = vsel %vm744, %v1409, 0
      %v1429 = vsel %vm744, %v1410, 0
      %v1432 = vsel %vm744, %v1411, 0
      %v1435 = vsel %vm744, %v1412, 0
      %v1438 = vsel %vm744, %v1413, 0
      %v1441 = vsel %vm744, %v1414, 0
      %v1444 = vsel %vm744, %v1415, 0
      %v1447 = vsel %vm656, %v1421, 0
      %1449 = vmatprep.subr.bf16.mxu0 0
      %1450 = vmatpush1.bf16.msra.mxu0 %v1447
      %1451 = vmatprep.subr.bf16.mxu0 0
      %1452 = vmatpush1.bf16.msra.mxu0 0
      %1453 = vmatprep.subr.bf16.mxu0 0
      %1454 = vmatpush1.bf16.msra.mxu0 0
      %1455 = vmatprep.subr.bf16.mxu0 0
      %1456 = vmatpush1.bf16.msra.mxu0 0
      %1457 = vmatprep.subr.bf16.mxu0 0
      %1458 = vmatpush1.bf16.msra.mxu0 0
      %1459 = vmatprep.subr.bf16.mxu0 0
      %1460 = vmatpush1.bf16.msra.mxu0 0
      %1461 = vmatprep.subr.bf16.mxu0 0
      %1462 = vmatpush1.bf16.msra.mxu0 0
      %1463 = vmatprep.subr.bf16.mxu0 0
      %1464 = vmatpush1.bf16.msra.mxu0 0
      %1465 = vmatprep.subr.bf16.mxu0 0
      %1466 = vmatpush1.bf16.msra.mxu0 0
      %1467 = vmatprep.subr.bf16.mxu0 0
      %1468 = vmatpush1.bf16.msra.mxu0 0
      %1469 = vmatprep.subr.bf16.mxu0 0
      %1470 = vmatpush1.bf16.msra.mxu0 0
      %1471 = vmatprep.subr.bf16.mxu0 0
      %1472 = vmatpush1.bf16.msra.mxu0 0
      %1473 = vmatprep.subr.bf16.mxu0 0
      %1474 = vmatpush1.bf16.msra.mxu0 0
      %1475 = vmatprep.subr.bf16.mxu0 0
      %1476 = vmatpush1.bf16.msra.mxu0 0
      %1477 = vmatprep.subr.bf16.mxu0 0
      %1478 = vmatpush1.bf16.msra.mxu0 0
      %1479 = vmatprep.subr.bf16.mxu0 0
      %1480 = vmatpush1.bf16.msra.mxu0 0
      %1481 = vmatprep.mubr.bf16.mxu0 0
      %1482 = vmatmul.mubr.bf16.gmra.mrb[0].mxu0 %v1423
      %v1483 = vpop.f32.mrb[0].mxu0
      %v1484 = vadd.f32 0.0, %v1483
      %v1485 = vpop.f32.mrb[0].mxu0
      %v1486 = vpop.f32.mrb[0].mxu0
      %v1487 = vadd.f32 0.0, %v1486
      %v1488 = vpop.f32.mrb[0].mxu0
      %1489 = vmatprep.mubr.bf16.mxu0 0
      %1490 = vmatmul.mubr.bf16.gmra.mrb[0].mxu0 %v1426
      %v1491 = vpop.f32.mrb[0].mxu0
      %v1492 = vadd.f32 0.0, %v1491
      %v1493 = vpop.f32.mrb[0].mxu0
      %v1494 = vpop.f32.mrb[0].mxu0
      %v1495 = vadd.f32 0.0, %v1494
      %v1496 = vpop.f32.mrb[0].mxu0
      %1497 = vmatprep.mubr.bf16.mxu0 0
      %1498 = vmatmul.mubr.bf16.gmra.mrb[0].mxu0 %v1429
      %v1499 = vpop.f32.mrb[0].mxu0
      %v1500 = vadd.f32 0.0, %v1499
      %v1501 = vpop.f32.mrb[0].mxu0
      %v1502 = vpop.f32.mrb[0].mxu0
      %v1503 = vadd.f32 0.0, %v1502
      %v1504 = vpop.f32.mrb[0].mxu0
      %1505 = vmatprep.mubr.bf16.mxu0 0
      %1506 = vmatmul.mubr.bf16.gmra.mrb[0].mxu0 %v1432
      %v1507 = vpop.f32.mrb[0].mxu0
      %v1508 = vadd.f32 0.0, %v1507
      %v1509 = vpop.f32.mrb[0].mxu0
      %v1510 = vpop.f32.mrb[0].mxu0
      %v1511 = vadd.f32 0.0, %v1510
      %v1512 = vpop.f32.mrb[0].mxu0
      %1513 = vmatprep.mubr.bf16.mxu0 0
      %1514 = vmatmul.mubr.bf16.gmra.mrb[0].mxu0 %v1435
      %v1515 = vpop.f32.mrb[0].mxu0
      %v1516 = vadd.f32 0.0, %v1515
      %v1517 = vpop.f32.mrb[0].mxu0
      %v1518 = vpop.f32.mrb[0].mxu0
      %v1519 = vadd.f32 0.0, %v1518
      %v1520 = vpop.f32.mrb[0].mxu0
      %1521 = vmatprep.mubr.bf16.mxu0 0
      %1522 = vmatmul.mubr.bf16.gmra.mrb[0].mxu0 %v1438
      %v1523 = vpop.f32.mrb[0].mxu0
      %v1524 = vadd.f32 0.0, %v1523
      %v1525 = vpop.f32.mrb[0].mxu0
      %v1526 = vpop.f32.mrb[0].mxu0
      %v1527 = vadd.f32 0.0, %v1526
      %v1528 = vpop.f32.mrb[0].mxu0
      %1529 = vmatprep.mubr.bf16.mxu0 0
      %1530 = vmatmul.mubr.bf16.gmra.mrb[0].mxu0 %v1441
      %v1531 = vpop.f32.mrb[0].mxu0
      %v1532 = vadd.f32 0.0, %v1531
      %v1533 = vpop.f32.mrb[0].mxu0
      %v1534 = vpop.f32.mrb[0].mxu0
      %v1535 = vadd.f32 0.0, %v1534
      %v1536 = vpop.f32.mrb[0].mxu0
      %1537 = vmatprep.mubr.bf16.mxu0 0
      %1538 = vmatmul.mubr.bf16.gmra.mrb[0].mxu0 %v1444
      %v1539 = vpop.f32.mrb[0].mxu0
      %v1540 = vadd.f32 0.0, %v1539
      %v1541 = vpop.f32.mrb[0].mxu0
      %v1542 = vpop.f32.mrb[0].mxu0
      %v1543 = vadd.f32 0.0, %v1542
      %v1544 = vpop.f32.mrb[0].mxu0
      %1545 = vdwg.mxu0
      %v1546 = vadd.f32 %v1319, %v1484
      %v1547 = vadd.f32 %v1320, %v1487
      %v1548 = vadd.f32 %v1321, %v1492
      %v1549 = vadd.f32 %v1322, %v1495
      %v1550 = vadd.f32 %v1323, %v1500
      %v1551 = vadd.f32 %v1324, %v1503
      %v1552 = vadd.f32 %v1325, %v1508
      %v1553 = vadd.f32 %v1326, %v1511
      %v1554 = vadd.f32 %v1327, %v1516
      %v1555 = vadd.f32 %v1328, %v1519
      %v1556 = vadd.f32 %v1329, %v1524
      %v1557 = vadd.f32 %v1330, %v1527
      %v1558 = vadd.f32 %v1331, %v1532
      %v1559 = vadd.f32 %v1332, %v1535
      %v1560 = vadd.f32 %v1333, %v1540
      %v1561 = vadd.f32 %v1334, %v1543
      %s1562 = scalar_lea.vmem %s3, 12
      %v1563 = vld [vmem:[%s1562] sm:$0x3]
      %v1565 = vsel %vm744, %v1416, 0
      %v1568 = vsel %vm656, %v1563, 0
      %1570 = vmatprep.subr.bf16.mxu0 0
      %1571 = vmatpush1.bf16.msra.mxu0 %v1568
      %1572 = vmatprep.subr.bf16.mxu0 0
      %1573 = vmatpush1.bf16.msra.mxu0 0
      %1574 = vmatprep.subr.bf16.mxu0 0
      %1575 = vmatpush1.bf16.msra.mxu0 0
      %1576 = vmatprep.subr.bf16.mxu0 0
      %1577 = vmatpush1.bf16.msra.mxu0 0
      %1578 = vmatprep.subr.bf16.mxu0 0
      %1579 = vmatpush1.bf16.msra.mxu0 0
      %1580 = vmatprep.subr.bf16.mxu0 0
      %1581 = vmatpush1.bf16.msra.mxu0 0
      %1582 = vmatprep.subr.bf16.mxu0 0
      %1583 = vmatpush1.bf16.msra.mxu0 0
      %1584 = vmatprep.subr.bf16.mxu0 0
      %1585 = vmatpush1.bf16.msra.mxu0 0
      %1586 = vmatprep.subr.bf16.mxu0 0
      %1587 = vmatpush1.bf16.msra.mxu0 0
      %1588 = vmatprep.subr.bf16.mxu0 0
      %1589 = vmatpush1.bf16.msra.mxu0 0
      %1590 = vmatprep.subr.bf16.mxu0 0
      %1591 = vmatpush1.bf16.msra.mxu0 0
      %1592 = vmatprep.subr.bf16.mxu0 0
      %1593 = vmatpush1.bf16.msra.mxu0 0
      %1594 = vmatprep.subr.bf16.mxu0 0
      %1595 = vmatpush1.bf16.msra.mxu0 0
      %1596 = vmatprep.subr.bf16.mxu0 0
      %1597 = vmatpush1.bf16.msra.mxu0 0
      %1598 = vmatprep.subr.bf16.mxu0 0
      %1599 = vmatpush1.bf16.msra.mxu0 0
      %1600 = vmatprep.subr.bf16.mxu0 0
      %1601 = vmatpush1.bf16.msra.mxu0 0
      %1602 = vmatprep.mubr.bf16.mxu0 0
      %1603 = vmatmul.mubr.bf16.gmra.mrb[0].mxu0 %v1426
      %v1604 = vpop.f32.mrb[0].mxu0
      %v1605 = vadd.f32 0.0, %v1604
      %v1606 = vpop.f32.mrb[0].mxu0
      %v1607 = vpop.f32.mrb[0].mxu0
      %v1608 = vadd.f32 0.0, %v1607
      %v1609 = vpop.f32.mrb[0].mxu0
      %1610 = vmatprep.mubr.bf16.mxu0 0
      %1611 = vmatmul.mubr.bf16.gmra.mrb[0].mxu0 %v1429
      %v1612 = vpop.f32.mrb[0].mxu0
      %v1613 = vadd.f32 0.0, %v1612
      %v1614 = vpop.f32.mrb[0].mxu0
      %v1615 = vpop.f32.mrb[0].mxu0
      %v1616 = vadd.f32 0.0, %v1615
      %v1617 = vpop.f32.mrb[0].mxu0
      %1618 = vmatprep.mubr.bf16.mxu0 0
      %1619 = vmatmul.mubr.bf16.gmra.mrb[0].mxu0 %v1432
      %v1620 = vpop.f32.mrb[0].mxu0
      %v1621 = vadd.f32 0.0, %v1620
      %v1622 = vpop.f32.mrb[0].mxu0
      %v1623 = vpop.f32.mrb[0].mxu0
      %v1624 = vadd.f32 0.0, %v1623
      %v1625 = vpop.f32.mrb[0].mxu0
      %1626 = vmatprep.mubr.bf16.mxu0 0
      %1627 = vmatmul.mubr.bf16.gmra.mrb[0].mxu0 %v1435
      %v1628 = vpop.f32.mrb[0].mxu0
      %v1629 = vadd.f32 0.0, %v1628
      %v1630 = vpop.f32.mrb[0].mxu0
      %v1631 = vpop.f32.mrb[0].mxu0
      %v1632 = vadd.f32 0.0, %v1631
      %v1633 = vpop.f32.mrb[0].mxu0
      %1634 = vmatprep.mubr.bf16.mxu0 0
      %1635 = vmatmul.mubr.bf16.gmra.mrb[0].mxu0 %v1438
      %v1636 = vpop.f32.mrb[0].mxu0
      %v1637 = vadd.f32 0.0, %v1636
      %v1638 = vpop.f32.mrb[0].mxu0
      %v1639 = vpop.f32.mrb[0].mxu0
      %v1640 = vadd.f32 0.0, %v1639
      %v1641 = vpop.f32.mrb[0].mxu0
      %1642 = vmatprep.mubr.bf16.mxu0 0
      %1643 = vmatmul.mubr.bf16.gmra.mrb[0].mxu0 %v1441
      %v1644 = vpop.f32.mrb[0].mxu0
      %v1645 = vadd.f32 0.0, %v1644
      %v1646 = vpop.f32.mrb[0].mxu0
      %v1647 = vpop.f32.mrb[0].mxu0
      %v1648 = vadd.f32 0.0, %v1647
      %v1649 = vpop.f32.mrb[0].mxu0
      %1650 = vmatprep.mubr.bf16.mxu0 0
      %1651 = vmatmul.mubr.bf16.gmra.mrb[0].mxu0 %v1444
      %v1652 = vpop.f32.mrb[0].mxu0
      %v1653 = vadd.f32 0.0, %v1652
      %v1654 = vpop.f32.mrb[0].mxu0
      %v1655 = vpop.f32.mrb[0].mxu0
      %v1656 = vadd.f32 0.0, %v1655
      %v1657 = vpop.f32.mrb[0].mxu0
      %1658 = vmatprep.mubr.bf16.mxu0 0
      %1659 = vmatmul.mubr.bf16.gmra.mrb[0].mxu0 %v1565
      %v1660 = vpop.f32.mrb[0].mxu0
      %v1661 = vadd.f32 0.0, %v1660
      %v1662 = vpop.f32.mrb[0].mxu0
      %v1663 = vpop.f32.mrb[0].mxu0
      %v1664 = vadd.f32 0.0, %v1663
      %v1665 = vpop.f32.mrb[0].mxu0
      %1666 = vdwg.mxu0
      %v1667 = vadd.f32 %v1546, %v1605
      %v1668 = vadd.f32 %v1547, %v1608
      %v1669 = vadd.f32 %v1548, %v1613
      %v1670 = vadd.f32 %v1549, %v1616
      %v1671 = vadd.f32 %v1550, %v1621
      %v1672 = vadd.f32 %v1551, %v1624
      %v1673 = vadd.f32 %v1552, %v1629
      %v1674 = vadd.f32 %v1553, %v1632
      %v1675 = vadd.f32 %v1554, %v1637
      %v1676 = vadd.f32 %v1555, %v1640
      %v1677 = vadd.f32 %v1556, %v1645
      %v1678 = vadd.f32 %v1557, %v1648
      %v1679 = vadd.f32 %v1558, %v1653
      %v1680 = vadd.f32 %v1559, %v1656
      %v1681 = vadd.f32 %v1560, %v1661
      %v1682 = vadd.f32 %v1561, %v1664
      %s1683 = scalar_lea.vmem %s3, 22
      %v1684 = vld [vmem:[%s1683] sm:$0x3]
      %v1686 = vsel %vm744, %v1417, 0
      %v1689 = vsel %vm656, %v1684, 0
      %1691 = vmatprep.subr.bf16.mxu0 0
      %1692 = vmatpush1.bf16.msra.mxu0 %v1689
      %1693 = vmatprep.subr.bf16.mxu0 0
      %1694 = vmatpush1.bf16.msra.mxu0 0
      %1695 = vmatprep.subr.bf16.mxu0 0
      %1696 = vmatpush1.bf16.msra.mxu0 0
      %1697 = vmatprep.subr.bf16.mxu0 0
      %1698 = vmatpush1.bf16.msra.mxu0 0
      %1699 = vmatprep.subr.bf16.mxu0 0
      %1700 = vmatpush1.bf16.msra.mxu0 0
      %1701 = vmatprep.subr.bf16.mxu0 0
      %1702 = vmatpush1.bf16.msra.mxu0 0
      %1703 = vmatprep.subr.bf16.mxu0 0
      %1704 = vmatpush1.bf16.msra.mxu0 0
      %1705 = vmatprep.subr.bf16.mxu0 0
      %1706 = vmatpush1.bf16.msra.mxu0 0
      %1707 = vmatprep.subr.bf16.mxu0 0
      %1708 = vmatpush1.bf16.msra.mxu0 0
      %1709 = vmatprep.subr.bf16.mxu0 0
      %1710 = vmatpush1.bf16.msra.mxu0 0
      %1711 = vmatprep.subr.bf16.mxu0 0
      %1712 = vmatpush1.bf16.msra.mxu0 0
      %1713 = vmatprep.subr.bf16.mxu0 0
      %1714 = vmatpush1.bf16.msra.mxu0 0
      %1715 = vmatprep.subr.bf16.mxu0 0
      %1716 = vmatpush1.bf16.msra.mxu0 0
      %1717 = vmatprep.subr.bf16.mxu0 0
      %1718 = vmatpush1.bf16.msra.mxu0 0
      %1719 = vmatprep.subr.bf16.mxu0 0
      %1720 = vmatpush1.bf16.msra.mxu0 0
      %1721 = vmatprep.subr.bf16.mxu0 0
      %1722 = vmatpush1.bf16.msra.mxu0 0
      %1723 = vmatprep.mubr.bf16.mxu0 0
      %1724 = vmatmul.mubr.bf16.gmra.mrb[0].mxu0 %v1429
      %v1725 = vpop.f32.mrb[0].mxu0
      %v1726 = vadd.f32 0.0, %v1725
      %v1727 = vpop.f32.mrb[0].mxu0
      %v1728 = vpop.f32.mrb[0].mxu0
      %v1729 = vadd.f32 0.0, %v1728
      %v1730 = vpop.f32.mrb[0].mxu0
      %1731 = vmatprep.mubr.bf16.mxu0 0
      %1732 = vmatmul.mubr.bf16.gmra.mrb[0].mxu0 %v1432
      %v1733 = vpop.f32.mrb[0].mxu0
      %v1734 = vadd.f32 0.0, %v1733
      %v1735 = vpop.f32.mrb[0].mxu0
      %v1736 = vpop.f32.mrb[0].mxu0
      %v1737 = vadd.f32 0.0, %v1736
      %v1738 = vpop.f32.mrb[0].mxu0
      %1739 = vmatprep.mubr.bf16.mxu0 0
      %1740 = vmatmul.mubr.bf16.gmra.mrb[0].mxu0 %v1435
      %v1741 = vpop.f32.mrb[0].mxu0
      %v1742 = vadd.f32 0.0, %v1741
      %v1743 = vpop.f32.mrb[0].mxu0
      %v1744 = vpop.f32.mrb[0].mxu0
      %v1745 = vadd.f32 0.0, %v1744
      %v1746 = vpop.f32.mrb[0].mxu0
      %1747 = vmatprep.mubr.bf16.mxu0 0
      %1748 = vmatmul.mubr.bf16.gmra.mrb[0].mxu0 %v1438
      %v1749 = vpop.f32.mrb[0].mxu0
      %v1750 = vadd.f32 0.0, %v1749
      %v1751 = vpop.f32.mrb[0].mxu0
      %v1752 = vpop.f32.mrb[0].mxu0
      %v1753 = vadd.f32 0.0, %v1752
      %v1754 = vpop.f32.mrb[0].mxu0
      %1755 = vmatprep.mubr.bf16.mxu0 0
      %1756 = vmatmul.mubr.bf16.gmra.mrb[0].mxu0 %v1441
      %v1757 = vpop.f32.mrb[0].mxu0
      %v1758 = vadd.f32 0.0, %v1757
      %v1759 = vpop.f32.mrb[0].mxu0
      %v1760 = vpop.f32.mrb[0].mxu0
      %v1761 = vadd.f32 0.0, %v1760
      %v1762 = vpop.f32.mrb[0].mxu0
      %1763 = vmatprep.mubr.bf16.mxu0 0
      %1764 = vmatmul.mubr.bf16.gmra.mrb[0].mxu0 %v1444
      %v1765 = vpop.f32.mrb[0].mxu0
      %v1766 = vadd.f32 0.0, %v1765
      %v1767 = vpop.f32.mrb[0].mxu0
      %v1768 = vpop.f32.mrb[0].mxu0
      %v1769 = vadd.f32 0.0, %v1768
      %v1770 = vpop.f32.mrb[0].mxu0
      %1771 = vmatprep.mubr.bf16.mxu0 0
      %1772 = vmatmul.mubr.bf16.gmra.mrb[0].mxu0 %v1565
      %v1773 = vpop.f32.mrb[0].mxu0
      %v1774 = vadd.f32 0.0, %v1773
      %v1775 = vpop.f32.mrb[0].mxu0
      %v1776 = vpop.f32.mrb[0].mxu0
      %v1777 = vadd.f32 0.0, %v1776
      %v1778 = vpop.f32.mrb[0].mxu0
      %1779 = vmatprep.mubr.bf16.mxu0 0
      %1780 = vmatmul.mubr.bf16.gmra.mrb[0].mxu0 %v1686
      %v1781 = vpop.f32.mrb[0].mxu0
      %v1782 = vadd.f32 0.0, %v1781
      %v1783 = vpop.f32.mrb[0].mxu0
      %v1784 = vpop.f32.mrb[0].mxu0
      %v1785 = vadd.f32 0.0, %v1784
      %v1786 = vpop.f32.mrb[0].mxu0
      %1787 = vdwg.mxu0
      %v1788 = vadd.f32 %v1667, %v1726
      %v1789 = vadd.f32 %v1668, %v1729
      %v1790 = vadd.f32 %v1669, %v1734
      %v1791 = vadd.f32 %v1670, %v1737
      %v1792 = vadd.f32 %v1671, %v1742
      %v1793 = vadd.f32 %v1672, %v1745
      %v1794 = vadd.f32 %v1673, %v1750
      %v1795 = vadd.f32 %v1674, %v1753
      %v1796 = vadd.f32 %v1675, %v1758
      %v1797 = vadd.f32 %v1676, %v1761
      %v1798 = vadd.f32 %v1677, %v1766
      %v1799 = vadd.f32 %v1678, %v1769
      %v1800 = vadd.f32 %v1679, %v1774
      %v1801 = vadd.f32 %v1680, %v1777
      %v1802 = vadd.f32 %v1681, %v1782
      %v1803 = vadd.f32 %v1682, %v1785
      %s1804 = scalar_lea.vmem %s3, 32
      %v1805 = vld [vmem:[%s1804] sm:$0x3]
      %v1807 = vsel %vm744, %v1418, 0
      %v1810 = vsel %vm656, %v1805, 0
      %1812 = vmatprep.subr.bf16.mxu0 0
      %1813 = vmatpush1.bf16.msra.mxu0 %v1810
      %1814 = vmatprep.subr.bf16.mxu0 0
      %1815 = vmatpush1.bf16.msra.mxu0 0
      %1816 = vmatprep.subr.bf16.mxu0 0
      %1817 = vmatpush1.bf16.msra.mxu0 0
      %1818 = vmatprep.subr.bf16.mxu0 0
      %1819 = vmatpush1.bf16.msra.mxu0 0
      %1820 = vmatprep.subr.bf16.mxu0 0
      %1821 = vmatpush1.bf16.msra.mxu0 0
      %1822 = vmatprep.subr.bf16.mxu0 0
      %1823 = vmatpush1.bf16.msra.mxu0 0
      %1824 = vmatprep.subr.bf16.mxu0 0
      %1825 = vmatpush1.bf16.msra.mxu0 0
      %1826 = vmatprep.subr.bf16.mxu0 0
      %1827 = vmatpush1.bf16.msra.mxu0 0
      %1828 = vmatprep.subr.bf16.mxu0 0
      %1829 = vmatpush1.bf16.msra.mxu0 0
      %1830 = vmatprep.subr.bf16.mxu0 0
      %1831 = vmatpush1.bf16.msra.mxu0 0
      %1832 = vmatprep.subr.bf16.mxu0 0
      %1833 = vmatpush1.bf16.msra.mxu0 0
      %1834 = vmatprep.subr.bf16.mxu0 0
      %1835 = vmatpush1.bf16.msra.mxu0 0
      %1836 = vmatprep.subr.bf16.mxu0 0
      %1837 = vmatpush1.bf16.msra.mxu0 0
      %1838 = vmatprep.subr.bf16.mxu0 0
      %1839 = vmatpush1.bf16.msra.mxu0 0
      %1840 = vmatprep.subr.bf16.mxu0 0
      %1841 = vmatpush1.bf16.msra.mxu0 0
      %1842 = vmatprep.subr.bf16.mxu0 0
      %1843 = vmatpush1.bf16.msra.mxu0 0
      %1844 = vmatprep.mubr.bf16.mxu0 0
      %1845 = vmatmul.mubr.bf16.gmra.mrb[0].mxu0 %v1432
      %v1846 = vpop.f32.mrb[0].mxu0
      %v1847 = vadd.f32 0.0, %v1846
      %v1848 = vpop.f32.mrb[0].mxu0
      %v1849 = vpop.f32.mrb[0].mxu0
      %v1850 = vadd.f32 0.0, %v1849
      %v1851 = vpop.f32.mrb[0].mxu0
      %1852 = vmatprep.mubr.bf16.mxu0 0
      %1853 = vmatmul.mubr.bf16.gmra.mrb[0].mxu0 %v1435
      %v1854 = vpop.f32.mrb[0].mxu0
      %v1855 = vadd.f32 0.0, %v1854
      %v1856 = vpop.f32.mrb[0].mxu0
      %v1857 = vpop.f32.mrb[0].mxu0
      %v1858 = vadd.f32 0.0, %v1857
      %v1859 = vpop.f32.mrb[0].mxu0
      %1860 = vmatprep.mubr.bf16.mxu0 0
      %1861 = vmatmul.mubr.bf16.gmra.mrb[0].mxu0 %v1438
      %v1862 = vpop.f32.mrb[0].mxu0
      %v1863 = vadd.f32 0.0, %v1862
      %v1864 = vpop.f32.mrb[0].mxu0
      %v1865 = vpop.f32.mrb[0].mxu0
      %v1866 = vadd.f32 0.0, %v1865
      %v1867 = vpop.f32.mrb[0].mxu0
      %1868 = vmatprep.mubr.bf16.mxu0 0
      %1869 = vmatmul.mubr.bf16.gmra.mrb[0].mxu0 %v1441
      %v1870 = vpop.f32.mrb[0].mxu0
      %v1871 = vadd.f32 0.0, %v1870
      %v1872 = vpop.f32.mrb[0].mxu0
      %v1873 = vpop.f32.mrb[0].mxu0
      %v1874 = vadd.f32 0.0, %v1873
      %v1875 = vpop.f32.mrb[0].mxu0
      %1876 = vmatprep.mubr.bf16.mxu0 0
      %1877 = vmatmul.mubr.bf16.gmra.mrb[0].mxu0 %v1444
      %v1878 = vpop.f32.mrb[0].mxu0
      %v1879 = vadd.f32 0.0, %v1878
      %v1880 = vpop.f32.mrb[0].mxu0
      %v1881 = vpop.f32.mrb[0].mxu0
      %v1882 = vadd.f32 0.0, %v1881
      %v1883 = vpop.f32.mrb[0].mxu0
      %1884 = vmatprep.mubr.bf16.mxu0 0
      %1885 = vmatmul.mubr.bf16.gmra.mrb[0].mxu0 %v1565
      %v1886 = vpop.f32.mrb[0].mxu0
      %v1887 = vadd.f32 0.0, %v1886
      %v1888 = vpop.f32.mrb[0].mxu0
      %v1889 = vpop.f32.mrb[0].mxu0
      %v1890 = vadd.f32 0.0, %v1889
      %v1891 = vpop.f32.mrb[0].mxu0
      %1892 = vmatprep.mubr.bf16.mxu0 0
      %1893 = vmatmul.mubr.bf16.gmra.mrb[0].mxu0 %v1686
      %v1894 = vpop.f32.mrb[0].mxu0
      %v1895 = vadd.f32 0.0, %v1894
      %v1896 = vpop.f32.mrb[0].mxu0
      %v1897 = vpop.f32.mrb[0].mxu0
      %v1898 = vadd.f32 0.0, %v1897
      %v1899 = vpop.f32.mrb[0].mxu0
      %1900 = vmatprep.mubr.bf16.mxu0 0
      %1901 = vmatmul.mubr.bf16.gmra.mrb[0].mxu0 %v1807
      %v1902 = vpop.f32.mrb[0].mxu0
      %v1903 = vadd.f32 0.0, %v1902
      %v1904 = vpop.f32.mrb[0].mxu0
      %v1905 = vpop.f32.mrb[0].mxu0
      %v1906 = vadd.f32 0.0, %v1905
      %v1907 = vpop.f32.mrb[0].mxu0
      %1908 = vdwg.mxu0
      %v1909 = vadd.f32 %v1788, %v1847
      %v1910 = vadd.f32 %v1789, %v1850
      %v1911 = vadd.f32 %v1790, %v1855
      %v1912 = vadd.f32 %v1791, %v1858
      %v1913 = vadd.f32 %v1792, %v1863
      %v1914 = vadd.f32 %v1793, %v1866
      %v1915 = vadd.f32 %v1794, %v1871
      %v1916 = vadd.f32 %v1795, %v1874
      %v1917 = vadd.f32 %v1796, %v1879
      %v1918 = vadd.f32 %v1797, %v1882
      %v1919 = vadd.f32 %v1798, %v1887
      %v1920 = vadd.f32 %v1799, %v1890
      %v1921 = vadd.f32 %v1800, %v1895
      %v1922 = vadd.f32 %v1801, %v1898
      %v1923 = vadd.f32 %v1802, %v1903
      %v1924 = vadd.f32 %v1803, %v1906
      %s1925 = scalar_lea.vmem %s3, 42
      %v1926 = vld [vmem:[%s1925] sm:$0x3]
      %v1928 = vsel %vm744, %v1419, 0
      %v1931 = vsel %vm656, %v1926, 0
      %1933 = vmatprep.subr.bf16.mxu0 0
      %1934 = vmatpush1.bf16.msra.mxu0 %v1931
      %1935 = vmatprep.subr.bf16.mxu0 0
      %1936 = vmatpush1.bf16.msra.mxu0 0
      %1937 = vmatprep.subr.bf16.mxu0 0
      %1938 = vmatpush1.bf16.msra.mxu0 0
      %1939 = vmatprep.subr.bf16.mxu0 0
      %1940 = vmatpush1.bf16.msra.mxu0 0
      %1941 = vmatprep.subr.bf16.mxu0 0
      %1942 = vmatpush1.bf16.msra.mxu0 0
      %1943 = vmatprep.subr.bf16.mxu0 0
      %1944 = vmatpush1.bf16.msra.mxu0 0
      %1945 = vmatprep.subr.bf16.mxu0 0
      %1946 = vmatpush1.bf16.msra.mxu0 0
      %1947 = vmatprep.subr.bf16.mxu0 0
      %1948 = vmatpush1.bf16.msra.mxu0 0
      %1949 = vmatprep.subr.bf16.mxu0 0
      %1950 = vmatpush1.bf16.msra.mxu0 0
      %1951 = vmatprep.subr.bf16.mxu0 0
      %1952 = vmatpush1.bf16.msra.mxu0 0
      %1953 = vmatprep.subr.bf16.mxu0 0
      %1954 = vmatpush1.bf16.msra.mxu0 0
      %1955 = vmatprep.subr.bf16.mxu0 0
      %1956 = vmatpush1.bf16.msra.mxu0 0
      %1957 = vmatprep.subr.bf16.mxu0 0
      %1958 = vmatpush1.bf16.msra.mxu0 0
      %1959 = vmatprep.subr.bf16.mxu0 0
      %1960 = vmatpush1.bf16.msra.mxu0 0
      %1961 = vmatprep.subr.bf16.mxu0 0
      %1962 = vmatpush1.bf16.msra.mxu0 0
      %1963 = vmatprep.subr.bf16.mxu0 0
      %1964 = vmatpush1.bf16.msra.mxu0 0
      %1965 = vmatprep.mubr.bf16.mxu0 0
      %1966 = vmatmul.mubr.bf16.gmra.mrb[0].mxu0 %v1435
      %v1967 = vpop.f32.mrb[0].mxu0
      %v1968 = vadd.f32 0.0, %v1967
      %v1969 = vpop.f32.mrb[0].mxu0
      %v1970 = vpop.f32.mrb[0].mxu0
      %v1971 = vadd.f32 0.0, %v1970
      %v1972 = vpop.f32.mrb[0].mxu0
      %1973 = vmatprep.mubr.bf16.mxu0 0
      %1974 = vmatmul.mubr.bf16.gmra.mrb[0].mxu0 %v1438
      %v1975 = vpop.f32.mrb[0].mxu0
      %v1976 = vadd.f32 0.0, %v1975
      %v1977 = vpop.f32.mrb[0].mxu0
      %v1978 = vpop.f32.mrb[0].mxu0
      %v1979 = vadd.f32 0.0, %v1978
      %v1980 = vpop.f32.mrb[0].mxu0
      %1981 = vmatprep.mubr.bf16.mxu0 0
      %1982 = vmatmul.mubr.bf16.gmra.mrb[0].mxu0 %v1441
      %v1983 = vpop.f32.mrb[0].mxu0
      %v1984 = vadd.f32 0.0, %v1983
      %v1985 = vpop.f32.mrb[0].mxu0
      %v1986 = vpop.f32.mrb[0].mxu0
      %v1987 = vadd.f32 0.0, %v1986
      %v1988 = vpop.f32.mrb[0].mxu0
      %1989 = vmatprep.mubr.bf16.mxu0 0
      %1990 = vmatmul.mubr.bf16.gmra.mrb[0].mxu0 %v1444
      %v1991 = vpop.f32.mrb[0].mxu0
      %v1992 = vadd.f32 0.0, %v1991
      %v1993 = vpop.f32.mrb[0].mxu0
      %v1994 = vpop.f32.mrb[0].mxu0
      %v1995 = vadd.f32 0.0, %v1994
      %v1996 = vpop.f32.mrb[0].mxu0
      %1997 = vmatprep.mubr.bf16.mxu0 0
      %1998 = vmatmul.mubr.bf16.gmra.mrb[0].mxu0 %v1565
      %v1999 = vpop.f32.mrb[0].mxu0
      %v2000 = vadd.f32 0.0, %v1999
      %v2001 = vpop.f32.mrb[0].mxu0
      %v2002 = vpop.f32.mrb[0].mxu0
      %v2003 = vadd.f32 0.0, %v2002
      %v2004 = vpop.f32.mrb[0].mxu0
      %2005 = vmatprep.mubr.bf16.mxu0 0
      %2006 = vmatmul.mubr.bf16.gmra.mrb[0].mxu0 %v1686
      %v2007 = vpop.f32.mrb[0].mxu0
      %v2008 = vadd.f32 0.0, %v2007
      %v2009 = vpop.f32.mrb[0].mxu0
      %v2010 = vpop.f32.mrb[0].mxu0
      %v2011 = vadd.f32 0.0, %v2010
      %v2012 = vpop.f32.mrb[0].mxu0
      %2013 = vmatprep.mubr.bf16.mxu0 0
      %2014 = vmatmul.mubr.bf16.gmra.mrb[0].mxu0 %v1807
      %v2015 = vpop.f32.mrb[0].mxu0
      %v2016 = vadd.f32 0.0, %v2015
      %v2017 = vpop.f32.mrb[0].mxu0
      %v2018 = vpop.f32.mrb[0].mxu0
      %v2019 = vadd.f32 0.0, %v2018
      %v2020 = vpop.f32.mrb[0].mxu0
      %2021 = vmatprep.mubr.bf16.mxu0 0
      %2022 = vmatmul.mubr.bf16.gmra.mrb[0].mxu0 %v1928
      %v2023 = vpop.f32.mrb[0].mxu0
      %v2024 = vadd.f32 0.0, %v2023
      %v2025 = vpop.f32.mrb[0].mxu0
      %v2026 = vpop.f32.mrb[0].mxu0
      %v2027 = vadd.f32 0.0, %v2026
      %v2028 = vpop.f32.mrb[0].mxu0
      %2029 = vdwg.mxu0
      %v2030 = vadd.f32 %v1909, %v1968
      %v2031 = vadd.f32 %v1910, %v1971
      %v2032 = vadd.f32 %v1911, %v1976
      %v2033 = vadd.f32 %v1912, %v1979
      %v2034 = vadd.f32 %v1913, %v1984
      %v2035 = vadd.f32 %v1914, %v1987
      %v2036 = vadd.f32 %v1915, %v1992
      %v2037 = vadd.f32 %v1916, %v1995
      %v2038 = vadd.f32 %v1917, %v2000
      %v2039 = vadd.f32 %v1918, %v2003
      %v2040 = vadd.f32 %v1919, %v2008
      %v2041 = vadd.f32 %v1920, %v2011
      %v2042 = vadd.f32 %v1921, %v2016
      %v2043 = vadd.f32 %v1922, %v2019
      %v2044 = vadd.f32 %v1923, %v2024
      %v2045 = vadd.f32 %v1924, %v2027
      %v2046 = vpack.c.bf16 %v541, %v540
      %v2047 = vpack.c.bf16 %v543, %v542
      %v2048 = vpack.c.bf16 %v617, %v616
      %v2049 = vpack.c.bf16 %v619, %v618
      %v2050 = vpack.c.bf16 %v621, %v620
      %v2051 = vpack.c.bf16 %v623, %v622
      %v2052 = vpack.c.bf16 %v625, %v624
      %v2053 = vpack.c.bf16 %v627, %v626
      %v2054 = vpack.c.bf16 %v629, %v628
      %v2055 = vpack.c.bf16 %v631, %v630
      %v2056 = vpack.c.bf16 %v565, %v564
      %v2057 = vpack.c.bf16 %v567, %v566
      %s2058 = scalar_lea.vmem %s3, 4
      %v2059 = vld [vmem:[%s2058] sm:$0x3]
      %v2061 = vsel %vm744, %v2046, 0
      %v2064 = vsel %vm744, %v2047, 0
      %v2067 = vsel %vm744, %v2048, 0
      %v2070 = vsel %vm744, %v2049, 0
      %v2073 = vsel %vm744, %v2050, 0
      %v2076 = vsel %vm744, %v2051, 0
      %v2079 = vsel %vm744, %v2052, 0
      %v2082 = vsel %vm744, %v2053, 0
      %v2085 = vsel %vm656, %v2059, 0
      %2087 = vmatprep.subr.bf16.mxu0 0
      %2088 = vmatpush1.bf16.msra.mxu0 %v2085
      %2089 = vmatprep.subr.bf16.mxu0 0
      %2090 = vmatpush1.bf16.msra.mxu0 0
      %2091 = vmatprep.subr.bf16.mxu0 0
      %2092 = vmatpush1.bf16.msra.mxu0 0
      %2093 = vmatprep.subr.bf16.mxu0 0
      %2094 = vmatpush1.bf16.msra.mxu0 0
      %2095 = vmatprep.subr.bf16.mxu0 0
      %2096 = vmatpush1.bf16.msra.mxu0 0
      %2097 = vmatprep.subr.bf16.mxu0 0
      %2098 = vmatpush1.bf16.msra.mxu0 0
      %2099 = vmatprep.subr.bf16.mxu0 0
      %2100 = vmatpush1.bf16.msra.mxu0 0
      %2101 = vmatprep.subr.bf16.mxu0 0
      %2102 = vmatpush1.bf16.msra.mxu0 0
      %2103 = vmatprep.subr.bf16.mxu0 0
      %2104 = vmatpush1.bf16.msra.mxu0 0
      %2105 = vmatprep.subr.bf16.mxu0 0
      %2106 = vmatpush1.bf16.msra.mxu0 0
      %2107 = vmatprep.subr.bf16.mxu0 0
      %2108 = vmatpush1.bf16.msra.mxu0 0
      %2109 = vmatprep.subr.bf16.mxu0 0
      %2110 = vmatpush1.bf16.msra.mxu0 0
      %2111 = vmatprep.subr.bf16.mxu0 0
      %2112 = vmatpush1.bf16.msra.mxu0 0
      %2113 = vmatprep.subr.bf16.mxu0 0
      %2114 = vmatpush1.bf16.msra.mxu0 0
      %2115 = vmatprep.subr.bf16.mxu0 0
      %2116 = vmatpush1.bf16.msra.mxu0 0
      %2117 = vmatprep.subr.bf16.mxu0 0
      %2118 = vmatpush1.bf16.msra.mxu0 0
      %2119 = vmatprep.mubr.bf16.mxu0 0
      %2120 = vmatmul.mubr.bf16.gmra.mrb[0].mxu0 %v2061
      %v2121 = vpop.f32.mrb[0].mxu0
      %v2122 = vadd.f32 0.0, %v2121
      %v2123 = vpop.f32.mrb[0].mxu0
      %v2124 = vpop.f32.mrb[0].mxu0
      %v2125 = vadd.f32 0.0, %v2124
      %v2126 = vpop.f32.mrb[0].mxu0
      %2127 = vmatprep.mubr.bf16.mxu0 0
      %2128 = vmatmul.mubr.bf16.gmra.mrb[0].mxu0 %v2064
      %v2129 = vpop.f32.mrb[0].mxu0
      %v2130 = vadd.f32 0.0, %v2129
      %v2131 = vpop.f32.mrb[0].mxu0
      %v2132 = vpop.f32.mrb[0].mxu0
      %v2133 = vadd.f32 0.0, %v2132
      %v2134 = vpop.f32.mrb[0].mxu0
      %2135 = vmatprep.mubr.bf16.mxu0 0
      %2136 = vmatmul.mubr.bf16.gmra.mrb[0].mxu0 %v2067
      %v2137 = vpop.f32.mrb[0].mxu0
      %v2138 = vadd.f32 0.0, %v2137
      %v2139 = vpop.f32.mrb[0].mxu0
      %v2140 = vpop.f32.mrb[0].mxu0
      %v2141 = vadd.f32 0.0, %v2140
      %v2142 = vpop.f32.mrb[0].mxu0
      %2143 = vmatprep.mubr.bf16.mxu0 0
      %2144 = vmatmul.mubr.bf16.gmra.mrb[0].mxu0 %v2070
      %v2145 = vpop.f32.mrb[0].mxu0
      %v2146 = vadd.f32 0.0, %v2145
      %v2147 = vpop.f32.mrb[0].mxu0
      %v2148 = vpop.f32.mrb[0].mxu0
      %v2149 = vadd.f32 0.0, %v2148
      %v2150 = vpop.f32.mrb[0].mxu0
      %2151 = vmatprep.mubr.bf16.mxu0 0
      %2152 = vmatmul.mubr.bf16.gmra.mrb[0].mxu0 %v2073
      %v2153 = vpop.f32.mrb[0].mxu0
      %v2154 = vadd.f32 0.0, %v2153
      %v2155 = vpop.f32.mrb[0].mxu0
      %v2156 = vpop.f32.mrb[0].mxu0
      %v2157 = vadd.f32 0.0, %v2156
      %v2158 = vpop.f32.mrb[0].mxu0
      %2159 = vmatprep.mubr.bf16.mxu0 0
      %2160 = vmatmul.mubr.bf16.gmra.mrb[0].mxu0 %v2076
      %v2161 = vpop.f32.mrb[0].mxu0
      %v2162 = vadd.f32 0.0, %v2161
      %v2163 = vpop.f32.mrb[0].mxu0
      %v2164 = vpop.f32.mrb[0].mxu0
      %v2165 = vadd.f32 0.0, %v2164
      %v2166 = vpop.f32.mrb[0].mxu0
      %2167 = vmatprep.mubr.bf16.mxu0 0
      %2168 = vmatmul.mubr.bf16.gmra.mrb[0].mxu0 %v2079
      %v2169 = vpop.f32.mrb[0].mxu0
      %v2170 = vadd.f32 0.0, %v2169
      %v2171 = vpop.f32.mrb[0].mxu0
      %v2172 = vpop.f32.mrb[0].mxu0
      %v2173 = vadd.f32 0.0, %v2172
      %v2174 = vpop.f32.mrb[0].mxu0
      %2175 = vmatprep.mubr.bf16.mxu0 0
      %2176 = vmatmul.mubr.bf16.gmra.mrb[0].mxu0 %v2082
      %v2177 = vpop.f32.mrb[0].mxu0
      %v2178 = vadd.f32 0.0, %v2177
      %v2179 = vpop.f32.mrb[0].mxu0
      %v2180 = vpop.f32.mrb[0].mxu0
      %v2181 = vadd.f32 0.0, %v2180
      %v2182 = vpop.f32.mrb[0].mxu0
      %2183 = vdwg.mxu0
      %v2184 = vadd.f32 %v2030, %v2122
      %v2185 = vadd.f32 %v2031, %v2125
      %v2186 = vadd.f32 %v2032, %v2130
      %v2187 = vadd.f32 %v2033, %v2133
      %v2188 = vadd.f32 %v2034, %v2138
      %v2189 = vadd.f32 %v2035, %v2141
      %v2190 = vadd.f32 %v2036, %v2146
      %v2191 = vadd.f32 %v2037, %v2149
      %v2192 = vadd.f32 %v2038, %v2154
      %v2193 = vadd.f32 %v2039, %v2157
      %v2194 = vadd.f32 %v2040, %v2162
      %v2195 = vadd.f32 %v2041, %v2165
      %v2196 = vadd.f32 %v2042, %v2170
      %v2197 = vadd.f32 %v2043, %v2173
      %v2198 = vadd.f32 %v2044, %v2178
      %v2199 = vadd.f32 %v2045, %v2181
      %s2200 = scalar_lea.vmem %s3, 14
      %v2201 = vld [vmem:[%s2200] sm:$0x3]
      %v2203 = vsel %vm744, %v2054, 0
      %v2206 = vsel %vm656, %v2201, 0
      %2208 = vmatprep.subr.bf16.mxu0 0
      %2209 = vmatpush1.bf16.msra.mxu0 %v2206
      %2210 = vmatprep.subr.bf16.mxu0 0
      %2211 = vmatpush1.bf16.msra.mxu0 0
      %2212 = vmatprep.subr.bf16.mxu0 0
      %2213 = vmatpush1.bf16.msra.mxu0 0
      %2214 = vmatprep.subr.bf16.mxu0 0
      %2215 = vmatpush1.bf16.msra.mxu0 0
      %2216 = vmatprep.subr.bf16.mxu0 0
      %2217 = vmatpush1.bf16.msra.mxu0 0
      %2218 = vmatprep.subr.bf16.mxu0 0
      %2219 = vmatpush1.bf16.msra.mxu0 0
      %2220 = vmatprep.subr.bf16.mxu0 0
      %2221 = vmatpush1.bf16.msra.mxu0 0
      %2222 = vmatprep.subr.bf16.mxu0 0
      %2223 = vmatpush1.bf16.msra.mxu0 0
      %2224 = vmatprep.subr.bf16.mxu0 0
      %2225 = vmatpush1.bf16.msra.mxu0 0
      %2226 = vmatprep.subr.bf16.mxu0 0
      %2227 = vmatpush1.bf16.msra.mxu0 0
      %2228 = vmatprep.subr.bf16.mxu0 0
      %2229 = vmatpush1.bf16.msra.mxu0 0
      %2230 = vmatprep.subr.bf16.mxu0 0
      %2231 = vmatpush1.bf16.msra.mxu0 0
      %2232 = vmatprep.subr.bf16.mxu0 0
      %2233 = vmatpush1.bf16.msra.mxu0 0
      %2234 = vmatprep.subr.bf16.mxu0 0
      %2235 = vmatpush1.bf16.msra.mxu0 0
      %2236 = vmatprep.subr.bf16.mxu0 0
      %2237 = vmatpush1.bf16.msra.mxu0 0
      %2238 = vmatprep.subr.bf16.mxu0 0
      %2239 = vmatpush1.bf16.msra.mxu0 0
      %2240 = vmatprep.mubr.bf16.mxu0 0
      %2241 = vmatmul.mubr.bf16.gmra.mrb[0].mxu0 %v2064
      %v2242 = vpop.f32.mrb[0].mxu0
      %v2243 = vadd.f32 0.0, %v2242
      %v2244 = vpop.f32.mrb[0].mxu0
      %v2245 = vpop.f32.mrb[0].mxu0
      %v2246 = vadd.f32 0.0, %v2245
      %v2247 = vpop.f32.mrb[0].mxu0
      %2248 = vmatprep.mubr.bf16.mxu0 0
      %2249 = vmatmul.mubr.bf16.gmra.mrb[0].mxu0 %v2067
      %v2250 = vpop.f32.mrb[0].mxu0
      %v2251 = vadd.f32 0.0, %v2250
      %v2252 = vpop.f32.mrb[0].mxu0
      %v2253 = vpop.f32.mrb[0].mxu0
      %v2254 = vadd.f32 0.0, %v2253
      %v2255 = vpop.f32.mrb[0].mxu0
      %2256 = vmatprep.mubr.bf16.mxu0 0
      %2257 = vmatmul.mubr.bf16.gmra.mrb[0].mxu0 %v2070
      %v2258 = vpop.f32.mrb[0].mxu0
      %v2259 = vadd.f32 0.0, %v2258
      %v2260 = vpop.f32.mrb[0].mxu0
      %v2261 = vpop.f32.mrb[0].mxu0
      %v2262 = vadd.f32 0.0, %v2261
      %v2263 = vpop.f32.mrb[0].mxu0
      %2264 = vmatprep.mubr.bf16.mxu0 0
      %2265 = vmatmul.mubr.bf16.gmra.mrb[0].mxu0 %v2073
      %v2266 = vpop.f32.mrb[0].mxu0
      %v2267 = vadd.f32 0.0, %v2266
      %v2268 = vpop.f32.mrb[0].mxu0
      %v2269 = vpop.f32.mrb[0].mxu0
      %v2270 = vadd.f32 0.0, %v2269
      %v2271 = vpop.f32.mrb[0].mxu0
      %2272 = vmatprep.mubr.bf16.mxu0 0
      %2273 = vmatmul.mubr.bf16.gmra.mrb[0].mxu0 %v2076
      %v2274 = vpop.f32.mrb[0].mxu0
      %v2275 = vadd.f32 0.0, %v2274
      %v2276 = vpop.f32.mrb[0].mxu0
      %v2277 = vpop.f32.mrb[0].mxu0
      %v2278 = vadd.f32 0.0, %v2277
      %v2279 = vpop.f32.mrb[0].mxu0
      %2280 = vmatprep.mubr.bf16.mxu0 0
      %2281 = vmatmul.mubr.bf16.gmra.mrb[0].mxu0 %v2079
      %v2282 = vpop.f32.mrb[0].mxu0
      %v2283 = vadd.f32 0.0, %v2282
      %v2284 = vpop.f32.mrb[0].mxu0
      %v2285 = vpop.f32.mrb[0].mxu0
      %v2286 = vadd.f32 0.0, %v2285
      %v2287 = vpop.f32.mrb[0].mxu0
      %2288 = vmatprep.mubr.bf16.mxu0 0
      %2289 = vmatmul.mubr.bf16.gmra.mrb[0].mxu0 %v2082
      %v2290 = vpop.f32.mrb[0].mxu0
      %v2291 = vadd.f32 0.0, %v2290
      %v2292 = vpop.f32.mrb[0].mxu0
      %v2293 = vpop.f32.mrb[0].mxu0
      %v2294 = vadd.f32 0.0, %v2293
      %v2295 = vpop.f32.mrb[0].mxu0
      %2296 = vmatprep.mubr.bf16.mxu0 0
      %2297 = vmatmul.mubr.bf16.gmra.mrb[0].mxu0 %v2203
      %v2298 = vpop.f32.mrb[0].mxu0
      %v2299 = vadd.f32 0.0, %v2298
      %v2300 = vpop.f32.mrb[0].mxu0
      %v2301 = vpop.f32.mrb[0].mxu0
      %v2302 = vadd.f32 0.0, %v2301
      %v2303 = vpop.f32.mrb[0].mxu0
      %2304 = vdwg.mxu0
      %v2305 = vadd.f32 %v2184, %v2243
      %v2306 = vadd.f32 %v2185, %v2246
      %v2307 = vadd.f32 %v2186, %v2251
      %v2308 = vadd.f32 %v2187, %v2254
      %v2309 = vadd.f32 %v2188, %v2259
      %v2310 = vadd.f32 %v2189, %v2262
      %v2311 = vadd.f32 %v2190, %v2267
      %v2312 = vadd.f32 %v2191, %v2270
      %v2313 = vadd.f32 %v2192, %v2275
      %v2314 = vadd.f32 %v2193, %v2278
      %v2315 = vadd.f32 %v2194, %v2283
      %v2316 = vadd.f32 %v2195, %v2286
      %v2317 = vadd.f32 %v2196, %v2291
      %v2318 = vadd.f32 %v2197, %v2294
      %v2319 = vadd.f32 %v2198, %v2299
      %v2320 = vadd.f32 %v2199, %v2302
      %s2321 = scalar_lea.vmem %s3, 24
      %v2322 = vld [vmem:[%s2321] sm:$0x3]
      %v2324 = vsel %vm744, %v2055, 0
      %v2327 = vsel %vm656, %v2322, 0
      %2329 = vmatprep.subr.bf16.mxu0 0
      %2330 = vmatpush1.bf16.msra.mxu0 %v2327
      %2331 = vmatprep.subr.bf16.mxu0 0
      %2332 = vmatpush1.bf16.msra.mxu0 0
      %2333 = vmatprep.subr.bf16.mxu0 0
      %2334 = vmatpush1.bf16.msra.mxu0 0
      %2335 = vmatprep.subr.bf16.mxu0 0
      %2336 = vmatpush1.bf16.msra.mxu0 0
      %2337 = vmatprep.subr.bf16.mxu0 0
      %2338 = vmatpush1.bf16.msra.mxu0 0
      %2339 = vmatprep.subr.bf16.mxu0 0
      %2340 = vmatpush1.bf16.msra.mxu0 0
      %2341 = vmatprep.subr.bf16.mxu0 0
      %2342 = vmatpush1.bf16.msra.mxu0 0
      %2343 = vmatprep.subr.bf16.mxu0 0
      %2344 = vmatpush1.bf16.msra.mxu0 0
      %2345 = vmatprep.subr.bf16.mxu0 0
      %2346 = vmatpush1.bf16.msra.mxu0 0
      %2347 = vmatprep.subr.bf16.mxu0 0
      %2348 = vmatpush1.bf16.msra.mxu0 0
      %2349 = vmatprep.subr.bf16.mxu0 0
      %2350 = vmatpush1.bf16.msra.mxu0 0
      %2351 = vmatprep.subr.bf16.mxu0 0
      %2352 = vmatpush1.bf16.msra.mxu0 0
      %2353 = vmatprep.subr.bf16.mxu0 0
      %2354 = vmatpush1.bf16.msra.mxu0 0
      %2355 = vmatprep.subr.bf16.mxu0 0
      %2356 = vmatpush1.bf16.msra.mxu0 0
      %2357 = vmatprep.subr.bf16.mxu0 0
      %2358 = vmatpush1.bf16.msra.mxu0 0
      %2359 = vmatprep.subr.bf16.mxu0 0
      %2360 = vmatpush1.bf16.msra.mxu0 0
      %2361 = vmatprep.mubr.bf16.mxu0 0
      %2362 = vmatmul.mubr.bf16.gmra.mrb[0].mxu0 %v2067
      %v2363 = vpop.f32.mrb[0].mxu0
      %v2364 = vadd.f32 0.0, %v2363
      %v2365 = vpop.f32.mrb[0].mxu0
      %v2366 = vpop.f32.mrb[0].mxu0
      %v2367 = vadd.f32 0.0, %v2366
      %v2368 = vpop.f32.mrb[0].mxu0
      %2369 = vmatprep.mubr.bf16.mxu0 0
      %2370 = vmatmul.mubr.bf16.gmra.mrb[0].mxu0 %v2070
      %v2371 = vpop.f32.mrb[0].mxu0
      %v2372 = vadd.f32 0.0, %v2371
      %v2373 = vpop.f32.mrb[0].mxu0
      %v2374 = vpop.f32.mrb[0].mxu0
      %v2375 = vadd.f32 0.0, %v2374
      %v2376 = vpop.f32.mrb[0].mxu0
      %2377 = vmatprep.mubr.bf16.mxu0 0
      %2378 = vmatmul.mubr.bf16.gmra.mrb[0].mxu0 %v2073
      %v2379 = vpop.f32.mrb[0].mxu0
      %v2380 = vadd.f32 0.0, %v2379
      %v2381 = vpop.f32.mrb[0].mxu0
      %v2382 = vpop.f32.mrb[0].mxu0
      %v2383 = vadd.f32 0.0, %v2382
      %v2384 = vpop.f32.mrb[0].mxu0
      %2385 = vmatprep.mubr.bf16.mxu0 0
      %2386 = vmatmul.mubr.bf16.gmra.mrb[0].mxu0 %v2076
      %v2387 = vpop.f32.mrb[0].mxu0
      %v2388 = vadd.f32 0.0, %v2387
      %v2389 = vpop.f32.mrb[0].mxu0
      %v2390 = vpop.f32.mrb[0].mxu0
      %v2391 = vadd.f32 0.0, %v2390
      %v2392 = vpop.f32.mrb[0].mxu0
      %2393 = vmatprep.mubr.bf16.mxu0 0
      %2394 = vmatmul.mubr.bf16.gmra.mrb[0].mxu0 %v2079
      %v2395 = vpop.f32.mrb[0].mxu0
      %v2396 = vadd.f32 0.0, %v2395
      %v2397 = vpop.f32.mrb[0].mxu0
      %v2398 = vpop.f32.mrb[0].mxu0
      %v2399 = vadd.f32 0.0, %v2398
      %v2400 = vpop.f32.mrb[0].mxu0
      %2401 = vmatprep.mubr.bf16.mxu0 0
      %2402 = vmatmul.mubr.bf16.gmra.mrb[0].mxu0 %v2082
      %v2403 = vpop.f32.mrb[0].mxu0
      %v2404 = vadd.f32 0.0, %v2403
      %v2405 = vpop.f32.mrb[0].mxu0
      %v2406 = vpop.f32.mrb[0].mxu0
      %v2407 = vadd.f32 0.0, %v2406
      %v2408 = vpop.f32.mrb[0].mxu0
      %2409 = vmatprep.mubr.bf16.mxu0 0
      %2410 = vmatmul.mubr.bf16.gmra.mrb[0].mxu0 %v2203
      %v2411 = vpop.f32.mrb[0].mxu0
      %v2412 = vadd.f32 0.0, %v2411
      %v2413 = vpop.f32.mrb[0].mxu0
      %v2414 = vpop.f32.mrb[0].mxu0
      %v2415 = vadd.f32 0.0, %v2414
      %v2416 = vpop.f32.mrb[0].mxu0
      %2417 = vmatprep.mubr.bf16.mxu0 0
      %2418 = vmatmul.mubr.bf16.gmra.mrb[0].mxu0 %v2324
      %v2419 = vpop.f32.mrb[0].mxu0
      %v2420 = vadd.f32 0.0, %v2419
      %v2421 = vpop.f32.mrb[0].mxu0
      %v2422 = vpop.f32.mrb[0].mxu0
      %v2423 = vadd.f32 0.0, %v2422
      %v2424 = vpop.f32.mrb[0].mxu0
      %2425 = vdwg.mxu0
      %v2426 = vadd.f32 %v2305, %v2364
      %v2427 = vadd.f32 %v2306, %v2367
      %v2428 = vadd.f32 %v2307, %v2372
      %v2429 = vadd.f32 %v2308, %v2375
      %v2430 = vadd.f32 %v2309, %v2380
      %v2431 = vadd.f32 %v2310, %v2383
      %v2432 = vadd.f32 %v2311, %v2388
      %v2433 = vadd.f32 %v2312, %v2391
      %v2434 = vadd.f32 %v2313, %v2396
      %v2435 = vadd.f32 %v2314, %v2399
      %v2436 = vadd.f32 %v2315, %v2404
      %v2437 = vadd.f32 %v2316, %v2407
      %v2438 = vadd.f32 %v2317, %v2412
      %v2439 = vadd.f32 %v2318, %v2415
      %v2440 = vadd.f32 %v2319, %v2420
      %v2441 = vadd.f32 %v2320, %v2423
      %s2442 = scalar_lea.vmem %s3, 34
      %v2443 = vld [vmem:[%s2442] sm:$0x3]
      %v2445 = vsel %vm744, %v2056, 0
      %v2448 = vsel %vm656, %v2443, 0
      %2450 = vmatprep.subr.bf16.mxu0 0
      %2451 = vmatpush1.bf16.msra.mxu0 %v2448
      %2452 = vmatprep.subr.bf16.mxu0 0
      %2453 = vmatpush1.bf16.msra.mxu0 0
      %2454 = vmatprep.subr.bf16.mxu0 0
      %2455 = vmatpush1.bf16.msra.mxu0 0
      %2456 = vmatprep.subr.bf16.mxu0 0
      %2457 = vmatpush1.bf16.msra.mxu0 0
      %2458 = vmatprep.subr.bf16.mxu0 0
      %2459 = vmatpush1.bf16.msra.mxu0 0
      %2460 = vmatprep.subr.bf16.mxu0 0
      %2461 = vmatpush1.bf16.msra.mxu0 0
      %2462 = vmatprep.subr.bf16.mxu0 0
      %2463 = vmatpush1.bf16.msra.mxu0 0
      %2464 = vmatprep.subr.bf16.mxu0 0
      %2465 = vmatpush1.bf16.msra.mxu0 0
      %2466 = vmatprep.subr.bf16.mxu0 0
      %2467 = vmatpush1.bf16.msra.mxu0 0
      %2468 = vmatprep.subr.bf16.mxu0 0
      %2469 = vmatpush1.bf16.msra.mxu0 0
      %2470 = vmatprep.subr.bf16.mxu0 0
      %2471 = vmatpush1.bf16.msra.mxu0 0
      %2472 = vmatprep.subr.bf16.mxu0 0
      %2473 = vmatpush1.bf16.msra.mxu0 0
      %2474 = vmatprep.subr.bf16.mxu0 0
      %2475 = vmatpush1.bf16.msra.mxu0 0
      %2476 = vmatprep.subr.bf16.mxu0 0
      %2477 = vmatpush1.bf16.msra.mxu0 0
      %2478 = vmatprep.subr.bf16.mxu0 0
      %2479 = vmatpush1.bf16.msra.mxu0 0
      %2480 = vmatprep.subr.bf16.mxu0 0
      %2481 = vmatpush1.bf16.msra.mxu0 0
      %2482 = vmatprep.mubr.bf16.mxu0 0
      %2483 = vmatmul.mubr.bf16.gmra.mrb[0].mxu0 %v2070
      %v2484 = vpop.f32.mrb[0].mxu0
      %v2485 = vadd.f32 0.0, %v2484
      %v2486 = vpop.f32.mrb[0].mxu0
      %v2487 = vpop.f32.mrb[0].mxu0
      %v2488 = vadd.f32 0.0, %v2487
      %v2489 = vpop.f32.mrb[0].mxu0
      %2490 = vmatprep.mubr.bf16.mxu0 0
      %2491 = vmatmul.mubr.bf16.gmra.mrb[0].mxu0 %v2073
      %v2492 = vpop.f32.mrb[0].mxu0
      %v2493 = vadd.f32 0.0, %v2492
      %v2494 = vpop.f32.mrb[0].mxu0
      %v2495 = vpop.f32.mrb[0].mxu0
      %v2496 = vadd.f32 0.0, %v2495
      %v2497 = vpop.f32.mrb[0].mxu0
      %2498 = vmatprep.mubr.bf16.mxu0 0
      %2499 = vmatmul.mubr.bf16.gmra.mrb[0].mxu0 %v2076
      %v2500 = vpop.f32.mrb[0].mxu0
      %v2501 = vadd.f32 0.0, %v2500
      %v2502 = vpop.f32.mrb[0].mxu0
      %v2503 = vpop.f32.mrb[0].mxu0
      %v2504 = vadd.f32 0.0, %v2503
      %v2505 = vpop.f32.mrb[0].mxu0
      %2506 = vmatprep.mubr.bf16.mxu0 0
      %2507 = vmatmul.mubr.bf16.gmra.mrb[0].mxu0 %v2079
      %v2508 = vpop.f32.mrb[0].mxu0
      %v2509 = vadd.f32 0.0, %v2508
      %v2510 = vpop.f32.mrb[0].mxu0
      %v2511 = vpop.f32.mrb[0].mxu0
      %v2512 = vadd.f32 0.0, %v2511
      %v2513 = vpop.f32.mrb[0].mxu0
      %2514 = vmatprep.mubr.bf16.mxu0 0
      %2515 = vmatmul.mubr.bf16.gmra.mrb[0].mxu0 %v2082
      %v2516 = vpop.f32.mrb[0].mxu0
      %v2517 = vadd.f32 0.0, %v2516
      %v2518 = vpop.f32.mrb[0].mxu0
      %v2519 = vpop.f32.mrb[0].mxu0
      %v2520 = vadd.f32 0.0, %v2519
      %v2521 = vpop.f32.mrb[0].mxu0
      %2522 = vmatprep.mubr.bf16.mxu0 0
      %2523 = vmatmul.mubr.bf16.gmra.mrb[0].mxu0 %v2203
      %v2524 = vpop.f32.mrb[0].mxu0
      %v2525 = vadd.f32 0.0, %v2524
      %v2526 = vpop.f32.mrb[0].mxu0
      %v2527 = vpop.f32.mrb[0].mxu0
      %v2528 = vadd.f32 0.0, %v2527
      %v2529 = vpop.f32.mrb[0].mxu0
      %2530 = vmatprep.mubr.bf16.mxu0 0
      %2531 = vmatmul.mubr.bf16.gmra.mrb[0].mxu0 %v2324
      %v2532 = vpop.f32.mrb[0].mxu0
      %v2533 = vadd.f32 0.0, %v2532
      %v2534 = vpop.f32.mrb[0].mxu0
      %v2535 = vpop.f32.mrb[0].mxu0
      %v2536 = vadd.f32 0.0, %v2535
      %v2537 = vpop.f32.mrb[0].mxu0
      %2538 = vmatprep.mubr.bf16.mxu0 0
      %2539 = vmatmul.mubr.bf16.gmra.mrb[0].mxu0 %v2445
      %v2540 = vpop.f32.mrb[0].mxu0
      %v2541 = vadd.f32 0.0, %v2540
      %v2542 = vpop.f32.mrb[0].mxu0
      %v2543 = vpop.f32.mrb[0].mxu0
      %v2544 = vadd.f32 0.0, %v2543
      %v2545 = vpop.f32.mrb[0].mxu0
      %2546 = vdwg.mxu0
      %v2547 = vadd.f32 %v2426, %v2485
      %v2548 = vadd.f32 %v2427, %v2488
      %v2549 = vadd.f32 %v2428, %v2493
      %v2550 = vadd.f32 %v2429, %v2496
      %v2551 = vadd.f32 %v2430, %v2501
      %v2552 = vadd.f32 %v2431, %v2504
      %v2553 = vadd.f32 %v2432, %v2509
      %v2554 = vadd.f32 %v2433, %v2512
      %v2555 = vadd.f32 %v2434, %v2517
      %v2556 = vadd.f32 %v2435, %v2520
      %v2557 = vadd.f32 %v2436, %v2525
      %v2558 = vadd.f32 %v2437, %v2528
      %v2559 = vadd.f32 %v2438, %v2533
      %v2560 = vadd.f32 %v2439, %v2536
      %v2561 = vadd.f32 %v2440, %v2541
      %v2562 = vadd.f32 %v2441, %v2544
      %s2563 = scalar_lea.vmem %s3, 44
      %v2564 = vld [vmem:[%s2563] sm:$0x3]
      %v2566 = vsel %vm744, %v2057, 0
      %v2569 = vsel %vm656, %v2564, 0
      %2571 = vmatprep.subr.bf16.mxu0 0
      %2572 = vmatpush1.bf16.msra.mxu0 %v2569
      %2573 = vmatprep.subr.bf16.mxu0 0
      %2574 = vmatpush1.bf16.msra.mxu0 0
      %2575 = vmatprep.subr.bf16.mxu0 0
      %2576 = vmatpush1.bf16.msra.mxu0 0
      %2577 = vmatprep.subr.bf16.mxu0 0
      %2578 = vmatpush1.bf16.msra.mxu0 0
      %2579 = vmatprep.subr.bf16.mxu0 0
      %2580 = vmatpush1.bf16.msra.mxu0 0
      %2581 = vmatprep.subr.bf16.mxu0 0
      %2582 = vmatpush1.bf16.msra.mxu0 0
      %2583 = vmatprep.subr.bf16.mxu0 0
      %2584 = vmatpush1.bf16.msra.mxu0 0
      %2585 = vmatprep.subr.bf16.mxu0 0
      %2586 = vmatpush1.bf16.msra.mxu0 0
      %2587 = vmatprep.subr.bf16.mxu0 0
      %2588 = vmatpush1.bf16.msra.mxu0 0
      %2589 = vmatprep.subr.bf16.mxu0 0
      %2590 = vmatpush1.bf16.msra.mxu0 0
      %2591 = vmatprep.subr.bf16.mxu0 0
      %2592 = vmatpush1.bf16.msra.mxu0 0
      %2593 = vmatprep.subr.bf16.mxu0 0
      %2594 = vmatpush1.bf16.msra.mxu0 0
      %2595 = vmatprep.subr.bf16.mxu0 0
      %2596 = vmatpush1.bf16.msra.mxu0 0
      %2597 = vmatprep.subr.bf16.mxu0 0
      %2598 = vmatpush1.bf16.msra.mxu0 0
      %2599 = vmatprep.subr.bf16.mxu0 0
      %2600 = vmatpush1.bf16.msra.mxu0 0
      %2601 = vmatprep.subr.bf16.mxu0 0
      %2602 = vmatpush1.bf16.msra.mxu0 0
      %2603 = vmatprep.mubr.bf16.mxu0 0
      %2604 = vmatmul.mubr.bf16.gmra.mrb[0].mxu0 %v2073
      %v2605 = vpop.f32.mrb[0].mxu0
      %v2606 = vadd.f32 0.0, %v2605
      %v2607 = vpop.f32.mrb[0].mxu0
      %v2608 = vpop.f32.mrb[0].mxu0
      %v2609 = vadd.f32 0.0, %v2608
      %v2610 = vpop.f32.mrb[0].mxu0
      %2611 = vmatprep.mubr.bf16.mxu0 0
      %2612 = vmatmul.mubr.bf16.gmra.mrb[0].mxu0 %v2076
      %v2613 = vpop.f32.mrb[0].mxu0
      %v2614 = vadd.f32 0.0, %v2613
      %v2615 = vpop.f32.mrb[0].mxu0
      %v2616 = vpop.f32.mrb[0].mxu0
      %v2617 = vadd.f32 0.0, %v2616
      %v2618 = vpop.f32.mrb[0].mxu0
      %2619 = vmatprep.mubr.bf16.mxu0 0
      %2620 = vmatmul.mubr.bf16.gmra.mrb[0].mxu0 %v2079
      %v2621 = vpop.f32.mrb[0].mxu0
      %v2622 = vadd.f32 0.0, %v2621
      %v2623 = vpop.f32.mrb[0].mxu0
      %v2624 = vpop.f32.mrb[0].mxu0
      %v2625 = vadd.f32 0.0, %v2624
      %v2626 = vpop.f32.mrb[0].mxu0
      %2627 = vmatprep.mubr.bf16.mxu0 0
      %2628 = vmatmul.mubr.bf16.gmra.mrb[0].mxu0 %v2082
      %v2629 = vpop.f32.mrb[0].mxu0
      %v2630 = vadd.f32 0.0, %v2629
      %v2631 = vpop.f32.mrb[0].mxu0
      %v2632 = vpop.f32.mrb[0].mxu0
      %v2633 = vadd.f32 0.0, %v2632
      %v2634 = vpop.f32.mrb[0].mxu0
      %2635 = vmatprep.mubr.bf16.mxu0 0
      %2636 = vmatmul.mubr.bf16.gmra.mrb[0].mxu0 %v2203
      %v2637 = vpop.f32.mrb[0].mxu0
      %v2638 = vadd.f32 0.0, %v2637
      %v2639 = vpop.f32.mrb[0].mxu0
      %v2640 = vpop.f32.mrb[0].mxu0
      %v2641 = vadd.f32 0.0, %v2640
      %v2642 = vpop.f32.mrb[0].mxu0
      %2643 = vmatprep.mubr.bf16.mxu0 0
      %2644 = vmatmul.mubr.bf16.gmra.mrb[0].mxu0 %v2324
      %v2645 = vpop.f32.mrb[0].mxu0
      %v2646 = vadd.f32 0.0, %v2645
      %v2647 = vpop.f32.mrb[0].mxu0
      %v2648 = vpop.f32.mrb[0].mxu0
      %v2649 = vadd.f32 0.0, %v2648
      %v2650 = vpop.f32.mrb[0].mxu0
      %2651 = vmatprep.mubr.bf16.mxu0 0
      %2652 = vmatmul.mubr.bf16.gmra.mrb[0].mxu0 %v2445
      %v2653 = vpop.f32.mrb[0].mxu0
      %v2654 = vadd.f32 0.0, %v2653
      %v2655 = vpop.f32.mrb[0].mxu0
      %v2656 = vpop.f32.mrb[0].mxu0
      %v2657 = vadd.f32 0.0, %v2656
      %v2658 = vpop.f32.mrb[0].mxu0
      %2659 = vmatprep.mubr.bf16.mxu0 0
      %2660 = vmatmul.mubr.bf16.gmra.mrb[0].mxu0 %v2566
      %v2661 = vpop.f32.mrb[0].mxu0
      %v2662 = vadd.f32 0.0, %v2661
      %v2663 = vpop.f32.mrb[0].mxu0
      %v2664 = vpop.f32.mrb[0].mxu0
      %v2665 = vadd.f32 0.0, %v2664
      %v2666 = vpop.f32.mrb[0].mxu0
      %2667 = vdwg.mxu0
      %v2668 = vadd.f32 %v2547, %v2606
      %v2669 = vadd.f32 %v2548, %v2609
      %v2670 = vadd.f32 %v2549, %v2614
      %v2671 = vadd.f32 %v2550, %v2617
      %v2672 = vadd.f32 %v2551, %v2622
      %v2673 = vadd.f32 %v2552, %v2625
      %v2674 = vadd.f32 %v2553, %v2630
      %v2675 = vadd.f32 %v2554, %v2633
      %v2676 = vadd.f32 %v2555, %v2638
      %v2677 = vadd.f32 %v2556, %v2641
      %v2678 = vadd.f32 %v2557, %v2646
      %v2679 = vadd.f32 %v2558, %v2649
      %v2680 = vadd.f32 %v2559, %v2654
      %v2681 = vadd.f32 %v2560, %v2657
      %v2682 = vadd.f32 %v2561, %v2662
      %v2683 = vadd.f32 %v2562, %v2665
      %vm2684 = vcmask 1046528
      %v2685 = vrot.slane %v540, 1
      %v2686 = vrot.slane %v541, 1
      %v2687 = vsel %vm2684, %v2685, %v2686
      %v2688 = vrot.slane %v542, 1
      %v2689 = vrot.slane %v543, 1
      %v2690 = vsel %vm2684, %v2688, %v2689
      %v2691 = vrot.slane %v616, 1
      %v2692 = vrot.slane %v617, 1
      %v2693 = vsel %vm2684, %v2691, %v2692
      %v2694 = vrot.slane %v618, 1
      %v2695 = vrot.slane %v619, 1
      %v2696 = vsel %vm2684, %v2694, %v2695
      %v2697 = vrot.slane %v620, 1
      %v2698 = vrot.slane %v621, 1
      %v2699 = vsel %vm2684, %v2697, %v2698
      %v2700 = vrot.slane %v622, 1
      %v2701 = vrot.slane %v623, 1
      %v2702 = vsel %vm2684, %v2700, %v2701
      %v2703 = vrot.slane %v624, 1
      %v2704 = vrot.slane %v625, 1
      %v2705 = vsel %vm2684, %v2703, %v2704
      %v2706 = vrot.slane %v626, 1
      %v2707 = vrot.slane %v627, 1
      %v2708 = vsel %vm2684, %v2706, %v2707
      %v2709 = vrot.slane %v628, 1
      %v2710 = vrot.slane %v629, 1
      %v2711 = vsel %vm2684, %v2709, %v2710
      %v2712 = vrot.slane %v630, 1
      %v2713 = vrot.slane %v631, 1
      %v2714 = vsel %vm2684, %v2712, %v2713
      %v2715 = vrot.slane %v564, 1
      %v2716 = vrot.slane %v565, 1
      %v2717 = vsel %vm2684, %v2715, %v2716
      %v2718 = vrot.slane %v566, 1
      %v2719 = vrot.slane %v567, 1
      %v2720 = vsel %vm2684, %v2718, %v2719
      %v2745 = vsel %vm2684, %v2686, 0.0
      %v2746 = vsel %vm2684, %v2689, 0.0
      %v2747 = vsel %vm2684, %v2692, 0.0
      %v2748 = vsel %vm2684, %v2695, 0.0
      %v2749 = vsel %vm2684, %v2698, 0.0
      %v2750 = vsel %vm2684, %v2701, 0.0
      %v2751 = vsel %vm2684, %v2704, 0.0
      %v2752 = vsel %vm2684, %v2707, 0.0
      %v2753 = vsel %vm2684, %v2710, 0.0
      %v2754 = vsel %vm2684, %v2713, 0.0
      %v2755 = vsel %vm2684, %v2716, 0.0
      %v2756 = vsel %vm2684, %v2719, 0.0
      %v2757 = vpack.c.bf16 %v2745, %v2687
      %v2758 = vpack.c.bf16 %v2746, %v2690
      %v2759 = vpack.c.bf16 %v2747, %v2693
      %v2760 = vpack.c.bf16 %v2748, %v2696
      %v2761 = vpack.c.bf16 %v2749, %v2699
      %v2762 = vpack.c.bf16 %v2750, %v2702
      %v2763 = vpack.c.bf16 %v2751, %v2705
      %v2764 = vpack.c.bf16 %v2752, %v2708
      %v2765 = vpack.c.bf16 %v2753, %v2711
      %v2766 = vpack.c.bf16 %v2754, %v2714
      %v2767 = vpack.c.bf16 %v2755, %v2717
      %v2768 = vpack.c.bf16 %v2756, %v2720
      %s2769 = scalar_lea.vmem %s3, 6
      %v2770 = vld [vmem:[%s2769] sm:$0x3]
      %v2772 = vsel %vm744, %v2757, 0
      %v2775 = vsel %vm744, %v2758, 0
      %v2778 = vsel %vm744, %v2759, 0
      %v2781 = vsel %vm744, %v2760, 0
      %v2784 = vsel %vm744, %v2761, 0
      %v2787 = vsel %vm744, %v2762, 0
      %v2790 = vsel %vm744, %v2763, 0
      %v2793 = vsel %vm744, %v2764, 0
      %v2796 = vsel %vm656, %v2770, 0
      %2798 = vmatprep.subr.bf16.mxu0 0
      %2799 = vmatpush1.bf16.msra.mxu0 %v2796
      %2800 = vmatprep.subr.bf16.mxu0 0
      %2801 = vmatpush1.bf16.msra.mxu0 0
      %2802 = vmatprep.subr.bf16.mxu0 0
      %2803 = vmatpush1.bf16.msra.mxu0 0
      %2804 = vmatprep.subr.bf16.mxu0 0
      %2805 = vmatpush1.bf16.msra.mxu0 0
      %2806 = vmatprep.subr.bf16.mxu0 0
      %2807 = vmatpush1.bf16.msra.mxu0 0
      %2808 = vmatprep.subr.bf16.mxu0 0
      %2809 = vmatpush1.bf16.msra.mxu0 0
      %2810 = vmatprep.subr.bf16.mxu0 0
      %2811 = vmatpush1.bf16.msra.mxu0 0
      %2812 = vmatprep.subr.bf16.mxu0 0
      %2813 = vmatpush1.bf16.msra.mxu0 0
      %2814 = vmatprep.subr.bf16.mxu0 0
      %2815 = vmatpush1.bf16.msra.mxu0 0
      %2816 = vmatprep.subr.bf16.mxu0 0
      %2817 = vmatpush1.bf16.msra.mxu0 0
      %2818 = vmatprep.subr.bf16.mxu0 0
      %2819 = vmatpush1.bf16.msra.mxu0 0
      %2820 = vmatprep.subr.bf16.mxu0 0
      %2821 = vmatpush1.bf16.msra.mxu0 0
      %2822 = vmatprep.subr.bf16.mxu0 0
      %2823 = vmatpush1.bf16.msra.mxu0 0
      %2824 = vmatprep.subr.bf16.mxu0 0
      %2825 = vmatpush1.bf16.msra.mxu0 0
      %2826 = vmatprep.subr.bf16.mxu0 0
      %2827 = vmatpush1.bf16.msra.mxu0 0
      %2828 = vmatprep.subr.bf16.mxu0 0
      %2829 = vmatpush1.bf16.msra.mxu0 0
      %2830 = vmatprep.mubr.bf16.mxu0 0
      %2831 = vmatmul.mubr.bf16.gmra.mrb[0].mxu0 %v2772
      %v2832 = vpop.f32.mrb[0].mxu0
      %v2833 = vadd.f32 0.0, %v2832
      %v2834 = vpop.f32.mrb[0].mxu0
      %v2835 = vpop.f32.mrb[0].mxu0
      %v2836 = vadd.f32 0.0, %v2835
      %v2837 = vpop.f32.mrb[0].mxu0
      %2838 = vmatprep.mubr.bf16.mxu0 0
      %2839 = vmatmul.mubr.bf16.gmra.mrb[0].mxu0 %v2775
      %v2840 = vpop.f32.mrb[0].mxu0
      %v2841 = vadd.f32 0.0, %v2840
      %v2842 = vpop.f32.mrb[0].mxu0
      %v2843 = vpop.f32.mrb[0].mxu0
      %v2844 = vadd.f32 0.0, %v2843
      %v2845 = vpop.f32.mrb[0].mxu0
      %2846 = vmatprep.mubr.bf16.mxu0 0
      %2847 = vmatmul.mubr.bf16.gmra.mrb[0].mxu0 %v2778
      %v2848 = vpop.f32.mrb[0].mxu0
      %v2849 = vadd.f32 0.0, %v2848
      %v2850 = vpop.f32.mrb[0].mxu0
      %v2851 = vpop.f32.mrb[0].mxu0
      %v2852 = vadd.f32 0.0, %v2851
      %v2853 = vpop.f32.mrb[0].mxu0
      %2854 = vmatprep.mubr.bf16.mxu0 0
      %2855 = vmatmul.mubr.bf16.gmra.mrb[0].mxu0 %v2781
      %v2856 = vpop.f32.mrb[0].mxu0
      %v2857 = vadd.f32 0.0, %v2856
      %v2858 = vpop.f32.mrb[0].mxu0
      %v2859 = vpop.f32.mrb[0].mxu0
      %v2860 = vadd.f32 0.0, %v2859
      %v2861 = vpop.f32.mrb[0].mxu0
      %2862 = vmatprep.mubr.bf16.mxu0 0
      %2863 = vmatmul.mubr.bf16.gmra.mrb[0].mxu0 %v2784
      %v2864 = vpop.f32.mrb[0].mxu0
      %v2865 = vadd.f32 0.0, %v2864
      %v2866 = vpop.f32.mrb[0].mxu0
      %v2867 = vpop.f32.mrb[0].mxu0
      %v2868 = vadd.f32 0.0, %v2867
      %v2869 = vpop.f32.mrb[0].mxu0
      %2870 = vmatprep.mubr.bf16.mxu0 0
      %2871 = vmatmul.mubr.bf16.gmra.mrb[0].mxu0 %v2787
      %v2872 = vpop.f32.mrb[0].mxu0
      %v2873 = vadd.f32 0.0, %v2872
      %v2874 = vpop.f32.mrb[0].mxu0
      %v2875 = vpop.f32.mrb[0].mxu0
      %v2876 = vadd.f32 0.0, %v2875
      %v2877 = vpop.f32.mrb[0].mxu0
      %2878 = vmatprep.mubr.bf16.mxu0 0
      %2879 = vmatmul.mubr.bf16.gmra.mrb[0].mxu0 %v2790
      %v2880 = vpop.f32.mrb[0].mxu0
      %v2881 = vadd.f32 0.0, %v2880
      %v2882 = vpop.f32.mrb[0].mxu0
      %v2883 = vpop.f32.mrb[0].mxu0
      %v2884 = vadd.f32 0.0, %v2883
      %v2885 = vpop.f32.mrb[0].mxu0
      %2886 = vmatprep.mubr.bf16.mxu0 0
      %2887 = vmatmul.mubr.bf16.gmra.mrb[0].mxu0 %v2793
      %v2888 = vpop.f32.mrb[0].mxu0
      %v2889 = vadd.f32 0.0, %v2888
      %v2890 = vpop.f32.mrb[0].mxu0
      %v2891 = vpop.f32.mrb[0].mxu0
      %v2892 = vadd.f32 0.0, %v2891
      %v2893 = vpop.f32.mrb[0].mxu0
      %2894 = vdwg.mxu0
      %v2895 = vadd.f32 %v2668, %v2833
      %v2896 = vadd.f32 %v2669, %v2836
      %v2897 = vadd.f32 %v2670, %v2841
      %v2898 = vadd.f32 %v2671, %v2844
      %v2899 = vadd.f32 %v2672, %v2849
      %v2900 = vadd.f32 %v2673, %v2852
      %v2901 = vadd.f32 %v2674, %v2857
      %v2902 = vadd.f32 %v2675, %v2860
      %v2903 = vadd.f32 %v2676, %v2865
      %v2904 = vadd.f32 %v2677, %v2868
      %v2905 = vadd.f32 %v2678, %v2873
      %v2906 = vadd.f32 %v2679, %v2876
      %v2907 = vadd.f32 %v2680, %v2881
      %v2908 = vadd.f32 %v2681, %v2884
      %v2909 = vadd.f32 %v2682, %v2889
      %v2910 = vadd.f32 %v2683, %v2892
      %s2911 = scalar_lea.vmem %s3, 16
      %v2912 = vld [vmem:[%s2911] sm:$0x3]
      %v2914 = vsel %vm744, %v2765, 0
      %v2917 = vsel %vm656, %v2912, 0
      %2919 = vmatprep.subr.bf16.mxu0 0
      %2920 = vmatpush1.bf16.msra.mxu0 %v2917
      %2921 = vmatprep.subr.bf16.mxu0 0
      %2922 = vmatpush1.bf16.msra.mxu0 0
      %2923 = vmatprep.subr.bf16.mxu0 0
      %2924 = vmatpush1.bf16.msra.mxu0 0
      %2925 = vmatprep.subr.bf16.mxu0 0
      %2926 = vmatpush1.bf16.msra.mxu0 0
      %2927 = vmatprep.subr.bf16.mxu0 0
      %2928 = vmatpush1.bf16.msra.mxu0 0
      %2929 = vmatprep.subr.bf16.mxu0 0
      %2930 = vmatpush1.bf16.msra.mxu0 0
      %2931 = vmatprep.subr.bf16.mxu0 0
      %2932 = vmatpush1.bf16.msra.mxu0 0
      %2933 = vmatprep.subr.bf16.mxu0 0
      %2934 = vmatpush1.bf16.msra.mxu0 0
      %2935 = vmatprep.subr.bf16.mxu0 0
      %2936 = vmatpush1.bf16.msra.mxu0 0
      %2937 = vmatprep.subr.bf16.mxu0 0
      %2938 = vmatpush1.bf16.msra.mxu0 0
      %2939 = vmatprep.subr.bf16.mxu0 0
      %2940 = vmatpush1.bf16.msra.mxu0 0
      %2941 = vmatprep.subr.bf16.mxu0 0
      %2942 = vmatpush1.bf16.msra.mxu0 0
      %2943 = vmatprep.subr.bf16.mxu0 0
      %2944 = vmatpush1.bf16.msra.mxu0 0
      %2945 = vmatprep.subr.bf16.mxu0 0
      %2946 = vmatpush1.bf16.msra.mxu0 0
      %2947 = vmatprep.subr.bf16.mxu0 0
      %2948 = vmatpush1.bf16.msra.mxu0 0
      %2949 = vmatprep.subr.bf16.mxu0 0
      %2950 = vmatpush1.bf16.msra.mxu0 0
      %2951 = vmatprep.mubr.bf16.mxu0 0
      %2952 = vmatmul.mubr.bf16.gmra.mrb[0].mxu0 %v2775
      %v2953 = vpop.f32.mrb[0].mxu0
      %v2954 = vadd.f32 0.0, %v2953
      %v2955 = vpop.f32.mrb[0].mxu0
      %v2956 = vpop.f32.mrb[0].mxu0
      %v2957 = vadd.f32 0.0, %v2956
      %v2958 = vpop.f32.mrb[0].mxu0
      %2959 = vmatprep.mubr.bf16.mxu0 0
      %2960 = vmatmul.mubr.bf16.gmra.mrb[0].mxu0 %v2778
      %v2961 = vpop.f32.mrb[0].mxu0
      %v2962 = vadd.f32 0.0, %v2961
      %v2963 = vpop.f32.mrb[0].mxu0
      %v2964 = vpop.f32.mrb[0].mxu0
      %v2965 = vadd.f32 0.0, %v2964
      %v2966 = vpop.f32.mrb[0].mxu0
      %2967 = vmatprep.mubr.bf16.mxu0 0
      %2968 = vmatmul.mubr.bf16.gmra.mrb[0].mxu0 %v2781
      %v2969 = vpop.f32.mrb[0].mxu0
      %v2970 = vadd.f32 0.0, %v2969
      %v2971 = vpop.f32.mrb[0].mxu0
      %v2972 = vpop.f32.mrb[0].mxu0
      %v2973 = vadd.f32 0.0, %v2972
      %v2974 = vpop.f32.mrb[0].mxu0
      %2975 = vmatprep.mubr.bf16.mxu0 0
      %2976 = vmatmul.mubr.bf16.gmra.mrb[0].mxu0 %v2784
      %v2977 = vpop.f32.mrb[0].mxu0
      %v2978 = vadd.f32 0.0, %v2977
      %v2979 = vpop.f32.mrb[0].mxu0
      %v2980 = vpop.f32.mrb[0].mxu0
      %v2981 = vadd.f32 0.0, %v2980
      %v2982 = vpop.f32.mrb[0].mxu0
      %2983 = vmatprep.mubr.bf16.mxu0 0
      %2984 = vmatmul.mubr.bf16.gmra.mrb[0].mxu0 %v2787
      %v2985 = vpop.f32.mrb[0].mxu0
      %v2986 = vadd.f32 0.0, %v2985
      %v2987 = vpop.f32.mrb[0].mxu0
      %v2988 = vpop.f32.mrb[0].mxu0
      %v2989 = vadd.f32 0.0, %v2988
      %v2990 = vpop.f32.mrb[0].mxu0
      %2991 = vmatprep.mubr.bf16.mxu0 0
      %2992 = vmatmul.mubr.bf16.gmra.mrb[0].mxu0 %v2790
      %v2993 = vpop.f32.mrb[0].mxu0
      %v2994 = vadd.f32 0.0, %v2993
      %v2995 = vpop.f32.mrb[0].mxu0
      %v2996 = vpop.f32.mrb[0].mxu0
      %v2997 = vadd.f32 0.0, %v2996
      %v2998 = vpop.f32.mrb[0].mxu0
      %2999 = vmatprep.mubr.bf16.mxu0 0
      %3000 = vmatmul.mubr.bf16.gmra.mrb[0].mxu0 %v2793
      %v3001 = vpop.f32.mrb[0].mxu0
      %v3002 = vadd.f32 0.0, %v3001
      %v3003 = vpop.f32.mrb[0].mxu0
      %v3004 = vpop.f32.mrb[0].mxu0
      %v3005 = vadd.f32 0.0, %v3004
      %v3006 = vpop.f32.mrb[0].mxu0
      %3007 = vmatprep.mubr.bf16.mxu0 0
      %3008 = vmatmul.mubr.bf16.gmra.mrb[0].mxu0 %v2914
      %v3009 = vpop.f32.mrb[0].mxu0
      %v3010 = vadd.f32 0.0, %v3009
      %v3011 = vpop.f32.mrb[0].mxu0
      %v3012 = vpop.f32.mrb[0].mxu0
      %v3013 = vadd.f32 0.0, %v3012
      %v3014 = vpop.f32.mrb[0].mxu0
      %3015 = vdwg.mxu0
      %v3016 = vadd.f32 %v2895, %v2954
      %v3017 = vadd.f32 %v2896, %v2957
      %v3018 = vadd.f32 %v2897, %v2962
      %v3019 = vadd.f32 %v2898, %v2965
      %v3020 = vadd.f32 %v2899, %v2970
      %v3021 = vadd.f32 %v2900, %v2973
      %v3022 = vadd.f32 %v2901, %v2978
      %v3023 = vadd.f32 %v2902, %v2981
      %v3024 = vadd.f32 %v2903, %v2986
      %v3025 = vadd.f32 %v2904, %v2989
      %v3026 = vadd.f32 %v2905, %v2994
      %v3027 = vadd.f32 %v2906, %v2997
      %v3028 = vadd.f32 %v2907, %v3002
      %v3029 = vadd.f32 %v2908, %v3005
      %v3030 = vadd.f32 %v2909, %v3010
      %v3031 = vadd.f32 %v2910, %v3013
      %s3032 = scalar_lea.vmem %s3, 26
      %v3033 = vld [vmem:[%s3032] sm:$0x3]
      %v3035 = vsel %vm744, %v2766, 0
      %v3038 = vsel %vm656, %v3033, 0
      %3040 = vmatprep.subr.bf16.mxu0 0
      %3041 = vmatpush1.bf16.msra.mxu0 %v3038
      %3042 = vmatprep.subr.bf16.mxu0 0
      %3043 = vmatpush1.bf16.msra.mxu0 0
      %3044 = vmatprep.subr.bf16.mxu0 0
      %3045 = vmatpush1.bf16.msra.mxu0 0
      %3046 = vmatprep.subr.bf16.mxu0 0
      %3047 = vmatpush1.bf16.msra.mxu0 0
      %3048 = vmatprep.subr.bf16.mxu0 0
      %3049 = vmatpush1.bf16.msra.mxu0 0
      %3050 = vmatprep.subr.bf16.mxu0 0
      %3051 = vmatpush1.bf16.msra.mxu0 0
      %3052 = vmatprep.subr.bf16.mxu0 0
      %3053 = vmatpush1.bf16.msra.mxu0 0
      %3054 = vmatprep.subr.bf16.mxu0 0
      %3055 = vmatpush1.bf16.msra.mxu0 0
      %3056 = vmatprep.subr.bf16.mxu0 0
      %3057 = vmatpush1.bf16.msra.mxu0 0
      %3058 = vmatprep.subr.bf16.mxu0 0
      %3059 = vmatpush1.bf16.msra.mxu0 0
      %3060 = vmatprep.subr.bf16.mxu0 0
      %3061 = vmatpush1.bf16.msra.mxu0 0
      %3062 = vmatprep.subr.bf16.mxu0 0
      %3063 = vmatpush1.bf16.msra.mxu0 0
      %3064 = vmatprep.subr.bf16.mxu0 0
      %3065 = vmatpush1.bf16.msra.mxu0 0
      %3066 = vmatprep.subr.bf16.mxu0 0
      %3067 = vmatpush1.bf16.msra.mxu0 0
      %3068 = vmatprep.subr.bf16.mxu0 0
      %3069 = vmatpush1.bf16.msra.mxu0 0
      %3070 = vmatprep.subr.bf16.mxu0 0
      %3071 = vmatpush1.bf16.msra.mxu0 0
      %3072 = vmatprep.mubr.bf16.mxu0 0
      %3073 = vmatmul.mubr.bf16.gmra.mrb[0].mxu0 %v2778
      %v3074 = vpop.f32.mrb[0].mxu0
      %v3075 = vadd.f32 0.0, %v3074
      %v3076 = vpop.f32.mrb[0].mxu0
      %v3077 = vpop.f32.mrb[0].mxu0
      %v3078 = vadd.f32 0.0, %v3077
      %v3079 = vpop.f32.mrb[0].mxu0
      %3080 = vmatprep.mubr.bf16.mxu0 0
      %3081 = vmatmul.mubr.bf16.gmra.mrb[0].mxu0 %v2781
      %v3082 = vpop.f32.mrb[0].mxu0
      %v3083 = vadd.f32 0.0, %v3082
      %v3084 = vpop.f32.mrb[0].mxu0
      %v3085 = vpop.f32.mrb[0].mxu0
      %v3086 = vadd.f32 0.0, %v3085
      %v3087 = vpop.f32.mrb[0].mxu0
      %3088 = vmatprep.mubr.bf16.mxu0 0
      %3089 = vmatmul.mubr.bf16.gmra.mrb[0].mxu0 %v2784
      %v3090 = vpop.f32.mrb[0].mxu0
      %v3091 = vadd.f32 0.0, %v3090
      %v3092 = vpop.f32.mrb[0].mxu0
      %v3093 = vpop.f32.mrb[0].mxu0
      %v3094 = vadd.f32 0.0, %v3093
      %v3095 = vpop.f32.mrb[0].mxu0
      %3096 = vmatprep.mubr.bf16.mxu0 0
      %3097 = vmatmul.mubr.bf16.gmra.mrb[0].mxu0 %v2787
      %v3098 = vpop.f32.mrb[0].mxu0
      %v3099 = vadd.f32 0.0, %v3098
      %v3100 = vpop.f32.mrb[0].mxu0
      %v3101 = vpop.f32.mrb[0].mxu0
      %v3102 = vadd.f32 0.0, %v3101
      %v3103 = vpop.f32.mrb[0].mxu0
      %3104 = vmatprep.mubr.bf16.mxu0 0
      %3105 = vmatmul.mubr.bf16.gmra.mrb[0].mxu0 %v2790
      %v3106 = vpop.f32.mrb[0].mxu0
      %v3107 = vadd.f32 0.0, %v3106
      %v3108 = vpop.f32.mrb[0].mxu0
      %v3109 = vpop.f32.mrb[0].mxu0
      %v3110 = vadd.f32 0.0, %v3109
      %v3111 = vpop.f32.mrb[0].mxu0
      %3112 = vmatprep.mubr.bf16.mxu0 0
      %3113 = vmatmul.mubr.bf16.gmra.mrb[0].mxu0 %v2793
      %v3114 = vpop.f32.mrb[0].mxu0
      %v3115 = vadd.f32 0.0, %v3114
      %v3116 = vpop.f32.mrb[0].mxu0
      %v3117 = vpop.f32.mrb[0].mxu0
      %v3118 = vadd.f32 0.0, %v3117
      %v3119 = vpop.f32.mrb[0].mxu0
      %3120 = vmatprep.mubr.bf16.mxu0 0
      %3121 = vmatmul.mubr.bf16.gmra.mrb[0].mxu0 %v2914
      %v3122 = vpop.f32.mrb[0].mxu0
      %v3123 = vadd.f32 0.0, %v3122
      %v3124 = vpop.f32.mrb[0].mxu0
      %v3125 = vpop.f32.mrb[0].mxu0
      %v3126 = vadd.f32 0.0, %v3125
      %v3127 = vpop.f32.mrb[0].mxu0
      %3128 = vmatprep.mubr.bf16.mxu0 0
      %3129 = vmatmul.mubr.bf16.gmra.mrb[0].mxu0 %v3035
      %v3130 = vpop.f32.mrb[0].mxu0
      %v3131 = vadd.f32 0.0, %v3130
      %v3132 = vpop.f32.mrb[0].mxu0
      %v3133 = vpop.f32.mrb[0].mxu0
      %v3134 = vadd.f32 0.0, %v3133
      %v3135 = vpop.f32.mrb[0].mxu0
      %3136 = vdwg.mxu0
      %v3137 = vadd.f32 %v3016, %v3075
      %v3138 = vadd.f32 %v3017, %v3078
      %v3139 = vadd.f32 %v3018, %v3083
      %v3140 = vadd.f32 %v3019, %v3086
      %v3141 = vadd.f32 %v3020, %v3091
      %v3142 = vadd.f32 %v3021, %v3094
      %v3143 = vadd.f32 %v3022, %v3099
      %v3144 = vadd.f32 %v3023, %v3102
      %v3145 = vadd.f32 %v3024, %v3107
      %v3146 = vadd.f32 %v3025, %v3110
      %v3147 = vadd.f32 %v3026, %v3115
      %v3148 = vadd.f32 %v3027, %v3118
      %v3149 = vadd.f32 %v3028, %v3123
      %v3150 = vadd.f32 %v3029, %v3126
      %v3151 = vadd.f32 %v3030, %v3131
      %v3152 = vadd.f32 %v3031, %v3134
      %s3153 = scalar_lea.vmem %s3, 36
      %v3154 = vld [vmem:[%s3153] sm:$0x3]
      %v3156 = vsel %vm744, %v2767, 0
      %v3159 = vsel %vm656, %v3154, 0
      %3161 = vmatprep.subr.bf16.mxu0 0
      %3162 = vmatpush1.bf16.msra.mxu0 %v3159
      %3163 = vmatprep.subr.bf16.mxu0 0
      %3164 = vmatpush1.bf16.msra.mxu0 0
      %3165 = vmatprep.subr.bf16.mxu0 0
      %3166 = vmatpush1.bf16.msra.mxu0 0
      %3167 = vmatprep.subr.bf16.mxu0 0
      %3168 = vmatpush1.bf16.msra.mxu0 0
      %3169 = vmatprep.subr.bf16.mxu0 0
      %3170 = vmatpush1.bf16.msra.mxu0 0
      %3171 = vmatprep.subr.bf16.mxu0 0
      %3172 = vmatpush1.bf16.msra.mxu0 0
      %3173 = vmatprep.subr.bf16.mxu0 0
      %3174 = vmatpush1.bf16.msra.mxu0 0
      %3175 = vmatprep.subr.bf16.mxu0 0
      %3176 = vmatpush1.bf16.msra.mxu0 0
      %3177 = vmatprep.subr.bf16.mxu0 0
      %3178 = vmatpush1.bf16.msra.mxu0 0
      %3179 = vmatprep.subr.bf16.mxu0 0
      %3180 = vmatpush1.bf16.msra.mxu0 0
      %3181 = vmatprep.subr.bf16.mxu0 0
      %3182 = vmatpush1.bf16.msra.mxu0 0
      %3183 = vmatprep.subr.bf16.mxu0 0
      %3184 = vmatpush1.bf16.msra.mxu0 0
      %3185 = vmatprep.subr.bf16.mxu0 0
      %3186 = vmatpush1.bf16.msra.mxu0 0
      %3187 = vmatprep.subr.bf16.mxu0 0
      %3188 = vmatpush1.bf16.msra.mxu0 0
      %3189 = vmatprep.subr.bf16.mxu0 0
      %3190 = vmatpush1.bf16.msra.mxu0 0
      %3191 = vmatprep.subr.bf16.mxu0 0
      %3192 = vmatpush1.bf16.msra.mxu0 0
      %3193 = vmatprep.mubr.bf16.mxu0 0
      %3194 = vmatmul.mubr.bf16.gmra.mrb[0].mxu0 %v2781
      %v3195 = vpop.f32.mrb[0].mxu0
      %v3196 = vadd.f32 0.0, %v3195
      %v3197 = vpop.f32.mrb[0].mxu0
      %v3198 = vpop.f32.mrb[0].mxu0
      %v3199 = vadd.f32 0.0, %v3198
      %v3200 = vpop.f32.mrb[0].mxu0
      %3201 = vmatprep.mubr.bf16.mxu0 0
      %3202 = vmatmul.mubr.bf16.gmra.mrb[0].mxu0 %v2784
      %v3203 = vpop.f32.mrb[0].mxu0
      %v3204 = vadd.f32 0.0, %v3203
      %v3205 = vpop.f32.mrb[0].mxu0
      %v3206 = vpop.f32.mrb[0].mxu0
      %v3207 = vadd.f32 0.0, %v3206
      %v3208 = vpop.f32.mrb[0].mxu0
      %3209 = vmatprep.mubr.bf16.mxu0 0
      %3210 = vmatmul.mubr.bf16.gmra.mrb[0].mxu0 %v2787
      %v3211 = vpop.f32.mrb[0].mxu0
      %v3212 = vadd.f32 0.0, %v3211
      %v3213 = vpop.f32.mrb[0].mxu0
      %v3214 = vpop.f32.mrb[0].mxu0
      %v3215 = vadd.f32 0.0, %v3214
      %v3216 = vpop.f32.mrb[0].mxu0
      %3217 = vmatprep.mubr.bf16.mxu0 0
      %3218 = vmatmul.mubr.bf16.gmra.mrb[0].mxu0 %v2790
      %v3219 = vpop.f32.mrb[0].mxu0
      %v3220 = vadd.f32 0.0, %v3219
      %v3221 = vpop.f32.mrb[0].mxu0
      %v3222 = vpop.f32.mrb[0].mxu0
      %v3223 = vadd.f32 0.0, %v3222
      %v3224 = vpop.f32.mrb[0].mxu0
      %3225 = vmatprep.mubr.bf16.mxu0 0
      %3226 = vmatmul.mubr.bf16.gmra.mrb[0].mxu0 %v2793
      %v3227 = vpop.f32.mrb[0].mxu0
      %v3228 = vadd.f32 0.0, %v3227
      %v3229 = vpop.f32.mrb[0].mxu0
      %v3230 = vpop.f32.mrb[0].mxu0
      %v3231 = vadd.f32 0.0, %v3230
      %v3232 = vpop.f32.mrb[0].mxu0
      %3233 = vmatprep.mubr.bf16.mxu0 0
      %3234 = vmatmul.mubr.bf16.gmra.mrb[0].mxu0 %v2914
      %v3235 = vpop.f32.mrb[0].mxu0
      %v3236 = vadd.f32 0.0, %v3235
      %v3237 = vpop.f32.mrb[0].mxu0
      %v3238 = vpop.f32.mrb[0].mxu0
      %v3239 = vadd.f32 0.0, %v3238
      %v3240 = vpop.f32.mrb[0].mxu0
      %3241 = vmatprep.mubr.bf16.mxu0 0
      %3242 = vmatmul.mubr.bf16.gmra.mrb[0].mxu0 %v3035
      %v3243 = vpop.f32.mrb[0].mxu0
      %v3244 = vadd.f32 0.0, %v3243
      %v3245 = vpop.f32.mrb[0].mxu0
      %v3246 = vpop.f32.mrb[0].mxu0
      %v3247 = vadd.f32 0.0, %v3246
      %v3248 = vpop.f32.mrb[0].mxu0
      %3249 = vmatprep.mubr.bf16.mxu0 0
      %3250 = vmatmul.mubr.bf16.gmra.mrb[0].mxu0 %v3156
      %v3251 = vpop.f32.mrb[0].mxu0
      %v3252 = vadd.f32 0.0, %v3251
      %v3253 = vpop.f32.mrb[0].mxu0
      %v3254 = vpop.f32.mrb[0].mxu0
      %v3255 = vadd.f32 0.0, %v3254
      %v3256 = vpop.f32.mrb[0].mxu0
      %3257 = vdwg.mxu0
      %v3258 = vadd.f32 %v3137, %v3196
      %v3259 = vadd.f32 %v3138, %v3199
      %v3260 = vadd.f32 %v3139, %v3204
      %v3261 = vadd.f32 %v3140, %v3207
      %v3262 = vadd.f32 %v3141, %v3212
      %v3263 = vadd.f32 %v3142, %v3215
      %v3264 = vadd.f32 %v3143, %v3220
      %v3265 = vadd.f32 %v3144, %v3223
      %v3266 = vadd.f32 %v3145, %v3228
      %v3267 = vadd.f32 %v3146, %v3231
      %v3268 = vadd.f32 %v3147, %v3236
      %v3269 = vadd.f32 %v3148, %v3239
      %v3270 = vadd.f32 %v3149, %v3244
      %v3271 = vadd.f32 %v3150, %v3247
      %v3272 = vadd.f32 %v3151, %v3252
      %v3273 = vadd.f32 %v3152, %v3255
      %s3274 = scalar_lea.vmem %s3, 46
      %v3275 = vld [vmem:[%s3274] sm:$0x3]
      %v3277 = vsel %vm744, %v2768, 0
      %v3280 = vsel %vm656, %v3275, 0
      %3282 = vmatprep.subr.bf16.mxu0 0
      %3283 = vmatpush1.bf16.msra.mxu0 %v3280
      %3284 = vmatprep.subr.bf16.mxu0 0
      %3285 = vmatpush1.bf16.msra.mxu0 0
      %3286 = vmatprep.subr.bf16.mxu0 0
      %3287 = vmatpush1.bf16.msra.mxu0 0
      %3288 = vmatprep.subr.bf16.mxu0 0
      %3289 = vmatpush1.bf16.msra.mxu0 0
      %3290 = vmatprep.subr.bf16.mxu0 0
      %3291 = vmatpush1.bf16.msra.mxu0 0
      %3292 = vmatprep.subr.bf16.mxu0 0
      %3293 = vmatpush1.bf16.msra.mxu0 0
      %3294 = vmatprep.subr.bf16.mxu0 0
      %3295 = vmatpush1.bf16.msra.mxu0 0
      %3296 = vmatprep.subr.bf16.mxu0 0
      %3297 = vmatpush1.bf16.msra.mxu0 0
      %3298 = vmatprep.subr.bf16.mxu0 0
      %3299 = vmatpush1.bf16.msra.mxu0 0
      %3300 = vmatprep.subr.bf16.mxu0 0
      %3301 = vmatpush1.bf16.msra.mxu0 0
      %3302 = vmatprep.subr.bf16.mxu0 0
      %3303 = vmatpush1.bf16.msra.mxu0 0
      %3304 = vmatprep.subr.bf16.mxu0 0
      %3305 = vmatpush1.bf16.msra.mxu0 0
      %3306 = vmatprep.subr.bf16.mxu0 0
      %3307 = vmatpush1.bf16.msra.mxu0 0
      %3308 = vmatprep.subr.bf16.mxu0 0
      %3309 = vmatpush1.bf16.msra.mxu0 0
      %3310 = vmatprep.subr.bf16.mxu0 0
      %3311 = vmatpush1.bf16.msra.mxu0 0
      %3312 = vmatprep.subr.bf16.mxu0 0
      %3313 = vmatpush1.bf16.msra.mxu0 0
      %3314 = vmatprep.mubr.bf16.mxu0 0
      %3315 = vmatmul.mubr.bf16.gmra.mrb[0].mxu0 %v2784
      %v3316 = vpop.f32.mrb[0].mxu0
      %v3317 = vadd.f32 0.0, %v3316
      %v3318 = vpop.f32.mrb[0].mxu0
      %v3319 = vpop.f32.mrb[0].mxu0
      %v3320 = vadd.f32 0.0, %v3319
      %v3321 = vpop.f32.mrb[0].mxu0
      %3322 = vmatprep.mubr.bf16.mxu0 0
      %3323 = vmatmul.mubr.bf16.gmra.mrb[0].mxu0 %v2787
      %v3324 = vpop.f32.mrb[0].mxu0
      %v3325 = vadd.f32 0.0, %v3324
      %v3326 = vpop.f32.mrb[0].mxu0
      %v3327 = vpop.f32.mrb[0].mxu0
      %v3328 = vadd.f32 0.0, %v3327
      %v3329 = vpop.f32.mrb[0].mxu0
      %3330 = vmatprep.mubr.bf16.mxu0 0
      %3331 = vmatmul.mubr.bf16.gmra.mrb[0].mxu0 %v2790
      %v3332 = vpop.f32.mrb[0].mxu0
      %v3333 = vadd.f32 0.0, %v3332
      %v3334 = vpop.f32.mrb[0].mxu0
      %v3335 = vpop.f32.mrb[0].mxu0
      %v3336 = vadd.f32 0.0, %v3335
      %v3337 = vpop.f32.mrb[0].mxu0
      %3338 = vmatprep.mubr.bf16.mxu0 0
      %3339 = vmatmul.mubr.bf16.gmra.mrb[0].mxu0 %v2793
      %v3340 = vpop.f32.mrb[0].mxu0
      %v3341 = vadd.f32 0.0, %v3340
      %v3342 = vpop.f32.mrb[0].mxu0
      %v3343 = vpop.f32.mrb[0].mxu0
      %v3344 = vadd.f32 0.0, %v3343
      %v3345 = vpop.f32.mrb[0].mxu0
      %3346 = vmatprep.mubr.bf16.mxu0 0
      %3347 = vmatmul.mubr.bf16.gmra.mrb[0].mxu0 %v2914
      %v3348 = vpop.f32.mrb[0].mxu0
      %v3349 = vadd.f32 0.0, %v3348
      %v3350 = vpop.f32.mrb[0].mxu0
      %v3351 = vpop.f32.mrb[0].mxu0
      %v3352 = vadd.f32 0.0, %v3351
      %v3353 = vpop.f32.mrb[0].mxu0
      %3354 = vmatprep.mubr.bf16.mxu0 0
      %3355 = vmatmul.mubr.bf16.gmra.mrb[0].mxu0 %v3035
      %v3356 = vpop.f32.mrb[0].mxu0
      %v3357 = vadd.f32 0.0, %v3356
      %v3358 = vpop.f32.mrb[0].mxu0
      %v3359 = vpop.f32.mrb[0].mxu0
      %v3360 = vadd.f32 0.0, %v3359
      %v3361 = vpop.f32.mrb[0].mxu0
      %3362 = vmatprep.mubr.bf16.mxu0 0
      %3363 = vmatmul.mubr.bf16.gmra.mrb[0].mxu0 %v3156
      %v3364 = vpop.f32.mrb[0].mxu0
      %v3365 = vadd.f32 0.0, %v3364
      %v3366 = vpop.f32.mrb[0].mxu0
      %v3367 = vpop.f32.mrb[0].mxu0
      %v3368 = vadd.f32 0.0, %v3367
      %v3369 = vpop.f32.mrb[0].mxu0
      %3370 = vmatprep.mubr.bf16.mxu0 0
      %3371 = vmatmul.mubr.bf16.gmra.mrb[0].mxu0 %v3277
      %v3372 = vpop.f32.mrb[0].mxu0
      %v3373 = vadd.f32 0.0, %v3372
      %v3374 = vpop.f32.mrb[0].mxu0
      %v3375 = vpop.f32.mrb[0].mxu0
      %v3376 = vadd.f32 0.0, %v3375
      %v3377 = vpop.f32.mrb[0].mxu0
      %3378 = vdwg.mxu0
      %v3379 = vadd.f32 %v3258, %v3317
      %v3380 = vadd.f32 %v3259, %v3320
      %v3381 = vadd.f32 %v3260, %v3325
      %v3382 = vadd.f32 %v3261, %v3328
      %v3383 = vadd.f32 %v3262, %v3333
      %v3384 = vadd.f32 %v3263, %v3336
      %v3385 = vadd.f32 %v3264, %v3341
      %v3386 = vadd.f32 %v3265, %v3344
      %v3387 = vadd.f32 %v3266, %v3349
      %v3388 = vadd.f32 %v3267, %v3352
      %v3389 = vadd.f32 %v3268, %v3357
      %v3390 = vadd.f32 %v3269, %v3360
      %v3391 = vadd.f32 %v3270, %v3365
      %v3392 = vadd.f32 %v3271, %v3368
      %v3393 = vadd.f32 %v3272, %v3373
      %v3394 = vadd.f32 %v3273, %v3376
      %vm3395 = vcmask 1045504
      %v3396 = vrot.slane %v540, 2
      %v3397 = vrot.slane %v541, 2
      %v3398 = vsel %vm3395, %v3396, %v3397
      %v3399 = vrot.slane %v542, 2
      %v3400 = vrot.slane %v543, 2
      %v3401 = vsel %vm3395, %v3399, %v3400
      %v3402 = vrot.slane %v616, 2
      %v3403 = vrot.slane %v617, 2
      %v3404 = vsel %vm3395, %v3402, %v3403
      %v3405 = vrot.slane %v618, 2
      %v3406 = vrot.slane %v619, 2
      %v3407 = vsel %vm3395, %v3405, %v3406
      %v3408 = vrot.slane %v620, 2
      %v3409 = vrot.slane %v621, 2
      %v3410 = vsel %vm3395, %v3408, %v3409
      %v3411 = vrot.slane %v622, 2
      %v3412 = vrot.slane %v623, 2
      %v3413 = vsel %vm3395, %v3411, %v3412
      %v3414 = vrot.slane %v624, 2
      %v3415 = vrot.slane %v625, 2
      %v3416 = vsel %vm3395, %v3414, %v3415
      %v3417 = vrot.slane %v626, 2
      %v3418 = vrot.slane %v627, 2
      %v3419 = vsel %vm3395, %v3417, %v3418
      %v3420 = vrot.slane %v628, 2
      %v3421 = vrot.slane %v629, 2
      %v3422 = vsel %vm3395, %v3420, %v3421
      %v3423 = vrot.slane %v630, 2
      %v3424 = vrot.slane %v631, 2
      %v3425 = vsel %vm3395, %v3423, %v3424
      %v3426 = vrot.slane %v564, 2
      %v3427 = vrot.slane %v565, 2
      %v3428 = vsel %vm3395, %v3426, %v3427
      %v3429 = vrot.slane %v566, 2
      %v3430 = vrot.slane %v567, 2
      %v3431 = vsel %vm3395, %v3429, %v3430
      %v3456 = vsel %vm3395, %v3397, 0.0
      %v3457 = vsel %vm3395, %v3400, 0.0
      %v3458 = vsel %vm3395, %v3403, 0.0
      %v3459 = vsel %vm3395, %v3406, 0.0
      %v3460 = vsel %vm3395, %v3409, 0.0
      %v3461 = vsel %vm3395, %v3412, 0.0
      %v3462 = vsel %vm3395, %v3415, 0.0
      %v3463 = vsel %vm3395, %v3418, 0.0
      %v3464 = vsel %vm3395, %v3421, 0.0
      %v3465 = vsel %vm3395, %v3424, 0.0
      %v3466 = vsel %vm3395, %v3427, 0.0
      %v3467 = vsel %vm3395, %v3430, 0.0
      %v3468 = vpack.c.bf16 %v3456, %v3398
      %v3469 = vpack.c.bf16 %v3457, %v3401
      %v3470 = vpack.c.bf16 %v3458, %v3404
      %v3471 = vpack.c.bf16 %v3459, %v3407
      %v3472 = vpack.c.bf16 %v3460, %v3410
      %v3473 = vpack.c.bf16 %v3461, %v3413
      %v3474 = vpack.c.bf16 %v3462, %v3416
      %v3475 = vpack.c.bf16 %v3463, %v3419
      %v3476 = vpack.c.bf16 %v3464, %v3422
      %v3477 = vpack.c.bf16 %v3465, %v3425
      %v3478 = vpack.c.bf16 %v3466, %v3428
      %v3479 = vpack.c.bf16 %v3467, %v3431
      %s3480 = scalar_lea.vmem %s3, 8
      %v3481 = vld [vmem:[%s3480] sm:$0x3]
      %v3483 = vsel %vm744, %v3468, 0
      %v3486 = vsel %vm744, %v3469, 0
      %v3489 = vsel %vm744, %v3470, 0
      %v3492 = vsel %vm744, %v3471, 0
      %v3495 = vsel %vm744, %v3472, 0
      %v3498 = vsel %vm744, %v3473, 0
      %v3501 = vsel %vm744, %v3474, 0
      %v3504 = vsel %vm744, %v3475, 0
      %v3507 = vsel %vm656, %v3481, 0
      %3509 = vmatprep.subr.bf16.mxu0 0
      %3510 = vmatpush1.bf16.msra.mxu0 %v3507
      %3511 = vmatprep.subr.bf16.mxu0 0
      %3512 = vmatpush1.bf16.msra.mxu0 0
      %3513 = vmatprep.subr.bf16.mxu0 0
      %3514 = vmatpush1.bf16.msra.mxu0 0
      %3515 = vmatprep.subr.bf16.mxu0 0
      %3516 = vmatpush1.bf16.msra.mxu0 0
      %3517 = vmatprep.subr.bf16.mxu0 0
      %3518 = vmatpush1.bf16.msra.mxu0 0
      %3519 = vmatprep.subr.bf16.mxu0 0
      %3520 = vmatpush1.bf16.msra.mxu0 0
      %3521 = vmatprep.subr.bf16.mxu0 0
      %3522 = vmatpush1.bf16.msra.mxu0 0
      %3523 = vmatprep.subr.bf16.mxu0 0
      %3524 = vmatpush1.bf16.msra.mxu0 0
      %3525 = vmatprep.subr.bf16.mxu0 0
      %3526 = vmatpush1.bf16.msra.mxu0 0
      %3527 = vmatprep.subr.bf16.mxu0 0
      %3528 = vmatpush1.bf16.msra.mxu0 0
      %3529 = vmatprep.subr.bf16.mxu0 0
      %3530 = vmatpush1.bf16.msra.mxu0 0
      %3531 = vmatprep.subr.bf16.mxu0 0
      %3532 = vmatpush1.bf16.msra.mxu0 0
      %3533 = vmatprep.subr.bf16.mxu0 0
      %3534 = vmatpush1.bf16.msra.mxu0 0
      %3535 = vmatprep.subr.bf16.mxu0 0
      %3536 = vmatpush1.bf16.msra.mxu0 0
      %3537 = vmatprep.subr.bf16.mxu0 0
      %3538 = vmatpush1.bf16.msra.mxu0 0
      %3539 = vmatprep.subr.bf16.mxu0 0
      %3540 = vmatpush1.bf16.msra.mxu0 0
      %3541 = vmatprep.mubr.bf16.mxu0 0
      %3542 = vmatmul.mubr.bf16.gmra.mrb[0].mxu0 %v3483
      %v3543 = vpop.f32.mrb[0].mxu0
      %v3544 = vadd.f32 0.0, %v3543
      %v3545 = vpop.f32.mrb[0].mxu0
      %v3546 = vpop.f32.mrb[0].mxu0
      %v3547 = vadd.f32 0.0, %v3546
      %v3548 = vpop.f32.mrb[0].mxu0
      %3549 = vmatprep.mubr.bf16.mxu0 0
      %3550 = vmatmul.mubr.bf16.gmra.mrb[0].mxu0 %v3486
      %v3551 = vpop.f32.mrb[0].mxu0
      %v3552 = vadd.f32 0.0, %v3551
      %v3553 = vpop.f32.mrb[0].mxu0
      %v3554 = vpop.f32.mrb[0].mxu0
      %v3555 = vadd.f32 0.0, %v3554
      %v3556 = vpop.f32.mrb[0].mxu0
      %3557 = vmatprep.mubr.bf16.mxu0 0
      %3558 = vmatmul.mubr.bf16.gmra.mrb[0].mxu0 %v3489
      %v3559 = vpop.f32.mrb[0].mxu0
      %v3560 = vadd.f32 0.0, %v3559
      %v3561 = vpop.f32.mrb[0].mxu0
      %v3562 = vpop.f32.mrb[0].mxu0
      %v3563 = vadd.f32 0.0, %v3562
      %v3564 = vpop.f32.mrb[0].mxu0
      %3565 = vmatprep.mubr.bf16.mxu0 0
      %3566 = vmatmul.mubr.bf16.gmra.mrb[0].mxu0 %v3492
      %v3567 = vpop.f32.mrb[0].mxu0
      %v3568 = vadd.f32 0.0, %v3567
      %v3569 = vpop.f32.mrb[0].mxu0
      %v3570 = vpop.f32.mrb[0].mxu0
      %v3571 = vadd.f32 0.0, %v3570
      %v3572 = vpop.f32.mrb[0].mxu0
      %3573 = vmatprep.mubr.bf16.mxu0 0
      %3574 = vmatmul.mubr.bf16.gmra.mrb[0].mxu0 %v3495
      %v3575 = vpop.f32.mrb[0].mxu0
      %v3576 = vadd.f32 0.0, %v3575
      %v3577 = vpop.f32.mrb[0].mxu0
      %v3578 = vpop.f32.mrb[0].mxu0
      %v3579 = vadd.f32 0.0, %v3578
      %v3580 = vpop.f32.mrb[0].mxu0
      %3581 = vmatprep.mubr.bf16.mxu0 0
      %3582 = vmatmul.mubr.bf16.gmra.mrb[0].mxu0 %v3498
      %v3583 = vpop.f32.mrb[0].mxu0
      %v3584 = vadd.f32 0.0, %v3583
      %v3585 = vpop.f32.mrb[0].mxu0
      %v3586 = vpop.f32.mrb[0].mxu0
      %v3587 = vadd.f32 0.0, %v3586
      %v3588 = vpop.f32.mrb[0].mxu0
      %3589 = vmatprep.mubr.bf16.mxu0 0
      %3590 = vmatmul.mubr.bf16.gmra.mrb[0].mxu0 %v3501
      %v3591 = vpop.f32.mrb[0].mxu0
      %v3592 = vadd.f32 0.0, %v3591
      %v3593 = vpop.f32.mrb[0].mxu0
      %v3594 = vpop.f32.mrb[0].mxu0
      %v3595 = vadd.f32 0.0, %v3594
      %v3596 = vpop.f32.mrb[0].mxu0
      %3597 = vmatprep.mubr.bf16.mxu0 0
      %3598 = vmatmul.mubr.bf16.gmra.mrb[0].mxu0 %v3504
      %v3599 = vpop.f32.mrb[0].mxu0
      %v3600 = vadd.f32 0.0, %v3599
      %v3601 = vpop.f32.mrb[0].mxu0
      %v3602 = vpop.f32.mrb[0].mxu0
      %v3603 = vadd.f32 0.0, %v3602
      %v3604 = vpop.f32.mrb[0].mxu0
      %3605 = vdwg.mxu0
      %v3606 = vadd.f32 %v3379, %v3544
      %v3607 = vadd.f32 %v3380, %v3547
      %v3608 = vadd.f32 %v3381, %v3552
      %v3609 = vadd.f32 %v3382, %v3555
      %v3610 = vadd.f32 %v3383, %v3560
      %v3611 = vadd.f32 %v3384, %v3563
      %v3612 = vadd.f32 %v3385, %v3568
      %v3613 = vadd.f32 %v3386, %v3571
      %v3614 = vadd.f32 %v3387, %v3576
      %v3615 = vadd.f32 %v3388, %v3579
      %v3616 = vadd.f32 %v3389, %v3584
      %v3617 = vadd.f32 %v3390, %v3587
      %v3618 = vadd.f32 %v3391, %v3592
      %v3619 = vadd.f32 %v3392, %v3595
      %v3620 = vadd.f32 %v3393, %v3600
      %v3621 = vadd.f32 %v3394, %v3603
      %s3622 = scalar_lea.vmem %s3, 18
      %v3623 = vld [vmem:[%s3622] sm:$0x3]
      %v3625 = vsel %vm744, %v3476, 0
      %v3628 = vsel %vm656, %v3623, 0
      %3630 = vmatprep.subr.bf16.mxu0 0
      %3631 = vmatpush1.bf16.msra.mxu0 %v3628
      %3632 = vmatprep.subr.bf16.mxu0 0
      %3633 = vmatpush1.bf16.msra.mxu0 0
      %3634 = vmatprep.subr.bf16.mxu0 0
      %3635 = vmatpush1.bf16.msra.mxu0 0
      %3636 = vmatprep.subr.bf16.mxu0 0
      %3637 = vmatpush1.bf16.msra.mxu0 0
      %3638 = vmatprep.subr.bf16.mxu0 0
      %3639 = vmatpush1.bf16.msra.mxu0 0
      %3640 = vmatprep.subr.bf16.mxu0 0
      %3641 = vmatpush1.bf16.msra.mxu0 0
      %3642 = vmatprep.subr.bf16.mxu0 0
      %3643 = vmatpush1.bf16.msra.mxu0 0
      %3644 = vmatprep.subr.bf16.mxu0 0
      %3645 = vmatpush1.bf16.msra.mxu0 0
      %3646 = vmatprep.subr.bf16.mxu0 0
      %3647 = vmatpush1.bf16.msra.mxu0 0
      %3648 = vmatprep.subr.bf16.mxu0 0
      %3649 = vmatpush1.bf16.msra.mxu0 0
      %3650 = vmatprep.subr.bf16.mxu0 0
      %3651 = vmatpush1.bf16.msra.mxu0 0
      %3652 = vmatprep.subr.bf16.mxu0 0
      %3653 = vmatpush1.bf16.msra.mxu0 0
      %3654 = vmatprep.subr.bf16.mxu0 0
      %3655 = vmatpush1.bf16.msra.mxu0 0
      %3656 = vmatprep.subr.bf16.mxu0 0
      %3657 = vmatpush1.bf16.msra.mxu0 0
      %3658 = vmatprep.subr.bf16.mxu0 0
      %3659 = vmatpush1.bf16.msra.mxu0 0
      %3660 = vmatprep.subr.bf16.mxu0 0
      %3661 = vmatpush1.bf16.msra.mxu0 0
      %3662 = vmatprep.mubr.bf16.mxu0 0
      %3663 = vmatmul.mubr.bf16.gmra.mrb[0].mxu0 %v3486
      %v3664 = vpop.f32.mrb[0].mxu0
      %v3665 = vadd.f32 0.0, %v3664
      %v3666 = vpop.f32.mrb[0].mxu0
      %v3667 = vpop.f32.mrb[0].mxu0
      %v3668 = vadd.f32 0.0, %v3667
      %v3669 = vpop.f32.mrb[0].mxu0
      %3670 = vmatprep.mubr.bf16.mxu0 0
      %3671 = vmatmul.mubr.bf16.gmra.mrb[0].mxu0 %v3489
      %v3672 = vpop.f32.mrb[0].mxu0
      %v3673 = vadd.f32 0.0, %v3672
      %v3674 = vpop.f32.mrb[0].mxu0
      %v3675 = vpop.f32.mrb[0].mxu0
      %v3676 = vadd.f32 0.0, %v3675
      %v3677 = vpop.f32.mrb[0].mxu0
      %3678 = vmatprep.mubr.bf16.mxu0 0
      %3679 = vmatmul.mubr.bf16.gmra.mrb[0].mxu0 %v3492
      %v3680 = vpop.f32.mrb[0].mxu0
      %v3681 = vadd.f32 0.0, %v3680
      %v3682 = vpop.f32.mrb[0].mxu0
      %v3683 = vpop.f32.mrb[0].mxu0
      %v3684 = vadd.f32 0.0, %v3683
      %v3685 = vpop.f32.mrb[0].mxu0
      %3686 = vmatprep.mubr.bf16.mxu0 0
      %3687 = vmatmul.mubr.bf16.gmra.mrb[0].mxu0 %v3495
      %v3688 = vpop.f32.mrb[0].mxu0
      %v3689 = vadd.f32 0.0, %v3688
      %v3690 = vpop.f32.mrb[0].mxu0
      %v3691 = vpop.f32.mrb[0].mxu0
      %v3692 = vadd.f32 0.0, %v3691
      %v3693 = vpop.f32.mrb[0].mxu0
      %3694 = vmatprep.mubr.bf16.mxu0 0
      %3695 = vmatmul.mubr.bf16.gmra.mrb[0].mxu0 %v3498
      %v3696 = vpop.f32.mrb[0].mxu0
      %v3697 = vadd.f32 0.0, %v3696
      %v3698 = vpop.f32.mrb[0].mxu0
      %v3699 = vpop.f32.mrb[0].mxu0
      %v3700 = vadd.f32 0.0, %v3699
      %v3701 = vpop.f32.mrb[0].mxu0
      %3702 = vmatprep.mubr.bf16.mxu0 0
      %3703 = vmatmul.mubr.bf16.gmra.mrb[0].mxu0 %v3501
      %v3704 = vpop.f32.mrb[0].mxu0
      %v3705 = vadd.f32 0.0, %v3704
      %v3706 = vpop.f32.mrb[0].mxu0
      %v3707 = vpop.f32.mrb[0].mxu0
      %v3708 = vadd.f32 0.0, %v3707
      %v3709 = vpop.f32.mrb[0].mxu0
      %3710 = vmatprep.mubr.bf16.mxu0 0
      %3711 = vmatmul.mubr.bf16.gmra.mrb[0].mxu0 %v3504
      %v3712 = vpop.f32.mrb[0].mxu0
      %v3713 = vadd.f32 0.0, %v3712
      %v3714 = vpop.f32.mrb[0].mxu0
      %v3715 = vpop.f32.mrb[0].mxu0
      %v3716 = vadd.f32 0.0, %v3715
      %v3717 = vpop.f32.mrb[0].mxu0
      %3718 = vmatprep.mubr.bf16.mxu0 0
      %3719 = vmatmul.mubr.bf16.gmra.mrb[0].mxu0 %v3625
      %v3720 = vpop.f32.mrb[0].mxu0
      %v3721 = vadd.f32 0.0, %v3720
      %v3722 = vpop.f32.mrb[0].mxu0
      %v3723 = vpop.f32.mrb[0].mxu0
      %v3724 = vadd.f32 0.0, %v3723
      %v3725 = vpop.f32.mrb[0].mxu0
      %3726 = vdwg.mxu0
      %v3727 = vadd.f32 %v3606, %v3665
      %v3728 = vadd.f32 %v3607, %v3668
      %v3729 = vadd.f32 %v3608, %v3673
      %v3730 = vadd.f32 %v3609, %v3676
      %v3731 = vadd.f32 %v3610, %v3681
      %v3732 = vadd.f32 %v3611, %v3684
      %v3733 = vadd.f32 %v3612, %v3689
      %v3734 = vadd.f32 %v3613, %v3692
      %v3735 = vadd.f32 %v3614, %v3697
      %v3736 = vadd.f32 %v3615, %v3700
      %v3737 = vadd.f32 %v3616, %v3705
      %v3738 = vadd.f32 %v3617, %v3708
      %v3739 = vadd.f32 %v3618, %v3713
      %v3740 = vadd.f32 %v3619, %v3716
      %v3741 = vadd.f32 %v3620, %v3721
      %v3742 = vadd.f32 %v3621, %v3724
      %s3743 = scalar_lea.vmem %s3, 28
      %v3744 = vld [vmem:[%s3743] sm:$0x3]
      %v3746 = vsel %vm744, %v3477, 0
      %v3749 = vsel %vm656, %v3744, 0
      %3751 = vmatprep.subr.bf16.mxu0 0
      %3752 = vmatpush1.bf16.msra.mxu0 %v3749
      %3753 = vmatprep.subr.bf16.mxu0 0
      %3754 = vmatpush1.bf16.msra.mxu0 0
      %3755 = vmatprep.subr.bf16.mxu0 0
      %3756 = vmatpush1.bf16.msra.mxu0 0
      %3757 = vmatprep.subr.bf16.mxu0 0
      %3758 = vmatpush1.bf16.msra.mxu0 0
      %3759 = vmatprep.subr.bf16.mxu0 0
      %3760 = vmatpush1.bf16.msra.mxu0 0
      %3761 = vmatprep.subr.bf16.mxu0 0
      %3762 = vmatpush1.bf16.msra.mxu0 0
      %3763 = vmatprep.subr.bf16.mxu0 0
      %3764 = vmatpush1.bf16.msra.mxu0 0
      %3765 = vmatprep.subr.bf16.mxu0 0
      %3766 = vmatpush1.bf16.msra.mxu0 0
      %3767 = vmatprep.subr.bf16.mxu0 0
      %3768 = vmatpush1.bf16.msra.mxu0 0
      %3769 = vmatprep.subr.bf16.mxu0 0
      %3770 = vmatpush1.bf16.msra.mxu0 0
      %3771 = vmatprep.subr.bf16.mxu0 0
      %3772 = vmatpush1.bf16.msra.mxu0 0
      %3773 = vmatprep.subr.bf16.mxu0 0
      %3774 = vmatpush1.bf16.msra.mxu0 0
      %3775 = vmatprep.subr.bf16.mxu0 0
      %3776 = vmatpush1.bf16.msra.mxu0 0
      %3777 = vmatprep.subr.bf16.mxu0 0
      %3778 = vmatpush1.bf16.msra.mxu0 0
      %3779 = vmatprep.subr.bf16.mxu0 0
      %3780 = vmatpush1.bf16.msra.mxu0 0
      %3781 = vmatprep.subr.bf16.mxu0 0
      %3782 = vmatpush1.bf16.msra.mxu0 0
      %3783 = vmatprep.mubr.bf16.mxu0 0
      %3784 = vmatmul.mubr.bf16.gmra.mrb[0].mxu0 %v3489
      %v3785 = vpop.f32.mrb[0].mxu0
      %v3786 = vadd.f32 0.0, %v3785
      %v3787 = vpop.f32.mrb[0].mxu0
      %v3788 = vpop.f32.mrb[0].mxu0
      %v3789 = vadd.f32 0.0, %v3788
      %v3790 = vpop.f32.mrb[0].mxu0
      %3791 = vmatprep.mubr.bf16.mxu0 0
      %3792 = vmatmul.mubr.bf16.gmra.mrb[0].mxu0 %v3492
      %v3793 = vpop.f32.mrb[0].mxu0
      %v3794 = vadd.f32 0.0, %v3793
      %v3795 = vpop.f32.mrb[0].mxu0
      %v3796 = vpop.f32.mrb[0].mxu0
      %v3797 = vadd.f32 0.0, %v3796
      %v3798 = vpop.f32.mrb[0].mxu0
      %3799 = vmatprep.mubr.bf16.mxu0 0
      %3800 = vmatmul.mubr.bf16.gmra.mrb[0].mxu0 %v3495
      %v3801 = vpop.f32.mrb[0].mxu0
      %v3802 = vadd.f32 0.0, %v3801
      %v3803 = vpop.f32.mrb[0].mxu0
      %v3804 = vpop.f32.mrb[0].mxu0
      %v3805 = vadd.f32 0.0, %v3804
      %v3806 = vpop.f32.mrb[0].mxu0
      %3807 = vmatprep.mubr.bf16.mxu0 0
      %3808 = vmatmul.mubr.bf16.gmra.mrb[0].mxu0 %v3498
      %v3809 = vpop.f32.mrb[0].mxu0
      %v3810 = vadd.f32 0.0, %v3809
      %v3811 = vpop.f32.mrb[0].mxu0
      %v3812 = vpop.f32.mrb[0].mxu0
      %v3813 = vadd.f32 0.0, %v3812
      %v3814 = vpop.f32.mrb[0].mxu0
      %3815 = vmatprep.mubr.bf16.mxu0 0
      %3816 = vmatmul.mubr.bf16.gmra.mrb[0].mxu0 %v3501
      %v3817 = vpop.f32.mrb[0].mxu0
      %v3818 = vadd.f32 0.0, %v3817
      %v3819 = vpop.f32.mrb[0].mxu0
      %v3820 = vpop.f32.mrb[0].mxu0
      %v3821 = vadd.f32 0.0, %v3820
      %v3822 = vpop.f32.mrb[0].mxu0
      %3823 = vmatprep.mubr.bf16.mxu0 0
      %3824 = vmatmul.mubr.bf16.gmra.mrb[0].mxu0 %v3504
      %v3825 = vpop.f32.mrb[0].mxu0
      %v3826 = vadd.f32 0.0, %v3825
      %v3827 = vpop.f32.mrb[0].mxu0
      %v3828 = vpop.f32.mrb[0].mxu0
      %v3829 = vadd.f32 0.0, %v3828
      %v3830 = vpop.f32.mrb[0].mxu0
      %3831 = vmatprep.mubr.bf16.mxu0 0
      %3832 = vmatmul.mubr.bf16.gmra.mrb[0].mxu0 %v3625
      %v3833 = vpop.f32.mrb[0].mxu0
      %v3834 = vadd.f32 0.0, %v3833
      %v3835 = vpop.f32.mrb[0].mxu0
      %v3836 = vpop.f32.mrb[0].mxu0
      %v3837 = vadd.f32 0.0, %v3836
      %v3838 = vpop.f32.mrb[0].mxu0
      %3839 = vmatprep.mubr.bf16.mxu0 0
      %3840 = vmatmul.mubr.bf16.gmra.mrb[0].mxu0 %v3746
      %v3841 = vpop.f32.mrb[0].mxu0
      %v3842 = vadd.f32 0.0, %v3841
      %v3843 = vpop.f32.mrb[0].mxu0
      %v3844 = vpop.f32.mrb[0].mxu0
      %v3845 = vadd.f32 0.0, %v3844
      %v3846 = vpop.f32.mrb[0].mxu0
      %3847 = vdwg.mxu0
      %v3848 = vadd.f32 %v3727, %v3786
      %v3849 = vadd.f32 %v3728, %v3789
      %v3850 = vadd.f32 %v3729, %v3794
      %v3851 = vadd.f32 %v3730, %v3797
      %v3852 = vadd.f32 %v3731, %v3802
      %v3853 = vadd.f32 %v3732, %v3805
      %v3854 = vadd.f32 %v3733, %v3810
      %v3855 = vadd.f32 %v3734, %v3813
      %v3856 = vadd.f32 %v3735, %v3818
      %v3857 = vadd.f32 %v3736, %v3821
      %v3858 = vadd.f32 %v3737, %v3826
      %v3859 = vadd.f32 %v3738, %v3829
      %v3860 = vadd.f32 %v3739, %v3834
      %v3861 = vadd.f32 %v3740, %v3837
      %v3862 = vadd.f32 %v3741, %v3842
      %v3863 = vadd.f32 %v3742, %v3845
      %s3864 = scalar_lea.vmem %s3, 38
      %v3865 = vld [vmem:[%s3864] sm:$0x3]
      %v3867 = vsel %vm744, %v3478, 0
      %v3870 = vsel %vm656, %v3865, 0
      %3872 = vmatprep.subr.bf16.mxu0 0
      %3873 = vmatpush1.bf16.msra.mxu0 %v3870
      %3874 = vmatprep.subr.bf16.mxu0 0
      %3875 = vmatpush1.bf16.msra.mxu0 0
      %3876 = vmatprep.subr.bf16.mxu0 0
      %3877 = vmatpush1.bf16.msra.mxu0 0
      %3878 = vmatprep.subr.bf16.mxu0 0
      %3879 = vmatpush1.bf16.msra.mxu0 0
      %3880 = vmatprep.subr.bf16.mxu0 0
      %3881 = vmatpush1.bf16.msra.mxu0 0
      %3882 = vmatprep.subr.bf16.mxu0 0
      %3883 = vmatpush1.bf16.msra.mxu0 0
      %3884 = vmatprep.subr.bf16.mxu0 0
      %3885 = vmatpush1.bf16.msra.mxu0 0
      %3886 = vmatprep.subr.bf16.mxu0 0
      %3887 = vmatpush1.bf16.msra.mxu0 0
      %3888 = vmatprep.subr.bf16.mxu0 0
      %3889 = vmatpush1.bf16.msra.mxu0 0
      %3890 = vmatprep.subr.bf16.mxu0 0
      %3891 = vmatpush1.bf16.msra.mxu0 0
      %3892 = vmatprep.subr.bf16.mxu0 0
      %3893 = vmatpush1.bf16.msra.mxu0 0
      %3894 = vmatprep.subr.bf16.mxu0 0
      %3895 = vmatpush1.bf16.msra.mxu0 0
      %3896 = vmatprep.subr.bf16.mxu0 0
      %3897 = vmatpush1.bf16.msra.mxu0 0
      %3898 = vmatprep.subr.bf16.mxu0 0
      %3899 = vmatpush1.bf16.msra.mxu0 0
      %3900 = vmatprep.subr.bf16.mxu0 0
      %3901 = vmatpush1.bf16.msra.mxu0 0
      %3902 = vmatprep.subr.bf16.mxu0 0
      %3903 = vmatpush1.bf16.msra.mxu0 0
      %3904 = vmatprep.mubr.bf16.mxu0 0
      %3905 = vmatmul.mubr.bf16.gmra.mrb[0].mxu0 %v3492
      %v3906 = vpop.f32.mrb[0].mxu0
      %v3907 = vadd.f32 0.0, %v3906
      %v3908 = vpop.f32.mrb[0].mxu0
      %v3909 = vpop.f32.mrb[0].mxu0
      %v3910 = vadd.f32 0.0, %v3909
      %v3911 = vpop.f32.mrb[0].mxu0
      %3912 = vmatprep.mubr.bf16.mxu0 0
      %3913 = vmatmul.mubr.bf16.gmra.mrb[0].mxu0 %v3495
      %v3914 = vpop.f32.mrb[0].mxu0
      %v3915 = vadd.f32 0.0, %v3914
      %v3916 = vpop.f32.mrb[0].mxu0
      %v3917 = vpop.f32.mrb[0].mxu0
      %v3918 = vadd.f32 0.0, %v3917
      %v3919 = vpop.f32.mrb[0].mxu0
      %3920 = vmatprep.mubr.bf16.mxu0 0
      %3921 = vmatmul.mubr.bf16.gmra.mrb[0].mxu0 %v3498
      %v3922 = vpop.f32.mrb[0].mxu0
      %v3923 = vadd.f32 0.0, %v3922
      %v3924 = vpop.f32.mrb[0].mxu0
      %v3925 = vpop.f32.mrb[0].mxu0
      %v3926 = vadd.f32 0.0, %v3925
      %v3927 = vpop.f32.mrb[0].mxu0
      %3928 = vmatprep.mubr.bf16.mxu0 0
      %3929 = vmatmul.mubr.bf16.gmra.mrb[0].mxu0 %v3501
      %v3930 = vpop.f32.mrb[0].mxu0
      %v3931 = vadd.f32 0.0, %v3930
      %v3932 = vpop.f32.mrb[0].mxu0
      %v3933 = vpop.f32.mrb[0].mxu0
      %v3934 = vadd.f32 0.0, %v3933
      %v3935 = vpop.f32.mrb[0].mxu0
      %3936 = vmatprep.mubr.bf16.mxu0 0
      %3937 = vmatmul.mubr.bf16.gmra.mrb[0].mxu0 %v3504
      %v3938 = vpop.f32.mrb[0].mxu0
      %v3939 = vadd.f32 0.0, %v3938
      %v3940 = vpop.f32.mrb[0].mxu0
      %v3941 = vpop.f32.mrb[0].mxu0
      %v3942 = vadd.f32 0.0, %v3941
      %v3943 = vpop.f32.mrb[0].mxu0
      %3944 = vmatprep.mubr.bf16.mxu0 0
      %3945 = vmatmul.mubr.bf16.gmra.mrb[0].mxu0 %v3625
      %v3946 = vpop.f32.mrb[0].mxu0
      %v3947 = vadd.f32 0.0, %v3946
      %v3948 = vpop.f32.mrb[0].mxu0
      %v3949 = vpop.f32.mrb[0].mxu0
      %v3950 = vadd.f32 0.0, %v3949
      %v3951 = vpop.f32.mrb[0].mxu0
      %3952 = vmatprep.mubr.bf16.mxu0 0
      %3953 = vmatmul.mubr.bf16.gmra.mrb[0].mxu0 %v3746
      %v3954 = vpop.f32.mrb[0].mxu0
      %v3955 = vadd.f32 0.0, %v3954
      %v3956 = vpop.f32.mrb[0].mxu0
      %v3957 = vpop.f32.mrb[0].mxu0
      %v3958 = vadd.f32 0.0, %v3957
      %v3959 = vpop.f32.mrb[0].mxu0
      %3960 = vmatprep.mubr.bf16.mxu0 0
      %3961 = vmatmul.mubr.bf16.gmra.mrb[0].mxu0 %v3867
      %v3962 = vpop.f32.mrb[0].mxu0
      %v3963 = vadd.f32 0.0, %v3962
      %v3964 = vpop.f32.mrb[0].mxu0
      %v3965 = vpop.f32.mrb[0].mxu0
      %v3966 = vadd.f32 0.0, %v3965
      %v3967 = vpop.f32.mrb[0].mxu0
      %3968 = vdwg.mxu0
      %v3969 = vadd.f32 %v3848, %v3907
      %v3970 = vadd.f32 %v3849, %v3910
      %v3971 = vadd.f32 %v3850, %v3915
      %v3972 = vadd.f32 %v3851, %v3918
      %v3973 = vadd.f32 %v3852, %v3923
      %v3974 = vadd.f32 %v3853, %v3926
      %v3975 = vadd.f32 %v3854, %v3931
      %v3976 = vadd.f32 %v3855, %v3934
      %v3977 = vadd.f32 %v3856, %v3939
      %v3978 = vadd.f32 %v3857, %v3942
      %v3979 = vadd.f32 %v3858, %v3947
      %v3980 = vadd.f32 %v3859, %v3950
      %v3981 = vadd.f32 %v3860, %v3955
      %v3982 = vadd.f32 %v3861, %v3958
      %v3983 = vadd.f32 %v3862, %v3963
      %v3984 = vadd.f32 %v3863, %v3966
      %s3985 = scalar_lea.vmem %s3, 48
      %v3986 = vld [vmem:[%s3985] sm:$0x3]
      %v3988 = vsel %vm744, %v3479, 0
      %v3991 = vsel %vm656, %v3986, 0
      %3993 = vmatprep.subr.bf16.mxu0 0
      %3994 = vmatpush1.bf16.msra.mxu0 %v3991
      %3995 = vmatprep.subr.bf16.mxu0 0
      %3996 = vmatpush1.bf16.msra.mxu0 0
      %3997 = vmatprep.subr.bf16.mxu0 0
      %3998 = vmatpush1.bf16.msra.mxu0 0
      %3999 = vmatprep.subr.bf16.mxu0 0
      %4000 = vmatpush1.bf16.msra.mxu0 0
      %4001 = vmatprep.subr.bf16.mxu0 0
      %4002 = vmatpush1.bf16.msra.mxu0 0
      %4003 = vmatprep.subr.bf16.mxu0 0
      %4004 = vmatpush1.bf16.msra.mxu0 0
      %4005 = vmatprep.subr.bf16.mxu0 0
      %4006 = vmatpush1.bf16.msra.mxu0 0
      %4007 = vmatprep.subr.bf16.mxu0 0
      %4008 = vmatpush1.bf16.msra.mxu0 0
      %4009 = vmatprep.subr.bf16.mxu0 0
      %4010 = vmatpush1.bf16.msra.mxu0 0
      %4011 = vmatprep.subr.bf16.mxu0 0
      %4012 = vmatpush1.bf16.msra.mxu0 0
      %4013 = vmatprep.subr.bf16.mxu0 0
      %4014 = vmatpush1.bf16.msra.mxu0 0
      %4015 = vmatprep.subr.bf16.mxu0 0
      %4016 = vmatpush1.bf16.msra.mxu0 0
      %4017 = vmatprep.subr.bf16.mxu0 0
      %4018 = vmatpush1.bf16.msra.mxu0 0
      %4019 = vmatprep.subr.bf16.mxu0 0
      %4020 = vmatpush1.bf16.msra.mxu0 0
      %4021 = vmatprep.subr.bf16.mxu0 0
      %4022 = vmatpush1.bf16.msra.mxu0 0
      %4023 = vmatprep.subr.bf16.mxu0 0
      %4024 = vmatpush1.bf16.msra.mxu0 0
      %4025 = vmatprep.mubr.bf16.mxu0 0
      %4026 = vmatmul.mubr.bf16.gmra.mrb[0].mxu0 %v3495
      %v4027 = vpop.f32.mrb[0].mxu0
      %v4028 = vadd.f32 0.0, %v4027
      %v4029 = vpop.f32.mrb[0].mxu0
      %v4030 = vpop.f32.mrb[0].mxu0
      %v4031 = vadd.f32 0.0, %v4030
      %v4032 = vpop.f32.mrb[0].mxu0
      %4033 = vmatprep.mubr.bf16.mxu0 0
      %4034 = vmatmul.mubr.bf16.gmra.mrb[0].mxu0 %v3498
      %v4035 = vpop.f32.mrb[0].mxu0
      %v4036 = vadd.f32 0.0, %v4035
      %v4037 = vpop.f32.mrb[0].mxu0
      %v4038 = vpop.f32.mrb[0].mxu0
      %v4039 = vadd.f32 0.0, %v4038
      %v4040 = vpop.f32.mrb[0].mxu0
      %4041 = vmatprep.mubr.bf16.mxu0 0
      %4042 = vmatmul.mubr.bf16.gmra.mrb[0].mxu0 %v3501
      %v4043 = vpop.f32.mrb[0].mxu0
      %v4044 = vadd.f32 0.0, %v4043
      %v4045 = vpop.f32.mrb[0].mxu0
      %v4046 = vpop.f32.mrb[0].mxu0
      %v4047 = vadd.f32 0.0, %v4046
      %v4048 = vpop.f32.mrb[0].mxu0
      %4049 = vmatprep.mubr.bf16.mxu0 0
      %4050 = vmatmul.mubr.bf16.gmra.mrb[0].mxu0 %v3504
      %v4051 = vpop.f32.mrb[0].mxu0
      %v4052 = vadd.f32 0.0, %v4051
      %v4053 = vpop.f32.mrb[0].mxu0
      %v4054 = vpop.f32.mrb[0].mxu0
      %v4055 = vadd.f32 0.0, %v4054
      %v4056 = vpop.f32.mrb[0].mxu0
      %4057 = vmatprep.mubr.bf16.mxu0 0
      %4058 = vmatmul.mubr.bf16.gmra.mrb[0].mxu0 %v3625
      %v4059 = vpop.f32.mrb[0].mxu0
      %v4060 = vadd.f32 0.0, %v4059
      %v4061 = vpop.f32.mrb[0].mxu0
      %v4062 = vpop.f32.mrb[0].mxu0
      %v4063 = vadd.f32 0.0, %v4062
      %v4064 = vpop.f32.mrb[0].mxu0
      %4065 = vmatprep.mubr.bf16.mxu0 0
      %4066 = vmatmul.mubr.bf16.gmra.mrb[0].mxu0 %v3746
      %v4067 = vpop.f32.mrb[0].mxu0
      %v4068 = vadd.f32 0.0, %v4067
      %v4069 = vpop.f32.mrb[0].mxu0
      %v4070 = vpop.f32.mrb[0].mxu0
      %v4071 = vadd.f32 0.0, %v4070
      %v4072 = vpop.f32.mrb[0].mxu0
      %4073 = vmatprep.mubr.bf16.mxu0 0
      %4074 = vmatmul.mubr.bf16.gmra.mrb[0].mxu0 %v3867
      %v4075 = vpop.f32.mrb[0].mxu0
      %v4076 = vadd.f32 0.0, %v4075
      %v4077 = vpop.f32.mrb[0].mxu0
      %v4078 = vpop.f32.mrb[0].mxu0
      %v4079 = vadd.f32 0.0, %v4078
      %v4080 = vpop.f32.mrb[0].mxu0
      %4081 = vmatprep.mubr.bf16.mxu0 0
      %4082 = vmatmul.mubr.bf16.gmra.mrb[0].mxu0 %v3988
      %v4083 = vpop.f32.mrb[0].mxu0
      %v4084 = vadd.f32 0.0, %v4083
      %v4085 = vpop.f32.mrb[0].mxu0
      %v4086 = vpop.f32.mrb[0].mxu0
      %v4087 = vadd.f32 0.0, %v4086
      %v4088 = vpop.f32.mrb[0].mxu0
      %4089 = vdwg.mxu0
      %v4090 = vadd.f32 %v3969, %v4028
      %v4091 = vadd.f32 %v3970, %v4031
      %v4092 = vadd.f32 %v3971, %v4036
      %v4093 = vadd.f32 %v3972, %v4039
      %v4094 = vadd.f32 %v3973, %v4044
      %v4095 = vadd.f32 %v3974, %v4047
      %v4096 = vadd.f32 %v3975, %v4052
      %v4097 = vadd.f32 %v3976, %v4055
      %v4098 = vadd.f32 %v3977, %v4060
      %v4099 = vadd.f32 %v3978, %v4063
      %v4100 = vadd.f32 %v3979, %v4068
      %v4101 = vadd.f32 %v3980, %v4071
      %v4102 = vadd.f32 %v3981, %v4076
      %v4103 = vadd.f32 %v3982, %v4079
      %v4104 = vadd.f32 %v3983, %v4084
      %v4105 = vadd.f32 %v3984, %v4087
      %v4106 = vld [vmem:[%s4] sm:$0x1]
      %v4108 = vlaneseq
      %v4109 = vshrl.u32 %v4108, 7
      %v4110 = vsub.s32 0, %v4109
      %v4111 = vrot.slane %v4106, %v4110
      %v4113 = vadd.f32 %v4090, %v4111
      %v4114 = vadd.f32 %v4091, %v4111
      %v4115 = vadd.f32 %v4092, %v4111
      %v4116 = vadd.f32 %v4093, %v4111
      %v4117 = vadd.f32 %v4094, %v4111
      %v4118 = vadd.f32 %v4095, %v4111
      %v4119 = vadd.f32 %v4096, %v4111
      %v4120 = vadd.f32 %v4097, %v4111
      %v4121 = vadd.f32 %v4098, %v4111
      %v4122 = vadd.f32 %v4099, %v4111
      %v4123 = vadd.f32 %v4100, %v4111
      %v4124 = vadd.f32 %v4101, %v4111
      %v4125 = vadd.f32 %v4102, %v4111
      %v4126 = vadd.f32 %v4103, %v4111
      %v4127 = vadd.f32 %v4104, %v4111
      %v4128 = vadd.f32 %v4105, %v4111
      %4129 = vst.msk [vmem:[%s495] sm:$0xff] %vm744, %v4113
      %4130 = vst.msk [vmem:[%s495 + $0x8] sm:$0xff] %vm744, %v4114
      %4131 = vst.msk [vmem:[%s495 + $0x10] sm:$0xff] %vm744, %v4115
      %4132 = vst.msk [vmem:[%s495 + $0x18] sm:$0xff] %vm744, %v4116
      %4133 = vst.msk [vmem:[%s495 + $0x20] sm:$0xff] %vm744, %v4117
      %4134 = vst.msk [vmem:[%s495 + $0x28] sm:$0xff] %vm744, %v4118
      %4135 = vst.msk [vmem:[%s495 + $0x30] sm:$0xff] %vm744, %v4119
      %4136 = vst.msk [vmem:[%s495 + $0x38] sm:$0xff] %vm744, %v4120
      %4137 = vst.msk [vmem:[%s495 + $0x40] sm:$0xff] %vm744, %v4121
      %4138 = vst.msk [vmem:[%s495 + $0x48] sm:$0xff] %vm744, %v4122
      %4139 = vst.msk [vmem:[%s495 + $0x50] sm:$0xff] %vm744, %v4123
      %4140 = vst.msk [vmem:[%s495 + $0x58] sm:$0xff] %vm744, %v4124
      %4141 = vst.msk [vmem:[%s495 + $0x60] sm:$0xff] %vm744, %v4125
      %4142 = vst.msk [vmem:[%s495 + $0x68] sm:$0xff] %vm744, %v4126
      %4143 = vst.msk [vmem:[%s495 + $0x70] sm:$0xff] %vm744, %v4127
      %4144 = vst.msk [vmem:[%s495 + $0x78] sm:$0xff] %vm744, %v4128
      %v4145 = vsel %vm744, %v4113, 0.0
      %v4146 = vsel %vm744, %v4114, 0.0
      %v4147 = vadd.f32 %v4145, %v4146
      %v4148 = vsel %vm744, %v4115, 0.0
      %v4149 = vadd.f32 %v4147, %v4148
      %v4150 = vsel %vm744, %v4116, 0.0
      %v4151 = vadd.f32 %v4149, %v4150
      %v4152 = vsel %vm744, %v4117, 0.0
      %v4153 = vadd.f32 %v4151, %v4152
      %v4154 = vsel %vm744, %v4118, 0.0
      %v4155 = vadd.f32 %v4153, %v4154
      %v4156 = vsel %vm744, %v4119, 0.0
      %v4157 = vadd.f32 %v4155, %v4156
      %v4158 = vsel %vm744, %v4120, 0.0
      %v4159 = vadd.f32 %v4157, %v4158
      %v4160 = vsel %vm744, %v4121, 0.0
      %v4161 = vadd.f32 %v4159, %v4160
      %v4162 = vsel %vm744, %v4122, 0.0
      %v4163 = vadd.f32 %v4161, %v4162
      %v4164 = vsel %vm744, %v4123, 0.0
      %v4165 = vadd.f32 %v4163, %v4164
      %v4166 = vsel %vm744, %v4124, 0.0
      %v4167 = vadd.f32 %v4165, %v4166
      %v4168 = vsel %vm744, %v4125, 0.0
      %v4169 = vadd.f32 %v4167, %v4168
      %v4170 = vsel %vm744, %v4126, 0.0
      %v4171 = vadd.f32 %v4169, %v4170
      %v4172 = vsel %vm744, %v4127, 0.0
      %v4173 = vadd.f32 %v4171, %v4172
      %v4174 = vsel %vm744, %v4128, 0.0
      %v4175 = vadd.f32 %v4173, %v4174
      %v4176 = vrot.slane %v4175, 4
      %v4177 = vadd.f32 %v4175, %v4176
      %v4178 = vrot.slane %v4177, 2
      %v4179 = vadd.f32 %v4177, %v4178
      %v4180 = vrot.slane %v4179, 1
      %v4181 = vadd.f32 %v4179, %v4180
      %v4182 = vmul.f32 %v4113, %v4113
      %v4183 = vmul.f32 %v4114, %v4114
      %v4184 = vmul.f32 %v4115, %v4115
      %v4185 = vmul.f32 %v4116, %v4116
      %v4186 = vmul.f32 %v4117, %v4117
      %v4187 = vmul.f32 %v4118, %v4118
      %v4188 = vmul.f32 %v4119, %v4119
      %v4189 = vmul.f32 %v4120, %v4120
      %v4190 = vmul.f32 %v4121, %v4121
      %v4191 = vmul.f32 %v4122, %v4122
      %v4192 = vmul.f32 %v4123, %v4123
      %v4193 = vmul.f32 %v4124, %v4124
      %v4194 = vmul.f32 %v4125, %v4125
      %v4195 = vmul.f32 %v4126, %v4126
      %v4196 = vmul.f32 %v4127, %v4127
      %v4197 = vmul.f32 %v4128, %v4128
      %v4198 = vsel %vm744, %v4182, 0.0
      %v4199 = vsel %vm744, %v4183, 0.0
      %v4200 = vadd.f32 %v4198, %v4199
      %v4201 = vsel %vm744, %v4184, 0.0
      %v4202 = vadd.f32 %v4200, %v4201
      %v4203 = vsel %vm744, %v4185, 0.0
      %v4204 = vadd.f32 %v4202, %v4203
      %v4205 = vsel %vm744, %v4186, 0.0
      %v4206 = vadd.f32 %v4204, %v4205
      %v4207 = vsel %vm744, %v4187, 0.0
      %v4208 = vadd.f32 %v4206, %v4207
      %v4209 = vsel %vm744, %v4188, 0.0
      %v4210 = vadd.f32 %v4208, %v4209
      %v4211 = vsel %vm744, %v4189, 0.0
      %v4212 = vadd.f32 %v4210, %v4211
      %v4213 = vsel %vm744, %v4190, 0.0
      %v4214 = vadd.f32 %v4212, %v4213
      %v4215 = vsel %vm744, %v4191, 0.0
      %v4216 = vadd.f32 %v4214, %v4215
      %v4217 = vsel %vm744, %v4192, 0.0
      %v4218 = vadd.f32 %v4216, %v4217
      %v4219 = vsel %vm744, %v4193, 0.0
      %v4220 = vadd.f32 %v4218, %v4219
      %v4221 = vsel %vm744, %v4194, 0.0
      %v4222 = vadd.f32 %v4220, %v4221
      %v4223 = vsel %vm744, %v4195, 0.0
      %v4224 = vadd.f32 %v4222, %v4223
      %v4225 = vsel %vm744, %v4196, 0.0
      %v4226 = vadd.f32 %v4224, %v4225
      %v4227 = vsel %vm744, %v4197, 0.0
      %v4228 = vadd.f32 %v4226, %v4227
      %v4229 = vrot.slane %v4228, 4
      %v4230 = vadd.f32 %v4228, %v4229
      %v4231 = vrot.slane %v4230, 2
      %v4232 = vadd.f32 %v4230, %v4231
      %v4233 = vrot.slane %v4232, 1
      %v4234 = vadd.f32 %v4232, %v4233
      %v4235 = vsel %vm1335, %v4181, %v4234
      %vm4236 = vcmask 25600
      %4237 = vst.msk [vmem:[%s504] sm:$0x3] %vm4236, %v4235
      %s4238 = smul.u32 8, %s25
      %p4239 = scmp.lt.s32.totalorder %s24, 1
      %s4240 = scalar_select %p4239, %s24, 1
      %p4241 = scmp.lt.s32.totalorder %s4238, 15
      %s4242 = scalar_select %p4241, %s4238, 15
      %s4243 = smul.addr %s4242, 2
      %s4244 = smul.addr %s4240, 32
      %s4245 = sadd.s32 %s4243, %s4244
      %s4246 = smul.addr %s4245, 8
      %s4247 = scalar_lea.vmem %s7, %s4246
      %p4248 = scmp.lt.s32.totalorder %s24, 1
      %s4249 = scalar_select %p4248, %s24, 1
      %p4250 = scmp.lt.s32.totalorder %s25, 1
      %s4251 = scalar_select %p4250, %s25, 1
      %s4252 = smul.addr %s4249, 2
      %s4253 = sadd.s32 %s4251, %s4252
      %s4254 = smul.addr %s4253, 2
      %s4255 = scalar_lea.vmem %s8, %s4254
      // Predicated region
      $region49: #{residual_block.4} parent=47 // pred_check
        %p4256 = pneg %p236
      $region50: #{residual_block.4} parent=47 // pred_check_branch
        %4258 = sbr.rel (%p4256) target = $region52
      $region51: #{residual_block.4} parent=47 // pred_region
        %s4259 = smul.u32 8, %s25
      $region52: #{residual_block.4} parent=47 // pred_fallthru
        _
      // Predicated region
      $region53: #{residual_block.4} parent=47 // pred_check
        %p4260 = pneg %p264
      $region54: #{residual_block.4} parent=47 // pred_check_branch
        %4262 = sbr.rel (%p4260) target = $region56
      $region55: #{residual_block.4} parent=47 // pred_region
        _
      $region56: #{residual_block.4} parent=47 // pred_fallthru
        _
    $region48: #{residual_block.4} parent=5 // pred_fallthru
      _
    %p4263 = scmp.le.s32.totalorder 2, %s15
    // Predicated region
    $region57: #{residual_block.4} parent=5 // pred_check
      %p4264 = pneg %p4263
    $region58: #{residual_block.4} parent=5 // pred_check_branch
      %4266 = sbr.rel (%p4264) target = $region60
    $region59: #{residual_block.4} parent=5 // pred_region
      %s4267 = ssub.s32 %s15, 2
      // Predicated region
      $region61: #{residual_block.4} parent=59 // pred_check
        %p4268 = pneg %p242
      $region62: #{residual_block.4} parent=59 // pred_check_branch
        %4270 = sbr.rel (%p4268) target = $region64
      $region63: #{residual_block.4} parent=59 // pred_region
        %s4271 = smul.u32 8, %s27
        %p4272 = scmp.lt.s32.totalorder %s26, 1
        %s4273 = scalar_select %p4272, %s26, 1
        %p4274 = scmp.lt.s32.totalorder %s4271, 15
        %s4275 = scalar_select %p4274, %s4271, 15
        %s4276 = smul.addr %s4275, 2
        %s4277 = smul.addr %s4273, 32
        %s4278 = sadd.s32 %s4276, %s4277
        %s4279 = smul.addr %s4278, 8
        %s4280 = scalar_lea.vmem %s7, %s4279
      $region64: #{residual_block.4} parent=59 // pred_fallthru
        _
      // Predicated region
      $region65: #{residual_block.4} parent=59 // pred_check
        %p4281 = pneg %p270
      $region66: #{residual_block.4} parent=59 // pred_check_branch
        %4283 = sbr.rel (%p4281) target = $region68
      $region67: #{residual_block.4} parent=59 // pred_region
        %p4284 = scmp.lt.s32.totalorder %s26, 1
        %s4285 = scalar_select %p4284, %s26, 1
        %p4286 = scmp.lt.s32.totalorder %s27, 1
        %s4287 = scalar_select %p4286, %s27, 1
        %s4288 = smul.addr %s4285, 2
        %s4289 = sadd.s32 %s4287, %s4288
        %s4290 = smul.addr %s4289, 2
        %s4291 = scalar_lea.vmem %s8, %s4290
      $region68: #{residual_block.4} parent=59 // pred_fallthru
        _
    $region60: #{residual_block.4} parent=5 // pred_fallthru
      _
  $region6: #{residual_block.4} parent=0 // loop_footer
    %s19 = sadd.s32 1, %s15
  $region7: #{residual_block.4} parent=0 // loop_footer_branch
    %14 = sbr.rel target = $region3
  $region8: #{residual_block.4} parent=0 // loop_exit
    _

</llo_original>
